<compile_context>
chip_gen: v5e
topology: v5e:2x2
jax: 0.10.0
libtpu: 0.0.40
codegen_flags: <defaults>
</compile_context>

<pallas_src>
import math
import functools

import jax
import jax.numpy as jnp
from jax.experimental import pallas as pl
from jax.experimental.pallas import tpu as pltpu

_BIG = 1e30


def _round_up(a, b):
    return (a + b - 1) // b * b


# ------------------- tiled matmul (+ optional bias) kernels ------------------

_MM_TILE_M = 1024


def _mm_kernel(x_ref, w_ref, o_ref):
    o_ref[...] = jnp.dot(x_ref[...], w_ref[...], preferred_element_type=jnp.float32)


def _mm_bias_kernel(x_ref, w_ref, b_ref, o_ref):
    o_ref[...] = (jnp.dot(x_ref[...], w_ref[...], preferred_element_type=jnp.float32)
                  + b_ref[...])


def matmul_bias(x, w, b=None, use_bf16=True):
    """x:(M,K) @ w:(K,N) [+ b] -> (M,N) f32.  M-tiled, bf16 operands, f32 accum."""
    M, K = x.shape
    N = w.shape[1]
    tm = min(_round_up(max(M, 1), 8), _MM_TILE_M)
    Mp = _round_up(M, tm)
    cdt = jnp.bfloat16 if use_bf16 else jnp.float32
    xp = x.astype(cdt)
    if Mp != M:
        xp = jnp.pad(xp, ((0, Mp - M), (0, 0)))
    wc = w.astype(cdt)
    params = pltpu.CompilerParams(dimension_semantics=("parallel",),
                                  vmem_limit_bytes=32 * 1024 * 1024)
    if b is None:
        out = pl.pallas_call(
            _mm_kernel,
            out_shape=jax.ShapeDtypeStruct((Mp, N), jnp.float32),
            grid=(Mp // tm,),
            in_specs=[pl.BlockSpec((tm, K), lambda i: (i, 0)),
                      pl.BlockSpec((K, N), lambda i: (0, 0))],
            out_specs=pl.BlockSpec((tm, N), lambda i: (i, 0)),
            compiler_params=params,
        )(xp, wc)
    else:
        out = pl.pallas_call(
            _mm_bias_kernel,
            out_shape=jax.ShapeDtypeStruct((Mp, N), jnp.float32),
            grid=(Mp // tm,),
            in_specs=[pl.BlockSpec((tm, K), lambda i: (i, 0)),
                      pl.BlockSpec((K, N), lambda i: (0, 0)),
                      pl.BlockSpec((1, N), lambda i: (0, 0))],
            out_specs=pl.BlockSpec((tm, N), lambda i: (i, 0)),
            compiler_params=params,
        )(xp, wc, b.reshape(1, N).astype(jnp.float32))
    return out[:M] if Mp != M else out


# -------------------- fused LayerNorm + 1-wide score head --------------------

def _ln_score_kernel(x_ref, g_ref, b_ref, sw_ref, sb_ref, y_ref, s_ref):
    x = x_ref[...]
    mu = jnp.mean(x, axis=-1, keepdims=True)
    var = jnp.mean(jnp.square(x - mu), axis=-1, keepdims=True)
    y = (x - mu) * jax.lax.rsqrt(var + 1e-5) * g_ref[...] + b_ref[...]
    y_ref[...] = y
    # score head fused as VPU multiply + lane reduction (avoids a 1-wide MXU op).
    s_ref[...] = jnp.sum(y * sw_ref[...], axis=-1, keepdims=True) + sb_ref[...]


def layernorm_score(x2d, gamma, beta, score_w, score_b):
    M, C = x2d.shape
    tm = min(_round_up(max(M, 1), 8), _MM_TILE_M)
    Mp = _round_up(M, tm)
    xp = x2d.astype(jnp.float32)
    if Mp != M:
        xp = jnp.pad(xp, ((0, Mp - M), (0, 0)))
    y, s = pl.pallas_call(
        _ln_score_kernel,
        out_shape=(jax.ShapeDtypeStruct((Mp, C), jnp.float32),
                   jax.ShapeDtypeStruct((Mp, 1), jnp.float32)),
        grid=(Mp // tm,),
        in_specs=[pl.BlockSpec((tm, C), lambda i: (i, 0)),
                  pl.BlockSpec((1, C), lambda i: (0, 0)),
                  pl.BlockSpec((1, C), lambda i: (0, 0)),
                  pl.BlockSpec((1, C), lambda i: (0, 0)),
                  pl.BlockSpec((1, 1), lambda i: (0, 0))],
        out_specs=(pl.BlockSpec((tm, C), lambda i: (i, 0)),
                   pl.BlockSpec((tm, 1), lambda i: (i, 0))),
        compiler_params=pltpu.CompilerParams(dimension_semantics=("parallel",)),
    )(xp,
      gamma.reshape(1, C).astype(jnp.float32),
      beta.reshape(1, C).astype(jnp.float32),
      score_w.reshape(1, C).astype(jnp.float32),
      jnp.asarray(score_b, jnp.float32).reshape(1, 1))
    if Mp != M:
        y, s = y[:M], s[:M]
    return y, s


# --------------------- fused DPC-KNN kernels (no NxN in HBM) ------------------

_DPC_TILE = 512
_SLAB = 32          # row-slab streamed through the running k-smallest merge


def _cluster_tiles(n):
    if n <= _DPC_TILE:
        t = _round_up(n, _SLAB)
        return t, t
    return _round_up(n, _DPC_TILE), _DPC_TILE


def _sq_norms(x_f32, n_pad):
    """Per-token squared norms (f32, exact), lane-dense (B, 1, n_pad)."""
    B, N, _ = x_f32.shape
    sq = jnp.sum(x_f32 * x_f32, axis=-1)
    if n_pad != N:
        sq = jnp.pad(sq, ((0, 0), (0, n_pad - N)))
    return sq.reshape(B, 1, n_pad)


def _density_kernel(xc_ref, xr_ref, sqc_ref, dens_ref, cmax_ref,
                    knn_sc, cmax_sc, *, k, n_valid, tile, slab, inv_c, big):
    i = pl.program_id(2)
    n_rt = pl.num_programs(2)

    @pl.when(i == 0)
    def _():
        knn_sc[...] = jnp.full(knn_sc.shape, big, knn_sc.dtype)
        cmax_sc[...] = jnp.full(cmax_sc.shape, -big, cmax_sc.dtype)

    xr = xr_ref[0]                              # (T, C) bf16 row tokens
    xc = xc_ref[0]                              # (T, C) bf16 column (output) tokens
    sqc = sqc_ref[0]                            # (1, T) f32 column norms (exact)

    # single-pass bf16 MXU Gram, f32 accumulation
    g = jax.lax.dot_general(xr, xc, (((1,), (1,)), ((), ())),
                            preferred_element_type=jnp.float32)        # (T, T)

    # row norms (sublane orientation), +/-BIG bias to mask padded rows
    xr32 = xr.astype(jnp.float32)
    sqr = jnp.sum(xr32 * xr32, axis=-1, keepdims=True)                 # (T, 1)
    row_id = i * tile + jax.lax.broadcasted_iota(jnp.int32, (tile, 1), 0)
    pad = jnp.where(row_id < n_valid, 0.0, big)                        # (T, 1)
    sqr_lo = sqr + pad
    sqr_hi = sqr - pad

    knn = knn_sc[...]                                                  # (k, T)
    cmax = cmax_sc[...]                                                # (1, T)

    for s in range(tile // slab):
        lo, hi = s * slab, (s + 1) * slab
        m2g = -2.0 * g[lo:hi, :]                                       # (S, T)
        # running per-column max of (||xr||^2 - 2 g); sqc added at the end
        cmax = jnp.maximum(cmax, jnp.max(m2g + sqr_hi[lo:hi],
                                         axis=0, keepdims=True))
        # squared distances for this slab
        d2 = jnp.maximum(m2g + sqr_lo[lo:hi] + sqc, 0.0)               # (S, T)
        # merge into running k-smallest (multiset, ties keep multiplicity)
        work = jnp.concatenate([knn, d2], axis=0)                      # (k+S, T)
        nw = work.shape[0]
        iota = jax.lax.broadcasted_iota(jnp.int32, (nw, 1), 0)
        rows = []
        for p in range(k):
            m = jnp.min(work, axis=0, keepdims=True)
            rows.append(m)
            if p + 1 < k:
                first = jnp.min(jnp.where(work <= m, iota, nw),
                                axis=0, keepdims=True)
                work = jnp.where(iota == first, big, work)
        knn = jnp.concatenate(rows, axis=0)                            # (k, T)

    knn_sc[...] = knn
    cmax_sc[...] = cmax

    @pl.when(i == n_rt - 1)
    def _():
        mean_d2 = jnp.mean(knn, axis=0, keepdims=True)                 # (1, T)
        dens_ref[0] = jnp.exp(-mean_d2 * inv_c)
        cmax_ref[0] = jnp.maximum(cmax + sqc, 0.0)


def dpc_density(x, k):
    """Fused cdist^2 + kNN + density; x:(B,N,C) f32 -> (density (B,N), d2max (B,))."""
    B, N, C = x.shape
    Np, T = _cluster_tiles(N)
    xb = x.astype(jnp.bfloat16)
    if Np != N:
        xb = jnp.pad(xb, ((0, 0), (0, Np - N), (0, 0)))
    sqc = _sq_norms(x, Np)
    n_t = Np // T
    kern = functools.partial(_density_kernel, k=k, n_valid=N, tile=T,
                             slab=_SLAB, inv_c=1.0 / C, big=_BIG)
    dens, cmax = pl.pallas_call(
        kern,
        out_shape=(jax.ShapeDtypeStruct((B, n_t, T), jnp.float32),
                   jax.ShapeDtypeStruct((B, n_t, T), jnp.float32)),
        grid=(B, n_t, n_t),
        in_specs=[pl.BlockSpec((1, T, C), lambda b, j, i: (b, j, 0)),
                  pl.BlockSpec((1, T, C), lambda b, j, i: (b, i, 0)),
                  pl.BlockSpec((1, 1, T), lambda b, j, i: (b, 0, j))],
        out_specs=(pl.BlockSpec((1, 1, T), lambda b, j, i: (b, j, 0)),
                   pl.BlockSpec((1, 1, T), lambda b, j, i: (b, j, 0))),
        scratch_shapes=[pltpu.VMEM((k, T), jnp.float32),
                        pltpu.VMEM((1, T), jnp.float32)],
        compiler_params=pltpu.CompilerParams(
            dimension_semantics=("parallel", "parallel", "arbitrary")),
    )(xb, xb, sqc)
    dens = dens.reshape(B, Np)[:, :N]
    cmax = cmax.reshape(B, Np)[:, :N]
    return dens, jnp.max(cmax, axis=-1)


def _indicator_kernel(xc_ref, xr_ref, sqc_ref, dsub_ref, dlane_ref, dmax_ref,
                      out_ref, rmin_sc, *, big):
    i = pl.program_id(2)
    n_rt = pl.num_programs(2)

    @pl.when(i == 0)
    def _():
        rmin_sc[...] = jnp.full(rmin_sc.shape, big, rmin_sc.dtype)

    xr = xr_ref[0]
    xc = xc_ref[0]
    sqc = sqc_ref[0]
    g = jax.lax.dot_general(xr, xc, (((1,), (1,)), ((), ())),
                            preferred_element_type=jnp.float32)
    xr32 = xr.astype(jnp.float32)
    sqr = jnp.sum(xr32 * xr32, axis=-1, keepdims=True)
    d2 = jnp.maximum(sqr + sqc - 2.0 * g, 0.0)                         # (T, T)

    dens_r = dsub_ref[0][:, 0:1]                                       # (T, 1)
    dens_c = dlane_ref[0]                                              # (1, T)
    masked = jnp.where(dens_r > dens_c, d2, big)
    rmin_sc[...] = jnp.minimum(rmin_sc[...],
                               jnp.min(masked, axis=0, keepdims=True))

    @pl.when(i == n_rt - 1)
    def _():
        # fill with the global (per-batch) squared dist-max, matching reference
        out_ref[0] = jnp.minimum(rmin_sc[...], dmax_ref[0])


def dpc_dist_indicator(x, density, d2max):
    """Masked row-min over higher-density tokens (squared space), lane-dense out."""
    B, N, C = x.shape
    Np, T = _cluster_tiles(N)
    xb = x.astype(jnp.bfloat16)
    dens = density
    if Np != N:
        xb = jnp.pad(xb, ((0, 0), (0, Np - N), (0, 0)))
        dens = jnp.pad(dens, ((0, 0), (0, Np - N)), constant_values=-1.0)
    sqc = _sq_norms(x, Np)
    n_t = Np // T
    dens_lane = dens.reshape(B, 1, Np)
    # lane-replicated row densities: contiguous DMA instead of (T,1) narrow block
    dens_sub = jnp.broadcast_to(dens[:, :, None], (B, Np, 128))
    dmax_in = d2max.reshape(B, 1, 1).astype(jnp.float32)
    kern = functools.partial(_indicator_kernel, big=_BIG)
    out = pl.pallas_call(
        kern,
        out_shape=jax.ShapeDtypeStruct((B, n_t, T), jnp.float32),
        grid=(B, n_t, n_t),
        in_specs=[pl.BlockSpec((1, T, C), lambda b, j, i: (b, j, 0)),
                  pl.BlockSpec((1, T, C), lambda b, j, i: (b, i, 0)),
                  pl.BlockSpec((1, 1, T), lambda b, j, i: (b, 0, j)),
                  pl.BlockSpec((1, T, 128), lambda b, j, i: (b, i, 0)),
                  pl.BlockSpec((1, 1, T), lambda b, j, i: (b, 0, j)),
                  pl.BlockSpec((1, 1, 1), lambda b, j, i: (b, 0, 0))],
        out_specs=pl.BlockSpec((1, 1, T), lambda b, j, i: (b, j, 0)),
        scratch_shapes=[pltpu.VMEM((1, T), jnp.float32)],
        compiler_params=pltpu.CompilerParams(
            dimension_semantics=("parallel", "parallel", "arbitrary")),
    )(xb, xb, sqc, dens_sub, dens_lane, dmax_in)
    return out.reshape(B, Np)[:, :N]


def _assign_kernel(xd_ref, xc_ref, sqc_ref, out_ref, bestd_sc, besti_sc,
                   *, m_valid, m_tile, big):
    mi = pl.program_id(2)
    n_mt = pl.num_programs(2)

    @pl.when(mi == 0)
    def _():
        bestd_sc[...] = jnp.full(bestd_sc.shape, big, bestd_sc.dtype)
        besti_sc[...] = jnp.zeros(besti_sc.shape, besti_sc.dtype)

    xd = xd_ref[0]                              # (Mt, C) bf16 cluster centers
    xc = xc_ref[0]                              # (T, C) bf16 tokens
    sqc = sqc_ref[0]                            # (1, T)
    g = jax.lax.dot_general(xd, xc, (((1,), (1,)), ((), ())),
                            preferred_element_type=jnp.float32)        # (Mt, T)
    xd32 = xd.astype(jnp.float32)
    sqm = jnp.sum(xd32 * xd32, axis=-1, keepdims=True)                 # (Mt, 1)
    m_ids = mi * m_tile + jax.lax.broadcasted_iota(jnp.int32, (m_tile, 1), 0)
    pad = jnp.where(m_ids < m_valid, 0.0, big)
    d2 = jnp.maximum(sqm + pad + sqc - 2.0 * g, 0.0)                   # (Mt, T)

    tile_min = jnp.min(d2, axis=0, keepdims=True)                      # (1, T)
    tile_arg = jnp.min(jnp.where(d2 <= tile_min, m_ids, jnp.int32(2 ** 30)),
                       axis=0, keepdims=True)                          # (1, T)
    better = tile_min < bestd_sc[...]           # strict < keeps first occurrence
    besti_sc[...] = jnp.where(better, tile_arg, besti_sc[...])
    bestd_sc[...] = jnp.where(better, tile_min, bestd_sc[...])

    @pl.when(mi == n_mt - 1)
    def _():
        out_ref[0] = besti_sc[...]


def dpc_assign(x_down, x):
    """Nearest cluster center per token, recomputed (no stored NxN), M-tiled."""
    B, M, C = x_down.shape
    _, N, _ = x.shape
    Np, T = _cluster_tiles(N)
    Mt = min(_round_up(max(M, 1), 8), 256)
    Mp = _round_up(M, Mt)
    xdb = x_down.astype(jnp.bfloat16)
    xcb = x.astype(jnp.bfloat16)
    if Mp != M:
        xdb = jnp.pad(xdb, ((0, 0), (0, Mp - M), (0, 0)))
    if Np != N:
        xcb = jnp.pad(xcb, ((0, 0), (0, Np - N), (0, 0)))
    sqc = _sq_norms(x, Np)
    n_t = Np // T
    n_mt = Mp // Mt
    kern = functools.partial(_assign_kernel, m_valid=M, m_tile=Mt, big=_BIG)
    out = pl.pallas_call(
        kern,
        out_shape=jax.ShapeDtypeStruct((B, n_t, T), jnp.int32),
        grid=(B, n_t, n_mt),
        in_specs=[pl.BlockSpec((1, Mt, C), lambda b, j, mi: (b, mi, 0)),
                  pl.BlockSpec((1, T, C), lambda b, j, mi: (b, j, 0)),
                  pl.BlockSpec((1, 1, T), lambda b, j, mi: (b, 0, j))],
        out_specs=pl.BlockSpec((1, 1, T), lambda b, j, mi: (b, j, 0)),
        scratch_shapes=[pltpu.VMEM((1, T), jnp.float32),
                        pltpu.VMEM((1, T), jnp.int32)],
        compiler_params=pltpu.CompilerParams(
            dimension_semantics=("parallel", "parallel", "arbitrary")),
    )(xdb, xcb, sqc)
    return out.reshape(B, Np)[:, :N]


# --------------------------------- JAX glue ----------------------------------

def extract_patches(x_nhwc, kh, kw, stride, pad):
    """Strided-slice im2col (no XLA gather).  Returns (B,Ho,Wo,kh*kw*C), Ho, Wo."""
    xp = jnp.pad(x_nhwc, ((0, 0), (pad, pad), (pad, pad), (0, 0)))
    B, Hp, Wp, C = xp.shape
    Ho = (Hp - kh) // stride + 1
    Wo = (Wp - kw) // stride + 1
    cols = []
    for di in range(kh):
        for dj in range(kw):
            cols.append(jax.lax.slice(
                xp, (0, di, dj, 0),
                (B, di + (Ho - 1) * stride + 1, dj + (Wo - 1) * stride + 1, C),
                (1, stride, stride, 1)))
    patches = jnp.concatenate(cols, axis=-1)        # ordering (kh, kw, C)
    return patches, Ho, Wo


def conv2d_as_matmul(x_nhwc, w_oihw, b, stride, pad):
    B = x_nhwc.shape[0]
    cout, cin, kh, kw = w_oihw.shape
    patches, Ho, Wo = extract_patches(x_nhwc, kh, kw, stride, pad)
    wmat = jnp.transpose(w_oihw, (2, 3, 1, 0)).reshape(kh * kw * cin, cout)
    y = matmul_bias(patches.reshape(B * Ho * Wo, -1), wmat, b)
    return y.reshape(B, Ho, Wo, cout)


def get_grid_index(init_size, map_size):
    H_init, W_init = init_size
    H, W = map_size
    rows = (jnp.arange(H_init, dtype=jnp.int32) * H) // H_init
    cols = (jnp.arange(W_init, dtype=jnp.int32) * W) // W_init
    return (rows[:, None] * W + cols[None, :]).reshape(-1)


def token2map(token_dict):
    x = token_dict['x']                               # (B, N, C)
    H, W = token_dict['map_size']
    H_init, W_init = token_dict['init_grid_size']
    idx_token = token_dict['idx_token']               # (B, N_init)
    B, N, C = x.shape
    N_init = H_init * W_init
    if N_init == N and N == H * W:
        return x.reshape(B, H, W, C)
    idx_hw = get_grid_index((H_init, W_init), (H, W))                 # (N_init,)
    rows = (jnp.broadcast_to(idx_hw[None, :], (B, N_init))
            + jnp.arange(B, dtype=jnp.int32)[:, None] * (H * W))      # (B, N_init)
    tok_feat = jnp.take_along_axis(x, idx_token[..., None], axis=1)   # (B, N_init, C)
    counts = jax.ops.segment_sum(jnp.ones((B * N_init,), jnp.float32),
                                 rows.reshape(-1), num_segments=B * H * W) + 1e-6
    vals = 1.0 / counts[rows]                                         # (B, N_init)
    x_map = jax.ops.segment_sum((tok_feat * vals[..., None]).reshape(B * N_init, C),
                                rows.reshape(-1), num_segments=B * H * W)
    return x_map.reshape(B, H, W, C)


def map2token(feature_map, token_dict):
    idx_token = token_dict['idx_token']
    N = token_dict['token_num']
    H_init, W_init = token_dict['init_grid_size']
    N_init = H_init * W_init
    B, H, W, C = feature_map.shape
    if N_init == N and N == H * W:
        return feature_map.reshape(B, N, C)
    idx_hw = get_grid_index((H_init, W_init), (H, W))                 # (N_init,)
    rows = idx_token + jnp.arange(B, dtype=jnp.int32)[:, None] * N    # (B, N_init)
    map_flat = feature_map.reshape(B, H * W, C)
    gathered = jnp.take_along_axis(
        map_flat, jnp.broadcast_to(idx_hw[None, :, None], (B, N_init, 1)), axis=1)
    counts = jax.ops.segment_sum(jnp.ones((B * N_init,), jnp.float32),
                                 rows.reshape(-1), num_segments=B * N) + 1e-6
    vals = 1.0 / counts[rows]
    out = jax.ops.segment_sum((gathered * vals[..., None]).reshape(B * N_init, C),
                              rows.reshape(-1), num_segments=B * N)
    return out.reshape(B, N, C)


def token_conv(p, token_dict):
    x = token_dict['x']                               # (B, N, Cin)
    B, N, Cin = x.shape
    x_map = token2map(token_dict)                     # (B, H, W, Cin)
    x_map = conv2d_as_matmul(x_map, p['conv_w'], p['conv_b'], stride=2, pad=1)
    cout = p['conv_w'].shape[0]
    skip_w = p['skip_w'][:, :, 0]                     # (Cout, Cin), Conv1d k=1, no bias
    x_skip = matmul_bias(x.reshape(B * N, Cin), skip_w.T, None).reshape(B, N, cout)
    return x_skip + map2token(x_map, token_dict)


def cluster_dpc_knn(x, cluster_num, k, noise_key):
    B, N, C = x.shape
    density, d2max = dpc_density(x, k)                        # (B,N), (B,) squared
    # reference adds torch.rand(...) * 1e-6 as a tie-breaker; deterministic key here
    density = density + jax.random.uniform(noise_key, density.shape,
                                           jnp.float32) * 1e-6
    ind2 = dpc_dist_indicator(x, density, d2max)              # (B, N) squared
    dist_ind = jnp.sqrt(ind2) * (1.0 / math.sqrt(C))          # back to scaled distance
    score = dist_ind * density
    index_down = jax.lax.top_k(score, cluster_num)[1]         # (B, cluster_num)
    x_down = jnp.take_along_axis(x, index_down[:, :, None], axis=1)
    idx_cluster = dpc_assign(x_down, x)                       # (B, N) int32
    cluster_ids = jnp.broadcast_to(
        jnp.arange(cluster_num, dtype=jnp.int32)[None, :], (B, cluster_num))
    idx_cluster = jax.vmap(lambda ic, idxd, cid: ic.at[idxd].set(cid))(
        idx_cluster, index_down, cluster_ids)
    return idx_cluster


def merge_tokens(token_dict, idx_cluster, cluster_num, token_weight):
    x = token_dict['x']
    idx_token = token_dict['idx_token']
    agg_weight = token_dict['agg_weight']
    B, N, C = x.shape
    idx = idx_cluster + jnp.arange(B, dtype=jnp.int32)[:, None] * cluster_num
    all_weight = jax.ops.segment_sum(token_weight.reshape(B * N), idx.reshape(B * N),
                                     num_segments=B * cluster_num) + 1e-6
    norm_weight = token_weight / all_weight[idx][..., None]          # (B, N, 1)
    source = (x * norm_weight).reshape(B * N, C)
    x_merged = jax.ops.segment_sum(source, idx.reshape(B * N),
                                   num_segments=B * cluster_num).reshape(B, cluster_num, C)
    idx_token_new = jnp.take_along_axis(idx_cluster, idx_token, axis=1)
    weight_t = jnp.take_along_axis(norm_weight, idx_token[..., None], axis=1)
    agg_weight_new = agg_weight * weight_t
    return dict(x=x_merged, token_num=cluster_num,
                map_size=token_dict['map_size'],
                init_grid_size=token_dict['init_grid_size'],
                idx_token=idx_token_new, agg_weight=agg_weight_new)


def ctm_forward(p, token_dict, sample_ratio, k, noise_key):
    token_dict = dict(token_dict)
    x = token_conv(p, token_dict)                             # (B, N, C)
    B, N, C = x.shape
    y2d, s2d = layernorm_score(x.reshape(B * N, C), p['ln_g'], p['ln_b'],
                               p['score_w'].reshape(-1), p['score_b'])
    x = y2d.reshape(B, N, C)
    token_score = s2d.reshape(B, N, 1)
    token_weight = jnp.exp(token_score)
    token_dict['x'] = x
    token_dict['token_score'] = token_score
    cluster_num = max(math.ceil(N * sample_ratio), 1)
    idx_cluster = cluster_dpc_knn(x, cluster_num, k, noise_key)
    down_dict = merge_tokens(token_dict, idx_cluster, cluster_num, token_weight)
    H, W = token_dict['map_size']
    down_dict['map_size'] = ((H - 1) // 2 + 1, (W - 1) // 2 + 1)
    return down_dict, token_dict


def forward(params, x_nchw):
    B = x_nchw.shape[0]
    x_nhwc = jnp.transpose(x_nchw, (0, 2, 3, 1)).astype(jnp.float32)
    feat = conv2d_as_matmul(x_nhwc, params['proj_w'], params['proj_b'],
                            stride=4, pad=2)                  # (B, H, W, token_dim)
    _, H, W, C = feat.shape
    x = feat.reshape(B, H * W, C)                             # == flatten(2).transpose(1,2)
    N = H * W
    idx_token = jnp.tile(jnp.arange(N, dtype=jnp.int32)[None, :], (B, 1))
    agg_weight = jnp.ones((B, N, 1), jnp.float32)
    token_dict = dict(x=x, token_num=N, map_size=(H, W), init_grid_size=(H, W),
                      idx_token=idx_token, agg_weight=agg_weight)
    token_dict, _ = ctm_forward(params['ctm1'], token_dict, 0.25, 5,
                                jax.random.PRNGKey(1))
    token_dict, _ = ctm_forward(params['ctm2'], token_dict, 0.25, 5,
                                jax.random.PRNGKey(2))
    xq = token_dict['x']
    Bq, Nq, Cq = xq.shape
    out = matmul_bias(xq.reshape(Bq * Nq, Cq), params['head_w'].T, params['head_b'])
    return out.reshape(Bq, Nq, -1)


# ----------------------------- parameter creation ----------------------------

def init_params(key, token_dim=64, embed_dim=128):
    ks = jax.random.split(key, 12)

    def nrm(k, shape, scale=0.05):
        return scale * jax.random.normal(k, shape, jnp.float32)

    def ctm(k):
        kk = jax.random.split(k, 4)
        return dict(
            conv_w=nrm(kk[0], (token_dim, token_dim, 3, 3)),
            conv_b=nrm(kk[1], (token_dim,)),
            skip_w=nrm(kk[2], (token_dim, token_dim, 1)),
            ln_g=jnp.ones((token_dim,), jnp.float32),
            ln_b=jnp.zeros((token_dim,), jnp.float32),
            score_w=nrm(kk[3], (1, token_dim)),
            score_b=jnp.zeros((1,), jnp.float32),
        )

    return dict(
        proj_w=nrm(ks[0], (token_dim, 1, 7, 7)),
        proj_b=nrm(ks[1], (token_dim,)),
        ctm1=ctm(ks[2]),
        ctm2=ctm(ks[3]),
        head_w=nrm(ks[4], (embed_dim, token_dim)),
        head_b=jnp.zeros((embed_dim,), jnp.float32),
    )


if __name__ == "__main__":
    key = jax.random.PRNGKey(0)
    kx, kp = jax.random.split(key)
    token_dim, embed_dim = 64, 128
    params = init_params(kp, token_dim=token_dim, embed_dim=embed_dim)

    # PyTorch-style NCHW input, small: 32x32 -> 8x8=64 tokens -> 16 -> 4 tokens
    x = jax.random.normal(kx, (2, 1, 32, 32), jnp.float32)

    out = jax.jit(forward)(params, x)
    out = jax.block_until_ready(out)
    assert out.shape == (2, 4, embed_dim), out.shape
    assert bool(jnp.all(jnp.isfinite(out)))
    print("KERNEL_OK")
</pallas_src>

<mosaic_0001>
module attributes {stable_mosaic.version = 11 : i64} {
  func.func @_mm_bias_kernel(%arg0: i32, %arg1: memref<128x49xbf16, #tpu.memory_space<vmem>>, %arg2: memref<49x64xbf16, #tpu.memory_space<vmem>>, %arg3: memref<1x64xf32, #tpu.memory_space<vmem>>, %arg4: memref<128x64xf32, #tpu.memory_space<vmem>>) attributes {dimension_semantics = [#tpu.dimension_semantics<parallel>], iteration_bounds = array<i64: 1>, scalar_prefetch = 0 : i64, scratch_operands = 0 : i64, tpu.core_type = #tpu.core_type<tc>, window_params = [{transform_indices = @transform_0, window_bounds = array<i64: 128, 49>}, {pipeline_mode = #tpu.pipeline_mode<synchronous>, transform_indices = @transform_1, window_bounds = array<i64: 49, 64>}, {pipeline_mode = #tpu.pipeline_mode<synchronous>, transform_indices = @transform_2, window_bounds = array<i64: 1, 64>}, {transform_indices = @transform_3, window_bounds = array<i64: 128, 64>}]} {
    %c0 = arith.constant 0 : index
    %c0_0 = arith.constant 0 : index
    %0 = vector.load %arg1[%c0, %c0_0] : memref<128x49xbf16, #tpu.memory_space<vmem>>, vector<128x49xbf16>
    %c0_1 = arith.constant 0 : index
    %c0_2 = arith.constant 0 : index
    %1 = vector.load %arg2[%c0_1, %c0_2] : memref<49x64xbf16, #tpu.memory_space<vmem>>, vector<49x64xbf16>
    %cst = arith.constant dense<0.000000e+00> : vector<128x64xf32>
    %2 = tpu.matmul %0, %1, %cst {dimension_numbers = #tpu.dot_dimension_numbers<[1], [0], [0], [1], [0, 0, 1, 1], [], []>} : vector<128x49xbf16>, vector<49x64xbf16>, vector<128x64xf32> -> vector<128x64xf32>
    %c0_3 = arith.constant 0 : index
    %c0_4 = arith.constant 0 : index
    %3 = vector.load %arg3[%c0_3, %c0_4] : memref<1x64xf32, #tpu.memory_space<vmem>>, vector<1x64xf32>
    %4 = vector.broadcast %3 : vector<1x64xf32> to vector<128x64xf32>
    %5 = arith.addf %2, %4 : vector<128x64xf32>
    %c0_5 = arith.constant 0 : index
    %c0_6 = arith.constant 0 : index
    %6 = vector.load %arg4[%c0_5, %c0_6] : memref<128x64xf32, #tpu.memory_space<vmem>>, vector<128x64xf32>
    tpu.vector_store %arg4[%c0_5, %c0_6], %5 {strides = array<i32>} : memref<128x64xf32, #tpu.memory_space<vmem>>, vector<128x64xf32>,
    return
  }
  func.func @transform_0(%arg0: i32) -> (i32, i32) {
    %c0_i32 = arith.constant 0 : i32
    %c0_i32_0 = arith.constant 0 : i32
    return %arg0, %c0_i32 : i32, i32
  }
  func.func @transform_1(%arg0: i32) -> (i32, i32) {
    %c0_i32 = arith.constant 0 : i32
    %c0_i32_0 = arith.constant 0 : i32
    %c0_i32_1 = arith.constant 0 : i32
    return %c0_i32, %c0_i32_0 : i32, i32
  }
  func.func @transform_2(%arg0: i32) -> (i32, i32) {
    %c0_i32 = arith.constant 0 : i32
    %c0_i32_0 = arith.constant 0 : i32
    %c0_i32_1 = arith.constant 0 : i32
    return %c0_i32, %c0_i32_0 : i32, i32
  }
  func.func @transform_3(%arg0: i32) -> (i32, i32) {
    %c0_i32 = arith.constant 0 : i32
    %c0_i32_0 = arith.constant 0 : i32
    return %arg0, %c0_i32 : i32, i32
  }
}

module attributes {stable_mosaic.version = 11 : i64} {
  func.func @_mm_bias_kernel(%arg0: i32, %arg1: memref<32x576xbf16, #tpu.memory_space<vmem>>, %arg2: memref<576x64xbf16, #tpu.memory_space<vmem>>, %arg3: memref<1x64xf32, #tpu.memory_space<vmem>>, %arg4: memref<32x64xf32, #tpu.memory_space<vmem>>) attributes {dimension_semantics = [#tpu.dimension_semantics<parallel>], iteration_bounds = array<i64: 1>, scalar_prefetch = 0 : i64, scratch_operands = 0 : i64, tpu.core_type = #tpu.core_type<tc>, window_params = [{transform_indices = @transform_0, window_bounds = array<i64: 32, 576>}, {pipeline_mode = #tpu.pipeline_mode<synchronous>, transform_indices = @transform_1, window_bounds = array<i64: 576, 64>}, {pipeline_mode = #tpu.pipeline_mode<synchronous>, transform_indices = @transform_2, window_bounds = array<i64: 1, 64>}, {transform_indices = @transform_3, window_bounds = array<i64: 32, 64>}]} {
    %c0 = arith.constant 0 : index
    %c0_0 = arith.constant 0 : index
    %0 = vector.load %arg1[%c0, %c0_0] : memref<32x576xbf16, #tpu.memory_space<vmem>>, vector<32x576xbf16>
    %c0_1 = arith.constant 0 : index
    %c0_2 = arith.constant 0 : index
    %1 = vector.load %arg2[%c0_1, %c0_2] : memref<576x64xbf16, #tpu.memory_space<vmem>>, vector<576x64xbf16>
    %cst = arith.constant dense<0.000000e+00> : vector<32x64xf32>
    %2 = tpu.matmul %0, %1, %cst {dimension_numbers = #tpu.dot_dimension_numbers<[1], [0], [0], [1], [0, 0, 1, 1], [], []>} : vector<32x576xbf16>, vector<576x64xbf16>, vector<32x64xf32> -> vector<32x64xf32>
    %c0_3 = arith.constant 0 : index
    %c0_4 = arith.constant 0 : index
    %3 = vector.load %arg3[%c0_3, %c0_4] : memref<1x64xf32, #tpu.memory_space<vmem>>, vector<1x64xf32>
    %4 = vector.broadcast %3 : vector<1x64xf32> to vector<32x64xf32>
    %5 = arith.addf %2, %4 : vector<32x64xf32>
    %c0_5 = arith.constant 0 : index
    %c0_6 = arith.constant 0 : index
    %6 = vector.load %arg4[%c0_5, %c0_6] : memref<32x64xf32, #tpu.memory_space<vmem>>, vector<32x64xf32>
    tpu.vector_store %arg4[%c0_5, %c0_6], %5 {strides = array<i32>} : memref<32x64xf32, #tpu.memory_space<vmem>>, vector<32x64xf32>,
    return
  }
  func.func @transform_0(%arg0: i32) -> (i32, i32) {
    %c0_i32 = arith.constant 0 : i32
    %c0_i32_0 = arith.constant 0 : i32
    return %arg0, %c0_i32 : i32, i32
  }
  func.func @transform_1(%arg0: i32) -> (i32, i32) {
    %c0_i32 = arith.constant 0 : i32
    %c0_i32_0 = arith.constant 0 : i32
    %c0_i32_1 = arith.constant 0 : i32
    return %c0_i32, %c0_i32_0 : i32, i32
  }
  func.func @transform_2(%arg0: i32) -> (i32, i32) {
    %c0_i32 = arith.constant 0 : i32
    %c0_i32_0 = arith.constant 0 : i32
    %c0_i32_1 = arith.constant 0 : i32
    return %c0_i32, %c0_i32_0 : i32, i32
  }
  func.func @transform_3(%arg0: i32) -> (i32, i32) {
    %c0_i32 = arith.constant 0 : i32
    %c0_i32_0 = arith.constant 0 : i32
    return %arg0, %c0_i32 : i32, i32
  }
}

module attributes {stable_mosaic.version = 11 : i64} {
  func.func @_mm_kernel(%arg0: i32, %arg1: memref<128x64xbf16, #tpu.memory_space<vmem>>, %arg2: memref<64x64xbf16, #tpu.memory_space<vmem>>, %arg3: memref<128x64xf32, #tpu.memory_space<vmem>>) attributes {dimension_semantics = [#tpu.dimension_semantics<parallel>], iteration_bounds = array<i64: 1>, scalar_prefetch = 0 : i64, scratch_operands = 0 : i64, tpu.core_type = #tpu.core_type<tc>, window_params = [{transform_indices = @transform_0, window_bounds = array<i64: 128, 64>}, {pipeline_mode = #tpu.pipeline_mode<synchronous>, transform_indices = @transform_1, window_bounds = array<i64: 64, 64>}, {transform_indices = @transform_2, window_bounds = array<i64: 128, 64>}]} {
    %c0 = arith.constant 0 : index
    %c0_0 = arith.constant 0 : index
    %0 = vector.load %arg1[%c0, %c0_0] : memref<128x64xbf16, #tpu.memory_space<vmem>>, vector<128x64xbf16>
    %c0_1 = arith.constant 0 : index
    %c0_2 = arith.constant 0 : index
    %1 = vector.load %arg2[%c0_1, %c0_2] : memref<64x64xbf16, #tpu.memory_space<vmem>>, vector<64x64xbf16>
    %cst = arith.constant dense<0.000000e+00> : vector<128x64xf32>
    %2 = tpu.matmul %0, %1, %cst {dimension_numbers = #tpu.dot_dimension_numbers<[1], [0], [0], [1], [0, 0, 1, 1], [], []>} : vector<128x64xbf16>, vector<64x64xbf16>, vector<128x64xf32> -> vector<128x64xf32>
    %c0_3 = arith.constant 0 : index
    %c0_4 = arith.constant 0 : index
    %3 = vector.load %arg3[%c0_3, %c0_4] : memref<128x64xf32, #tpu.memory_space<vmem>>, vector<128x64xf32>
    tpu.vector_store %arg3[%c0_3, %c0_4], %2 {strides = array<i32>} : memref<128x64xf32, #tpu.memory_space<vmem>>, vector<128x64xf32>,
    return
  }
  func.func @transform_0(%arg0: i32) -> (i32, i32) {
    %c0_i32 = arith.constant 0 : i32
    %c0_i32_0 = arith.constant 0 : i32
    return %arg0, %c0_i32 : i32, i32
  }
  func.func @transform_1(%arg0: i32) -> (i32, i32) {
    %c0_i32 = arith.constant 0 : i32
    %c0_i32_0 = arith.constant 0 : i32
    %c0_i32_1 = arith.constant 0 : i32
    return %c0_i32, %c0_i32_0 : i32, i32
  }
  func.func @transform_2(%arg0: i32) -> (i32, i32) {
    %c0_i32 = arith.constant 0 : i32
    %c0_i32_0 = arith.constant 0 : i32
    return %arg0, %c0_i32 : i32, i32
  }
}

module attributes {stable_mosaic.version = 11 : i64} {
  func.func @_ln_score_kernel(%arg0: i32, %arg1: memref<128x64xf32, #tpu.memory_space<vmem>>, %arg2: memref<1x64xf32, #tpu.memory_space<vmem>>, %arg3: memref<1x64xf32, #tpu.memory_space<vmem>>, %arg4: memref<1x64xf32, #tpu.memory_space<vmem>>, %arg5: memref<1x1xf32, #tpu.memory_space<vmem>>, %arg6: memref<128x64xf32, #tpu.memory_space<vmem>>, %arg7: memref<128x1xf32, #tpu.memory_space<vmem>>) attributes {dimension_semantics = [#tpu.dimension_semantics<parallel>], iteration_bounds = array<i64: 1>, scalar_prefetch = 0 : i64, scratch_operands = 0 : i64, tpu.core_type = #tpu.core_type<tc>, window_params = [{transform_indices = @transform_0, window_bounds = array<i64: 128, 64>}, {pipeline_mode = #tpu.pipeline_mode<synchronous>, transform_indices = @transform_1, window_bounds = array<i64: 1, 64>}, {pipeline_mode = #tpu.pipeline_mode<synchronous>, transform_indices = @transform_2, window_bounds = array<i64: 1, 64>}, {pipeline_mode = #tpu.pipeline_mode<synchronous>, transform_indices = @transform_3, window_bounds = array<i64: 1, 64>}, {pipeline_mode = #tpu.pipeline_mode<synchronous>, transform_indices = @transform_4, window_bounds = array<i64: 1, 1>}, {transform_indices = @transform_5, window_bounds = array<i64: 128, 64>}, {transform_indices = @transform_6, window_bounds = array<i64: 128, 1>}]} {
    %c0 = arith.constant 0 : index
    %c0_0 = arith.constant 0 : index
    %0 = vector.load %arg1[%c0, %c0_0] : memref<128x64xf32, #tpu.memory_space<vmem>>, vector<128x64xf32>
    %cst = arith.constant dense<0.000000e+00> : vector<128xf32>
    %1 = vector.multi_reduction <add>, %0, %cst [1] : vector<128x64xf32> to vector<128xf32>
    %2 = vector.shape_cast %1 : vector<128xf32> to vector<128x1xf32>
    %cst_1 = arith.constant 6.400000e+01 : f32
    %3 = vector.broadcast %cst_1 : f32 to vector<128x1xf32>
    %4 = arith.divf %2, %3 : vector<128x1xf32>
    %5 = vector.broadcast %4 : vector<128x1xf32> to vector<128x64xf32>
    %6 = arith.subf %0, %5 : vector<128x64xf32>
    %7 = arith.mulf %6, %6 : vector<128x64xf32>
    %cst_2 = arith.constant dense<0.000000e+00> : vector<128xf32>
    %8 = vector.multi_reduction <add>, %7, %cst_2 [1] : vector<128x64xf32> to vector<128xf32>
    %9 = vector.shape_cast %8 : vector<128xf32> to vector<128x1xf32>
    %cst_3 = arith.constant 6.400000e+01 : f32
    %10 = vector.broadcast %cst_3 : f32 to vector<128x1xf32>
    %11 = arith.divf %9, %10 : vector<128x1xf32>
    %12 = vector.broadcast %4 : vector<128x1xf32> to vector<128x64xf32>
    %13 = arith.subf %0, %12 : vector<128x64xf32>
    %cst_4 = arith.constant 9.99999974E-6 : f32
    %14 = vector.broadcast %cst_4 : f32 to vector<128x1xf32>
    %15 = arith.addf %11, %14 : vector<128x1xf32>
    %16 = math.rsqrt %15 : vector<128x1xf32>
    %17 = vector.broadcast %16 : vector<128x1xf32> to vector<128x64xf32>
    %18 = arith.mulf %13, %17 : vector<128x64xf32>
    %c0_5 = arith.constant 0 : index
    %c0_6 = arith.constant 0 : index
    %19 = vector.load %arg2[%c0_5, %c0_6] : memref<1x64xf32, #tpu.memory_space<vmem>>, vector<1x64xf32>
    %20 = vector.broadcast %19 : vector<1x64xf32> to vector<128x64xf32>
    %21 = arith.mulf %18, %20 : vector<128x64xf32>
    %c0_7 = arith.constant 0 : index
    %c0_8 = arith.constant 0 : index
    %22 = vector.load %arg3[%c0_7, %c0_8] : memref<1x64xf32, #tpu.memory_space<vmem>>, vector<1x64xf32>
    %23 = vector.broadcast %22 : vector<1x64xf32> to vector<128x64xf32>
    %24 = arith.addf %21, %23 : vector<128x64xf32>
    %c0_9 = arith.constant 0 : index
    %c0_10 = arith.constant 0 : index
    %25 = vector.load %arg6[%c0_9, %c0_10] : memref<128x64xf32, #tpu.memory_space<vmem>>, vector<128x64xf32>
    tpu.vector_store %arg6[%c0_9, %c0_10], %24 {strides = array<i32>} : memref<128x64xf32, #tpu.memory_space<vmem>>, vector<128x64xf32>,
    %c0_11 = arith.constant 0 : index
    %c0_12 = arith.constant 0 : index
    %26 = vector.load %arg4[%c0_11, %c0_12] : memref<1x64xf32, #tpu.memory_space<vmem>>, vector<1x64xf32>
    %27 = vector.broadcast %26 : vector<1x64xf32> to vector<128x64xf32>
    %28 = arith.mulf %24, %27 : vector<128x64xf32>
    %cst_13 = arith.constant dense<0.000000e+00> : vector<128xf32>
    %29 = vector.multi_reduction <add>, %28, %cst_13 [1] : vector<128x64xf32> to vector<128xf32>
    %30 = vector.shape_cast %29 : vector<128xf32> to vector<128x1xf32>
    %c0_14 = arith.constant 0 : index
    %c0_15 = arith.constant 0 : index
    %31 = vector.load %arg5[%c0_14, %c0_15] : memref<1x1xf32, #tpu.memory_space<vmem>>, vector<1x1xf32>
    %32 = vector.broadcast %31 : vector<1x1xf32> to vector<128x1xf32>
    %33 = arith.addf %30, %32 : vector<128x1xf32>
    %c0_16 = arith.constant 0 : index
    %c0_17 = arith.constant 0 : index
    %34 = vector.load %arg7[%c0_16, %c0_17] : memref<128x1xf32, #tpu.memory_space<vmem>>, vector<128x1xf32>
    tpu.vector_store %arg7[%c0_16, %c0_17], %33 {strides = array<i32>} : memref<128x1xf32, #tpu.memory_space<vmem>>, vector<128x1xf32>,
    return
  }
  func.func @transform_0(%arg0: i32) -> (i32, i32) {
    %c0_i32 = arith.constant 0 : i32
    %c0_i32_0 = arith.constant 0 : i32
    return %arg0, %c0_i32 : i32, i32
  }
  func.func @transform_1(%arg0: i32) -> (i32, i32) {
    %c0_i32 = arith.constant 0 : i32
    %c0_i32_0 = arith.constant 0 : i32
    %c0_i32_1 = arith.constant 0 : i32
    return %c0_i32, %c0_i32_0 : i32, i32
  }
  func.func @transform_2(%arg0: i32) -> (i32, i32) {
    %c0_i32 = arith.constant 0 : i32
    %c0_i32_0 = arith.constant 0 : i32
    %c0_i32_1 = arith.constant 0 : i32
    return %c0_i32, %c0_i32_0 : i32, i32
  }
  func.func @transform_3(%arg0: i32) -> (i32, i32) {
    %c0_i32 = arith.constant 0 : i32
    %c0_i32_0 = arith.constant 0 : i32
    %c0_i32_1 = arith.constant 0 : i32
    return %c0_i32, %c0_i32_0 : i32, i32
  }
  func.func @transform_4(%arg0: i32) -> (i32, i32) {
    %c0_i32 = arith.constant 0 : i32
    %c0_i32_0 = arith.constant 0 : i32
    %c0_i32_1 = arith.constant 0 : i32
    return %c0_i32, %c0_i32_0 : i32, i32
  }
  func.func @transform_5(%arg0: i32) -> (i32, i32) {
    %c0_i32 = arith.constant 0 : i32
    %c0_i32_0 = arith.constant 0 : i32
    return %arg0, %c0_i32 : i32, i32
  }
  func.func @transform_6(%arg0: i32) -> (i32, i32) {
    %c0_i32 = arith.constant 0 : i32
    %c0_i32_0 = arith.constant 0 : i32
    return %arg0, %c0_i32 : i32, i32
  }
}

module attributes {stable_mosaic.version = 11 : i64} {
  func.func @_density_kernel(%arg0: i32, %arg1: i32, %arg2: i32, %arg3: memref<1x64x64xbf16, #tpu.memory_space<vmem>>, %arg4: memref<1x64x64xbf16, #tpu.memory_space<vmem>>, %arg5: memref<1x1x64xf32, #tpu.memory_space<vmem>>, %arg6: memref<1x1x64xf32, #tpu.memory_space<vmem>>, %arg7: memref<1x1x64xf32, #tpu.memory_space<vmem>>, %arg8: memref<5x64xf32, #tpu.memory_space<vmem>>, %arg9: memref<1x64xf32, #tpu.memory_space<vmem>>) attributes {dimension_semantics = [#tpu.dimension_semantics<parallel>, #tpu.dimension_semantics<parallel>, #tpu.dimension_semantics<arbitrary>], iteration_bounds = array<i64: 2, 1, 1>, scalar_prefetch = 0 : i64, scratch_operands = 2 : i64, tpu.core_type = #tpu.core_type<tc>, window_params = [{transform_indices = @transform_0, window_bounds = array<i64: 1, 64, 64>}, {transform_indices = @transform_1, window_bounds = array<i64: 1, 64, 64>}, {transform_indices = @transform_2, window_bounds = array<i64: 1, 1, 64>}, {transform_indices = @transform_3, window_bounds = array<i64: 1, 1, 64>}, {transform_indices = @transform_4, window_bounds = array<i64: 1, 1, 64>}]} {
    %c0_i32 = arith.constant 0 : i32
    %0 = arith.cmpi eq, %arg2, %c0_i32 : i32
    %1 = arith.extui %0 : i1 to i32
    %c0_i32_0 = arith.constant 0 : i32
    %2 = arith.cmpi ne, %1, %c0_i32_0 : i32
    scf.if %2 {
      %cst_62 = arith.constant 1.000000e+30 : f32
      %194 = vector.broadcast %cst_62 : f32 to vector<5x64xf32>
      %c0_63 = arith.constant 0 : index
      %c0_64 = arith.constant 0 : index
      %195 = vector.load %arg8[%c0_63, %c0_64] : memref<5x64xf32, #tpu.memory_space<vmem>>, vector<5x64xf32>
      tpu.vector_store %arg8[%c0_63, %c0_64], %194 {strides = array<i32>} : memref<5x64xf32, #tpu.memory_space<vmem>>, vector<5x64xf32>,
      %cst_65 = arith.constant -1.000000e+30 : f32
      %196 = vector.broadcast %cst_65 : f32 to vector<1x64xf32>
      %c0_66 = arith.constant 0 : index
      %c0_67 = arith.constant 0 : index
      %197 = vector.load %arg9[%c0_66, %c0_67] : memref<1x64xf32, #tpu.memory_space<vmem>>, vector<1x64xf32>
      tpu.vector_store %arg9[%c0_66, %c0_67], %196 {strides = array<i32>} : memref<1x64xf32, #tpu.memory_space<vmem>>, vector<1x64xf32>,
    } else {
    }
    %c0 = arith.constant 0 : index
    %c0_1 = arith.constant 0 : index
    %c0_2 = arith.constant 0 : index
    %3 = vector.load %arg4[%c0, %c0_1, %c0_2] : memref<1x64x64xbf16, #tpu.memory_space<vmem>>, vector<1x64x64xbf16>
    %4 = vector.shape_cast %3 : vector<1x64x64xbf16> to vector<64x64xbf16>
    %c0_3 = arith.constant 0 : index
    %c0_4 = arith.constant 0 : index
    %c0_5 = arith.constant 0 : index
    %5 = vector.load %arg3[%c0_3, %c0_4, %c0_5] : memref<1x64x64xbf16, #tpu.memory_space<vmem>>, vector<1x64x64xbf16>
    %6 = vector.shape_cast %5 : vector<1x64x64xbf16> to vector<64x64xbf16>
    %c0_6 = arith.constant 0 : index
    %c0_7 = arith.constant 0 : index
    %c0_8 = arith.constant 0 : index
    %7 = vector.load %arg5[%c0_6, %c0_7, %c0_8] : memref<1x1x64xf32, #tpu.memory_space<vmem>>, vector<1x1x64xf32>
    %8 = vector.shape_cast %7 : vector<1x1x64xf32> to vector<1x64xf32>
    %cst = arith.constant dense<0.000000e+00> : vector<64x64xf32>
    %9 = tpu.matmul %4, %6, %cst {dimension_numbers = #tpu.dot_dimension_numbers<[1], [1], [0], [0], [0, 0, 1, 0], [], []>} : vector<64x64xbf16>, vector<64x64xbf16>, vector<64x64xf32> -> vector<64x64xf32>
    %10 = arith.extf %4 : vector<64x64xbf16> to vector<64x64xf32>
    %11 = arith.mulf %10, %10 : vector<64x64xf32>
    %cst_9 = arith.constant dense<0.000000e+00> : vector<64xf32>
    %12 = vector.multi_reduction <add>, %11, %cst_9 [1] : vector<64x64xf32> to vector<64xf32>
    %13 = vector.shape_cast %12 : vector<64xf32> to vector<64x1xf32>
    %c64_i32 = arith.constant 64 : i32
    %14 = arith.muli %arg2, %c64_i32 : i32
    %15 = tpu.iota {dimensions = array<i32: 0>} : vector<64x1xi32>
    %16 = vector.broadcast %14 : i32 to vector<64x1xi32>
    %17 = arith.addi %16, %15 : vector<64x1xi32>
    %c64_i32_10 = arith.constant 64 : i32
    %18 = vector.broadcast %c64_i32_10 : i32 to vector<64x1xi32>
    %19 = arith.cmpi slt, %17, %18 : vector<64x1xi32>
    %cst_11 = arith.constant 0.000000e+00 : f32
    %cst_12 = arith.constant 1.000000e+30 : f32
    %20 = vector.broadcast %cst_11 : f32 to vector<64x1xf32>
    %21 = vector.broadcast %cst_12 : f32 to vector<64x1xf32>
    %22 = arith.select %19, %20, %21 : vector<64x1xi1>, vector<64x1xf32>
    %23 = arith.addf %13, %22 : vector<64x1xf32>
    %24 = arith.subf %13, %22 : vector<64x1xf32>
    %c0_13 = arith.constant 0 : index
    %c0_14 = arith.constant 0 : index
    %25 = vector.load %arg8[%c0_13, %c0_14] : memref<5x64xf32, #tpu.memory_space<vmem>>, vector<5x64xf32>
    %c0_15 = arith.constant 0 : index
    %c0_16 = arith.constant 0 : index
    %26 = vector.load %arg9[%c0_15, %c0_16] : memref<1x64xf32, #tpu.memory_space<vmem>>, vector<1x64xf32>
    %27 = vector.extract_strided_slice %9 {offsets = [0, 0], sizes = [32, 64], strides = [1, 1]} : vector<64x64xf32> to vector<32x64xf32>
    %cst_17 = arith.constant -2.000000e+00 : f32
    %28 = vector.broadcast %cst_17 : f32 to vector<32x64xf32>
    %29 = arith.mulf %28, %27 : vector<32x64xf32>
    %30 = vector.extract_strided_slice %24 {offsets = [0, 0], sizes = [32, 1], strides = [1, 1]} : vector<64x1xf32> to vector<32x1xf32>
    %31 = vector.broadcast %30 : vector<32x1xf32> to vector<32x64xf32>
    %32 = arith.addf %29, %31 : vector<32x64xf32>
    %cst_18 = arith.constant dense<0xFF800000> : vector<64xf32>
    %33 = vector.multi_reduction <maximumf>, %32, %cst_18 [0] : vector<32x64xf32> to vector<64xf32>
    %34 = vector.shape_cast %33 : vector<64xf32> to vector<1x64xf32>
    %35 = arith.maximumf %26, %34 : vector<1x64xf32>
    %36 = vector.extract_strided_slice %23 {offsets = [0, 0], sizes = [32, 1], strides = [1, 1]} : vector<64x1xf32> to vector<32x1xf32>
    %37 = vector.broadcast %36 : vector<32x1xf32> to vector<32x64xf32>
    %38 = arith.addf %29, %37 : vector<32x64xf32>
    %39 = vector.broadcast %8 : vector<1x64xf32> to vector<32x64xf32>
    %40 = arith.addf %38, %39 : vector<32x64xf32>
    %cst_19 = arith.constant 0.000000e+00 : f32
    %41 = vector.broadcast %cst_19 : f32 to vector<32x64xf32>
    %42 = arith.maximumf %40, %41 : vector<32x64xf32>
    %43 = tpu.concatenate %25, %42 in 0 : vector<5x64xf32>, vector<32x64xf32> -> vector<37x64xf32>
    %44 = tpu.iota {dimensions = array<i32: 0>} : vector<37x1xi32>
    %cst_20 = arith.constant dense<0x7F800000> : vector<64xf32>
    %45 = vector.multi_reduction <minimumf>, %43, %cst_20 [0] : vector<37x64xf32> to vector<64xf32>
    %46 = vector.shape_cast %45 : vector<64xf32> to vector<1x64xf32>
    %47 = vector.broadcast %46 : vector<1x64xf32> to vector<37x64xf32>
    %48 = arith.cmpf ole, %43, %47 : vector<37x64xf32>
    %c37_i32 = arith.constant 37 : i32
    %49 = vector.shape_cast %44 : vector<37x1xi32> to vector<37x1xi32>
    %50 = vector.broadcast %49 : vector<37x1xi32> to vector<37x64xi32>
    %51 = vector.broadcast %c37_i32 : i32 to vector<37x64xi32>
    %52 = arith.select %48, %50, %51 : vector<37x64xi1>, vector<37x64xi32>
    %cst_21 = arith.constant dense<2147483647> : vector<64xi32>
    %53 = vector.multi_reduction <minsi>, %52, %cst_21 [0] : vector<37x64xi32> to vector<64xi32>
    %54 = vector.shape_cast %53 : vector<64xi32> to vector<1x64xi32>
    %55 = vector.broadcast %44 : vector<37x1xi32> to vector<37x64xi32>
    %56 = vector.broadcast %54 : vector<1x64xi32> to vector<37x64xi32>
    %57 = arith.cmpi eq, %55, %56 : vector<37x64xi32>
    %cst_22 = arith.constant 1.000000e+30 : f32
    %58 = vector.broadcast %cst_22 : f32 to vector<37x64xf32>
    %59 = arith.select %57, %58, %43 : vector<37x64xi1>, vector<37x64xf32>
    %cst_23 = arith.constant dense<0x7F800000> : vector<64xf32>
    %60 = vector.multi_reduction <minimumf>, %59, %cst_23 [0] : vector<37x64xf32> to vector<64xf32>
    %61 = vector.shape_cast %60 : vector<64xf32> to vector<1x64xf32>
    %62 = vector.broadcast %61 : vector<1x64xf32> to vector<37x64xf32>
    %63 = arith.cmpf ole, %59, %62 : vector<37x64xf32>
    %c37_i32_24 = arith.constant 37 : i32
    %64 = vector.shape_cast %44 : vector<37x1xi32> to vector<37x1xi32>
    %65 = vector.broadcast %64 : vector<37x1xi32> to vector<37x64xi32>
    %66 = vector.broadcast %c37_i32_24 : i32 to vector<37x64xi32>
    %67 = arith.select %63, %65, %66 : vector<37x64xi1>, vector<37x64xi32>
    %cst_25 = arith.constant dense<2147483647> : vector<64xi32>
    %68 = vector.multi_reduction <minsi>, %67, %cst_25 [0] : vector<37x64xi32> to vector<64xi32>
    %69 = vector.shape_cast %68 : vector<64xi32> to vector<1x64xi32>
    %70 = vector.broadcast %44 : vector<37x1xi32> to vector<37x64xi32>
    %71 = vector.broadcast %69 : vector<1x64xi32> to vector<37x64xi32>
    %72 = arith.cmpi eq, %70, %71 : vector<37x64xi32>
    %cst_26 = arith.constant 1.000000e+30 : f32
    %73 = vector.broadcast %cst_26 : f32 to vector<37x64xf32>
    %74 = arith.select %72, %73, %59 : vector<37x64xi1>, vector<37x64xf32>
    %cst_27 = arith.constant dense<0x7F800000> : vector<64xf32>
    %75 = vector.multi_reduction <minimumf>, %74, %cst_27 [0] : vector<37x64xf32> to vector<64xf32>
    %76 = vector.shape_cast %75 : vector<64xf32> to vector<1x64xf32>
    %77 = vector.broadcast %76 : vector<1x64xf32> to vector<37x64xf32>
    %78 = arith.cmpf ole, %74, %77 : vector<37x64xf32>
    %c37_i32_28 = arith.constant 37 : i32
    %79 = vector.shape_cast %44 : vector<37x1xi32> to vector<37x1xi32>
    %80 = vector.broadcast %79 : vector<37x1xi32> to vector<37x64xi32>
    %81 = vector.broadcast %c37_i32_28 : i32 to vector<37x64xi32>
    %82 = arith.select %78, %80, %81 : vector<37x64xi1>, vector<37x64xi32>
    %cst_29 = arith.constant dense<2147483647> : vector<64xi32>
    %83 = vector.multi_reduction <minsi>, %82, %cst_29 [0] : vector<37x64xi32> to vector<64xi32>
    %84 = vector.shape_cast %83 : vector<64xi32> to vector<1x64xi32>
    %85 = vector.broadcast %44 : vector<37x1xi32> to vector<37x64xi32>
    %86 = vector.broadcast %84 : vector<1x64xi32> to vector<37x64xi32>
    %87 = arith.cmpi eq, %85, %86 : vector<37x64xi32>
    %cst_30 = arith.constant 1.000000e+30 : f32
    %88 = vector.broadcast %cst_30 : f32 to vector<37x64xf32>
    %89 = arith.select %87, %88, %74 : vector<37x64xi1>, vector<37x64xf32>
    %cst_31 = arith.constant dense<0x7F800000> : vector<64xf32>
    %90 = vector.multi_reduction <minimumf>, %89, %cst_31 [0] : vector<37x64xf32> to vector<64xf32>
    %91 = vector.shape_cast %90 : vector<64xf32> to vector<1x64xf32>
    %92 = vector.broadcast %91 : vector<1x64xf32> to vector<37x64xf32>
    %93 = arith.cmpf ole, %89, %92 : vector<37x64xf32>
    %c37_i32_32 = arith.constant 37 : i32
    %94 = vector.shape_cast %44 : vector<37x1xi32> to vector<37x1xi32>
    %95 = vector.broadcast %94 : vector<37x1xi32> to vector<37x64xi32>
    %96 = vector.broadcast %c37_i32_32 : i32 to vector<37x64xi32>
    %97 = arith.select %93, %95, %96 : vector<37x64xi1>, vector<37x64xi32>
    %cst_33 = arith.constant dense<2147483647> : vector<64xi32>
    %98 = vector.multi_reduction <minsi>, %97, %cst_33 [0] : vector<37x64xi32> to vector<64xi32>
    %99 = vector.shape_cast %98 : vector<64xi32> to vector<1x64xi32>
    %100 = vector.broadcast %44 : vector<37x1xi32> to vector<37x64xi32>
    %101 = vector.broadcast %99 : vector<1x64xi32> to vector<37x64xi32>
    %102 = arith.cmpi eq, %100, %101 : vector<37x64xi32>
    %cst_34 = arith.constant 1.000000e+30 : f32
    %103 = vector.broadcast %cst_34 : f32 to vector<37x64xf32>
    %104 = arith.select %102, %103, %89 : vector<37x64xi1>, vector<37x64xf32>
    %cst_35 = arith.constant dense<0x7F800000> : vector<64xf32>
    %105 = vector.multi_reduction <minimumf>, %104, %cst_35 [0] : vector<37x64xf32> to vector<64xf32>
    %106 = vector.shape_cast %105 : vector<64xf32> to vector<1x64xf32>
    %107 = tpu.concatenate %46, %61, %76, %91, %106 in 0 : vector<1x64xf32>, vector<1x64xf32>, vector<1x64xf32>, vector<1x64xf32>, vector<1x64xf32> -> vector<5x64xf32>
    %108 = vector.extract_strided_slice %9 {offsets = [32, 0], sizes = [32, 64], strides = [1, 1]} : vector<64x64xf32> to vector<32x64xf32>
    %cst_36 = arith.constant -2.000000e+00 : f32
    %109 = vector.broadcast %cst_36 : f32 to vector<32x64xf32>
    %110 = arith.mulf %109, %108 : vector<32x64xf32>
    %111 = vector.extract_strided_slice %24 {offsets = [32, 0], sizes = [32, 1], strides = [1, 1]} : vector<64x1xf32> to vector<32x1xf32>
    %112 = vector.broadcast %111 : vector<32x1xf32> to vector<32x64xf32>
    %113 = arith.addf %110, %112 : vector<32x64xf32>
    %cst_37 = arith.constant dense<0xFF800000> : vector<64xf32>
    %114 = vector.multi_reduction <maximumf>, %113, %cst_37 [0] : vector<32x64xf32> to vector<64xf32>
    %115 = vector.shape_cast %114 : vector<64xf32> to vector<1x64xf32>
    %116 = arith.maximumf %35, %115 : vector<1x64xf32>
    %117 = vector.extract_strided_slice %23 {offsets = [32, 0], sizes = [32, 1], strides = [1, 1]} : vector<64x1xf32> to vector<32x1xf32>
    %118 = vector.broadcast %117 : vector<32x1xf32> to vector<32x64xf32>
    %119 = arith.addf %110, %118 : vector<32x64xf32>
    %120 = vector.broadcast %8 : vector<1x64xf32> to vector<32x64xf32>
    %121 = arith.addf %119, %120 : vector<32x64xf32>
    %cst_38 = arith.constant 0.000000e+00 : f32
    %122 = vector.broadcast %cst_38 : f32 to vector<32x64xf32>
    %123 = arith.maximumf %121, %122 : vector<32x64xf32>
    %124 = tpu.concatenate %107, %123 in 0 : vector<5x64xf32>, vector<32x64xf32> -> vector<37x64xf32>
    %125 = tpu.iota {dimensions = array<i32: 0>} : vector<37x1xi32>
    %cst_39 = arith.constant dense<0x7F800000> : vector<64xf32>
    %126 = vector.multi_reduction <minimumf>, %124, %cst_39 [0] : vector<37x64xf32> to vector<64xf32>
    %127 = vector.shape_cast %126 : vector<64xf32> to vector<1x64xf32>
    %128 = vector.broadcast %127 : vector<1x64xf32> to vector<37x64xf32>
    %129 = arith.cmpf ole, %124, %128 : vector<37x64xf32>
    %c37_i32_40 = arith.constant 37 : i32
    %130 = vector.shape_cast %125 : vector<37x1xi32> to vector<37x1xi32>
    %131 = vector.broadcast %130 : vector<37x1xi32> to vector<37x64xi32>
    %132 = vector.broadcast %c37_i32_40 : i32 to vector<37x64xi32>
    %133 = arith.select %129, %131, %132 : vector<37x64xi1>, vector<37x64xi32>
    %cst_41 = arith.constant dense<2147483647> : vector<64xi32>
    %134 = vector.multi_reduction <minsi>, %133, %cst_41 [0] : vector<37x64xi32> to vector<64xi32>
    %135 = vector.shape_cast %134 : vector<64xi32> to vector<1x64xi32>
    %136 = vector.broadcast %125 : vector<37x1xi32> to vector<37x64xi32>
    %137 = vector.broadcast %135 : vector<1x64xi32> to vector<37x64xi32>
    %138 = arith.cmpi eq, %136, %137 : vector<37x64xi32>
    %cst_42 = arith.constant 1.000000e+30 : f32
    %139 = vector.broadcast %cst_42 : f32 to vector<37x64xf32>
    %140 = arith.select %138, %139, %124 : vector<37x64xi1>, vector<37x64xf32>
    %cst_43 = arith.constant dense<0x7F800000> : vector<64xf32>
    %141 = vector.multi_reduction <minimumf>, %140, %cst_43 [0] : vector<37x64xf32> to vector<64xf32>
    %142 = vector.shape_cast %141 : vector<64xf32> to vector<1x64xf32>
    %143 = vector.broadcast %142 : vector<1x64xf32> to vector<37x64xf32>
    %144 = arith.cmpf ole, %140, %143 : vector<37x64xf32>
    %c37_i32_44 = arith.constant 37 : i32
    %145 = vector.shape_cast %125 : vector<37x1xi32> to vector<37x1xi32>
    %146 = vector.broadcast %145 : vector<37x1xi32> to vector<37x64xi32>
    %147 = vector.broadcast %c37_i32_44 : i32 to vector<37x64xi32>
    %148 = arith.select %144, %146, %147 : vector<37x64xi1>, vector<37x64xi32>
    %cst_45 = arith.constant dense<2147483647> : vector<64xi32>
    %149 = vector.multi_reduction <minsi>, %148, %cst_45 [0] : vector<37x64xi32> to vector<64xi32>
    %150 = vector.shape_cast %149 : vector<64xi32> to vector<1x64xi32>
    %151 = vector.broadcast %125 : vector<37x1xi32> to vector<37x64xi32>
    %152 = vector.broadcast %150 : vector<1x64xi32> to vector<37x64xi32>
    %153 = arith.cmpi eq, %151, %152 : vector<37x64xi32>
    %cst_46 = arith.constant 1.000000e+30 : f32
    %154 = vector.broadcast %cst_46 : f32 to vector<37x64xf32>
    %155 = arith.select %153, %154, %140 : vector<37x64xi1>, vector<37x64xf32>
    %cst_47 = arith.constant dense<0x7F800000> : vector<64xf32>
    %156 = vector.multi_reduction <minimumf>, %155, %cst_47 [0] : vector<37x64xf32> to vector<64xf32>
    %157 = vector.shape_cast %156 : vector<64xf32> to vector<1x64xf32>
    %158 = vector.broadcast %157 : vector<1x64xf32> to vector<37x64xf32>
    %159 = arith.cmpf ole, %155, %158 : vector<37x64xf32>
    %c37_i32_48 = arith.constant 37 : i32
    %160 = vector.shape_cast %125 : vector<37x1xi32> to vector<37x1xi32>
    %161 = vector.broadcast %160 : vector<37x1xi32> to vector<37x64xi32>
    %162 = vector.broadcast %c37_i32_48 : i32 to vector<37x64xi32>
    %163 = arith.select %159, %161, %162 : vector<37x64xi1>, vector<37x64xi32>
    %cst_49 = arith.constant dense<2147483647> : vector<64xi32>
    %164 = vector.multi_reduction <minsi>, %163, %cst_49 [0] : vector<37x64xi32> to vector<64xi32>
    %165 = vector.shape_cast %164 : vector<64xi32> to vector<1x64xi32>
    %166 = vector.broadcast %125 : vector<37x1xi32> to vector<37x64xi32>
    %167 = vector.broadcast %165 : vector<1x64xi32> to vector<37x64xi32>
    %168 = arith.cmpi eq, %166, %167 : vector<37x64xi32>
    %cst_50 = arith.constant 1.000000e+30 : f32
    %169 = vector.broadcast %cst_50 : f32 to vector<37x64xf32>
    %170 = arith.select %168, %169, %155 : vector<37x64xi1>, vector<37x64xf32>
    %cst_51 = arith.constant dense<0x7F800000> : vector<64xf32>
    %171 = vector.multi_reduction <minimumf>, %170, %cst_51 [0] : vector<37x64xf32> to vector<64xf32>
    %172 = vector.shape_cast %171 : vector<64xf32> to vector<1x64xf32>
    %173 = vector.broadcast %172 : vector<1x64xf32> to vector<37x64xf32>
    %174 = arith.cmpf ole, %170, %173 : vector<37x64xf32>
    %c37_i32_52 = arith.constant 37 : i32
    %175 = vector.shape_cast %125 : vector<37x1xi32> to vector<37x1xi32>
    %176 = vector.broadcast %175 : vector<37x1xi32> to vector<37x64xi32>
    %177 = vector.broadcast %c37_i32_52 : i32 to vector<37x64xi32>
    %178 = arith.select %174, %176, %177 : vector<37x64xi1>, vector<37x64xi32>
    %cst_53 = arith.constant dense<2147483647> : vector<64xi32>
    %179 = vector.multi_reduction <minsi>, %178, %cst_53 [0] : vector<37x64xi32> to vector<64xi32>
    %180 = vector.shape_cast %179 : vector<64xi32> to vector<1x64xi32>
    %181 = vector.broadcast %125 : vector<37x1xi32> to vector<37x64xi32>
    %182 = vector.broadcast %180 : vector<1x64xi32> to vector<37x64xi32>
    %183 = arith.cmpi eq, %181, %182 : vector<37x64xi32>
    %cst_54 = arith.constant 1.000000e+30 : f32
    %184 = vector.broadcast %cst_54 : f32 to vector<37x64xf32>
    %185 = arith.select %183, %184, %170 : vector<37x64xi1>, vector<37x64xf32>
    %cst_55 = arith.constant dense<0x7F800000> : vector<64xf32>
    %186 = vector.multi_reduction <minimumf>, %185, %cst_55 [0] : vector<37x64xf32> to vector<64xf32>
    %187 = vector.shape_cast %186 : vector<64xf32> to vector<1x64xf32>
    %188 = tpu.concatenate %127, %142, %157, %172, %187 in 0 : vector<1x64xf32>, vector<1x64xf32>, vector<1x64xf32>, vector<1x64xf32>, vector<1x64xf32> -> vector<5x64xf32>
    %c0_56 = arith.constant 0 : index
    %c0_57 = arith.constant 0 : index
    %189 = vector.load %arg8[%c0_56, %c0_57] : memref<5x64xf32, #tpu.memory_space<vmem>>, vector<5x64xf32>
    tpu.vector_store %arg8[%c0_56, %c0_57], %188 {strides = array<i32>} : memref<5x64xf32, #tpu.memory_space<vmem>>, vector<5x64xf32>,
    %c0_58 = arith.constant 0 : index
    %c0_59 = arith.constant 0 : index
    %190 = vector.load %arg9[%c0_58, %c0_59] : memref<1x64xf32, #tpu.memory_space<vmem>>, vector<1x64xf32>
    tpu.vector_store %arg9[%c0_58, %c0_59], %116 {strides = array<i32>} : memref<1x64xf32, #tpu.memory_space<vmem>>, vector<1x64xf32>,
    %c0_i32_60 = arith.constant 0 : i32
    %191 = arith.cmpi eq, %arg2, %c0_i32_60 : i32
    %192 = arith.extui %191 : i1 to i32
    %c0_i32_61 = arith.constant 0 : i32
    %193 = arith.cmpi ne, %192, %c0_i32_61 : i32
    scf.if %193 {
      %cst_62 = arith.constant dense<0.000000e+00> : vector<64xf32>
      %194 = vector.multi_reduction <add>, %188, %cst_62 [0] : vector<5x64xf32> to vector<64xf32>
      %195 = vector.shape_cast %194 : vector<64xf32> to vector<1x64xf32>
      %cst_63 = arith.constant 5.000000e+00 : f32
      %196 = vector.broadcast %cst_63 : f32 to vector<1x64xf32>
      %197 = arith.divf %195, %196 : vector<1x64xf32>
      %cst_64 = arith.constant 0.000000e+00 : f32
      %198 = vector.broadcast %cst_64 : f32 to vector<1x64xf32>
      %199 = arith.subf %198, %197 : vector<1x64xf32>
      %cst_65 = arith.constant 1.562500e-02 : f32
      %200 = vector.broadcast %cst_65 : f32 to vector<1x64xf32>
      %201 = arith.mulf %199, %200 : vector<1x64xf32>
      %202 = math.exp %201 : vector<1x64xf32>
      %c0_66 = arith.constant 0 : index
      %c0_67 = arith.constant 0 : index
      %c0_68 = arith.constant 0 : index
      %203 = vector.load %arg6[%c0_66, %c0_67, %c0_68] : memref<1x1x64xf32, #tpu.memory_space<vmem>>, vector<1x1x64xf32>
      %204 = vector.shape_cast %203 : vector<1x1x64xf32> to vector<1x64xf32>
      %205 = vector.shape_cast %202 : vector<1x64xf32> to vector<1x1x64xf32>
      tpu.vector_store %arg6[%c0_66, %c0_67, %c0_68], %205 {strides = array<i32>} : memref<1x1x64xf32, #tpu.memory_space<vmem>>, vector<1x1x64xf32>,
      %206 = arith.addf %116, %8 : vector<1x64xf32>
      %cst_69 = arith.constant 0.000000e+00 : f32
      %207 = vector.broadcast %cst_69 : f32 to vector<1x64xf32>
      %208 = arith.maximumf %206, %207 : vector<1x64xf32>
      %c0_70 = arith.constant 0 : index
      %c0_71 = arith.constant 0 : index
      %c0_72 = arith.constant 0 : index
      %209 = vector.load %arg7[%c0_70, %c0_71, %c0_72] : memref<1x1x64xf32, #tpu.memory_space<vmem>>, vector<1x1x64xf32>
      %210 = vector.shape_cast %209 : vector<1x1x64xf32> to vector<1x64xf32>
      %211 = vector.shape_cast %208 : vector<1x64xf32> to vector<1x1x64xf32>
      tpu.vector_store %arg7[%c0_70, %c0_71, %c0_72], %211 {strides = array<i32>} : memref<1x1x64xf32, #tpu.memory_space<vmem>>, vector<1x1x64xf32>,
    } else {
    }
    return
  }
  func.func @transform_0(%arg0: i32, %arg1: i32, %arg2: i32) -> (i32, i32, i32) {
    %c0_i32 = arith.constant 0 : i32
    %c0_i32_0 = arith.constant 0 : i32
    return %arg0, %arg1, %c0_i32 : i32, i32, i32
  }
  func.func @transform_1(%arg0: i32, %arg1: i32, %arg2: i32) -> (i32, i32, i32) {
    %c0_i32 = arith.constant 0 : i32
    %c0_i32_0 = arith.constant 0 : i32
    return %arg0, %arg2, %c0_i32 : i32, i32, i32
  }
  func.func @transform_2(%arg0: i32, %arg1: i32, %arg2: i32) -> (i32, i32, i32) {
    %c0_i32 = arith.constant 0 : i32
    %c0_i32_0 = arith.constant 0 : i32
    return %arg0, %c0_i32, %arg1 : i32, i32, i32
  }
  func.func @transform_3(%arg0: i32, %arg1: i32, %arg2: i32) -> (i32, i32, i32) {
    %c0_i32 = arith.constant 0 : i32
    %c0_i32_0 = arith.constant 0 : i32
    return %arg0, %arg1, %c0_i32 : i32, i32, i32
  }
  func.func @transform_4(%arg0: i32, %arg1: i32, %arg2: i32) -> (i32, i32, i32) {
    %c0_i32 = arith.constant 0 : i32
    %c0_i32_0 = arith.constant 0 : i32
    return %arg0, %arg1, %c0_i32 : i32, i32, i32
  }
}

module attributes {stable_mosaic.version = 11 : i64} {
  func.func @_indicator_kernel(%arg0: i32, %arg1: i32, %arg2: i32, %arg3: memref<1x64x64xbf16, #tpu.memory_space<vmem>>, %arg4: memref<1x64x64xbf16, #tpu.memory_space<vmem>>, %arg5: memref<1x1x64xf32, #tpu.memory_space<vmem>>, %arg6: memref<1x64x128xf32, #tpu.memory_space<vmem>>, %arg7: memref<1x1x64xf32, #tpu.memory_space<vmem>>, %arg8: memref<1x1x1xf32, #tpu.memory_space<vmem>>, %arg9: memref<1x1x64xf32, #tpu.memory_space<vmem>>, %arg10: memref<1x64xf32, #tpu.memory_space<vmem>>) attributes {dimension_semantics = [#tpu.dimension_semantics<parallel>, #tpu.dimension_semantics<parallel>, #tpu.dimension_semantics<arbitrary>], iteration_bounds = array<i64: 2, 1, 1>, scalar_prefetch = 0 : i64, scratch_operands = 1 : i64, tpu.core_type = #tpu.core_type<tc>, window_params = [{transform_indices = @transform_0, window_bounds = array<i64: 1, 64, 64>}, {transform_indices = @transform_1, window_bounds = array<i64: 1, 64, 64>}, {transform_indices = @transform_2, window_bounds = array<i64: 1, 1, 64>}, {transform_indices = @transform_3, window_bounds = array<i64: 1, 64, 128>}, {transform_indices = @transform_4, window_bounds = array<i64: 1, 1, 64>}, {transform_indices = @transform_5, window_bounds = array<i64: 1, 1, 1>}, {transform_indices = @transform_6, window_bounds = array<i64: 1, 1, 64>}]} {
    %c0_i32 = arith.constant 0 : i32
    %0 = arith.cmpi eq, %arg2, %c0_i32 : i32
    %1 = arith.extui %0 : i1 to i32
    %c0_i32_0 = arith.constant 0 : i32
    %2 = arith.cmpi ne, %1, %c0_i32_0 : i32
    scf.if %2 {
      %cst_26 = arith.constant 1.000000e+30 : f32
      %40 = vector.broadcast %cst_26 : f32 to vector<1x64xf32>
      %c0_27 = arith.constant 0 : index
      %c0_28 = arith.constant 0 : index
      %41 = vector.load %arg10[%c0_27, %c0_28] : memref<1x64xf32, #tpu.memory_space<vmem>>, vector<1x64xf32>
      tpu.vector_store %arg10[%c0_27, %c0_28], %40 {strides = array<i32>} : memref<1x64xf32, #tpu.memory_space<vmem>>, vector<1x64xf32>,
    } else {
    }
    %c0 = arith.constant 0 : index
    %c0_1 = arith.constant 0 : index
    %c0_2 = arith.constant 0 : index
    %3 = vector.load %arg4[%c0, %c0_1, %c0_2] : memref<1x64x64xbf16, #tpu.memory_space<vmem>>, vector<1x64x64xbf16>
    %4 = vector.shape_cast %3 : vector<1x64x64xbf16> to vector<64x64xbf16>
    %c0_3 = arith.constant 0 : index
    %c0_4 = arith.constant 0 : index
    %c0_5 = arith.constant 0 : index
    %5 = vector.load %arg3[%c0_3, %c0_4, %c0_5] : memref<1x64x64xbf16, #tpu.memory_space<vmem>>, vector<1x64x64xbf16>
    %6 = vector.shape_cast %5 : vector<1x64x64xbf16> to vector<64x64xbf16>
    %c0_6 = arith.constant 0 : index
    %c0_7 = arith.constant 0 : index
    %c0_8 = arith.constant 0 : index
    %7 = vector.load %arg5[%c0_6, %c0_7, %c0_8] : memref<1x1x64xf32, #tpu.memory_space<vmem>>, vector<1x1x64xf32>
    %8 = vector.shape_cast %7 : vector<1x1x64xf32> to vector<1x64xf32>
    %cst = arith.constant dense<0.000000e+00> : vector<64x64xf32>
    %9 = tpu.matmul %4, %6, %cst {dimension_numbers = #tpu.dot_dimension_numbers<[1], [1], [0], [0], [0, 0, 1, 0], [], []>} : vector<64x64xbf16>, vector<64x64xbf16>, vector<64x64xf32> -> vector<64x64xf32>
    %10 = arith.extf %4 : vector<64x64xbf16> to vector<64x64xf32>
    %11 = arith.mulf %10, %10 : vector<64x64xf32>
    %cst_9 = arith.constant dense<0.000000e+00> : vector<64xf32>
    %12 = vector.multi_reduction <add>, %11, %cst_9 [1] : vector<64x64xf32> to vector<64xf32>
    %13 = vector.shape_cast %12 : vector<64xf32> to vector<64x1xf32>
    %14 = vector.broadcast %13 : vector<64x1xf32> to vector<64x64xf32>
    %15 = vector.broadcast %8 : vector<1x64xf32> to vector<64x64xf32>
    %16 = arith.addf %14, %15 : vector<64x64xf32>
    %cst_10 = arith.constant 2.000000e+00 : f32
    %17 = vector.broadcast %cst_10 : f32 to vector<64x64xf32>
    %18 = arith.mulf %17, %9 : vector<64x64xf32>
    %19 = arith.subf %16, %18 : vector<64x64xf32>
    %cst_11 = arith.constant 0.000000e+00 : f32
    %20 = vector.broadcast %cst_11 : f32 to vector<64x64xf32>
    %21 = arith.maximumf %19, %20 : vector<64x64xf32>
    %c0_12 = arith.constant 0 : index
    %c0_13 = arith.constant 0 : index
    %c0_14 = arith.constant 0 : index
    %22 = vector.load %arg6[%c0_12, %c0_13, %c0_14] : memref<1x64x128xf32, #tpu.memory_space<vmem>>, vector<1x64x128xf32>
    %23 = vector.shape_cast %22 : vector<1x64x128xf32> to vector<64x128xf32>
    %24 = vector.extract_strided_slice %23 {offsets = [0, 0], sizes = [64, 1], strides = [1, 1]} : vector<64x128xf32> to vector<64x1xf32>
    %c0_15 = arith.constant 0 : index
    %c0_16 = arith.constant 0 : index
    %c0_17 = arith.constant 0 : index
    %25 = vector.load %arg7[%c0_15, %c0_16, %c0_17] : memref<1x1x64xf32, #tpu.memory_space<vmem>>, vector<1x1x64xf32>
    %26 = vector.shape_cast %25 : vector<1x1x64xf32> to vector<1x64xf32>
    %27 = vector.broadcast %24 : vector<64x1xf32> to vector<64x64xf32>
    %28 = vector.broadcast %26 : vector<1x64xf32> to vector<64x64xf32>
    %29 = arith.cmpf ogt, %27, %28 : vector<64x64xf32>
    %cst_18 = arith.constant 1.000000e+30 : f32
    %30 = vector.broadcast %cst_18 : f32 to vector<64x64xf32>
    %31 = arith.select %29, %21, %30 : vector<64x64xi1>, vector<64x64xf32>
    %c0_19 = arith.constant 0 : index
    %c0_20 = arith.constant 0 : index
    %32 = vector.load %arg10[%c0_19, %c0_20] : memref<1x64xf32, #tpu.memory_space<vmem>>, vector<1x64xf32>
    %cst_21 = arith.constant dense<0x7F800000> : vector<64xf32>
    %33 = vector.multi_reduction <minimumf>, %31, %cst_21 [0] : vector<64x64xf32> to vector<64xf32>
    %34 = vector.shape_cast %33 : vector<64xf32> to vector<1x64xf32>
    %35 = arith.minimumf %32, %34 : vector<1x64xf32>
    %c0_22 = arith.constant 0 : index
    %c0_23 = arith.constant 0 : index
    %36 = vector.load %arg10[%c0_22, %c0_23] : memref<1x64xf32, #tpu.memory_space<vmem>>, vector<1x64xf32>
    tpu.vector_store %arg10[%c0_22, %c0_23], %35 {strides = array<i32>} : memref<1x64xf32, #tpu.memory_space<vmem>>, vector<1x64xf32>,
    %c0_i32_24 = arith.constant 0 : i32
    %37 = arith.cmpi eq, %arg2, %c0_i32_24 : i32
    %38 = arith.extui %37 : i1 to i32
    %c0_i32_25 = arith.constant 0 : i32
    %39 = arith.cmpi ne, %38, %c0_i32_25 : i32
    scf.if %39 {
      %c0_26 = arith.constant 0 : index
      %c0_27 = arith.constant 0 : index
      %40 = vector.load %arg10[%c0_26, %c0_27] : memref<1x64xf32, #tpu.memory_space<vmem>>, vector<1x64xf32>
      %c0_28 = arith.constant 0 : index
      %c0_29 = arith.constant 0 : index
      %c0_30 = arith.constant 0 : index
      %41 = vector.load %arg8[%c0_28, %c0_29, %c0_30] : memref<1x1x1xf32, #tpu.memory_space<vmem>>, vector<1x1x1xf32>
      %42 = vector.shape_cast %41 : vector<1x1x1xf32> to vector<1x1xf32>
      %43 = vector.broadcast %42 : vector<1x1xf32> to vector<1x64xf32>
      %44 = arith.minimumf %40, %43 : vector<1x64xf32>
      %c0_31 = arith.constant 0 : index
      %c0_32 = arith.constant 0 : index
      %c0_33 = arith.constant 0 : index
      %45 = vector.load %arg9[%c0_31, %c0_32, %c0_33] : memref<1x1x64xf32, #tpu.memory_space<vmem>>, vector<1x1x64xf32>
      %46 = vector.shape_cast %45 : vector<1x1x64xf32> to vector<1x64xf32>
      %47 = vector.shape_cast %44 : vector<1x64xf32> to vector<1x1x64xf32>
      tpu.vector_store %arg9[%c0_31, %c0_32, %c0_33], %47 {strides = array<i32>} : memref<1x1x64xf32, #tpu.memory_space<vmem>>, vector<1x1x64xf32>,
    } else {
    }
    return
  }
  func.func @transform_0(%arg0: i32, %arg1: i32, %arg2: i32) -> (i32, i32, i32) {
    %c0_i32 = arith.constant 0 : i32
    %c0_i32_0 = arith.constant 0 : i32
    return %arg0, %arg1, %c0_i32 : i32, i32, i32
  }
  func.func @transform_1(%arg0: i32, %arg1: i32, %arg2: i32) -> (i32, i32, i32) {
    %c0_i32 = arith.constant 0 : i32
    %c0_i32_0 = arith.constant 0 : i32
    return %arg0, %arg2, %c0_i32 : i32, i32, i32
  }
  func.func @transform_2(%arg0: i32, %arg1: i32, %arg2: i32) -> (i32, i32, i32) {
    %c0_i32 = arith.constant 0 : i32
    %c0_i32_0 = arith.constant 0 : i32
    return %arg0, %c0_i32, %arg1 : i32, i32, i32
  }
  func.func @transform_3(%arg0: i32, %arg1: i32, %arg2: i32) -> (i32, i32, i32) {
    %c0_i32 = arith.constant 0 : i32
    %c0_i32_0 = arith.constant 0 : i32
    return %arg0, %arg2, %c0_i32 : i32, i32, i32
  }
  func.func @transform_4(%arg0: i32, %arg1: i32, %arg2: i32) -> (i32, i32, i32) {
    %c0_i32 = arith.constant 0 : i32
    %c0_i32_0 = arith.constant 0 : i32
    return %arg0, %c0_i32, %arg1 : i32, i32, i32
  }
  func.func @transform_5(%arg0: i32, %arg1: i32, %arg2: i32) -> (i32, i32, i32) {
    %c0_i32 = arith.constant 0 : i32
    %c0_i32_0 = arith.constant 0 : i32
    %c0_i32_1 = arith.constant 0 : i32
    return %arg0, %c0_i32, %c0_i32_0 : i32, i32, i32
  }
  func.func @transform_6(%arg0: i32, %arg1: i32, %arg2: i32) -> (i32, i32, i32) {
    %c0_i32 = arith.constant 0 : i32
    %c0_i32_0 = arith.constant 0 : i32
    return %arg0, %arg1, %c0_i32 : i32, i32, i32
  }
}

module attributes {stable_mosaic.version = 11 : i64} {
  func.func @_assign_kernel(%arg0: i32, %arg1: i32, %arg2: i32, %arg3: memref<1x16x64xbf16, #tpu.memory_space<vmem>>, %arg4: memref<1x64x64xbf16, #tpu.memory_space<vmem>>, %arg5: memref<1x1x64xf32, #tpu.memory_space<vmem>>, %arg6: memref<1x1x64xi32, #tpu.memory_space<vmem>>, %arg7: memref<1x64xf32, #tpu.memory_space<vmem>>, %arg8: memref<1x64xi32, #tpu.memory_space<vmem>>) attributes {dimension_semantics = [#tpu.dimension_semantics<parallel>, #tpu.dimension_semantics<parallel>, #tpu.dimension_semantics<arbitrary>], iteration_bounds = array<i64: 2, 1, 1>, scalar_prefetch = 0 : i64, scratch_operands = 2 : i64, tpu.core_type = #tpu.core_type<tc>, window_params = [{transform_indices = @transform_0, window_bounds = array<i64: 1, 16, 64>}, {transform_indices = @transform_1, window_bounds = array<i64: 1, 64, 64>}, {transform_indices = @transform_2, window_bounds = array<i64: 1, 1, 64>}, {transform_indices = @transform_3, window_bounds = array<i64: 1, 1, 64>}]} {
    %c0_i32 = arith.constant 0 : i32
    %0 = arith.cmpi eq, %arg2, %c0_i32 : i32
    %1 = arith.extui %0 : i1 to i32
    %c0_i32_0 = arith.constant 0 : i32
    %2 = arith.cmpi ne, %1, %c0_i32_0 : i32
    scf.if %2 {
      %cst_29 = arith.constant 1.000000e+30 : f32
      %53 = vector.broadcast %cst_29 : f32 to vector<1x64xf32>
      %c0_30 = arith.constant 0 : index
      %c0_31 = arith.constant 0 : index
      %54 = vector.load %arg7[%c0_30, %c0_31] : memref<1x64xf32, #tpu.memory_space<vmem>>, vector<1x64xf32>
      tpu.vector_store %arg7[%c0_30, %c0_31], %53 {strides = array<i32>} : memref<1x64xf32, #tpu.memory_space<vmem>>, vector<1x64xf32>,
      %c0_i32_32 = arith.constant 0 : i32
      %55 = vector.broadcast %c0_i32_32 : i32 to vector<1x64xi32>
      %c0_33 = arith.constant 0 : index
      %c0_34 = arith.constant 0 : index
      %56 = vector.load %arg8[%c0_33, %c0_34] : memref<1x64xi32, #tpu.memory_space<vmem>>, vector<1x64xi32>
      tpu.vector_store %arg8[%c0_33, %c0_34], %55 {strides = array<i32>} : memref<1x64xi32, #tpu.memory_space<vmem>>, vector<1x64xi32>,
    } else {
    }
    %c0 = arith.constant 0 : index
    %c0_1 = arith.constant 0 : index
    %c0_2 = arith.constant 0 : index
    %3 = vector.load %arg3[%c0, %c0_1, %c0_2] : memref<1x16x64xbf16, #tpu.memory_space<vmem>>, vector<1x16x64xbf16>
    %4 = vector.shape_cast %3 : vector<1x16x64xbf16> to vector<16x64xbf16>
    %c0_3 = arith.constant 0 : index
    %c0_4 = arith.constant 0 : index
    %c0_5 = arith.constant 0 : index
    %5 = vector.load %arg4[%c0_3, %c0_4, %c0_5] : memref<1x64x64xbf16, #tpu.memory_space<vmem>>, vector<1x64x64xbf16>
    %6 = vector.shape_cast %5 : vector<1x64x64xbf16> to vector<64x64xbf16>
    %c0_6 = arith.constant 0 : index
    %c0_7 = arith.constant 0 : index
    %c0_8 = arith.constant 0 : index
    %7 = vector.load %arg5[%c0_6, %c0_7, %c0_8] : memref<1x1x64xf32, #tpu.memory_space<vmem>>, vector<1x1x64xf32>
    %8 = vector.shape_cast %7 : vector<1x1x64xf32> to vector<1x64xf32>
    %cst = arith.constant dense<0.000000e+00> : vector<16x64xf32>
    %9 = tpu.matmul %4, %6, %cst {dimension_numbers = #tpu.dot_dimension_numbers<[1], [1], [0], [0], [0, 0, 1, 0], [], []>} : vector<16x64xbf16>, vector<64x64xbf16>, vector<16x64xf32> -> vector<16x64xf32>
    %10 = arith.extf %4 : vector<16x64xbf16> to vector<16x64xf32>
    %11 = arith.mulf %10, %10 : vector<16x64xf32>
    %cst_9 = arith.constant dense<0.000000e+00> : vector<16xf32>
    %12 = vector.multi_reduction <add>, %11, %cst_9 [1] : vector<16x64xf32> to vector<16xf32>
    %13 = vector.shape_cast %12 : vector<16xf32> to vector<16x1xf32>
    %c16_i32 = arith.constant 16 : i32
    %14 = arith.muli %arg2, %c16_i32 : i32
    %15 = tpu.iota {dimensions = array<i32: 0>} : vector<16x1xi32>
    %16 = vector.broadcast %14 : i32 to vector<16x1xi32>
    %17 = arith.addi %16, %15 : vector<16x1xi32>
    %c16_i32_10 = arith.constant 16 : i32
    %18 = vector.broadcast %c16_i32_10 : i32 to vector<16x1xi32>
    %19 = arith.cmpi slt, %17, %18 : vector<16x1xi32>
    %cst_11 = arith.constant 0.000000e+00 : f32
    %cst_12 = arith.constant 1.000000e+30 : f32
    %20 = vector.broadcast %cst_11 : f32 to vector<16x1xf32>
    %21 = vector.broadcast %cst_12 : f32 to vector<16x1xf32>
    %22 = arith.select %19, %20, %21 : vector<16x1xi1>, vector<16x1xf32>
    %23 = arith.addf %13, %22 : vector<16x1xf32>
    %24 = vector.broadcast %23 : vector<16x1xf32> to vector<16x64xf32>
    %25 = vector.broadcast %8 : vector<1x64xf32> to vector<16x64xf32>
    %26 = arith.addf %24, %25 : vector<16x64xf32>
    %cst_13 = arith.constant 2.000000e+00 : f32
    %27 = vector.broadcast %cst_13 : f32 to vector<16x64xf32>
    %28 = arith.mulf %27, %9 : vector<16x64xf32>
    %29 = arith.subf %26, %28 : vector<16x64xf32>
    %cst_14 = arith.constant 0.000000e+00 : f32
    %30 = vector.broadcast %cst_14 : f32 to vector<16x64xf32>
    %31 = arith.maximumf %29, %30 : vector<16x64xf32>
    %cst_15 = arith.constant dense<0x7F800000> : vector<64xf32>
    %32 = vector.multi_reduction <minimumf>, %31, %cst_15 [0] : vector<16x64xf32> to vector<64xf32>
    %33 = vector.shape_cast %32 : vector<64xf32> to vector<1x64xf32>
    %34 = vector.broadcast %33 : vector<1x64xf32> to vector<16x64xf32>
    %35 = arith.cmpf ole, %31, %34 : vector<16x64xf32>
    %c1073741824_i32 = arith.constant 1073741824 : i32
    %36 = vector.shape_cast %17 : vector<16x1xi32> to vector<16x1xi32>
    %37 = vector.broadcast %36 : vector<16x1xi32> to vector<16x64xi32>
    %38 = vector.broadcast %c1073741824_i32 : i32 to vector<16x64xi32>
    %39 = arith.select %35, %37, %38 : vector<16x64xi1>, vector<16x64xi32>
    %cst_16 = arith.constant dense<2147483647> : vector<64xi32>
    %40 = vector.multi_reduction <minsi>, %39, %cst_16 [0] : vector<16x64xi32> to vector<64xi32>
    %41 = vector.shape_cast %40 : vector<64xi32> to vector<1x64xi32>
    %c0_17 = arith.constant 0 : index
    %c0_18 = arith.constant 0 : index
    %42 = vector.load %arg7[%c0_17, %c0_18] : memref<1x64xf32, #tpu.memory_space<vmem>>, vector<1x64xf32>
    %43 = arith.cmpf olt, %33, %42 : vector<1x64xf32>
    %c0_19 = arith.constant 0 : index
    %c0_20 = arith.constant 0 : index
    %44 = vector.load %arg8[%c0_19, %c0_20] : memref<1x64xi32, #tpu.memory_space<vmem>>, vector<1x64xi32>
    %45 = arith.select %43, %41, %44 : vector<1x64xi1>, vector<1x64xi32>
    %c0_21 = arith.constant 0 : index
    %c0_22 = arith.constant 0 : index
    %46 = vector.load %arg8[%c0_21, %c0_22] : memref<1x64xi32, #tpu.memory_space<vmem>>, vector<1x64xi32>
    tpu.vector_store %arg8[%c0_21, %c0_22], %45 {strides = array<i32>} : memref<1x64xi32, #tpu.memory_space<vmem>>, vector<1x64xi32>,
    %c0_23 = arith.constant 0 : index
    %c0_24 = arith.constant 0 : index
    %47 = vector.load %arg7[%c0_23, %c0_24] : memref<1x64xf32, #tpu.memory_space<vmem>>, vector<1x64xf32>
    %48 = arith.select %43, %33, %47 : vector<1x64xi1>, vector<1x64xf32>
    %c0_25 = arith.constant 0 : index
    %c0_26 = arith.constant 0 : index
    %49 = vector.load %arg7[%c0_25, %c0_26] : memref<1x64xf32, #tpu.memory_space<vmem>>, vector<1x64xf32>
    tpu.vector_store %arg7[%c0_25, %c0_26], %48 {strides = array<i32>} : memref<1x64xf32, #tpu.memory_space<vmem>>, vector<1x64xf32>,
    %c0_i32_27 = arith.constant 0 : i32
    %50 = arith.cmpi eq, %arg2, %c0_i32_27 : i32
    %51 = arith.extui %50 : i1 to i32
    %c0_i32_28 = arith.constant 0 : i32
    %52 = arith.cmpi ne, %51, %c0_i32_28 : i32
    scf.if %52 {
      %c0_29 = arith.constant 0 : index
      %c0_30 = arith.constant 0 : index
      %53 = vector.load %arg8[%c0_29, %c0_30] : memref<1x64xi32, #tpu.memory_space<vmem>>, vector<1x64xi32>
      %c0_31 = arith.constant 0 : index
      %c0_32 = arith.constant 0 : index
      %c0_33 = arith.constant 0 : index
      %54 = vector.load %arg6[%c0_31, %c0_32, %c0_33] : memref<1x1x64xi32, #tpu.memory_space<vmem>>, vector<1x1x64xi32>
      %55 = vector.shape_cast %54 : vector<1x1x64xi32> to vector<1x64xi32>
      %56 = vector.shape_cast %53 : vector<1x64xi32> to vector<1x1x64xi32>
      tpu.vector_store %arg6[%c0_31, %c0_32, %c0_33], %56 {strides = array<i32>} : memref<1x1x64xi32, #tpu.memory_space<vmem>>, vector<1x1x64xi32>,
    } else {
    }
    return
  }
  func.func @transform_0(%arg0: i32, %arg1: i32, %arg2: i32) -> (i32, i32, i32) {
    %c0_i32 = arith.constant 0 : i32
    %c0_i32_0 = arith.constant 0 : i32
    return %arg0, %arg2, %c0_i32 : i32, i32, i32
  }
  func.func @transform_1(%arg0: i32, %arg1: i32, %arg2: i32) -> (i32, i32, i32) {
    %c0_i32 = arith.constant 0 : i32
    %c0_i32_0 = arith.constant 0 : i32
    return %arg0, %arg1, %c0_i32 : i32, i32, i32
  }
  func.func @transform_2(%arg0: i32, %arg1: i32, %arg2: i32) -> (i32, i32, i32) {
    %c0_i32 = arith.constant 0 : i32
    %c0_i32_0 = arith.constant 0 : i32
    return %arg0, %c0_i32, %arg1 : i32, i32, i32
  }
  func.func @transform_3(%arg0: i32, %arg1: i32, %arg2: i32) -> (i32, i32, i32) {
    %c0_i32 = arith.constant 0 : i32
    %c0_i32_0 = arith.constant 0 : i32
    return %arg0, %arg1, %c0_i32 : i32, i32, i32
  }
}

module attributes {stable_mosaic.version = 11 : i64} {
  func.func @_mm_bias_kernel(%arg0: i32, %arg1: memref<8x576xbf16, #tpu.memory_space<vmem>>, %arg2: memref<576x64xbf16, #tpu.memory_space<vmem>>, %arg3: memref<1x64xf32, #tpu.memory_space<vmem>>, %arg4: memref<8x64xf32, #tpu.memory_space<vmem>>) attributes {dimension_semantics = [#tpu.dimension_semantics<parallel>], iteration_bounds = array<i64: 1>, scalar_prefetch = 0 : i64, scratch_operands = 0 : i64, tpu.core_type = #tpu.core_type<tc>, window_params = [{transform_indices = @transform_0, window_bounds = array<i64: 8, 576>}, {pipeline_mode = #tpu.pipeline_mode<synchronous>, transform_indices = @transform_1, window_bounds = array<i64: 576, 64>}, {pipeline_mode = #tpu.pipeline_mode<synchronous>, transform_indices = @transform_2, window_bounds = array<i64: 1, 64>}, {transform_indices = @transform_3, window_bounds = array<i64: 8, 64>}]} {
    %c0 = arith.constant 0 : index
    %c0_0 = arith.constant 0 : index
    %0 = vector.load %arg1[%c0, %c0_0] : memref<8x576xbf16, #tpu.memory_space<vmem>>, vector<8x576xbf16>
    %c0_1 = arith.constant 0 : index
    %c0_2 = arith.constant 0 : index
    %1 = vector.load %arg2[%c0_1, %c0_2] : memref<576x64xbf16, #tpu.memory_space<vmem>>, vector<576x64xbf16>
    %cst = arith.constant dense<0.000000e+00> : vector<8x64xf32>
    %2 = tpu.matmul %0, %1, %cst {dimension_numbers = #tpu.dot_dimension_numbers<[1], [0], [0], [1], [0, 0, 1, 1], [], []>} : vector<8x576xbf16>, vector<576x64xbf16>, vector<8x64xf32> -> vector<8x64xf32>
    %c0_3 = arith.constant 0 : index
    %c0_4 = arith.constant 0 : index
    %3 = vector.load %arg3[%c0_3, %c0_4] : memref<1x64xf32, #tpu.memory_space<vmem>>, vector<1x64xf32>
    %4 = vector.broadcast %3 : vector<1x64xf32> to vector<8x64xf32>
    %5 = arith.addf %2, %4 : vector<8x64xf32>
    %c0_5 = arith.constant 0 : index
    %c0_6 = arith.constant 0 : index
    %6 = vector.load %arg4[%c0_5, %c0_6] : memref<8x64xf32, #tpu.memory_space<vmem>>, vector<8x64xf32>
    tpu.vector_store %arg4[%c0_5, %c0_6], %5 {strides = array<i32>} : memref<8x64xf32, #tpu.memory_space<vmem>>, vector<8x64xf32>,
    return
  }
  func.func @transform_0(%arg0: i32) -> (i32, i32) {
    %c0_i32 = arith.constant 0 : i32
    %c0_i32_0 = arith.constant 0 : i32
    return %arg0, %c0_i32 : i32, i32
  }
  func.func @transform_1(%arg0: i32) -> (i32, i32) {
    %c0_i32 = arith.constant 0 : i32
    %c0_i32_0 = arith.constant 0 : i32
    %c0_i32_1 = arith.constant 0 : i32
    return %c0_i32, %c0_i32_0 : i32, i32
  }
  func.func @transform_2(%arg0: i32) -> (i32, i32) {
    %c0_i32 = arith.constant 0 : i32
    %c0_i32_0 = arith.constant 0 : i32
    %c0_i32_1 = arith.constant 0 : i32
    return %c0_i32, %c0_i32_0 : i32, i32
  }
  func.func @transform_3(%arg0: i32) -> (i32, i32) {
    %c0_i32 = arith.constant 0 : i32
    %c0_i32_0 = arith.constant 0 : i32
    return %arg0, %c0_i32 : i32, i32
  }
}

module attributes {stable_mosaic.version = 11 : i64} {
  func.func @_mm_kernel(%arg0: i32, %arg1: memref<32x64xbf16, #tpu.memory_space<vmem>>, %arg2: memref<64x64xbf16, #tpu.memory_space<vmem>>, %arg3: memref<32x64xf32, #tpu.memory_space<vmem>>) attributes {dimension_semantics = [#tpu.dimension_semantics<parallel>], iteration_bounds = array<i64: 1>, scalar_prefetch = 0 : i64, scratch_operands = 0 : i64, tpu.core_type = #tpu.core_type<tc>, window_params = [{transform_indices = @transform_0, window_bounds = array<i64: 32, 64>}, {pipeline_mode = #tpu.pipeline_mode<synchronous>, transform_indices = @transform_1, window_bounds = array<i64: 64, 64>}, {transform_indices = @transform_2, window_bounds = array<i64: 32, 64>}]} {
    %c0 = arith.constant 0 : index
    %c0_0 = arith.constant 0 : index
    %0 = vector.load %arg1[%c0, %c0_0] : memref<32x64xbf16, #tpu.memory_space<vmem>>, vector<32x64xbf16>
    %c0_1 = arith.constant 0 : index
    %c0_2 = arith.constant 0 : index
    %1 = vector.load %arg2[%c0_1, %c0_2] : memref<64x64xbf16, #tpu.memory_space<vmem>>, vector<64x64xbf16>
    %cst = arith.constant dense<0.000000e+00> : vector<32x64xf32>
    %2 = tpu.matmul %0, %1, %cst {dimension_numbers = #tpu.dot_dimension_numbers<[1], [0], [0], [1], [0, 0, 1, 1], [], []>} : vector<32x64xbf16>, vector<64x64xbf16>, vector<32x64xf32> -> vector<32x64xf32>
    %c0_3 = arith.constant 0 : index
    %c0_4 = arith.constant 0 : index
    %3 = vector.load %arg3[%c0_3, %c0_4] : memref<32x64xf32, #tpu.memory_space<vmem>>, vector<32x64xf32>
    tpu.vector_store %arg3[%c0_3, %c0_4], %2 {strides = array<i32>} : memref<32x64xf32, #tpu.memory_space<vmem>>, vector<32x64xf32>,
    return
  }
  func.func @transform_0(%arg0: i32) -> (i32, i32) {
    %c0_i32 = arith.constant 0 : i32
    %c0_i32_0 = arith.constant 0 : i32
    return %arg0, %c0_i32 : i32, i32
  }
  func.func @transform_1(%arg0: i32) -> (i32, i32) {
    %c0_i32 = arith.constant 0 : i32
    %c0_i32_0 = arith.constant 0 : i32
    %c0_i32_1 = arith.constant 0 : i32
    return %c0_i32, %c0_i32_0 : i32, i32
  }
  func.func @transform_2(%arg0: i32) -> (i32, i32) {
    %c0_i32 = arith.constant 0 : i32
    %c0_i32_0 = arith.constant 0 : i32
    return %arg0, %c0_i32 : i32, i32
  }
}

module attributes {stable_mosaic.version = 11 : i64} {
  func.func @_ln_score_kernel(%arg0: i32, %arg1: memref<32x64xf32, #tpu.memory_space<vmem>>, %arg2: memref<1x64xf32, #tpu.memory_space<vmem>>, %arg3: memref<1x64xf32, #tpu.memory_space<vmem>>, %arg4: memref<1x64xf32, #tpu.memory_space<vmem>>, %arg5: memref<1x1xf32, #tpu.memory_space<vmem>>, %arg6: memref<32x64xf32, #tpu.memory_space<vmem>>, %arg7: memref<32x1xf32, #tpu.memory_space<vmem>>) attributes {dimension_semantics = [#tpu.dimension_semantics<parallel>], iteration_bounds = array<i64: 1>, scalar_prefetch = 0 : i64, scratch_operands = 0 : i64, tpu.core_type = #tpu.core_type<tc>, window_params = [{transform_indices = @transform_0, window_bounds = array<i64: 32, 64>}, {pipeline_mode = #tpu.pipeline_mode<synchronous>, transform_indices = @transform_1, window_bounds = array<i64: 1, 64>}, {pipeline_mode = #tpu.pipeline_mode<synchronous>, transform_indices = @transform_2, window_bounds = array<i64: 1, 64>}, {pipeline_mode = #tpu.pipeline_mode<synchronous>, transform_indices = @transform_3, window_bounds = array<i64: 1, 64>}, {pipeline_mode = #tpu.pipeline_mode<synchronous>, transform_indices = @transform_4, window_bounds = array<i64: 1, 1>}, {transform_indices = @transform_5, window_bounds = array<i64: 32, 64>}, {transform_indices = @transform_6, window_bounds = array<i64: 32, 1>}]} {
    %c0 = arith.constant 0 : index
    %c0_0 = arith.constant 0 : index
    %0 = vector.load %arg1[%c0, %c0_0] : memref<32x64xf32, #tpu.memory_space<vmem>>, vector<32x64xf32>
    %cst = arith.constant dense<0.000000e+00> : vector<32xf32>
    %1 = vector.multi_reduction <add>, %0, %cst [1] : vector<32x64xf32> to vector<32xf32>
    %2 = vector.shape_cast %1 : vector<32xf32> to vector<32x1xf32>
    %cst_1 = arith.constant 6.400000e+01 : f32
    %3 = vector.broadcast %cst_1 : f32 to vector<32x1xf32>
    %4 = arith.divf %2, %3 : vector<32x1xf32>
    %5 = vector.broadcast %4 : vector<32x1xf32> to vector<32x64xf32>
    %6 = arith.subf %0, %5 : vector<32x64xf32>
    %7 = arith.mulf %6, %6 : vector<32x64xf32>
    %cst_2 = arith.constant dense<0.000000e+00> : vector<32xf32>
    %8 = vector.multi_reduction <add>, %7, %cst_2 [1] : vector<32x64xf32> to vector<32xf32>
    %9 = vector.shape_cast %8 : vector<32xf32> to vector<32x1xf32>
    %cst_3 = arith.constant 6.400000e+01 : f32
    %10 = vector.broadcast %cst_3 : f32 to vector<32x1xf32>
    %11 = arith.divf %9, %10 : vector<32x1xf32>
    %12 = vector.broadcast %4 : vector<32x1xf32> to vector<32x64xf32>
    %13 = arith.subf %0, %12 : vector<32x64xf32>
    %cst_4 = arith.constant 9.99999974E-6 : f32
    %14 = vector.broadcast %cst_4 : f32 to vector<32x1xf32>
    %15 = arith.addf %11, %14 : vector<32x1xf32>
    %16 = math.rsqrt %15 : vector<32x1xf32>
    %17 = vector.broadcast %16 : vector<32x1xf32> to vector<32x64xf32>
    %18 = arith.mulf %13, %17 : vector<32x64xf32>
    %c0_5 = arith.constant 0 : index
    %c0_6 = arith.constant 0 : index
    %19 = vector.load %arg2[%c0_5, %c0_6] : memref<1x64xf32, #tpu.memory_space<vmem>>, vector<1x64xf32>
    %20 = vector.broadcast %19 : vector<1x64xf32> to vector<32x64xf32>
    %21 = arith.mulf %18, %20 : vector<32x64xf32>
    %c0_7 = arith.constant 0 : index
    %c0_8 = arith.constant 0 : index
    %22 = vector.load %arg3[%c0_7, %c0_8] : memref<1x64xf32, #tpu.memory_space<vmem>>, vector<1x64xf32>
    %23 = vector.broadcast %22 : vector<1x64xf32> to vector<32x64xf32>
    %24 = arith.addf %21, %23 : vector<32x64xf32>
    %c0_9 = arith.constant 0 : index
    %c0_10 = arith.constant 0 : index
    %25 = vector.load %arg6[%c0_9, %c0_10] : memref<32x64xf32, #tpu.memory_space<vmem>>, vector<32x64xf32>
    tpu.vector_store %arg6[%c0_9, %c0_10], %24 {strides = array<i32>} : memref<32x64xf32, #tpu.memory_space<vmem>>, vector<32x64xf32>,
    %c0_11 = arith.constant 0 : index
    %c0_12 = arith.constant 0 : index
    %26 = vector.load %arg4[%c0_11, %c0_12] : memref<1x64xf32, #tpu.memory_space<vmem>>, vector<1x64xf32>
    %27 = vector.broadcast %26 : vector<1x64xf32> to vector<32x64xf32>
    %28 = arith.mulf %24, %27 : vector<32x64xf32>
    %cst_13 = arith.constant dense<0.000000e+00> : vector<32xf32>
    %29 = vector.multi_reduction <add>, %28, %cst_13 [1] : vector<32x64xf32> to vector<32xf32>
    %30 = vector.shape_cast %29 : vector<32xf32> to vector<32x1xf32>
    %c0_14 = arith.constant 0 : index
    %c0_15 = arith.constant 0 : index
    %31 = vector.load %arg5[%c0_14, %c0_15] : memref<1x1xf32, #tpu.memory_space<vmem>>, vector<1x1xf32>
    %32 = vector.broadcast %31 : vector<1x1xf32> to vector<32x1xf32>
    %33 = arith.addf %30, %32 : vector<32x1xf32>
    %c0_16 = arith.constant 0 : index
    %c0_17 = arith.constant 0 : index
    %34 = vector.load %arg7[%c0_16, %c0_17] : memref<32x1xf32, #tpu.memory_space<vmem>>, vector<32x1xf32>
    tpu.vector_store %arg7[%c0_16, %c0_17], %33 {strides = array<i32>} : memref<32x1xf32, #tpu.memory_space<vmem>>, vector<32x1xf32>,
    return
  }
  func.func @transform_0(%arg0: i32) -> (i32, i32) {
    %c0_i32 = arith.constant 0 : i32
    %c0_i32_0 = arith.constant 0 : i32
    return %arg0, %c0_i32 : i32, i32
  }
  func.func @transform_1(%arg0: i32) -> (i32, i32) {
    %c0_i32 = arith.constant 0 : i32
    %c0_i32_0 = arith.constant 0 : i32
    %c0_i32_1 = arith.constant 0 : i32
    return %c0_i32, %c0_i32_0 : i32, i32
  }
  func.func @transform_2(%arg0: i32) -> (i32, i32) {
    %c0_i32 = arith.constant 0 : i32
    %c0_i32_0 = arith.constant 0 : i32
    %c0_i32_1 = arith.constant 0 : i32
    return %c0_i32, %c0_i32_0 : i32, i32
  }
  func.func @transform_3(%arg0: i32) -> (i32, i32) {
    %c0_i32 = arith.constant 0 : i32
    %c0_i32_0 = arith.constant 0 : i32
    %c0_i32_1 = arith.constant 0 : i32
    return %c0_i32, %c0_i32_0 : i32, i32
  }
  func.func @transform_4(%arg0: i32) -> (i32, i32) {
    %c0_i32 = arith.constant 0 : i32
    %c0_i32_0 = arith.constant 0 : i32
    %c0_i32_1 = arith.constant 0 : i32
    return %c0_i32, %c0_i32_0 : i32, i32
  }
  func.func @transform_5(%arg0: i32) -> (i32, i32) {
    %c0_i32 = arith.constant 0 : i32
    %c0_i32_0 = arith.constant 0 : i32
    return %arg0, %c0_i32 : i32, i32
  }
  func.func @transform_6(%arg0: i32) -> (i32, i32) {
    %c0_i32 = arith.constant 0 : i32
    %c0_i32_0 = arith.constant 0 : i32
    return %arg0, %c0_i32 : i32, i32
  }
}

module attributes {stable_mosaic.version = 11 : i64} {
  func.func @_density_kernel(%arg0: i32, %arg1: i32, %arg2: i32, %arg3: memref<1x32x64xbf16, #tpu.memory_space<vmem>>, %arg4: memref<1x32x64xbf16, #tpu.memory_space<vmem>>, %arg5: memref<1x1x32xf32, #tpu.memory_space<vmem>>, %arg6: memref<1x1x32xf32, #tpu.memory_space<vmem>>, %arg7: memref<1x1x32xf32, #tpu.memory_space<vmem>>, %arg8: memref<5x32xf32, #tpu.memory_space<vmem>>, %arg9: memref<1x32xf32, #tpu.memory_space<vmem>>) attributes {dimension_semantics = [#tpu.dimension_semantics<parallel>, #tpu.dimension_semantics<parallel>, #tpu.dimension_semantics<arbitrary>], iteration_bounds = array<i64: 2, 1, 1>, scalar_prefetch = 0 : i64, scratch_operands = 2 : i64, tpu.core_type = #tpu.core_type<tc>, window_params = [{transform_indices = @transform_0, window_bounds = array<i64: 1, 32, 64>}, {transform_indices = @transform_1, window_bounds = array<i64: 1, 32, 64>}, {transform_indices = @transform_2, window_bounds = array<i64: 1, 1, 32>}, {transform_indices = @transform_3, window_bounds = array<i64: 1, 1, 32>}, {transform_indices = @transform_4, window_bounds = array<i64: 1, 1, 32>}]} {
    %c0_i32 = arith.constant 0 : i32
    %0 = arith.cmpi eq, %arg2, %c0_i32 : i32
    %1 = arith.extui %0 : i1 to i32
    %c0_i32_0 = arith.constant 0 : i32
    %2 = arith.cmpi ne, %1, %c0_i32_0 : i32
    scf.if %2 {
      %cst_41 = arith.constant 1.000000e+30 : f32
      %110 = vector.broadcast %cst_41 : f32 to vector<5x32xf32>
      %c0_42 = arith.constant 0 : index
      %c0_43 = arith.constant 0 : index
      %111 = vector.load %arg8[%c0_42, %c0_43] : memref<5x32xf32, #tpu.memory_space<vmem>>, vector<5x32xf32>
      tpu.vector_store %arg8[%c0_42, %c0_43], %110 {strides = array<i32>} : memref<5x32xf32, #tpu.memory_space<vmem>>, vector<5x32xf32>,
      %cst_44 = arith.constant -1.000000e+30 : f32
      %112 = vector.broadcast %cst_44 : f32 to vector<1x32xf32>
      %c0_45 = arith.constant 0 : index
      %c0_46 = arith.constant 0 : index
      %113 = vector.load %arg9[%c0_45, %c0_46] : memref<1x32xf32, #tpu.memory_space<vmem>>, vector<1x32xf32>
      tpu.vector_store %arg9[%c0_45, %c0_46], %112 {strides = array<i32>} : memref<1x32xf32, #tpu.memory_space<vmem>>, vector<1x32xf32>,
    } else {
    }
    %c0 = arith.constant 0 : index
    %c0_1 = arith.constant 0 : index
    %c0_2 = arith.constant 0 : index
    %3 = vector.load %arg4[%c0, %c0_1, %c0_2] : memref<1x32x64xbf16, #tpu.memory_space<vmem>>, vector<1x32x64xbf16>
    %4 = vector.shape_cast %3 : vector<1x32x64xbf16> to vector<32x64xbf16>
    %c0_3 = arith.constant 0 : index
    %c0_4 = arith.constant 0 : index
    %c0_5 = arith.constant 0 : index
    %5 = vector.load %arg3[%c0_3, %c0_4, %c0_5] : memref<1x32x64xbf16, #tpu.memory_space<vmem>>, vector<1x32x64xbf16>
    %6 = vector.shape_cast %5 : vector<1x32x64xbf16> to vector<32x64xbf16>
    %c0_6 = arith.constant 0 : index
    %c0_7 = arith.constant 0 : index
    %c0_8 = arith.constant 0 : index
    %7 = vector.load %arg5[%c0_6, %c0_7, %c0_8] : memref<1x1x32xf32, #tpu.memory_space<vmem>>, vector<1x1x32xf32>
    %8 = vector.shape_cast %7 : vector<1x1x32xf32> to vector<1x32xf32>
    %cst = arith.constant dense<0.000000e+00> : vector<32x32xf32>
    %9 = tpu.matmul %4, %6, %cst {dimension_numbers = #tpu.dot_dimension_numbers<[1], [1], [0], [0], [0, 0, 1, 0], [], []>} : vector<32x64xbf16>, vector<32x64xbf16>, vector<32x32xf32> -> vector<32x32xf32>
    %10 = arith.extf %4 : vector<32x64xbf16> to vector<32x64xf32>
    %11 = arith.mulf %10, %10 : vector<32x64xf32>
    %cst_9 = arith.constant dense<0.000000e+00> : vector<32xf32>
    %12 = vector.multi_reduction <add>, %11, %cst_9 [1] : vector<32x64xf32> to vector<32xf32>
    %13 = vector.shape_cast %12 : vector<32xf32> to vector<32x1xf32>
    %c32_i32 = arith.constant 32 : i32
    %14 = arith.muli %arg2, %c32_i32 : i32
    %15 = tpu.iota {dimensions = array<i32: 0>} : vector<32x1xi32>
    %16 = vector.broadcast %14 : i32 to vector<32x1xi32>
    %17 = arith.addi %16, %15 : vector<32x1xi32>
    %c16_i32 = arith.constant 16 : i32
    %18 = vector.broadcast %c16_i32 : i32 to vector<32x1xi32>
    %19 = arith.cmpi slt, %17, %18 : vector<32x1xi32>
    %cst_10 = arith.constant 0.000000e+00 : f32
    %cst_11 = arith.constant 1.000000e+30 : f32
    %20 = vector.broadcast %cst_10 : f32 to vector<32x1xf32>
    %21 = vector.broadcast %cst_11 : f32 to vector<32x1xf32>
    %22 = arith.select %19, %20, %21 : vector<32x1xi1>, vector<32x1xf32>
    %23 = arith.addf %13, %22 : vector<32x1xf32>
    %24 = arith.subf %13, %22 : vector<32x1xf32>
    %c0_12 = arith.constant 0 : index
    %c0_13 = arith.constant 0 : index
    %25 = vector.load %arg8[%c0_12, %c0_13] : memref<5x32xf32, #tpu.memory_space<vmem>>, vector<5x32xf32>
    %c0_14 = arith.constant 0 : index
    %c0_15 = arith.constant 0 : index
    %26 = vector.load %arg9[%c0_14, %c0_15] : memref<1x32xf32, #tpu.memory_space<vmem>>, vector<1x32xf32>
    %cst_16 = arith.constant -2.000000e+00 : f32
    %27 = vector.broadcast %cst_16 : f32 to vector<32x32xf32>
    %28 = arith.mulf %27, %9 : vector<32x32xf32>
    %29 = vector.broadcast %24 : vector<32x1xf32> to vector<32x32xf32>
    %30 = arith.addf %28, %29 : vector<32x32xf32>
    %cst_17 = arith.constant dense<0xFF800000> : vector<32xf32>
    %31 = vector.multi_reduction <maximumf>, %30, %cst_17 [0] : vector<32x32xf32> to vector<32xf32>
    %32 = vector.shape_cast %31 : vector<32xf32> to vector<1x32xf32>
    %33 = arith.maximumf %26, %32 : vector<1x32xf32>
    %34 = vector.broadcast %23 : vector<32x1xf32> to vector<32x32xf32>
    %35 = arith.addf %28, %34 : vector<32x32xf32>
    %36 = vector.broadcast %8 : vector<1x32xf32> to vector<32x32xf32>
    %37 = arith.addf %35, %36 : vector<32x32xf32>
    %cst_18 = arith.constant 0.000000e+00 : f32
    %38 = vector.broadcast %cst_18 : f32 to vector<32x32xf32>
    %39 = arith.maximumf %37, %38 : vector<32x32xf32>
    %40 = tpu.concatenate %25, %39 in 0 : vector<5x32xf32>, vector<32x32xf32> -> vector<37x32xf32>
    %41 = tpu.iota {dimensions = array<i32: 0>} : vector<37x1xi32>
    %cst_19 = arith.constant dense<0x7F800000> : vector<32xf32>
    %42 = vector.multi_reduction <minimumf>, %40, %cst_19 [0] : vector<37x32xf32> to vector<32xf32>
    %43 = vector.shape_cast %42 : vector<32xf32> to vector<1x32xf32>
    %44 = vector.broadcast %43 : vector<1x32xf32> to vector<37x32xf32>
    %45 = arith.cmpf ole, %40, %44 : vector<37x32xf32>
    %c37_i32 = arith.constant 37 : i32
    %46 = vector.shape_cast %41 : vector<37x1xi32> to vector<37x1xi32>
    %47 = vector.broadcast %46 : vector<37x1xi32> to vector<37x32xi32>
    %48 = vector.broadcast %c37_i32 : i32 to vector<37x32xi32>
    %49 = arith.select %45, %47, %48 : vector<37x32xi1>, vector<37x32xi32>
    %cst_20 = arith.constant dense<2147483647> : vector<32xi32>
    %50 = vector.multi_reduction <minsi>, %49, %cst_20 [0] : vector<37x32xi32> to vector<32xi32>
    %51 = vector.shape_cast %50 : vector<32xi32> to vector<1x32xi32>
    %52 = vector.broadcast %41 : vector<37x1xi32> to vector<37x32xi32>
    %53 = vector.broadcast %51 : vector<1x32xi32> to vector<37x32xi32>
    %54 = arith.cmpi eq, %52, %53 : vector<37x32xi32>
    %cst_21 = arith.constant 1.000000e+30 : f32
    %55 = vector.broadcast %cst_21 : f32 to vector<37x32xf32>
    %56 = arith.select %54, %55, %40 : vector<37x32xi1>, vector<37x32xf32>
    %cst_22 = arith.constant dense<0x7F800000> : vector<32xf32>
    %57 = vector.multi_reduction <minimumf>, %56, %cst_22 [0] : vector<37x32xf32> to vector<32xf32>
    %58 = vector.shape_cast %57 : vector<32xf32> to vector<1x32xf32>
    %59 = vector.broadcast %58 : vector<1x32xf32> to vector<37x32xf32>
    %60 = arith.cmpf ole, %56, %59 : vector<37x32xf32>
    %c37_i32_23 = arith.constant 37 : i32
    %61 = vector.shape_cast %41 : vector<37x1xi32> to vector<37x1xi32>
    %62 = vector.broadcast %61 : vector<37x1xi32> to vector<37x32xi32>
    %63 = vector.broadcast %c37_i32_23 : i32 to vector<37x32xi32>
    %64 = arith.select %60, %62, %63 : vector<37x32xi1>, vector<37x32xi32>
    %cst_24 = arith.constant dense<2147483647> : vector<32xi32>
    %65 = vector.multi_reduction <minsi>, %64, %cst_24 [0] : vector<37x32xi32> to vector<32xi32>
    %66 = vector.shape_cast %65 : vector<32xi32> to vector<1x32xi32>
    %67 = vector.broadcast %41 : vector<37x1xi32> to vector<37x32xi32>
    %68 = vector.broadcast %66 : vector<1x32xi32> to vector<37x32xi32>
    %69 = arith.cmpi eq, %67, %68 : vector<37x32xi32>
    %cst_25 = arith.constant 1.000000e+30 : f32
    %70 = vector.broadcast %cst_25 : f32 to vector<37x32xf32>
    %71 = arith.select %69, %70, %56 : vector<37x32xi1>, vector<37x32xf32>
    %cst_26 = arith.constant dense<0x7F800000> : vector<32xf32>
    %72 = vector.multi_reduction <minimumf>, %71, %cst_26 [0] : vector<37x32xf32> to vector<32xf32>
    %73 = vector.shape_cast %72 : vector<32xf32> to vector<1x32xf32>
    %74 = vector.broadcast %73 : vector<1x32xf32> to vector<37x32xf32>
    %75 = arith.cmpf ole, %71, %74 : vector<37x32xf32>
    %c37_i32_27 = arith.constant 37 : i32
    %76 = vector.shape_cast %41 : vector<37x1xi32> to vector<37x1xi32>
    %77 = vector.broadcast %76 : vector<37x1xi32> to vector<37x32xi32>
    %78 = vector.broadcast %c37_i32_27 : i32 to vector<37x32xi32>
    %79 = arith.select %75, %77, %78 : vector<37x32xi1>, vector<37x32xi32>
    %cst_28 = arith.constant dense<2147483647> : vector<32xi32>
    %80 = vector.multi_reduction <minsi>, %79, %cst_28 [0] : vector<37x32xi32> to vector<32xi32>
    %81 = vector.shape_cast %80 : vector<32xi32> to vector<1x32xi32>
    %82 = vector.broadcast %41 : vector<37x1xi32> to vector<37x32xi32>
    %83 = vector.broadcast %81 : vector<1x32xi32> to vector<37x32xi32>
    %84 = arith.cmpi eq, %82, %83 : vector<37x32xi32>
    %cst_29 = arith.constant 1.000000e+30 : f32
    %85 = vector.broadcast %cst_29 : f32 to vector<37x32xf32>
    %86 = arith.select %84, %85, %71 : vector<37x32xi1>, vector<37x32xf32>
    %cst_30 = arith.constant dense<0x7F800000> : vector<32xf32>
    %87 = vector.multi_reduction <minimumf>, %86, %cst_30 [0] : vector<37x32xf32> to vector<32xf32>
    %88 = vector.shape_cast %87 : vector<32xf32> to vector<1x32xf32>
    %89 = vector.broadcast %88 : vector<1x32xf32> to vector<37x32xf32>
    %90 = arith.cmpf ole, %86, %89 : vector<37x32xf32>
    %c37_i32_31 = arith.constant 37 : i32
    %91 = vector.shape_cast %41 : vector<37x1xi32> to vector<37x1xi32>
    %92 = vector.broadcast %91 : vector<37x1xi32> to vector<37x32xi32>
    %93 = vector.broadcast %c37_i32_31 : i32 to vector<37x32xi32>
    %94 = arith.select %90, %92, %93 : vector<37x32xi1>, vector<37x32xi32>
    %cst_32 = arith.constant dense<2147483647> : vector<32xi32>
    %95 = vector.multi_reduction <minsi>, %94, %cst_32 [0] : vector<37x32xi32> to vector<32xi32>
    %96 = vector.shape_cast %95 : vector<32xi32> to vector<1x32xi32>
    %97 = vector.broadcast %41 : vector<37x1xi32> to vector<37x32xi32>
    %98 = vector.broadcast %96 : vector<1x32xi32> to vector<37x32xi32>
    %99 = arith.cmpi eq, %97, %98 : vector<37x32xi32>
    %cst_33 = arith.constant 1.000000e+30 : f32
    %100 = vector.broadcast %cst_33 : f32 to vector<37x32xf32>
    %101 = arith.select %99, %100, %86 : vector<37x32xi1>, vector<37x32xf32>
    %cst_34 = arith.constant dense<0x7F800000> : vector<32xf32>
    %102 = vector.multi_reduction <minimumf>, %101, %cst_34 [0] : vector<37x32xf32> to vector<32xf32>
    %103 = vector.shape_cast %102 : vector<32xf32> to vector<1x32xf32>
    %104 = tpu.concatenate %43, %58, %73, %88, %103 in 0 : vector<1x32xf32>, vector<1x32xf32>, vector<1x32xf32>, vector<1x32xf32>, vector<1x32xf32> -> vector<5x32xf32>
    %c0_35 = arith.constant 0 : index
    %c0_36 = arith.constant 0 : index
    %105 = vector.load %arg8[%c0_35, %c0_36] : memref<5x32xf32, #tpu.memory_space<vmem>>, vector<5x32xf32>
    tpu.vector_store %arg8[%c0_35, %c0_36], %104 {strides = array<i32>} : memref<5x32xf32, #tpu.memory_space<vmem>>, vector<5x32xf32>,
    %c0_37 = arith.constant 0 : index
    %c0_38 = arith.constant 0 : index
    %106 = vector.load %arg9[%c0_37, %c0_38] : memref<1x32xf32, #tpu.memory_space<vmem>>, vector<1x32xf32>
    tpu.vector_store %arg9[%c0_37, %c0_38], %33 {strides = array<i32>} : memref<1x32xf32, #tpu.memory_space<vmem>>, vector<1x32xf32>,
    %c0_i32_39 = arith.constant 0 : i32
    %107 = arith.cmpi eq, %arg2, %c0_i32_39 : i32
    %108 = arith.extui %107 : i1 to i32
    %c0_i32_40 = arith.constant 0 : i32
    %109 = arith.cmpi ne, %108, %c0_i32_40 : i32
    scf.if %109 {
      %cst_41 = arith.constant dense<0.000000e+00> : vector<32xf32>
      %110 = vector.multi_reduction <add>, %104, %cst_41 [0] : vector<5x32xf32> to vector<32xf32>
      %111 = vector.shape_cast %110 : vector<32xf32> to vector<1x32xf32>
      %cst_42 = arith.constant 5.000000e+00 : f32
      %112 = vector.broadcast %cst_42 : f32 to vector<1x32xf32>
      %113 = arith.divf %111, %112 : vector<1x32xf32>
      %cst_43 = arith.constant 0.000000e+00 : f32
      %114 = vector.broadcast %cst_43 : f32 to vector<1x32xf32>
      %115 = arith.subf %114, %113 : vector<1x32xf32>
      %cst_44 = arith.constant 1.562500e-02 : f32
      %116 = vector.broadcast %cst_44 : f32 to vector<1x32xf32>
      %117 = arith.mulf %115, %116 : vector<1x32xf32>
      %118 = math.exp %117 : vector<1x32xf32>
      %c0_45 = arith.constant 0 : index
      %c0_46 = arith.constant 0 : index
      %c0_47 = arith.constant 0 : index
      %119 = vector.load %arg6[%c0_45, %c0_46, %c0_47] : memref<1x1x32xf32, #tpu.memory_space<vmem>>, vector<1x1x32xf32>
      %120 = vector.shape_cast %119 : vector<1x1x32xf32> to vector<1x32xf32>
      %121 = vector.shape_cast %118 : vector<1x32xf32> to vector<1x1x32xf32>
      tpu.vector_store %arg6[%c0_45, %c0_46, %c0_47], %121 {strides = array<i32>} : memref<1x1x32xf32, #tpu.memory_space<vmem>>, vector<1x1x32xf32>,
      %122 = arith.addf %33, %8 : vector<1x32xf32>
      %cst_48 = arith.constant 0.000000e+00 : f32
      %123 = vector.broadcast %cst_48 : f32 to vector<1x32xf32>
      %124 = arith.maximumf %122, %123 : vector<1x32xf32>
      %c0_49 = arith.constant 0 : index
      %c0_50 = arith.constant 0 : index
      %c0_51 = arith.constant 0 : index
      %125 = vector.load %arg7[%c0_49, %c0_50, %c0_51] : memref<1x1x32xf32, #tpu.memory_space<vmem>>, vector<1x1x32xf32>
      %126 = vector.shape_cast %125 : vector<1x1x32xf32> to vector<1x32xf32>
      %127 = vector.shape_cast %124 : vector<1x32xf32> to vector<1x1x32xf32>
      tpu.vector_store %arg7[%c0_49, %c0_50, %c0_51], %127 {strides = array<i32>} : memref<1x1x32xf32, #tpu.memory_space<vmem>>, vector<1x1x32xf32>,
    } else {
    }
    return
  }
  func.func @transform_0(%arg0: i32, %arg1: i32, %arg2: i32) -> (i32, i32, i32) {
    %c0_i32 = arith.constant 0 : i32
    %c0_i32_0 = arith.constant 0 : i32
    return %arg0, %arg1, %c0_i32 : i32, i32, i32
  }
  func.func @transform_1(%arg0: i32, %arg1: i32, %arg2: i32) -> (i32, i32, i32) {
    %c0_i32 = arith.constant 0 : i32
    %c0_i32_0 = arith.constant 0 : i32
    return %arg0, %arg2, %c0_i32 : i32, i32, i32
  }
  func.func @transform_2(%arg0: i32, %arg1: i32, %arg2: i32) -> (i32, i32, i32) {
    %c0_i32 = arith.constant 0 : i32
    %c0_i32_0 = arith.constant 0 : i32
    return %arg0, %c0_i32, %arg1 : i32, i32, i32
  }
  func.func @transform_3(%arg0: i32, %arg1: i32, %arg2: i32) -> (i32, i32, i32) {
    %c0_i32 = arith.constant 0 : i32
    %c0_i32_0 = arith.constant 0 : i32
    return %arg0, %arg1, %c0_i32 : i32, i32, i32
  }
  func.func @transform_4(%arg0: i32, %arg1: i32, %arg2: i32) -> (i32, i32, i32) {
    %c0_i32 = arith.constant 0 : i32
    %c0_i32_0 = arith.constant 0 : i32
    return %arg0, %arg1, %c0_i32 : i32, i32, i32
  }
}

module attributes {stable_mosaic.version = 11 : i64} {
  func.func @_indicator_kernel(%arg0: i32, %arg1: i32, %arg2: i32, %arg3: memref<1x32x64xbf16, #tpu.memory_space<vmem>>, %arg4: memref<1x32x64xbf16, #tpu.memory_space<vmem>>, %arg5: memref<1x1x32xf32, #tpu.memory_space<vmem>>, %arg6: memref<1x32x128xf32, #tpu.memory_space<vmem>>, %arg7: memref<1x1x32xf32, #tpu.memory_space<vmem>>, %arg8: memref<1x1x1xf32, #tpu.memory_space<vmem>>, %arg9: memref<1x1x32xf32, #tpu.memory_space<vmem>>, %arg10: memref<1x32xf32, #tpu.memory_space<vmem>>) attributes {dimension_semantics = [#tpu.dimension_semantics<parallel>, #tpu.dimension_semantics<parallel>, #tpu.dimension_semantics<arbitrary>], iteration_bounds = array<i64: 2, 1, 1>, scalar_prefetch = 0 : i64, scratch_operands = 1 : i64, tpu.core_type = #tpu.core_type<tc>, window_params = [{transform_indices = @transform_0, window_bounds = array<i64: 1, 32, 64>}, {transform_indices = @transform_1, window_bounds = array<i64: 1, 32, 64>}, {transform_indices = @transform_2, window_bounds = array<i64: 1, 1, 32>}, {transform_indices = @transform_3, window_bounds = array<i64: 1, 32, 128>}, {transform_indices = @transform_4, window_bounds = array<i64: 1, 1, 32>}, {transform_indices = @transform_5, window_bounds = array<i64: 1, 1, 1>}, {transform_indices = @transform_6, window_bounds = array<i64: 1, 1, 32>}]} {
    %c0_i32 = arith.constant 0 : i32
    %0 = arith.cmpi eq, %arg2, %c0_i32 : i32
    %1 = arith.extui %0 : i1 to i32
    %c0_i32_0 = arith.constant 0 : i32
    %2 = arith.cmpi ne, %1, %c0_i32_0 : i32
    scf.if %2 {
      %cst_26 = arith.constant 1.000000e+30 : f32
      %40 = vector.broadcast %cst_26 : f32 to vector<1x32xf32>
      %c0_27 = arith.constant 0 : index
      %c0_28 = arith.constant 0 : index
      %41 = vector.load %arg10[%c0_27, %c0_28] : memref<1x32xf32, #tpu.memory_space<vmem>>, vector<1x32xf32>
      tpu.vector_store %arg10[%c0_27, %c0_28], %40 {strides = array<i32>} : memref<1x32xf32, #tpu.memory_space<vmem>>, vector<1x32xf32>,
    } else {
    }
    %c0 = arith.constant 0 : index
    %c0_1 = arith.constant 0 : index
    %c0_2 = arith.constant 0 : index
    %3 = vector.load %arg4[%c0, %c0_1, %c0_2] : memref<1x32x64xbf16, #tpu.memory_space<vmem>>, vector<1x32x64xbf16>
    %4 = vector.shape_cast %3 : vector<1x32x64xbf16> to vector<32x64xbf16>
    %c0_3 = arith.constant 0 : index
    %c0_4 = arith.constant 0 : index
    %c0_5 = arith.constant 0 : index
    %5 = vector.load %arg3[%c0_3, %c0_4, %c0_5] : memref<1x32x64xbf16, #tpu.memory_space<vmem>>, vector<1x32x64xbf16>
    %6 = vector.shape_cast %5 : vector<1x32x64xbf16> to vector<32x64xbf16>
    %c0_6 = arith.constant 0 : index
    %c0_7 = arith.constant 0 : index
    %c0_8 = arith.constant 0 : index
    %7 = vector.load %arg5[%c0_6, %c0_7, %c0_8] : memref<1x1x32xf32, #tpu.memory_space<vmem>>, vector<1x1x32xf32>
    %8 = vector.shape_cast %7 : vector<1x1x32xf32> to vector<1x32xf32>
    %cst = arith.constant dense<0.000000e+00> : vector<32x32xf32>
    %9 = tpu.matmul %4, %6, %cst {dimension_numbers = #tpu.dot_dimension_numbers<[1], [1], [0], [0], [0, 0, 1, 0], [], []>} : vector<32x64xbf16>, vector<32x64xbf16>, vector<32x32xf32> -> vector<32x32xf32>
    %10 = arith.extf %4 : vector<32x64xbf16> to vector<32x64xf32>
    %11 = arith.mulf %10, %10 : vector<32x64xf32>
    %cst_9 = arith.constant dense<0.000000e+00> : vector<32xf32>
    %12 = vector.multi_reduction <add>, %11, %cst_9 [1] : vector<32x64xf32> to vector<32xf32>
    %13 = vector.shape_cast %12 : vector<32xf32> to vector<32x1xf32>
    %14 = vector.broadcast %13 : vector<32x1xf32> to vector<32x32xf32>
    %15 = vector.broadcast %8 : vector<1x32xf32> to vector<32x32xf32>
    %16 = arith.addf %14, %15 : vector<32x32xf32>
    %cst_10 = arith.constant 2.000000e+00 : f32
    %17 = vector.broadcast %cst_10 : f32 to vector<32x32xf32>
    %18 = arith.mulf %17, %9 : vector<32x32xf32>
    %19 = arith.subf %16, %18 : vector<32x32xf32>
    %cst_11 = arith.constant 0.000000e+00 : f32
    %20 = vector.broadcast %cst_11 : f32 to vector<32x32xf32>
    %21 = arith.maximumf %19, %20 : vector<32x32xf32>
    %c0_12 = arith.constant 0 : index
    %c0_13 = arith.constant 0 : index
    %c0_14 = arith.constant 0 : index
    %22 = vector.load %arg6[%c0_12, %c0_13, %c0_14] : memref<1x32x128xf32, #tpu.memory_space<vmem>>, vector<1x32x128xf32>
    %23 = vector.shape_cast %22 : vector<1x32x128xf32> to vector<32x128xf32>
    %24 = vector.extract_strided_slice %23 {offsets = [0, 0], sizes = [32, 1], strides = [1, 1]} : vector<32x128xf32> to vector<32x1xf32>
    %c0_15 = arith.constant 0 : index
    %c0_16 = arith.constant 0 : index
    %c0_17 = arith.constant 0 : index
    %25 = vector.load %arg7[%c0_15, %c0_16, %c0_17] : memref<1x1x32xf32, #tpu.memory_space<vmem>>, vector<1x1x32xf32>
    %26 = vector.shape_cast %25 : vector<1x1x32xf32> to vector<1x32xf32>
    %27 = vector.broadcast %24 : vector<32x1xf32> to vector<32x32xf32>
    %28 = vector.broadcast %26 : vector<1x32xf32> to vector<32x32xf32>
    %29 = arith.cmpf ogt, %27, %28 : vector<32x32xf32>
    %cst_18 = arith.constant 1.000000e+30 : f32
    %30 = vector.broadcast %cst_18 : f32 to vector<32x32xf32>
    %31 = arith.select %29, %21, %30 : vector<32x32xi1>, vector<32x32xf32>
    %c0_19 = arith.constant 0 : index
    %c0_20 = arith.constant 0 : index
    %32 = vector.load %arg10[%c0_19, %c0_20] : memref<1x32xf32, #tpu.memory_space<vmem>>, vector<1x32xf32>
    %cst_21 = arith.constant dense<0x7F800000> : vector<32xf32>
    %33 = vector.multi_reduction <minimumf>, %31, %cst_21 [0] : vector<32x32xf32> to vector<32xf32>
    %34 = vector.shape_cast %33 : vector<32xf32> to vector<1x32xf32>
    %35 = arith.minimumf %32, %34 : vector<1x32xf32>
    %c0_22 = arith.constant 0 : index
    %c0_23 = arith.constant 0 : index
    %36 = vector.load %arg10[%c0_22, %c0_23] : memref<1x32xf32, #tpu.memory_space<vmem>>, vector<1x32xf32>
    tpu.vector_store %arg10[%c0_22, %c0_23], %35 {strides = array<i32>} : memref<1x32xf32, #tpu.memory_space<vmem>>, vector<1x32xf32>,
    %c0_i32_24 = arith.constant 0 : i32
    %37 = arith.cmpi eq, %arg2, %c0_i32_24 : i32
    %38 = arith.extui %37 : i1 to i32
    %c0_i32_25 = arith.constant 0 : i32
    %39 = arith.cmpi ne, %38, %c0_i32_25 : i32
    scf.if %39 {
      %c0_26 = arith.constant 0 : index
      %c0_27 = arith.constant 0 : index
      %40 = vector.load %arg10[%c0_26, %c0_27] : memref<1x32xf32, #tpu.memory_space<vmem>>, vector<1x32xf32>
      %c0_28 = arith.constant 0 : index
      %c0_29 = arith.constant 0 : index
      %c0_30 = arith.constant 0 : index
      %41 = vector.load %arg8[%c0_28, %c0_29, %c0_30] : memref<1x1x1xf32, #tpu.memory_space<vmem>>, vector<1x1x1xf32>
      %42 = vector.shape_cast %41 : vector<1x1x1xf32> to vector<1x1xf32>
      %43 = vector.broadcast %42 : vector<1x1xf32> to vector<1x32xf32>
      %44 = arith.minimumf %40, %43 : vector<1x32xf32>
      %c0_31 = arith.constant 0 : index
      %c0_32 = arith.constant 0 : index
      %c0_33 = arith.constant 0 : index
      %45 = vector.load %arg9[%c0_31, %c0_32, %c0_33] : memref<1x1x32xf32, #tpu.memory_space<vmem>>, vector<1x1x32xf32>
      %46 = vector.shape_cast %45 : vector<1x1x32xf32> to vector<1x32xf32>
      %47 = vector.shape_cast %44 : vector<1x32xf32> to vector<1x1x32xf32>
      tpu.vector_store %arg9[%c0_31, %c0_32, %c0_33], %47 {strides = array<i32>} : memref<1x1x32xf32, #tpu.memory_space<vmem>>, vector<1x1x32xf32>,
    } else {
    }
    return
  }
  func.func @transform_0(%arg0: i32, %arg1: i32, %arg2: i32) -> (i32, i32, i32) {
    %c0_i32 = arith.constant 0 : i32
    %c0_i32_0 = arith.constant 0 : i32
    return %arg0, %arg1, %c0_i32 : i32, i32, i32
  }
  func.func @transform_1(%arg0: i32, %arg1: i32, %arg2: i32) -> (i32, i32, i32) {
    %c0_i32 = arith.constant 0 : i32
    %c0_i32_0 = arith.constant 0 : i32
    return %arg0, %arg2, %c0_i32 : i32, i32, i32
  }
  func.func @transform_2(%arg0: i32, %arg1: i32, %arg2: i32) -> (i32, i32, i32) {
    %c0_i32 = arith.constant 0 : i32
    %c0_i32_0 = arith.constant 0 : i32
    return %arg0, %c0_i32, %arg1 : i32, i32, i32
  }
  func.func @transform_3(%arg0: i32, %arg1: i32, %arg2: i32) -> (i32, i32, i32) {
    %c0_i32 = arith.constant 0 : i32
    %c0_i32_0 = arith.constant 0 : i32
    return %arg0, %arg2, %c0_i32 : i32, i32, i32
  }
  func.func @transform_4(%arg0: i32, %arg1: i32, %arg2: i32) -> (i32, i32, i32) {
    %c0_i32 = arith.constant 0 : i32
    %c0_i32_0 = arith.constant 0 : i32
    return %arg0, %c0_i32, %arg1 : i32, i32, i32
  }
  func.func @transform_5(%arg0: i32, %arg1: i32, %arg2: i32) -> (i32, i32, i32) {
    %c0_i32 = arith.constant 0 : i32
    %c0_i32_0 = arith.constant 0 : i32
    %c0_i32_1 = arith.constant 0 : i32
    return %arg0, %c0_i32, %c0_i32_0 : i32, i32, i32
  }
  func.func @transform_6(%arg0: i32, %arg1: i32, %arg2: i32) -> (i32, i32, i32) {
    %c0_i32 = arith.constant 0 : i32
    %c0_i32_0 = arith.constant 0 : i32
    return %arg0, %arg1, %c0_i32 : i32, i32, i32
  }
}

module attributes {stable_mosaic.version = 11 : i64} {
  func.func @_assign_kernel(%arg0: i32, %arg1: i32, %arg2: i32, %arg3: memref<1x8x64xbf16, #tpu.memory_space<vmem>>, %arg4: memref<1x32x64xbf16, #tpu.memory_space<vmem>>, %arg5: memref<1x1x32xf32, #tpu.memory_space<vmem>>, %arg6: memref<1x1x32xi32, #tpu.memory_space<vmem>>, %arg7: memref<1x32xf32, #tpu.memory_space<vmem>>, %arg8: memref<1x32xi32, #tpu.memory_space<vmem>>) attributes {dimension_semantics = [#tpu.dimension_semantics<parallel>, #tpu.dimension_semantics<parallel>, #tpu.dimension_semantics<arbitrary>], iteration_bounds = array<i64: 2, 1, 1>, scalar_prefetch = 0 : i64, scratch_operands = 2 : i64, tpu.core_type = #tpu.core_type<tc>, window_params = [{transform_indices = @transform_0, window_bounds = array<i64: 1, 8, 64>}, {transform_indices = @transform_1, window_bounds = array<i64: 1, 32, 64>}, {transform_indices = @transform_2, window_bounds = array<i64: 1, 1, 32>}, {transform_indices = @transform_3, window_bounds = array<i64: 1, 1, 32>}]} {
    %c0_i32 = arith.constant 0 : i32
    %0 = arith.cmpi eq, %arg2, %c0_i32 : i32
    %1 = arith.extui %0 : i1 to i32
    %c0_i32_0 = arith.constant 0 : i32
    %2 = arith.cmpi ne, %1, %c0_i32_0 : i32
    scf.if %2 {
      %cst_28 = arith.constant 1.000000e+30 : f32
      %53 = vector.broadcast %cst_28 : f32 to vector<1x32xf32>
      %c0_29 = arith.constant 0 : index
      %c0_30 = arith.constant 0 : index
      %54 = vector.load %arg7[%c0_29, %c0_30] : memref<1x32xf32, #tpu.memory_space<vmem>>, vector<1x32xf32>
      tpu.vector_store %arg7[%c0_29, %c0_30], %53 {strides = array<i32>} : memref<1x32xf32, #tpu.memory_space<vmem>>, vector<1x32xf32>,
      %c0_i32_31 = arith.constant 0 : i32
      %55 = vector.broadcast %c0_i32_31 : i32 to vector<1x32xi32>
      %c0_32 = arith.constant 0 : index
      %c0_33 = arith.constant 0 : index
      %56 = vector.load %arg8[%c0_32, %c0_33] : memref<1x32xi32, #tpu.memory_space<vmem>>, vector<1x32xi32>
      tpu.vector_store %arg8[%c0_32, %c0_33], %55 {strides = array<i32>} : memref<1x32xi32, #tpu.memory_space<vmem>>, vector<1x32xi32>,
    } else {
    }
    %c0 = arith.constant 0 : index
    %c0_1 = arith.constant 0 : index
    %c0_2 = arith.constant 0 : index
    %3 = vector.load %arg3[%c0, %c0_1, %c0_2] : memref<1x8x64xbf16, #tpu.memory_space<vmem>>, vector<1x8x64xbf16>
    %4 = vector.shape_cast %3 : vector<1x8x64xbf16> to vector<8x64xbf16>
    %c0_3 = arith.constant 0 : index
    %c0_4 = arith.constant 0 : index
    %c0_5 = arith.constant 0 : index
    %5 = vector.load %arg4[%c0_3, %c0_4, %c0_5] : memref<1x32x64xbf16, #tpu.memory_space<vmem>>, vector<1x32x64xbf16>
    %6 = vector.shape_cast %5 : vector<1x32x64xbf16> to vector<32x64xbf16>
    %c0_6 = arith.constant 0 : index
    %c0_7 = arith.constant 0 : index
    %c0_8 = arith.constant 0 : index
    %7 = vector.load %arg5[%c0_6, %c0_7, %c0_8] : memref<1x1x32xf32, #tpu.memory_space<vmem>>, vector<1x1x32xf32>
    %8 = vector.shape_cast %7 : vector<1x1x32xf32> to vector<1x32xf32>
    %cst = arith.constant dense<0.000000e+00> : vector<8x32xf32>
    %9 = tpu.matmul %4, %6, %cst {dimension_numbers = #tpu.dot_dimension_numbers<[1], [1], [0], [0], [0, 0, 1, 0], [], []>} : vector<8x64xbf16>, vector<32x64xbf16>, vector<8x32xf32> -> vector<8x32xf32>
    %10 = arith.extf %4 : vector<8x64xbf16> to vector<8x64xf32>
    %11 = arith.mulf %10, %10 : vector<8x64xf32>
    %cst_9 = arith.constant dense<0.000000e+00> : vector<8xf32>
    %12 = vector.multi_reduction <add>, %11, %cst_9 [1] : vector<8x64xf32> to vector<8xf32>
    %13 = vector.shape_cast %12 : vector<8xf32> to vector<8x1xf32>
    %c8_i32 = arith.constant 8 : i32
    %14 = arith.muli %arg2, %c8_i32 : i32
    %15 = tpu.iota {dimensions = array<i32: 0>} : vector<8x1xi32>
    %16 = vector.broadcast %14 : i32 to vector<8x1xi32>
    %17 = arith.addi %16, %15 : vector<8x1xi32>
    %c4_i32 = arith.constant 4 : i32
    %18 = vector.broadcast %c4_i32 : i32 to vector<8x1xi32>
    %19 = arith.cmpi slt, %17, %18 : vector<8x1xi32>
    %cst_10 = arith.constant 0.000000e+00 : f32
    %cst_11 = arith.constant 1.000000e+30 : f32
    %20 = vector.broadcast %cst_10 : f32 to vector<8x1xf32>
    %21 = vector.broadcast %cst_11 : f32 to vector<8x1xf32>
    %22 = arith.select %19, %20, %21 : vector<8x1xi1>, vector<8x1xf32>
    %23 = arith.addf %13, %22 : vector<8x1xf32>
    %24 = vector.broadcast %23 : vector<8x1xf32> to vector<8x32xf32>
    %25 = vector.broadcast %8 : vector<1x32xf32> to vector<8x32xf32>
    %26 = arith.addf %24, %25 : vector<8x32xf32>
    %cst_12 = arith.constant 2.000000e+00 : f32
    %27 = vector.broadcast %cst_12 : f32 to vector<8x32xf32>
    %28 = arith.mulf %27, %9 : vector<8x32xf32>
    %29 = arith.subf %26, %28 : vector<8x32xf32>
    %cst_13 = arith.constant 0.000000e+00 : f32
    %30 = vector.broadcast %cst_13 : f32 to vector<8x32xf32>
    %31 = arith.maximumf %29, %30 : vector<8x32xf32>
    %cst_14 = arith.constant dense<0x7F800000> : vector<32xf32>
    %32 = vector.multi_reduction <minimumf>, %31, %cst_14 [0] : vector<8x32xf32> to vector<32xf32>
    %33 = vector.shape_cast %32 : vector<32xf32> to vector<1x32xf32>
    %34 = vector.broadcast %33 : vector<1x32xf32> to vector<8x32xf32>
    %35 = arith.cmpf ole, %31, %34 : vector<8x32xf32>
    %c1073741824_i32 = arith.constant 1073741824 : i32
    %36 = vector.shape_cast %17 : vector<8x1xi32> to vector<8x1xi32>
    %37 = vector.broadcast %36 : vector<8x1xi32> to vector<8x32xi32>
    %38 = vector.broadcast %c1073741824_i32 : i32 to vector<8x32xi32>
    %39 = arith.select %35, %37, %38 : vector<8x32xi1>, vector<8x32xi32>
    %cst_15 = arith.constant dense<2147483647> : vector<32xi32>
    %40 = vector.multi_reduction <minsi>, %39, %cst_15 [0] : vector<8x32xi32> to vector<32xi32>
    %41 = vector.shape_cast %40 : vector<32xi32> to vector<1x32xi32>
    %c0_16 = arith.constant 0 : index
    %c0_17 = arith.constant 0 : index
    %42 = vector.load %arg7[%c0_16, %c0_17] : memref<1x32xf32, #tpu.memory_space<vmem>>, vector<1x32xf32>
    %43 = arith.cmpf olt, %33, %42 : vector<1x32xf32>
    %c0_18 = arith.constant 0 : index
    %c0_19 = arith.constant 0 : index
    %44 = vector.load %arg8[%c0_18, %c0_19] : memref<1x32xi32, #tpu.memory_space<vmem>>, vector<1x32xi32>
    %45 = arith.select %43, %41, %44 : vector<1x32xi1>, vector<1x32xi32>
    %c0_20 = arith.constant 0 : index
    %c0_21 = arith.constant 0 : index
    %46 = vector.load %arg8[%c0_20, %c0_21] : memref<1x32xi32, #tpu.memory_space<vmem>>, vector<1x32xi32>
    tpu.vector_store %arg8[%c0_20, %c0_21], %45 {strides = array<i32>} : memref<1x32xi32, #tpu.memory_space<vmem>>, vector<1x32xi32>,
    %c0_22 = arith.constant 0 : index
    %c0_23 = arith.constant 0 : index
    %47 = vector.load %arg7[%c0_22, %c0_23] : memref<1x32xf32, #tpu.memory_space<vmem>>, vector<1x32xf32>
    %48 = arith.select %43, %33, %47 : vector<1x32xi1>, vector<1x32xf32>
    %c0_24 = arith.constant 0 : index
    %c0_25 = arith.constant 0 : index
    %49 = vector.load %arg7[%c0_24, %c0_25] : memref<1x32xf32, #tpu.memory_space<vmem>>, vector<1x32xf32>
    tpu.vector_store %arg7[%c0_24, %c0_25], %48 {strides = array<i32>} : memref<1x32xf32, #tpu.memory_space<vmem>>, vector<1x32xf32>,
    %c0_i32_26 = arith.constant 0 : i32
    %50 = arith.cmpi eq, %arg2, %c0_i32_26 : i32
    %51 = arith.extui %50 : i1 to i32
    %c0_i32_27 = arith.constant 0 : i32
    %52 = arith.cmpi ne, %51, %c0_i32_27 : i32
    scf.if %52 {
      %c0_28 = arith.constant 0 : index
      %c0_29 = arith.constant 0 : index
      %53 = vector.load %arg8[%c0_28, %c0_29] : memref<1x32xi32, #tpu.memory_space<vmem>>, vector<1x32xi32>
      %c0_30 = arith.constant 0 : index
      %c0_31 = arith.constant 0 : index
      %c0_32 = arith.constant 0 : index
      %54 = vector.load %arg6[%c0_30, %c0_31, %c0_32] : memref<1x1x32xi32, #tpu.memory_space<vmem>>, vector<1x1x32xi32>
      %55 = vector.shape_cast %54 : vector<1x1x32xi32> to vector<1x32xi32>
      %56 = vector.shape_cast %53 : vector<1x32xi32> to vector<1x1x32xi32>
      tpu.vector_store %arg6[%c0_30, %c0_31, %c0_32], %56 {strides = array<i32>} : memref<1x1x32xi32, #tpu.memory_space<vmem>>, vector<1x1x32xi32>,
    } else {
    }
    return
  }
  func.func @transform_0(%arg0: i32, %arg1: i32, %arg2: i32) -> (i32, i32, i32) {
    %c0_i32 = arith.constant 0 : i32
    %c0_i32_0 = arith.constant 0 : i32
    return %arg0, %arg2, %c0_i32 : i32, i32, i32
  }
  func.func @transform_1(%arg0: i32, %arg1: i32, %arg2: i32) -> (i32, i32, i32) {
    %c0_i32 = arith.constant 0 : i32
    %c0_i32_0 = arith.constant 0 : i32
    return %arg0, %arg1, %c0_i32 : i32, i32, i32
  }
  func.func @transform_2(%arg0: i32, %arg1: i32, %arg2: i32) -> (i32, i32, i32) {
    %c0_i32 = arith.constant 0 : i32
    %c0_i32_0 = arith.constant 0 : i32
    return %arg0, %c0_i32, %arg1 : i32, i32, i32
  }
  func.func @transform_3(%arg0: i32, %arg1: i32, %arg2: i32) -> (i32, i32, i32) {
    %c0_i32 = arith.constant 0 : i32
    %c0_i32_0 = arith.constant 0 : i32
    return %arg0, %arg1, %c0_i32 : i32, i32, i32
  }
}

module attributes {stable_mosaic.version = 11 : i64} {
  func.func @_mm_bias_kernel(%arg0: i32, %arg1: memref<8x64xbf16, #tpu.memory_space<vmem>>, %arg2: memref<64x128xbf16, #tpu.memory_space<vmem>>, %arg3: memref<1x128xf32, #tpu.memory_space<vmem>>, %arg4: memref<8x128xf32, #tpu.memory_space<vmem>>) attributes {dimension_semantics = [#tpu.dimension_semantics<parallel>], iteration_bounds = array<i64: 1>, scalar_prefetch = 0 : i64, scratch_operands = 0 : i64, tpu.core_type = #tpu.core_type<tc>, window_params = [{transform_indices = @transform_0, window_bounds = array<i64: 8, 64>}, {pipeline_mode = #tpu.pipeline_mode<synchronous>, transform_indices = @transform_1, window_bounds = array<i64: 64, 128>}, {pipeline_mode = #tpu.pipeline_mode<synchronous>, transform_indices = @transform_2, window_bounds = array<i64: 1, 128>}, {transform_indices = @transform_3, window_bounds = array<i64: 8, 128>}]} {
    %c0 = arith.constant 0 : index
    %c0_0 = arith.constant 0 : index
    %0 = vector.load %arg1[%c0, %c0_0] : memref<8x64xbf16, #tpu.memory_space<vmem>>, vector<8x64xbf16>
    %c0_1 = arith.constant 0 : index
    %c0_2 = arith.constant 0 : index
    %1 = vector.load %arg2[%c0_1, %c0_2] : memref<64x128xbf16, #tpu.memory_space<vmem>>, vector<64x128xbf16>
    %cst = arith.constant dense<0.000000e+00> : vector<8x128xf32>
    %2 = tpu.matmul %0, %1, %cst {dimension_numbers = #tpu.dot_dimension_numbers<[1], [0], [0], [1], [0, 0, 1, 1], [], []>} : vector<8x64xbf16>, vector<64x128xbf16>, vector<8x128xf32> -> vector<8x128xf32>
    %c0_3 = arith.constant 0 : index
    %c0_4 = arith.constant 0 : index
    %3 = vector.load %arg3[%c0_3, %c0_4] : memref<1x128xf32, #tpu.memory_space<vmem>>, vector<1x128xf32>
    %4 = vector.broadcast %3 : vector<1x128xf32> to vector<8x128xf32>
    %5 = arith.addf %2, %4 : vector<8x128xf32>
    %c0_5 = arith.constant 0 : index
    %c0_6 = arith.constant 0 : index
    %6 = vector.load %arg4[%c0_5, %c0_6] : memref<8x128xf32, #tpu.memory_space<vmem>>, vector<8x128xf32>
    tpu.vector_store %arg4[%c0_5, %c0_6], %5 {strides = array<i32>} : memref<8x128xf32, #tpu.memory_space<vmem>>, vector<8x128xf32>,
    return
  }
  func.func @transform_0(%arg0: i32) -> (i32, i32) {
    %c0_i32 = arith.constant 0 : i32
    %c0_i32_0 = arith.constant 0 : i32
    return %arg0, %c0_i32 : i32, i32
  }
  func.func @transform_1(%arg0: i32) -> (i32, i32) {
    %c0_i32 = arith.constant 0 : i32
    %c0_i32_0 = arith.constant 0 : i32
    %c0_i32_1 = arith.constant 0 : i32
    return %c0_i32, %c0_i32_0 : i32, i32
  }
  func.func @transform_2(%arg0: i32) -> (i32, i32) {
    %c0_i32 = arith.constant 0 : i32
    %c0_i32_0 = arith.constant 0 : i32
    %c0_i32_1 = arith.constant 0 : i32
    return %c0_i32, %c0_i32_0 : i32, i32
  }
  func.func @transform_3(%arg0: i32) -> (i32, i32) {
    %c0_i32 = arith.constant 0 : i32
    %c0_i32_0 = arith.constant 0 : i32
    return %arg0, %c0_i32 : i32, i32
  }
}

</mosaic_0001>

<llo_original>
// kernel: forward.14
$region0: #{forward.14}
  #allocation0 [shape = 'u32[]', space=smem, size = 0x4, offset = 0x4, fixed_abs, tag = 'smem constant byte address 0x4 - core index']
  #allocation1 [shape = 'u32[72,128]{1,0:T(1,128)}', space=vmem, size = 0x9000, scoped, tag = 'internal scratch']
  %s0 = inlined_call_operand.vmem [shape: bf16[128,49], index: 0, kind: input, shape index: {}]
  %s1 = inlined_call_operand.vmem [shape: bf16[49,64], index: 1, kind: input, shape index: {}]
  %s2 = inlined_call_operand.vmem [shape: f32[1,64], index: 2, kind: input, shape index: {}]
  %s3 = inlined_call_operand.vmem [shape: f32[128,64], index: 3, kind: output, shape index: {}]
  %s4 = sld [smem:[#allocation0]]
  $region22: #{forward.14} parent=0
    _
  %s6 = ssub.s32 1, %s4
  %s7 = scalar_select 0, %s6, %s4
  // Predicated region
  $region2: #{forward.14} parent=0 // pred_check
    _
  $region3: #{forward.14} parent=0 // pred_check_branch
    %9 = sbr.rel (0) target = $region5
  $region4: #{forward.14} parent=0 // pred_region
    _
  $region5: #{forward.14} parent=0 // pred_fallthru
    _
  // Predicated region
  $region6: #{forward.14} parent=0 // pred_check
    _
  $region7: #{forward.14} parent=0 // pred_check_branch
    %11 = sbr.rel (0) target = $region9
  $region8: #{forward.14} parent=0 // pred_region
    _
  $region9: #{forward.14} parent=0 // pred_fallthru
    _
  // Predicated region
  $region10: #{forward.14} parent=0 // pred_check
    _
  $region11: #{forward.14} parent=0 // pred_check_branch
    %13 = sbr.rel (0) target = $region13
  $region12: #{forward.14} parent=0 // pred_region
    _
  $region13: #{forward.14} parent=0 // pred_fallthru
    _
  %v15 = vld [vmem:[%s0] sm:$0xf]
  %v16 = vld [vmem:[%s0 + $0x4] sm:$0xf]
  %v17 = vld [vmem:[%s0 + $0x8] sm:$0xf]
  %v18 = vld [vmem:[%s0 + $0xc] sm:$0xf]
  %v19 = vld [vmem:[%s0 + $0x10] sm:$0xf]
  %v20 = vld [vmem:[%s0 + $0x14] sm:$0xf]
  %v21 = vld [vmem:[%s0 + $0x18] sm:$0xf]
  %v22 = vld [vmem:[%s0 + $0x1c] sm:$0xf]
  %v23 = vld [vmem:[%s0 + $0x20] sm:$0xf]
  %v24 = vld [vmem:[%s0 + $0x24] sm:$0xf]
  %v25 = vld [vmem:[%s0 + $0x28] sm:$0xf]
  %v26 = vld [vmem:[%s0 + $0x2c] sm:$0xf]
  %v27 = vld [vmem:[%s0 + $0x30] sm:$0xf]
  %v28 = vld [vmem:[%s0 + $0x34] sm:$0xf]
  %v29 = vld [vmem:[%s0 + $0x38] sm:$0xf]
  %v30 = vld [vmem:[%s0 + $0x3c] sm:$0xf]
  %v31 = vld [vmem:[%s1] sm:$0xf]
  %v32 = vld [vmem:[%s1 + $0x4] sm:$0xf]
  %v33 = vld [vmem:[%s1 + $0x8] sm:$0xf]
  %v34 = vld [vmem:[%s1 + $0xc] sm:$0xf]
  %v35 = vld [vmem:[%s1 + $0x10] sm:$0xf]
  %v36 = vld [vmem:[%s1 + $0x14] sm:$0xf]
  %v37 = vld [vmem:[%s1 + $0x18] sm:$0x1]
  %v38 = vld [vmem:[%s2] sm:$0x1]
  %v40 = vperm.slane %v38, 0
  %v58 = vunpack.c.l.b16 %v15
  %v59 = vunpack.c.l.b16 %v16
  %v60 = vunpack.c.l.b16 %v17
  %v61 = vunpack.c.l.b16 %v18
  %v62 = vunpack.c.l.b16 %v19
  %v63 = vunpack.c.l.b16 %v20
  %v64 = vunpack.c.l.b16 %v21
  %v65 = vunpack.c.l.b16 %v22
  %v66 = vunpack.c.l.b16 %v23
  %v67 = vunpack.c.l.b16 %v24
  %v68 = vunpack.c.l.b16 %v25
  %v69 = vunpack.c.l.b16 %v26
  %v70 = vunpack.c.l.b16 %v27
  %v71 = vunpack.c.l.b16 %v28
  %v72 = vunpack.c.l.b16 %v29
  %v73 = vunpack.c.l.b16 %v30
  %v74 = vpack.c.b16 %v59, %v58
  %v75 = vpack.c.b16 %v61, %v60
  %v76 = vpack.c.b16 %v63, %v62
  %v77 = vpack.c.b16 %v65, %v64
  %v78 = vpack.c.b16 %v67, %v66
  %v79 = vpack.c.b16 %v69, %v68
  %v80 = vpack.c.b16 %v71, %v70
  %v81 = vpack.c.b16 %v73, %v72
  %v89 = vunpack.c.l.b16 %v31
  %v90 = vunpack.c.l.b16 %v32
  %v91 = vunpack.c.l.b16 %v33
  %v92 = vunpack.c.l.b16 %v34
  %v93 = vunpack.c.l.b16 %v35
  %v94 = vunpack.c.l.b16 %v36
  %v95 = vunpack.c.l.b16 %v37
  %v96 = vpack.c.b16 %v90, %v89
  %v97 = vpack.c.b16 %v92, %v91
  %v98 = vpack.c.b16 %v94, %v93
  %v99 = vpack.c.b16 %v95, %v95
  %vm103 = vcmask 400384
  %v105 = vsel %vm103, %v74, 0
  %v108 = vsel %vm103, %v75, 0
  %v111 = vsel %vm103, %v76, 0
  %v114 = vsel %vm103, %v77, 0
  %v117 = vsel %vm103, %v78, 0
  %v120 = vsel %vm103, %v79, 0
  %v123 = vsel %vm103, %v80, 0
  %v126 = vsel %vm103, %v81, 0
  %vm128 = vcmask 1040384
  %v129 = vsel 0, 4294967295, 65535
  %v130 = vsel %vm128, %v129, 0
  %v132 = vand.u32 %v99, %v130
  %134 = vmatpush.bf16.msra.mxu0 0
  %135 = vmatpush.bf16.msra.mxu0 0
  %136 = vmatpush.bf16.msra.mxu0 0
  %137 = vmatpush.bf16.msra.mxu0 0
  %138 = vmatpush.bf16.msra.mxu0 %v132
  %139 = vmatpush.bf16.msra.mxu0 %v98
  %140 = vmatpush.bf16.msra.mxu0 %v97
  %141 = vmatpush.bf16.msra.mxu0 %v96
  %142 = vmatmul.bf16.gmra.mxu0 %v105
  %v143 = vpop.f32.mrf.mxu0
  %v144 = vadd.f32 %v40, %v143
  %v145 = vpop.f32.mrf.mxu0
  %v146 = vadd.f32 %v40, %v145
  %147 = vmatmul.bf16.gmra.mxu0 %v108
  %v148 = vpop.f32.mrf.mxu0
  %v149 = vadd.f32 %v40, %v148
  %v150 = vpop.f32.mrf.mxu0
  %v151 = vadd.f32 %v40, %v150
  %152 = vmatmul.bf16.gmra.mxu0 %v111
  %v153 = vpop.f32.mrf.mxu0
  %v154 = vadd.f32 %v40, %v153
  %v155 = vpop.f32.mrf.mxu0
  %v156 = vadd.f32 %v40, %v155
  %157 = vmatmul.bf16.gmra.mxu0 %v114
  %v158 = vpop.f32.mrf.mxu0
  %v159 = vadd.f32 %v40, %v158
  %v160 = vpop.f32.mrf.mxu0
  %v161 = vadd.f32 %v40, %v160
  %162 = vmatmul.bf16.gmra.mxu0 %v117
  %v163 = vpop.f32.mrf.mxu0
  %v164 = vadd.f32 %v40, %v163
  %v165 = vpop.f32.mrf.mxu0
  %v166 = vadd.f32 %v40, %v165
  %167 = vmatmul.bf16.gmra.mxu0 %v120
  %v168 = vpop.f32.mrf.mxu0
  %v169 = vadd.f32 %v40, %v168
  %v170 = vpop.f32.mrf.mxu0
  %v171 = vadd.f32 %v40, %v170
  %172 = vmatmul.bf16.gmra.mxu0 %v123
  %v173 = vpop.f32.mrf.mxu0
  %v174 = vadd.f32 %v40, %v173
  %v175 = vpop.f32.mrf.mxu0
  %v176 = vadd.f32 %v40, %v175
  %177 = vmatmul.bf16.gmra.mxu0 %v126
  %v178 = vpop.f32.mrf.mxu0
  %v179 = vadd.f32 %v40, %v178
  %v180 = vpop.f32.mrf.mxu0
  %v181 = vadd.f32 %v40, %v180
  %182 = vdwg.mxu0
  %vm183 = vcmask 523264
  %184 = vst.msk [vmem:[%s3] sm:$0xff] %vm183, %v144
  %185 = vst.msk [vmem:[%s3 + $0x8] sm:$0xff] %vm183, %v146
  %186 = vst.msk [vmem:[%s3 + $0x10] sm:$0xff] %vm183, %v149
  %187 = vst.msk [vmem:[%s3 + $0x18] sm:$0xff] %vm183, %v151
  %188 = vst.msk [vmem:[%s3 + $0x20] sm:$0xff] %vm183, %v154
  %189 = vst.msk [vmem:[%s3 + $0x28] sm:$0xff] %vm183, %v156
  %190 = vst.msk [vmem:[%s3 + $0x30] sm:$0xff] %vm183, %v159
  %191 = vst.msk [vmem:[%s3 + $0x38] sm:$0xff] %vm183, %v161
  %192 = vst.msk [vmem:[%s3 + $0x40] sm:$0xff] %vm183, %v164
  %193 = vst.msk [vmem:[%s3 + $0x48] sm:$0xff] %vm183, %v166
  %194 = vst.msk [vmem:[%s3 + $0x50] sm:$0xff] %vm183, %v169
  %195 = vst.msk [vmem:[%s3 + $0x58] sm:$0xff] %vm183, %v171
  %196 = vst.msk [vmem:[%s3 + $0x60] sm:$0xff] %vm183, %v174
  %197 = vst.msk [vmem:[%s3 + $0x68] sm:$0xff] %vm183, %v176
  %198 = vst.msk [vmem:[%s3 + $0x70] sm:$0xff] %vm183, %v179
  %199 = vst.msk [vmem:[%s3 + $0x78] sm:$0xff] %vm183, %v181
  // Predicated region
  $region14: #{forward.14} parent=0 // pred_check
    _
  $region15: #{forward.14} parent=0 // pred_check_branch
    %201 = sbr.rel (0) target = $region17
  $region16: #{forward.14} parent=0 // pred_region
    _
  $region17: #{forward.14} parent=0 // pred_fallthru
    _
  // Predicated region
  $region18: #{forward.14} parent=0 // pred_check
    _
  $region19: #{forward.14} parent=0 // pred_check_branch
    %203 = sbr.rel (0) target = $region21
  $region20: #{forward.14} parent=0 // pred_region
    _
  $region21: #{forward.14} parent=0 // pred_fallthru
    _

// kernel: forward.16
$region0: #{forward.16}
  #allocation0 [shape = 'u32[]', space=smem, size = 0x4, offset = 0x4, fixed_abs, tag = 'smem constant byte address 0x4 - core index']
  #allocation1 [shape = 'u32[72,128]{1,0:T(1,128)}', space=vmem, size = 0x9000, scoped, tag = 'internal scratch']
  %s0 = inlined_call_operand.vmem [shape: bf16[32,576], index: 0, kind: input, shape index: {}]
  %s1 = inlined_call_operand.vmem [shape: bf16[576,64], index: 1, kind: input, shape index: {}]
  %s2 = inlined_call_operand.vmem [shape: f32[1,64], index: 2, kind: input, shape index: {}]
  %s3 = inlined_call_operand.vmem [shape: f32[32,64], index: 3, kind: output, shape index: {}]
  %s4 = sld [smem:[#allocation0]]
  $region22: #{forward.16} parent=0
    _
  %s6 = ssub.s32 1, %s4
  %s7 = scalar_select 0, %s6, %s4
  // Predicated region
  $region2: #{forward.16} parent=0 // pred_check
    _
  $region3: #{forward.16} parent=0 // pred_check_branch
    %9 = sbr.rel (0) target = $region5
  $region4: #{forward.16} parent=0 // pred_region
    _
  $region5: #{forward.16} parent=0 // pred_fallthru
    _
  // Predicated region
  $region6: #{forward.16} parent=0 // pred_check
    _
  $region7: #{forward.16} parent=0 // pred_check_branch
    %11 = sbr.rel (0) target = $region9
  $region8: #{forward.16} parent=0 // pred_region
    _
  $region9: #{forward.16} parent=0 // pred_fallthru
    _
  // Predicated region
  $region10: #{forward.16} parent=0 // pred_check
    _
  $region11: #{forward.16} parent=0 // pred_check_branch
    %13 = sbr.rel (0) target = $region13
  $region12: #{forward.16} parent=0 // pred_region
    _
  $region13: #{forward.16} parent=0 // pred_fallthru
    _
  %v15 = vld [vmem:[%s0] sm:$0xff]
  %v16 = vld [vmem:[%s0 + $0x8] sm:$0xff]
  %v17 = vld [vmem:[%s0 + $0x10] sm:$0xf]
  %v18 = vld [vmem:[%s0 + $0x14] sm:$0xff]
  %v19 = vld [vmem:[%s0 + $0x1c] sm:$0xff]
  %v20 = vld [vmem:[%s0 + $0x24] sm:$0xf]
  %v21 = vld [vmem:[%s0 + $0x28] sm:$0xff]
  %v22 = vld [vmem:[%s0 + $0x30] sm:$0xff]
  %v23 = vld [vmem:[%s0 + $0x38] sm:$0xf]
  %v24 = vld [vmem:[%s0 + $0x3c] sm:$0xff]
  %v25 = vld [vmem:[%s0 + $0x44] sm:$0xff]
  %v26 = vld [vmem:[%s0 + $0x4c] sm:$0xf]
  %v27 = vld [vmem:[%s1] sm:$0xf]
  %v28 = vld [vmem:[%s1 + $0x4] sm:$0xf]
  %v29 = vld [vmem:[%s1 + $0x8] sm:$0xf]
  %v30 = vld [vmem:[%s1 + $0xc] sm:$0xf]
  %v31 = vld [vmem:[%s1 + $0x10] sm:$0xf]
  %v32 = vld [vmem:[%s1 + $0x14] sm:$0xf]
  %v33 = vld [vmem:[%s1 + $0x18] sm:$0xf]
  %v34 = vld [vmem:[%s1 + $0x1c] sm:$0xf]
  %v35 = vld [vmem:[%s1 + $0x20] sm:$0xf]
  %v36 = vld [vmem:[%s1 + $0x24] sm:$0xf]
  %v37 = vld [vmem:[%s1 + $0x28] sm:$0xf]
  %v38 = vld [vmem:[%s1 + $0x2c] sm:$0xf]
  %v39 = vld [vmem:[%s1 + $0x30] sm:$0xf]
  %v40 = vld [vmem:[%s1 + $0x34] sm:$0xf]
  %v41 = vld [vmem:[%s1 + $0x38] sm:$0xf]
  %v42 = vld [vmem:[%s1 + $0x3c] sm:$0xf]
  %v43 = vld [vmem:[%s1 + $0x40] sm:$0xf]
  %v44 = vld [vmem:[%s1 + $0x44] sm:$0xf]
  %v45 = vld [vmem:[%s1 + $0x48] sm:$0xf]
  %v46 = vld [vmem:[%s1 + $0x4c] sm:$0xf]
  %v47 = vld [vmem:[%s1 + $0x50] sm:$0xf]
  %v48 = vld [vmem:[%s1 + $0x54] sm:$0xf]
  %v49 = vld [vmem:[%s1 + $0x58] sm:$0xf]
  %v50 = vld [vmem:[%s1 + $0x5c] sm:$0xf]
  %v51 = vld [vmem:[%s1 + $0x60] sm:$0xf]
  %v52 = vld [vmem:[%s1 + $0x64] sm:$0xf]
  %v53 = vld [vmem:[%s1 + $0x68] sm:$0xf]
  %v54 = vld [vmem:[%s1 + $0x6c] sm:$0xf]
  %v55 = vld [vmem:[%s1 + $0x70] sm:$0xf]
  %v56 = vld [vmem:[%s1 + $0x74] sm:$0xf]
  %v57 = vld [vmem:[%s1 + $0x78] sm:$0xf]
  %v58 = vld [vmem:[%s1 + $0x7c] sm:$0xf]
  %v59 = vld [vmem:[%s1 + $0x80] sm:$0xf]
  %v60 = vld [vmem:[%s1 + $0x84] sm:$0xf]
  %v61 = vld [vmem:[%s1 + $0x88] sm:$0xf]
  %v62 = vld [vmem:[%s1 + $0x8c] sm:$0xf]
  %v63 = vld [vmem:[%s1 + $0x90] sm:$0xf]
  %v64 = vld [vmem:[%s1 + $0x94] sm:$0xf]
  %v65 = vld [vmem:[%s1 + $0x98] sm:$0xf]
  %v66 = vld [vmem:[%s1 + $0x9c] sm:$0xf]
  %v67 = vld [vmem:[%s1 + $0xa0] sm:$0xf]
  %v68 = vld [vmem:[%s1 + $0xa4] sm:$0xf]
  %v69 = vld [vmem:[%s1 + $0xa8] sm:$0xf]
  %v70 = vld [vmem:[%s1 + $0xac] sm:$0xf]
  %v71 = vld [vmem:[%s1 + $0xb0] sm:$0xf]
  %v72 = vld [vmem:[%s1 + $0xb4] sm:$0xf]
  %v73 = vld [vmem:[%s1 + $0xb8] sm:$0xf]
  %v74 = vld [vmem:[%s1 + $0xbc] sm:$0xf]
  %v75 = vld [vmem:[%s1 + $0xc0] sm:$0xf]
  %v76 = vld [vmem:[%s1 + $0xc4] sm:$0xf]
  %v77 = vld [vmem:[%s1 + $0xc8] sm:$0xf]
  %v78 = vld [vmem:[%s1 + $0xcc] sm:$0xf]
  %v79 = vld [vmem:[%s1 + $0xd0] sm:$0xf]
  %v80 = vld [vmem:[%s1 + $0xd4] sm:$0xf]
  %v81 = vld [vmem:[%s1 + $0xd8] sm:$0xf]
  %v82 = vld [vmem:[%s1 + $0xdc] sm:$0xf]
  %v83 = vld [vmem:[%s1 + $0xe0] sm:$0xf]
  %v84 = vld [vmem:[%s1 + $0xe4] sm:$0xf]
  %v85 = vld [vmem:[%s1 + $0xe8] sm:$0xf]
  %v86 = vld [vmem:[%s1 + $0xec] sm:$0xf]
  %v87 = vld [vmem:[%s1 + $0xf0] sm:$0xf]
  %v88 = vld [vmem:[%s1 + $0xf4] sm:$0xf]
  %v89 = vld [vmem:[%s1 + $0xf8] sm:$0xf]
  %v90 = vld [vmem:[%s1 + $0xfc] sm:$0xf]
  %v91 = vld [vmem:[%s1 + $0x100] sm:$0xf]
  %v92 = vld [vmem:[%s1 + $0x104] sm:$0xf]
  %v93 = vld [vmem:[%s1 + $0x108] sm:$0xf]
  %v94 = vld [vmem:[%s1 + $0x10c] sm:$0xf]
  %v95 = vld [vmem:[%s1 + $0x110] sm:$0xf]
  %v96 = vld [vmem:[%s1 + $0x114] sm:$0xf]
  %v97 = vld [vmem:[%s1 + $0x118] sm:$0xf]
  %v98 = vld [vmem:[%s1 + $0x11c] sm:$0xf]
  %v99 = vld [vmem:[%s2] sm:$0x1]
  %v101 = vperm.slane %v99, 0
  %v115 = vunpack.c.l.b16 %v15
  %v116 = vunpack.c.h.b16 %v15
  %v117 = vunpack.c.l.b16 %v16
  %v118 = vunpack.c.h.b16 %v16
  %v119 = vunpack.c.l.b16 %v17
  %v120 = vunpack.c.l.b16 %v18
  %v121 = vunpack.c.h.b16 %v18
  %v122 = vunpack.c.l.b16 %v19
  %v123 = vunpack.c.h.b16 %v19
  %v124 = vunpack.c.l.b16 %v20
  %v125 = vunpack.c.l.b16 %v21
  %v126 = vunpack.c.h.b16 %v21
  %v127 = vunpack.c.l.b16 %v22
  %v128 = vunpack.c.h.b16 %v22
  %v129 = vunpack.c.l.b16 %v23
  %v130 = vunpack.c.l.b16 %v24
  %v131 = vunpack.c.h.b16 %v24
  %v132 = vunpack.c.l.b16 %v25
  %v133 = vunpack.c.h.b16 %v25
  %v134 = vunpack.c.l.b16 %v26
  %v135 = vpack.c.b16 %v120, %v115
  %v136 = vpack.c.b16 %v121, %v116
  %v137 = vpack.c.b16 %v122, %v117
  %v138 = vpack.c.b16 %v123, %v118
  %v139 = vpack.c.b16 %v124, %v119
  %v140 = vpack.c.b16 %v130, %v125
  %v141 = vpack.c.b16 %v131, %v126
  %v142 = vpack.c.b16 %v132, %v127
  %v143 = vpack.c.b16 %v133, %v128
  %v144 = vpack.c.b16 %v134, %v129
  %v225 = vunpack.c.l.b16 %v27
  %v226 = vunpack.c.l.b16 %v28
  %v227 = vunpack.c.l.b16 %v29
  %v228 = vunpack.c.l.b16 %v30
  %v229 = vunpack.c.l.b16 %v31
  %v230 = vunpack.c.l.b16 %v32
  %v231 = vunpack.c.l.b16 %v33
  %v232 = vunpack.c.l.b16 %v34
  %v233 = vunpack.c.l.b16 %v35
  %v234 = vunpack.c.l.b16 %v36
  %v235 = vunpack.c.l.b16 %v37
  %v236 = vunpack.c.l.b16 %v38
  %v237 = vunpack.c.l.b16 %v39
  %v238 = vunpack.c.l.b16 %v40
  %v239 = vunpack.c.l.b16 %v41
  %v240 = vunpack.c.l.b16 %v42
  %v241 = vunpack.c.l.b16 %v43
  %v242 = vunpack.c.l.b16 %v44
  %v243 = vunpack.c.l.b16 %v45
  %v244 = vunpack.c.l.b16 %v46
  %v245 = vunpack.c.l.b16 %v47
  %v246 = vunpack.c.l.b16 %v48
  %v247 = vunpack.c.l.b16 %v49
  %v248 = vunpack.c.l.b16 %v50
  %v249 = vunpack.c.l.b16 %v51
  %v250 = vunpack.c.l.b16 %v52
  %v251 = vunpack.c.l.b16 %v53
  %v252 = vunpack.c.l.b16 %v54
  %v253 = vunpack.c.l.b16 %v55
  %v254 = vunpack.c.l.b16 %v56
  %v255 = vunpack.c.l.b16 %v57
  %v256 = vunpack.c.l.b16 %v58
  %v257 = vunpack.c.l.b16 %v59
  %v258 = vunpack.c.l.b16 %v60
  %v259 = vunpack.c.l.b16 %v61
  %v260 = vunpack.c.l.b16 %v62
  %v261 = vunpack.c.l.b16 %v63
  %v262 = vunpack.c.l.b16 %v64
  %v263 = vunpack.c.l.b16 %v65
  %v264 = vunpack.c.l.b16 %v66
  %v265 = vunpack.c.l.b16 %v67
  %v266 = vunpack.c.l.b16 %v68
  %v267 = vunpack.c.l.b16 %v69
  %v268 = vunpack.c.l.b16 %v70
  %v269 = vunpack.c.l.b16 %v71
  %v270 = vunpack.c.l.b16 %v72
  %v271 = vunpack.c.l.b16 %v73
  %v272 = vunpack.c.l.b16 %v74
  %v273 = vunpack.c.l.b16 %v75
  %v274 = vunpack.c.l.b16 %v76
  %v275 = vunpack.c.l.b16 %v77
  %v276 = vunpack.c.l.b16 %v78
  %v277 = vunpack.c.l.b16 %v79
  %v278 = vunpack.c.l.b16 %v80
  %v279 = vunpack.c.l.b16 %v81
  %v280 = vunpack.c.l.b16 %v82
  %v281 = vunpack.c.l.b16 %v83
  %v282 = vunpack.c.l.b16 %v84
  %v283 = vunpack.c.l.b16 %v85
  %v284 = vunpack.c.l.b16 %v86
  %v285 = vunpack.c.l.b16 %v87
  %v286 = vunpack.c.l.b16 %v88
  %v287 = vunpack.c.l.b16 %v89
  %v288 = vunpack.c.l.b16 %v90
  %v289 = vunpack.c.l.b16 %v91
  %v290 = vunpack.c.l.b16 %v92
  %v291 = vunpack.c.l.b16 %v93
  %v292 = vunpack.c.l.b16 %v94
  %v293 = vunpack.c.l.b16 %v95
  %v294 = vunpack.c.l.b16 %v96
  %v295 = vunpack.c.l.b16 %v97
  %v296 = vunpack.c.l.b16 %v98
  %v297 = vpack.c.b16 %v226, %v225
  %v298 = vpack.c.b16 %v228, %v227
  %v299 = vpack.c.b16 %v230, %v229
  %v300 = vpack.c.b16 %v232, %v231
  %v301 = vpack.c.b16 %v234, %v233
  %v302 = vpack.c.b16 %v236, %v235
  %v303 = vpack.c.b16 %v238, %v237
  %v304 = vpack.c.b16 %v240, %v239
  %v305 = vpack.c.b16 %v242, %v241
  %v306 = vpack.c.b16 %v244, %v243
  %v307 = vpack.c.b16 %v246, %v245
  %v308 = vpack.c.b16 %v248, %v247
  %v309 = vpack.c.b16 %v250, %v249
  %v310 = vpack.c.b16 %v252, %v251
  %v311 = vpack.c.b16 %v254, %v253
  %v312 = vpack.c.b16 %v256, %v255
  %v313 = vpack.c.b16 %v258, %v257
  %v314 = vpack.c.b16 %v260, %v259
  %v315 = vpack.c.b16 %v262, %v261
  %v316 = vpack.c.b16 %v264, %v263
  %v317 = vpack.c.b16 %v266, %v265
  %v318 = vpack.c.b16 %v268, %v267
  %v319 = vpack.c.b16 %v270, %v269
  %v320 = vpack.c.b16 %v272, %v271
  %v321 = vpack.c.b16 %v274, %v273
  %v322 = vpack.c.b16 %v276, %v275
  %v323 = vpack.c.b16 %v278, %v277
  %v324 = vpack.c.b16 %v280, %v279
  %v325 = vpack.c.b16 %v282, %v281
  %v326 = vpack.c.b16 %v284, %v283
  %v327 = vpack.c.b16 %v286, %v285
  %v328 = vpack.c.b16 %v288, %v287
  %v329 = vpack.c.b16 %v290, %v289
  %v330 = vpack.c.b16 %v292, %v291
  %v331 = vpack.c.b16 %v294, %v293
  %v332 = vpack.c.b16 %v296, %v295
  %vm369 = vcmask 523264
  %v371 = vsel %vm369, %v139, 0
  %v374 = vsel %vm369, %v144, 0
  %376 = vmatpush.bf16.msra.mxu0 %v304
  %377 = vmatpush.bf16.msra.mxu0 %v303
  %378 = vmatpush.bf16.msra.mxu0 %v302
  %379 = vmatpush.bf16.msra.mxu0 %v301
  %380 = vmatpush.bf16.msra.mxu0 %v300
  %381 = vmatpush.bf16.msra.mxu0 %v299
  %382 = vmatpush.bf16.msra.mxu0 %v298
  %383 = vmatpush.bf16.msra.mxu0 %v297
  %384 = vmatmul.bf16.gmra.mxu0 %v135
  %v385 = vpop.f32.mrf.mxu0
  %v386 = vadd.f32 %v101, %v385
  %v387 = vpop.f32.mrf.mxu0
  %v388 = vadd.f32 %v101, %v387
  %389 = vmatmul.bf16.gmra.mxu0 %v140
  %v390 = vpop.f32.mrf.mxu0
  %v391 = vadd.f32 %v101, %v390
  %v392 = vpop.f32.mrf.mxu0
  %v393 = vadd.f32 %v101, %v392
  %394 = vdwg.mxu0
  %395 = vmatpush.bf16.msra.mxu0 %v312
  %396 = vmatpush.bf16.msra.mxu0 %v311
  %397 = vmatpush.bf16.msra.mxu0 %v310
  %398 = vmatpush.bf16.msra.mxu0 %v309
  %399 = vmatpush.bf16.msra.mxu0 %v308
  %400 = vmatpush.bf16.msra.mxu0 %v307
  %401 = vmatpush.bf16.msra.mxu0 %v306
  %402 = vmatpush.bf16.msra.mxu0 %v305
  %403 = vmatmul.bf16.gmra.mxu0 %v136
  %v404 = vpop.f32.mrf.mxu0
  %v405 = vadd.f32 %v386, %v404
  %v406 = vpop.f32.mrf.mxu0
  %v407 = vadd.f32 %v388, %v406
  %408 = vmatmul.bf16.gmra.mxu0 %v141
  %v409 = vpop.f32.mrf.mxu0
  %v410 = vadd.f32 %v391, %v409
  %v411 = vpop.f32.mrf.mxu0
  %v412 = vadd.f32 %v393, %v411
  %413 = vdwg.mxu0
  %414 = vmatpush.bf16.msra.mxu0 %v320
  %415 = vmatpush.bf16.msra.mxu0 %v319
  %416 = vmatpush.bf16.msra.mxu0 %v318
  %417 = vmatpush.bf16.msra.mxu0 %v317
  %418 = vmatpush.bf16.msra.mxu0 %v316
  %419 = vmatpush.bf16.msra.mxu0 %v315
  %420 = vmatpush.bf16.msra.mxu0 %v314
  %421 = vmatpush.bf16.msra.mxu0 %v313
  %422 = vmatmul.bf16.gmra.mxu0 %v137
  %v423 = vpop.f32.mrf.mxu0
  %v424 = vadd.f32 %v405, %v423
  %v425 = vpop.f32.mrf.mxu0
  %v426 = vadd.f32 %v407, %v425
  %427 = vmatmul.bf16.gmra.mxu0 %v142
  %v428 = vpop.f32.mrf.mxu0
  %v429 = vadd.f32 %v410, %v428
  %v430 = vpop.f32.mrf.mxu0
  %v431 = vadd.f32 %v412, %v430
  %432 = vdwg.mxu0
  %433 = vmatpush.bf16.msra.mxu0 %v328
  %434 = vmatpush.bf16.msra.mxu0 %v327
  %435 = vmatpush.bf16.msra.mxu0 %v326
  %436 = vmatpush.bf16.msra.mxu0 %v325
  %437 = vmatpush.bf16.msra.mxu0 %v324
  %438 = vmatpush.bf16.msra.mxu0 %v323
  %439 = vmatpush.bf16.msra.mxu0 %v322
  %440 = vmatpush.bf16.msra.mxu0 %v321
  %441 = vmatmul.bf16.gmra.mxu0 %v138
  %v442 = vpop.f32.mrf.mxu0
  %v443 = vadd.f32 %v424, %v442
  %v444 = vpop.f32.mrf.mxu0
  %v445 = vadd.f32 %v426, %v444
  %446 = vmatmul.bf16.gmra.mxu0 %v143
  %v447 = vpop.f32.mrf.mxu0
  %v448 = vadd.f32 %v429, %v447
  %v449 = vpop.f32.mrf.mxu0
  %v450 = vadd.f32 %v431, %v449
  %451 = vdwg.mxu0
  %452 = vmatpush.bf16.msra.mxu0 0
  %453 = vmatpush.bf16.msra.mxu0 0
  %454 = vmatpush.bf16.msra.mxu0 0
  %455 = vmatpush.bf16.msra.mxu0 0
  %456 = vmatpush.bf16.msra.mxu0 %v332
  %457 = vmatpush.bf16.msra.mxu0 %v331
  %458 = vmatpush.bf16.msra.mxu0 %v330
  %459 = vmatpush.bf16.msra.mxu0 %v329
  %460 = vmatmul.bf16.gmra.mxu0 %v371
  %v461 = vpop.f32.mrf.mxu0
  %v462 = vadd.f32 %v443, %v461
  %v463 = vpop.f32.mrf.mxu0
  %v464 = vadd.f32 %v445, %v463
  %465 = vmatmul.bf16.gmra.mxu0 %v374
  %v466 = vpop.f32.mrf.mxu0
  %v467 = vadd.f32 %v448, %v466
  %v468 = vpop.f32.mrf.mxu0
  %v469 = vadd.f32 %v450, %v468
  %470 = vdwg.mxu0
  %471 = vst.msk [vmem:[%s3] sm:$0xff] %vm369, %v462
  %472 = vst.msk [vmem:[%s3 + $0x8] sm:$0xff] %vm369, %v464
  %473 = vst.msk [vmem:[%s3 + $0x10] sm:$0xff] %vm369, %v467
  %474 = vst.msk [vmem:[%s3 + $0x18] sm:$0xff] %vm369, %v469
  // Predicated region
  $region14: #{forward.16} parent=0 // pred_check
    _
  $region15: #{forward.16} parent=0 // pred_check_branch
    %476 = sbr.rel (0) target = $region17
  $region16: #{forward.16} parent=0 // pred_region
    _
  $region17: #{forward.16} parent=0 // pred_fallthru
    _
  // Predicated region
  $region18: #{forward.16} parent=0 // pred_check
    _
  $region19: #{forward.16} parent=0 // pred_check_branch
    %478 = sbr.rel (0) target = $region21
  $region20: #{forward.16} parent=0 // pred_region
    _
  $region21: #{forward.16} parent=0 // pred_fallthru
    _

// kernel: forward.15
$region0: #{forward.15}
  #allocation0 [shape = 'u32[]', space=smem, size = 0x4, offset = 0x4, fixed_abs, tag = 'smem constant byte address 0x4 - core index']
  #allocation1 [shape = 'u32[72,128]{1,0:T(1,128)}', space=vmem, size = 0x9000, scoped, tag = 'internal scratch']
  %s0 = inlined_call_operand.vmem [shape: bf16[128,64], index: 0, kind: input, shape index: {}]
  %s1 = inlined_call_operand.vmem [shape: bf16[64,64], index: 1, kind: input, shape index: {}]
  %s2 = inlined_call_operand.vmem [shape: f32[128,64], index: 2, kind: output, shape index: {}]
  %s3 = sld [smem:[#allocation0]]
  $region18: #{forward.15} parent=0
    _
  %s5 = ssub.s32 1, %s3
  %s6 = scalar_select 0, %s5, %s3
  // Predicated region
  $region2: #{forward.15} parent=0 // pred_check
    _
  $region3: #{forward.15} parent=0 // pred_check_branch
    %8 = sbr.rel (0) target = $region5
  $region4: #{forward.15} parent=0 // pred_region
    _
  $region5: #{forward.15} parent=0 // pred_fallthru
    _
  // Predicated region
  $region6: #{forward.15} parent=0 // pred_check
    _
  $region7: #{forward.15} parent=0 // pred_check_branch
    %10 = sbr.rel (0) target = $region9
  $region8: #{forward.15} parent=0 // pred_region
    _
  $region9: #{forward.15} parent=0 // pred_fallthru
    _
  %v12 = vld [vmem:[%s0] sm:$0xf]
  %v13 = vld [vmem:[%s0 + $0x4] sm:$0xf]
  %v14 = vld [vmem:[%s0 + $0x8] sm:$0xf]
  %v15 = vld [vmem:[%s0 + $0xc] sm:$0xf]
  %v16 = vld [vmem:[%s0 + $0x10] sm:$0xf]
  %v17 = vld [vmem:[%s0 + $0x14] sm:$0xf]
  %v18 = vld [vmem:[%s0 + $0x18] sm:$0xf]
  %v19 = vld [vmem:[%s0 + $0x1c] sm:$0xf]
  %v20 = vld [vmem:[%s0 + $0x20] sm:$0xf]
  %v21 = vld [vmem:[%s0 + $0x24] sm:$0xf]
  %v22 = vld [vmem:[%s0 + $0x28] sm:$0xf]
  %v23 = vld [vmem:[%s0 + $0x2c] sm:$0xf]
  %v24 = vld [vmem:[%s0 + $0x30] sm:$0xf]
  %v25 = vld [vmem:[%s0 + $0x34] sm:$0xf]
  %v26 = vld [vmem:[%s0 + $0x38] sm:$0xf]
  %v27 = vld [vmem:[%s0 + $0x3c] sm:$0xf]
  %v28 = vld [vmem:[%s1] sm:$0xf]
  %v29 = vld [vmem:[%s1 + $0x4] sm:$0xf]
  %v30 = vld [vmem:[%s1 + $0x8] sm:$0xf]
  %v31 = vld [vmem:[%s1 + $0xc] sm:$0xf]
  %v32 = vld [vmem:[%s1 + $0x10] sm:$0xf]
  %v33 = vld [vmem:[%s1 + $0x14] sm:$0xf]
  %v34 = vld [vmem:[%s1 + $0x18] sm:$0xf]
  %v35 = vld [vmem:[%s1 + $0x1c] sm:$0xf]
  %v52 = vunpack.c.l.b16 %v12
  %v53 = vunpack.c.l.b16 %v13
  %v54 = vunpack.c.l.b16 %v14
  %v55 = vunpack.c.l.b16 %v15
  %v56 = vunpack.c.l.b16 %v16
  %v57 = vunpack.c.l.b16 %v17
  %v58 = vunpack.c.l.b16 %v18
  %v59 = vunpack.c.l.b16 %v19
  %v60 = vunpack.c.l.b16 %v20
  %v61 = vunpack.c.l.b16 %v21
  %v62 = vunpack.c.l.b16 %v22
  %v63 = vunpack.c.l.b16 %v23
  %v64 = vunpack.c.l.b16 %v24
  %v65 = vunpack.c.l.b16 %v25
  %v66 = vunpack.c.l.b16 %v26
  %v67 = vunpack.c.l.b16 %v27
  %v68 = vpack.c.b16 %v53, %v52
  %v69 = vpack.c.b16 %v55, %v54
  %v70 = vpack.c.b16 %v57, %v56
  %v71 = vpack.c.b16 %v59, %v58
  %v72 = vpack.c.b16 %v61, %v60
  %v73 = vpack.c.b16 %v63, %v62
  %v74 = vpack.c.b16 %v65, %v64
  %v75 = vpack.c.b16 %v67, %v66
  %v84 = vunpack.c.l.b16 %v28
  %v85 = vunpack.c.l.b16 %v29
  %v86 = vunpack.c.l.b16 %v30
  %v87 = vunpack.c.l.b16 %v31
  %v88 = vunpack.c.l.b16 %v32
  %v89 = vunpack.c.l.b16 %v33
  %v90 = vunpack.c.l.b16 %v34
  %v91 = vunpack.c.l.b16 %v35
  %v92 = vpack.c.b16 %v85, %v84
  %v93 = vpack.c.b16 %v87, %v86
  %v94 = vpack.c.b16 %v89, %v88
  %v95 = vpack.c.b16 %v91, %v90
  %vm100 = vcmask 523264
  %v102 = vsel %vm100, %v68, 0
  %v105 = vsel %vm100, %v69, 0
  %v108 = vsel %vm100, %v70, 0
  %v111 = vsel %vm100, %v71, 0
  %v114 = vsel %vm100, %v72, 0
  %v117 = vsel %vm100, %v73, 0
  %v120 = vsel %vm100, %v74, 0
  %v123 = vsel %vm100, %v75, 0
  %125 = vmatpush.bf16.msra.mxu0 0
  %126 = vmatpush.bf16.msra.mxu0 0
  %127 = vmatpush.bf16.msra.mxu0 0
  %128 = vmatpush.bf16.msra.mxu0 0
  %129 = vmatpush.bf16.msra.mxu0 %v95
  %130 = vmatpush.bf16.msra.mxu0 %v94
  %131 = vmatpush.bf16.msra.mxu0 %v93
  %132 = vmatpush.bf16.msra.mxu0 %v92
  %133 = vmatmul.bf16.gmra.mxu0 %v102
  %v134 = vpop.f32.mrf.mxu0
  %v135 = vadd.f32 0.0, %v134
  %v136 = vpop.f32.mrf.mxu0
  %v137 = vadd.f32 0.0, %v136
  %138 = vmatmul.bf16.gmra.mxu0 %v105
  %v139 = vpop.f32.mrf.mxu0
  %v140 = vadd.f32 0.0, %v139
  %v141 = vpop.f32.mrf.mxu0
  %v142 = vadd.f32 0.0, %v141
  %143 = vmatmul.bf16.gmra.mxu0 %v108
  %v144 = vpop.f32.mrf.mxu0
  %v145 = vadd.f32 0.0, %v144
  %v146 = vpop.f32.mrf.mxu0
  %v147 = vadd.f32 0.0, %v146
  %148 = vmatmul.bf16.gmra.mxu0 %v111
  %v149 = vpop.f32.mrf.mxu0
  %v150 = vadd.f32 0.0, %v149
  %v151 = vpop.f32.mrf.mxu0
  %v152 = vadd.f32 0.0, %v151
  %153 = vmatmul.bf16.gmra.mxu0 %v114
  %v154 = vpop.f32.mrf.mxu0
  %v155 = vadd.f32 0.0, %v154
  %v156 = vpop.f32.mrf.mxu0
  %v157 = vadd.f32 0.0, %v156
  %158 = vmatmul.bf16.gmra.mxu0 %v117
  %v159 = vpop.f32.mrf.mxu0
  %v160 = vadd.f32 0.0, %v159
  %v161 = vpop.f32.mrf.mxu0
  %v162 = vadd.f32 0.0, %v161
  %163 = vmatmul.bf16.gmra.mxu0 %v120
  %v164 = vpop.f32.mrf.mxu0
  %v165 = vadd.f32 0.0, %v164
  %v166 = vpop.f32.mrf.mxu0
  %v167 = vadd.f32 0.0, %v166
  %168 = vmatmul.bf16.gmra.mxu0 %v123
  %v169 = vpop.f32.mrf.mxu0
  %v170 = vadd.f32 0.0, %v169
  %v171 = vpop.f32.mrf.mxu0
  %v172 = vadd.f32 0.0, %v171
  %173 = vdwg.mxu0
  %174 = vst.msk [vmem:[%s2] sm:$0xff] %vm100, %v135
  %175 = vst.msk [vmem:[%s2 + $0x8] sm:$0xff] %vm100, %v137
  %176 = vst.msk [vmem:[%s2 + $0x10] sm:$0xff] %vm100, %v140
  %177 = vst.msk [vmem:[%s2 + $0x18] sm:$0xff] %vm100, %v142
  %178 = vst.msk [vmem:[%s2 + $0x20] sm:$0xff] %vm100, %v145
  %179 = vst.msk [vmem:[%s2 + $0x28] sm:$0xff] %vm100, %v147
  %180 = vst.msk [vmem:[%s2 + $0x30] sm:$0xff] %vm100, %v150
  %181 = vst.msk [vmem:[%s2 + $0x38] sm:$0xff] %vm100, %v152
  %182 = vst.msk [vmem:[%s2 + $0x40] sm:$0xff] %vm100, %v155
  %183 = vst.msk [vmem:[%s2 + $0x48] sm:$0xff] %vm100, %v157
  %184 = vst.msk [vmem:[%s2 + $0x50] sm:$0xff] %vm100, %v160
  %185 = vst.msk [vmem:[%s2 + $0x58] sm:$0xff] %vm100, %v162
  %186 = vst.msk [vmem:[%s2 + $0x60] sm:$0xff] %vm100, %v165
  %187 = vst.msk [vmem:[%s2 + $0x68] sm:$0xff] %vm100, %v167
  %188 = vst.msk [vmem:[%s2 + $0x70] sm:$0xff] %vm100, %v170
  %189 = vst.msk [vmem:[%s2 + $0x78] sm:$0xff] %vm100, %v172
  // Predicated region
  $region10: #{forward.15} parent=0 // pred_check
    _
  $region11: #{forward.15} parent=0 // pred_check_branch
    %191 = sbr.rel (0) target = $region13
  $region12: #{forward.15} parent=0 // pred_region
    _
  $region13: #{forward.15} parent=0 // pred_fallthru
    _
  // Predicated region
  $region14: #{forward.15} parent=0 // pred_check
    _
  $region15: #{forward.15} parent=0 // pred_check_branch
    %193 = sbr.rel (0) target = $region17
  $region16: #{forward.15} parent=0 // pred_region
    _
  $region17: #{forward.15} parent=0 // pred_fallthru
    _

// kernel: forward.17
$region0: #{forward.17}
  #allocation0 [shape = 'u32[]', space=smem, size = 0x4, offset = 0x4, fixed_abs, tag = 'smem constant byte address 0x4 - core index']
  #allocation1 [shape = 'u32[72,128]{1,0:T(1,128)}', space=vmem, size = 0x9000, scoped, tag = 'internal scratch']
  #allocation2 [shape = 'f32[1,1]{1,0:T(1,128)S(1)}', space=vmem, size = 0x200, scoped, tag = 'scoped memory for forward.17']
  %s0 = inlined_call_operand.vmem [shape: f32[128,64], index: 0, kind: input, shape index: {}]
  %s1 = inlined_call_operand.vmem [shape: f32[1,64], index: 1, kind: input, shape index: {}]
  %s2 = inlined_call_operand.vmem [shape: f32[1,64], index: 2, kind: input, shape index: {}]
  %s3 = inlined_call_operand.vmem [shape: f32[1,64], index: 3, kind: input, shape index: {}]
  %s4 = inlined_call_operand.<no memory space> [shape: f32[1,1], index: 4, kind: input, shape index: {}]
  %s5 = inlined_call_operand.vmem [shape: f32[128,64], index: 5, kind: output, shape index: {0}]
  %s6 = inlined_call_operand.vmem [shape: f32[128,1], index: 6, kind: output, shape index: {1}]
  %7 = xla_tuple %s5, %s6
  %s8 = sld [smem:[#allocation0]]
  $region38: #{forward.17} parent=0
    _
  %s10 = ssub.s32 1, %s8
  %s11 = scalar_select 0, %s10, %s8
  %v12 = vstv %s4
  %13 = vst [vmem:[#allocation2] sm:$0x1] %v12
  // Predicated region
  $region2: #{forward.17} parent=0 // pred_check
    _
  $region3: #{forward.17} parent=0 // pred_check_branch
    %15 = sbr.rel (0) target = $region5
  $region4: #{forward.17} parent=0 // pred_region
    _
  $region5: #{forward.17} parent=0 // pred_fallthru
    _
  // Predicated region
  $region6: #{forward.17} parent=0 // pred_check
    _
  $region7: #{forward.17} parent=0 // pred_check_branch
    %17 = sbr.rel (0) target = $region9
  $region8: #{forward.17} parent=0 // pred_region
    _
  $region9: #{forward.17} parent=0 // pred_fallthru
    _
  // Predicated region
  $region10: #{forward.17} parent=0 // pred_check
    _
  $region11: #{forward.17} parent=0 // pred_check_branch
    %19 = sbr.rel (0) target = $region13
  $region12: #{forward.17} parent=0 // pred_region
    _
  $region13: #{forward.17} parent=0 // pred_fallthru
    _
  // Predicated region
  $region14: #{forward.17} parent=0 // pred_check
    _
  $region15: #{forward.17} parent=0 // pred_check_branch
    %21 = sbr.rel (0) target = $region17
  $region16: #{forward.17} parent=0 // pred_region
    _
  $region17: #{forward.17} parent=0 // pred_fallthru
    _
  // Predicated region
  $region18: #{forward.17} parent=0 // pred_check
    _
  $region19: #{forward.17} parent=0 // pred_check_branch
    %23 = sbr.rel (0) target = $region21
  $region20: #{forward.17} parent=0 // pred_region
    _
  $region21: #{forward.17} parent=0 // pred_fallthru
    _
  %v24 = vld [vmem:[%s0] sm:$0xff]
  %v25 = vld [vmem:[%s0 + $0x8] sm:$0xff]
  %v26 = vld [vmem:[%s0 + $0x10] sm:$0xff]
  %v27 = vld [vmem:[%s0 + $0x18] sm:$0xff]
  %v28 = vld [vmem:[%s0 + $0x20] sm:$0xff]
  %v29 = vld [vmem:[%s0 + $0x28] sm:$0xff]
  %v30 = vld [vmem:[%s0 + $0x30] sm:$0xff]
  %v31 = vld [vmem:[%s0 + $0x38] sm:$0xff]
  %v32 = vld [vmem:[%s0 + $0x40] sm:$0xff]
  %v33 = vld [vmem:[%s0 + $0x48] sm:$0xff]
  %v34 = vld [vmem:[%s0 + $0x50] sm:$0xff]
  %v35 = vld [vmem:[%s0 + $0x58] sm:$0xff]
  %v36 = vld [vmem:[%s0 + $0x60] sm:$0xff]
  %v37 = vld [vmem:[%s0 + $0x68] sm:$0xff]
  %v38 = vld [vmem:[%s0 + $0x70] sm:$0xff]
  %v39 = vld [vmem:[%s0 + $0x78] sm:$0xff]
  %vm40 = vcmask 523264
  %v41 = vsel %vm40, %v24, 0.0
  %42 = vadd.xlane.f32.xlu0 %v41
  %v43 = vpop.xlane.xlu0 %42
  %v44 = vsel %vm40, %v25, 0.0
  %45 = vadd.xlane.f32.xlu0 %v44
  %v46 = vpop.xlane.xlu0 %45
  %v47 = vsel %vm40, %v26, 0.0
  %48 = vadd.xlane.f32.xlu0 %v47
  %v49 = vpop.xlane.xlu0 %48
  %v50 = vsel %vm40, %v27, 0.0
  %51 = vadd.xlane.f32.xlu0 %v50
  %v52 = vpop.xlane.xlu0 %51
  %v53 = vsel %vm40, %v28, 0.0
  %54 = vadd.xlane.f32.xlu0 %v53
  %v55 = vpop.xlane.xlu0 %54
  %v56 = vsel %vm40, %v29, 0.0
  %57 = vadd.xlane.f32.xlu0 %v56
  %v58 = vpop.xlane.xlu0 %57
  %v59 = vsel %vm40, %v30, 0.0
  %60 = vadd.xlane.f32.xlu0 %v59
  %v61 = vpop.xlane.xlu0 %60
  %v62 = vsel %vm40, %v31, 0.0
  %63 = vadd.xlane.f32.xlu0 %v62
  %v64 = vpop.xlane.xlu0 %63
  %v65 = vsel %vm40, %v32, 0.0
  %66 = vadd.xlane.f32.xlu0 %v65
  %v67 = vpop.xlane.xlu0 %66
  %v68 = vsel %vm40, %v33, 0.0
  %69 = vadd.xlane.f32.xlu0 %v68
  %v70 = vpop.xlane.xlu0 %69
  %v71 = vsel %vm40, %v34, 0.0
  %72 = vadd.xlane.f32.xlu0 %v71
  %v73 = vpop.xlane.xlu0 %72
  %v74 = vsel %vm40, %v35, 0.0
  %75 = vadd.xlane.f32.xlu0 %v74
  %v76 = vpop.xlane.xlu0 %75
  %v77 = vsel %vm40, %v36, 0.0
  %78 = vadd.xlane.f32.xlu0 %v77
  %v79 = vpop.xlane.xlu0 %78
  %v80 = vsel %vm40, %v37, 0.0
  %81 = vadd.xlane.f32.xlu0 %v80
  %v82 = vpop.xlane.xlu0 %81
  %v83 = vsel %vm40, %v38, 0.0
  %84 = vadd.xlane.f32.xlu0 %v83
  %v85 = vpop.xlane.xlu0 %84
  %v86 = vsel %vm40, %v39, 0.0
  %87 = vadd.xlane.f32.xlu0 %v86
  %v88 = vpop.xlane.xlu0 %87
  %v89 = vrcp.pop 64.0
  %v90 = vmul.f32 64.0, %v89
  %v91 = vsub.f32 1.0, %v90
  %v92 = vmul.f32 %v89, %v91
  %v93 = vadd.f32 %v89, %v92
  %vm94 = vweird.f32 %v89
  %v95 = vsel %vm94, %v89, %v93
  %v96 = vmul.f32 %v43, %v95
  %v97 = vmul.f32 %v46, %v95
  %v98 = vmul.f32 %v49, %v95
  %v99 = vmul.f32 %v52, %v95
  %v100 = vmul.f32 %v55, %v95
  %v101 = vmul.f32 %v58, %v95
  %v102 = vmul.f32 %v61, %v95
  %v103 = vmul.f32 %v64, %v95
  %v104 = vmul.f32 %v67, %v95
  %v105 = vmul.f32 %v70, %v95
  %v106 = vmul.f32 %v73, %v95
  %v107 = vmul.f32 %v76, %v95
  %v108 = vmul.f32 %v79, %v95
  %v109 = vmul.f32 %v82, %v95
  %v110 = vmul.f32 %v85, %v95
  %v111 = vmul.f32 %v88, %v95
  %v112 = vsub.f32 %v24, %v96
  %v113 = vsub.f32 %v25, %v97
  %v114 = vsub.f32 %v26, %v98
  %v115 = vsub.f32 %v27, %v99
  %v116 = vsub.f32 %v28, %v100
  %v117 = vsub.f32 %v29, %v101
  %v118 = vsub.f32 %v30, %v102
  %v119 = vsub.f32 %v31, %v103
  %v120 = vsub.f32 %v32, %v104
  %v121 = vsub.f32 %v33, %v105
  %v122 = vsub.f32 %v34, %v106
  %v123 = vsub.f32 %v35, %v107
  %v124 = vsub.f32 %v36, %v108
  %v125 = vsub.f32 %v37, %v109
  %v126 = vsub.f32 %v38, %v110
  %v127 = vsub.f32 %v39, %v111
  %v128 = vmul.f32 %v112, %v112
  %v129 = vmul.f32 %v113, %v113
  %v130 = vmul.f32 %v114, %v114
  %v131 = vmul.f32 %v115, %v115
  %v132 = vmul.f32 %v116, %v116
  %v133 = vmul.f32 %v117, %v117
  %v134 = vmul.f32 %v118, %v118
  %v135 = vmul.f32 %v119, %v119
  %v136 = vmul.f32 %v120, %v120
  %v137 = vmul.f32 %v121, %v121
  %v138 = vmul.f32 %v122, %v122
  %v139 = vmul.f32 %v123, %v123
  %v140 = vmul.f32 %v124, %v124
  %v141 = vmul.f32 %v125, %v125
  %v142 = vmul.f32 %v126, %v126
  %v143 = vmul.f32 %v127, %v127
  %v144 = vsel %vm40, %v128, 0.0
  %145 = vadd.xlane.f32.xlu0 %v144
  %v146 = vpop.xlane.xlu0 %145
  %v147 = vsel %vm40, %v129, 0.0
  %148 = vadd.xlane.f32.xlu0 %v147
  %v149 = vpop.xlane.xlu0 %148
  %v150 = vsel %vm40, %v130, 0.0
  %151 = vadd.xlane.f32.xlu0 %v150
  %v152 = vpop.xlane.xlu0 %151
  %v153 = vsel %vm40, %v131, 0.0
  %154 = vadd.xlane.f32.xlu0 %v153
  %v155 = vpop.xlane.xlu0 %154
  %v156 = vsel %vm40, %v132, 0.0
  %157 = vadd.xlane.f32.xlu0 %v156
  %v158 = vpop.xlane.xlu0 %157
  %v159 = vsel %vm40, %v133, 0.0
  %160 = vadd.xlane.f32.xlu0 %v159
  %v161 = vpop.xlane.xlu0 %160
  %v162 = vsel %vm40, %v134, 0.0
  %163 = vadd.xlane.f32.xlu0 %v162
  %v164 = vpop.xlane.xlu0 %163
  %v165 = vsel %vm40, %v135, 0.0
  %166 = vadd.xlane.f32.xlu0 %v165
  %v167 = vpop.xlane.xlu0 %166
  %v168 = vsel %vm40, %v136, 0.0
  %169 = vadd.xlane.f32.xlu0 %v168
  %v170 = vpop.xlane.xlu0 %169
  %v171 = vsel %vm40, %v137, 0.0
  %172 = vadd.xlane.f32.xlu0 %v171
  %v173 = vpop.xlane.xlu0 %172
  %v174 = vsel %vm40, %v138, 0.0
  %175 = vadd.xlane.f32.xlu0 %v174
  %v176 = vpop.xlane.xlu0 %175
  %v177 = vsel %vm40, %v139, 0.0
  %178 = vadd.xlane.f32.xlu0 %v177
  %v179 = vpop.xlane.xlu0 %178
  %v180 = vsel %vm40, %v140, 0.0
  %181 = vadd.xlane.f32.xlu0 %v180
  %v182 = vpop.xlane.xlu0 %181
  %v183 = vsel %vm40, %v141, 0.0
  %184 = vadd.xlane.f32.xlu0 %v183
  %v185 = vpop.xlane.xlu0 %184
  %v186 = vsel %vm40, %v142, 0.0
  %187 = vadd.xlane.f32.xlu0 %v186
  %v188 = vpop.xlane.xlu0 %187
  %v189 = vsel %vm40, %v143, 0.0
  %190 = vadd.xlane.f32.xlu0 %v189
  %v191 = vpop.xlane.xlu0 %190
  %v192 = vmul.f32 %v146, %v95
  %v193 = vmul.f32 %v149, %v95
  %v194 = vmul.f32 %v152, %v95
  %v195 = vmul.f32 %v155, %v95
  %v196 = vmul.f32 %v158, %v95
  %v197 = vmul.f32 %v161, %v95
  %v198 = vmul.f32 %v164, %v95
  %v199 = vmul.f32 %v167, %v95
  %v200 = vmul.f32 %v170, %v95
  %v201 = vmul.f32 %v173, %v95
  %v202 = vmul.f32 %v176, %v95
  %v203 = vmul.f32 %v179, %v95
  %v204 = vmul.f32 %v182, %v95
  %v205 = vmul.f32 %v185, %v95
  %v206 = vmul.f32 %v188, %v95
  %v207 = vmul.f32 %v191, %v95
  %v208 = vadd.f32 %v192, 1e-05
  %v209 = vadd.f32 %v193, 1e-05
  %v210 = vadd.f32 %v194, 1e-05
  %v211 = vadd.f32 %v195, 1e-05
  %v212 = vadd.f32 %v196, 1e-05
  %v213 = vadd.f32 %v197, 1e-05
  %v214 = vadd.f32 %v198, 1e-05
  %v215 = vadd.f32 %v199, 1e-05
  %v216 = vadd.f32 %v200, 1e-05
  %v217 = vadd.f32 %v201, 1e-05
  %v218 = vadd.f32 %v202, 1e-05
  %v219 = vadd.f32 %v203, 1e-05
  %v220 = vadd.f32 %v204, 1e-05
  %v221 = vadd.f32 %v205, 1e-05
  %v222 = vadd.f32 %v206, 1e-05
  %v223 = vadd.f32 %v207, 1e-05
  %v224 = vrsqrt.pop %v208
  %v225 = vmul.f32 %v224, %v208
  %v226 = vmul.f32 %v225, %v224
  %v227 = vmul.f32 0.5, %v226
  %v228 = vsub.f32 1.5, %v227
  %v229 = vmul.f32 %v224, %v228
  %vm230 = vweird.f32 %v208
  %vm231 = vweird.f32 %v224
  %vm232 = vmor %vm230, %vm231
  %v233 = vsel %vm232, %v224, %v229
  %v234 = vrsqrt.pop %v209
  %v235 = vmul.f32 %v234, %v209
  %v236 = vmul.f32 %v235, %v234
  %v237 = vmul.f32 0.5, %v236
  %v238 = vsub.f32 1.5, %v237
  %v239 = vmul.f32 %v234, %v238
  %vm240 = vweird.f32 %v209
  %vm241 = vweird.f32 %v234
  %vm242 = vmor %vm240, %vm241
  %v243 = vsel %vm242, %v234, %v239
  %v244 = vrsqrt.pop %v210
  %v245 = vmul.f32 %v244, %v210
  %v246 = vmul.f32 %v245, %v244
  %v247 = vmul.f32 0.5, %v246
  %v248 = vsub.f32 1.5, %v247
  %v249 = vmul.f32 %v244, %v248
  %vm250 = vweird.f32 %v210
  %vm251 = vweird.f32 %v244
  %vm252 = vmor %vm250, %vm251
  %v253 = vsel %vm252, %v244, %v249
  %v254 = vrsqrt.pop %v211
  %v255 = vmul.f32 %v254, %v211
  %v256 = vmul.f32 %v255, %v254
  %v257 = vmul.f32 0.5, %v256
  %v258 = vsub.f32 1.5, %v257
  %v259 = vmul.f32 %v254, %v258
  %vm260 = vweird.f32 %v211
  %vm261 = vweird.f32 %v254
  %vm262 = vmor %vm260, %vm261
  %v263 = vsel %vm262, %v254, %v259
  %v264 = vrsqrt.pop %v212
  %v265 = vmul.f32 %v264, %v212
  %v266 = vmul.f32 %v265, %v264
  %v267 = vmul.f32 0.5, %v266
  %v268 = vsub.f32 1.5, %v267
  %v269 = vmul.f32 %v264, %v268
  %vm270 = vweird.f32 %v212
  %vm271 = vweird.f32 %v264
  %vm272 = vmor %vm270, %vm271
  %v273 = vsel %vm272, %v264, %v269
  %v274 = vrsqrt.pop %v213
  %v275 = vmul.f32 %v274, %v213
  %v276 = vmul.f32 %v275, %v274
  %v277 = vmul.f32 0.5, %v276
  %v278 = vsub.f32 1.5, %v277
  %v279 = vmul.f32 %v274, %v278
  %vm280 = vweird.f32 %v213
  %vm281 = vweird.f32 %v274
  %vm282 = vmor %vm280, %vm281
  %v283 = vsel %vm282, %v274, %v279
  %v284 = vrsqrt.pop %v214
  %v285 = vmul.f32 %v284, %v214
  %v286 = vmul.f32 %v285, %v284
  %v287 = vmul.f32 0.5, %v286
  %v288 = vsub.f32 1.5, %v287
  %v289 = vmul.f32 %v284, %v288
  %vm290 = vweird.f32 %v214
  %vm291 = vweird.f32 %v284
  %vm292 = vmor %vm290, %vm291
  %v293 = vsel %vm292, %v284, %v289
  %v294 = vrsqrt.pop %v215
  %v295 = vmul.f32 %v294, %v215
  %v296 = vmul.f32 %v295, %v294
  %v297 = vmul.f32 0.5, %v296
  %v298 = vsub.f32 1.5, %v297
  %v299 = vmul.f32 %v294, %v298
  %vm300 = vweird.f32 %v215
  %vm301 = vweird.f32 %v294
  %vm302 = vmor %vm300, %vm301
  %v303 = vsel %vm302, %v294, %v299
  %v304 = vrsqrt.pop %v216
  %v305 = vmul.f32 %v304, %v216
  %v306 = vmul.f32 %v305, %v304
  %v307 = vmul.f32 0.5, %v306
  %v308 = vsub.f32 1.5, %v307
  %v309 = vmul.f32 %v304, %v308
  %vm310 = vweird.f32 %v216
  %vm311 = vweird.f32 %v304
  %vm312 = vmor %vm310, %vm311
  %v313 = vsel %vm312, %v304, %v309
  %v314 = vrsqrt.pop %v217
  %v315 = vmul.f32 %v314, %v217
  %v316 = vmul.f32 %v315, %v314
  %v317 = vmul.f32 0.5, %v316
  %v318 = vsub.f32 1.5, %v317
  %v319 = vmul.f32 %v314, %v318
  %vm320 = vweird.f32 %v217
  %vm321 = vweird.f32 %v314
  %vm322 = vmor %vm320, %vm321
  %v323 = vsel %vm322, %v314, %v319
  %v324 = vrsqrt.pop %v218
  %v325 = vmul.f32 %v324, %v218
  %v326 = vmul.f32 %v325, %v324
  %v327 = vmul.f32 0.5, %v326
  %v328 = vsub.f32 1.5, %v327
  %v329 = vmul.f32 %v324, %v328
  %vm330 = vweird.f32 %v218
  %vm331 = vweird.f32 %v324
  %vm332 = vmor %vm330, %vm331
  %v333 = vsel %vm332, %v324, %v329
  %v334 = vrsqrt.pop %v219
  %v335 = vmul.f32 %v334, %v219
  %v336 = vmul.f32 %v335, %v334
  %v337 = vmul.f32 0.5, %v336
  %v338 = vsub.f32 1.5, %v337
  %v339 = vmul.f32 %v334, %v338
  %vm340 = vweird.f32 %v219
  %vm341 = vweird.f32 %v334
  %vm342 = vmor %vm340, %vm341
  %v343 = vsel %vm342, %v334, %v339
  %v344 = vrsqrt.pop %v220
  %v345 = vmul.f32 %v344, %v220
  %v346 = vmul.f32 %v345, %v344
  %v347 = vmul.f32 0.5, %v346
  %v348 = vsub.f32 1.5, %v347
  %v349 = vmul.f32 %v344, %v348
  %vm350 = vweird.f32 %v220
  %vm351 = vweird.f32 %v344
  %vm352 = vmor %vm350, %vm351
  %v353 = vsel %vm352, %v344, %v349
  %v354 = vrsqrt.pop %v221
  %v355 = vmul.f32 %v354, %v221
  %v356 = vmul.f32 %v355, %v354
  %v357 = vmul.f32 0.5, %v356
  %v358 = vsub.f32 1.5, %v357
  %v359 = vmul.f32 %v354, %v358
  %vm360 = vweird.f32 %v221
  %vm361 = vweird.f32 %v354
  %vm362 = vmor %vm360, %vm361
  %v363 = vsel %vm362, %v354, %v359
  %v364 = vrsqrt.pop %v222
  %v365 = vmul.f32 %v364, %v222
  %v366 = vmul.f32 %v365, %v364
  %v367 = vmul.f32 0.5, %v366
  %v368 = vsub.f32 1.5, %v367
  %v369 = vmul.f32 %v364, %v368
  %vm370 = vweird.f32 %v222
  %vm371 = vweird.f32 %v364
  %vm372 = vmor %vm370, %vm371
  %v373 = vsel %vm372, %v364, %v369
  %v374 = vrsqrt.pop %v223
  %v375 = vmul.f32 %v374, %v223
  %v376 = vmul.f32 %v375, %v374
  %v377 = vmul.f32 0.5, %v376
  %v378 = vsub.f32 1.5, %v377
  %v379 = vmul.f32 %v374, %v378
  %vm380 = vweird.f32 %v223
  %vm381 = vweird.f32 %v374
  %vm382 = vmor %vm380, %vm381
  %v383 = vsel %vm382, %v374, %v379
  %v384 = vmul.f32 %v112, %v233
  %v385 = vmul.f32 %v113, %v243
  %v386 = vmul.f32 %v114, %v253
  %v387 = vmul.f32 %v115, %v263
  %v388 = vmul.f32 %v116, %v273
  %v389 = vmul.f32 %v117, %v283
  %v390 = vmul.f32 %v118, %v293
  %v391 = vmul.f32 %v119, %v303
  %v392 = vmul.f32 %v120, %v313
  %v393 = vmul.f32 %v121, %v323
  %v394 = vmul.f32 %v122, %v333
  %v395 = vmul.f32 %v123, %v343
  %v396 = vmul.f32 %v124, %v353
  %v397 = vmul.f32 %v125, %v363
  %v398 = vmul.f32 %v126, %v373
  %v399 = vmul.f32 %v127, %v383
  %v400 = vld [vmem:[%s1] sm:$0x1]
  %v402 = vperm.slane %v400, 0
  %v404 = vmul.f32 %v384, %v402
  %v405 = vmul.f32 %v385, %v402
  %v406 = vmul.f32 %v386, %v402
  %v407 = vmul.f32 %v387, %v402
  %v408 = vmul.f32 %v388, %v402
  %v409 = vmul.f32 %v389, %v402
  %v410 = vmul.f32 %v390, %v402
  %v411 = vmul.f32 %v391, %v402
  %v412 = vmul.f32 %v392, %v402
  %v413 = vmul.f32 %v393, %v402
  %v414 = vmul.f32 %v394, %v402
  %v415 = vmul.f32 %v395, %v402
  %v416 = vmul.f32 %v396, %v402
  %v417 = vmul.f32 %v397, %v402
  %v418 = vmul.f32 %v398, %v402
  %v419 = vmul.f32 %v399, %v402
  %v420 = vld [vmem:[%s2] sm:$0x1]
  %v422 = vperm.slane %v420, 0
  %v424 = vadd.f32 %v404, %v422
  %v425 = vadd.f32 %v405, %v422
  %v426 = vadd.f32 %v406, %v422
  %v427 = vadd.f32 %v407, %v422
  %v428 = vadd.f32 %v408, %v422
  %v429 = vadd.f32 %v409, %v422
  %v430 = vadd.f32 %v410, %v422
  %v431 = vadd.f32 %v411, %v422
  %v432 = vadd.f32 %v412, %v422
  %v433 = vadd.f32 %v413, %v422
  %v434 = vadd.f32 %v414, %v422
  %v435 = vadd.f32 %v415, %v422
  %v436 = vadd.f32 %v416, %v422
  %v437 = vadd.f32 %v417, %v422
  %v438 = vadd.f32 %v418, %v422
  %v439 = vadd.f32 %v419, %v422
  %440 = vst.msk [vmem:[%s5] sm:$0xff] %vm40, %v424
  %441 = vst.msk [vmem:[%s5 + $0x8] sm:$0xff] %vm40, %v425
  %442 = vst.msk [vmem:[%s5 + $0x10] sm:$0xff] %vm40, %v426
  %443 = vst.msk [vmem:[%s5 + $0x18] sm:$0xff] %vm40, %v427
  %444 = vst.msk [vmem:[%s5 + $0x20] sm:$0xff] %vm40, %v428
  %445 = vst.msk [vmem:[%s5 + $0x28] sm:$0xff] %vm40, %v429
  %446 = vst.msk [vmem:[%s5 + $0x30] sm:$0xff] %vm40, %v430
  %447 = vst.msk [vmem:[%s5 + $0x38] sm:$0xff] %vm40, %v431
  %448 = vst.msk [vmem:[%s5 + $0x40] sm:$0xff] %vm40, %v432
  %449 = vst.msk [vmem:[%s5 + $0x48] sm:$0xff] %vm40, %v433
  %450 = vst.msk [vmem:[%s5 + $0x50] sm:$0xff] %vm40, %v434
  %451 = vst.msk [vmem:[%s5 + $0x58] sm:$0xff] %vm40, %v435
  %452 = vst.msk [vmem:[%s5 + $0x60] sm:$0xff] %vm40, %v436
  %453 = vst.msk [vmem:[%s5 + $0x68] sm:$0xff] %vm40, %v437
  %454 = vst.msk [vmem:[%s5 + $0x70] sm:$0xff] %vm40, %v438
  %455 = vst.msk [vmem:[%s5 + $0x78] sm:$0xff] %vm40, %v439
  %v456 = vld [vmem:[%s3] sm:$0x1]
  %v458 = vperm.slane %v456, 0
  %v460 = vmul.f32 %v424, %v458
  %v461 = vmul.f32 %v425, %v458
  %v462 = vmul.f32 %v426, %v458
  %v463 = vmul.f32 %v427, %v458
  %v464 = vmul.f32 %v428, %v458
  %v465 = vmul.f32 %v429, %v458
  %v466 = vmul.f32 %v430, %v458
  %v467 = vmul.f32 %v431, %v458
  %v468 = vmul.f32 %v432, %v458
  %v469 = vmul.f32 %v433, %v458
  %v470 = vmul.f32 %v434, %v458
  %v471 = vmul.f32 %v435, %v458
  %v472 = vmul.f32 %v436, %v458
  %v473 = vmul.f32 %v437, %v458
  %v474 = vmul.f32 %v438, %v458
  %v475 = vmul.f32 %v439, %v458
  %v476 = vsel %vm40, %v460, 0.0
  %477 = vadd.xlane.f32.xlu0 %v476
  %v478 = vpop.xlane.xlu0 %477
  %v479 = vsel %vm40, %v461, 0.0
  %480 = vadd.xlane.f32.xlu0 %v479
  %v481 = vpop.xlane.xlu0 %480
  %v482 = vsel %vm40, %v462, 0.0
  %483 = vadd.xlane.f32.xlu0 %v482
  %v484 = vpop.xlane.xlu0 %483
  %v485 = vsel %vm40, %v463, 0.0
  %486 = vadd.xlane.f32.xlu0 %v485
  %v487 = vpop.xlane.xlu0 %486
  %v488 = vsel %vm40, %v464, 0.0
  %489 = vadd.xlane.f32.xlu0 %v488
  %v490 = vpop.xlane.xlu0 %489
  %v491 = vsel %vm40, %v465, 0.0
  %492 = vadd.xlane.f32.xlu0 %v491
  %v493 = vpop.xlane.xlu0 %492
  %v494 = vsel %vm40, %v466, 0.0
  %495 = vadd.xlane.f32.xlu0 %v494
  %v496 = vpop.xlane.xlu0 %495
  %v497 = vsel %vm40, %v467, 0.0
  %498 = vadd.xlane.f32.xlu0 %v497
  %v499 = vpop.xlane.xlu0 %498
  %v500 = vsel %vm40, %v468, 0.0
  %501 = vadd.xlane.f32.xlu0 %v500
  %v502 = vpop.xlane.xlu0 %501
  %v503 = vsel %vm40, %v469, 0.0
  %504 = vadd.xlane.f32.xlu0 %v503
  %v505 = vpop.xlane.xlu0 %504
  %v506 = vsel %vm40, %v470, 0.0
  %507 = vadd.xlane.f32.xlu0 %v506
  %v508 = vpop.xlane.xlu0 %507
  %v509 = vsel %vm40, %v471, 0.0
  %510 = vadd.xlane.f32.xlu0 %v509
  %v511 = vpop.xlane.xlu0 %510
  %v512 = vsel %vm40, %v472, 0.0
  %513 = vadd.xlane.f32.xlu0 %v512
  %v514 = vpop.xlane.xlu0 %513
  %v515 = vsel %vm40, %v473, 0.0
  %516 = vadd.xlane.f32.xlu0 %v515
  %v517 = vpop.xlane.xlu0 %516
  %v518 = vsel %vm40, %v474, 0.0
  %519 = vadd.xlane.f32.xlu0 %v518
  %v520 = vpop.xlane.xlu0 %519
  %v521 = vsel %vm40, %v475, 0.0
  %522 = vadd.xlane.f32.xlu0 %v521
  %v523 = vpop.xlane.xlu0 %522
  %v524 = vld [vmem:[#allocation2] sm:$0x1]
  %v526 = vperm.slane %v524, 0
  %v528 = vadd.f32 %v478, %v526
  %v529 = vadd.f32 %v481, %v526
  %v530 = vadd.f32 %v484, %v526
  %v531 = vadd.f32 %v487, %v526
  %v532 = vadd.f32 %v490, %v526
  %v533 = vadd.f32 %v493, %v526
  %v534 = vadd.f32 %v496, %v526
  %v535 = vadd.f32 %v499, %v526
  %v536 = vadd.f32 %v502, %v526
  %v537 = vadd.f32 %v505, %v526
  %v538 = vadd.f32 %v508, %v526
  %v539 = vadd.f32 %v511, %v526
  %v540 = vadd.f32 %v514, %v526
  %v541 = vadd.f32 %v517, %v526
  %v542 = vadd.f32 %v520, %v526
  %v543 = vadd.f32 %v523, %v526
  %vm544 = vcmask 7168
  %545 = vst.msk [vmem:[%s6] sm:$0xff] %vm544, %v528
  %546 = vst.msk [vmem:[%s6 + $0x8] sm:$0xff] %vm544, %v529
  %547 = vst.msk [vmem:[%s6 + $0x10] sm:$0xff] %vm544, %v530
  %548 = vst.msk [vmem:[%s6 + $0x18] sm:$0xff] %vm544, %v531
  %549 = vst.msk [vmem:[%s6 + $0x20] sm:$0xff] %vm544, %v532
  %550 = vst.msk [vmem:[%s6 + $0x28] sm:$0xff] %vm544, %v533
  %551 = vst.msk [vmem:[%s6 + $0x30] sm:$0xff] %vm544, %v534
  %552 = vst.msk [vmem:[%s6 + $0x38] sm:$0xff] %vm544, %v535
  %553 = vst.msk [vmem:[%s6 + $0x40] sm:$0xff] %vm544, %v536
  %554 = vst.msk [vmem:[%s6 + $0x48] sm:$0xff] %vm544, %v537
  %555 = vst.msk [vmem:[%s6 + $0x50] sm:$0xff] %vm544, %v538
  %556 = vst.msk [vmem:[%s6 + $0x58] sm:$0xff] %vm544, %v539
  %557 = vst.msk [vmem:[%s6 + $0x60] sm:$0xff] %vm544, %v540
  %558 = vst.msk [vmem:[%s6 + $0x68] sm:$0xff] %vm544, %v541
  %559 = vst.msk [vmem:[%s6 + $0x70] sm:$0xff] %vm544, %v542
  %560 = vst.msk [vmem:[%s6 + $0x78] sm:$0xff] %vm544, %v543
  // Predicated region
  $region22: #{forward.17} parent=0 // pred_check
    _
  $region23: #{forward.17} parent=0 // pred_check_branch
    %562 = sbr.rel (0) target = $region25
  $region24: #{forward.17} parent=0 // pred_region
    _
  $region25: #{forward.17} parent=0 // pred_fallthru
    _
  // Predicated region
  $region26: #{forward.17} parent=0 // pred_check
    _
  $region27: #{forward.17} parent=0 // pred_check_branch
    %564 = sbr.rel (0) target = $region29
  $region28: #{forward.17} parent=0 // pred_region
    _
  $region29: #{forward.17} parent=0 // pred_fallthru
    _
  // Predicated region
  $region30: #{forward.17} parent=0 // pred_check
    _
  $region31: #{forward.17} parent=0 // pred_check_branch
    %566 = sbr.rel (0) target = $region33
  $region32: #{forward.17} parent=0 // pred_region
    _
  $region33: #{forward.17} parent=0 // pred_fallthru
    _
  // Predicated region
  $region34: #{forward.17} parent=0 // pred_check
    _
  $region35: #{forward.17} parent=0 // pred_check_branch
    %568 = sbr.rel (0) target = $region37
  $region36: #{forward.17} parent=0 // pred_region
    _
  $region37: #{forward.17} parent=0 // pred_fallthru
    _

// kernel: forward.18
$region0: #{forward.18}
  #allocation0 [shape = 'u32[]', space=smem, size = 0x4, offset = 0x4, fixed_abs, tag = 'smem constant byte address 0x4 - core index']
  #allocation1 [shape = 'u32[72,128]{1,0:T(1,128)}', space=vmem, size = 0x9000, scoped, tag = 'internal scratch']
  #allocation2 [shape = 'f32[5,64]{1,0:T(8,128)}', space=vmem, size = 0x1000, scoped, tag = 'scratch operand']
  #allocation3 [shape = 'f32[1,64]{1,0:T(1,128)}', space=vmem, size = 0x200, scoped, tag = 'scratch operand']
  %s0 = inlined_call_operand.vmem [shape: bf16[2,64,64], index: 0, kind: input, shape index: {}, may-alias: {0,1}]
  %s1 = inlined_call_operand.vmem [shape: bf16[2,64,64], index: 1, kind: input, shape index: {}, may-alias: {0,1}]
  %s2 = inlined_call_operand.vmem [shape: f32[2,1,64], index: 2, kind: input, shape index: {}]
  %s3 = inlined_call_operand.vmem [shape: f32[2,1,64], index: 3, kind: output, shape index: {0}]
  %s4 = inlined_call_operand.vmem [shape: f32[2,1,64], index: 4, kind: output, shape index: {1}]
  %5 = xla_tuple %s3, %s4
  %s6 = sld [smem:[#allocation0]]
  $region61: #{forward.18} parent=0
    _
  %s8 = ssub.s32 1, %s6
  %s9 = scalar_select 0, %s8, %s6
  loop: start=0, step=1, limit=4
  $region2: #{forward.18} parent=0 // loop_pre_header
    _
  $region3: #{forward.18} parent=0 // loop_header
    %s11 = sphi 0, %s15
    %p12 = scmp.ge.s32.totalorder %s11, 4
    %s18 = sphi 0, %s37
    %s19 = sphi 0, %s33
    %s20 = sphi 0, %s29
    %s21 = sphi 0, %s18
    %s22 = sphi 0, %s19
    %s23 = sphi 0, %s20
    %s24 = sphi 0, %s21
    %s25 = sphi 0, %s22
    %s26 = sphi 0, %s23
    %s42 = sphi 0, %s44
    %s45 = sphi 0, %s42
    %s46 = sphi 0, %s45
    %s62 = sphi 0, %s46
    %s70 = sphi 0, %s72
    %s73 = sphi 0, %s70
    %s74 = sphi 0, %s73
    %s90 = sphi 0, %s74
    %s98 = sphi 0, %s100
    %s101 = sphi 0, %s98
    %s102 = sphi 0, %s101
    %s118 = sphi 0, %s102
    %s126 = sphi 0, %s128
    %s129 = sphi 0, %s126
    %s130 = sphi 0, %s129
    %s146 = sphi 0, %s130
    %s154 = sphi 0, %s156
    %s157 = sphi 0, %s154
    %s158 = sphi 0, %s157
    %s174 = sphi 0, %s158
  $region4: #{forward.18} parent=0 // loop_header_branch
    %14 = sbr.rel (%p12) target = $region8
  $region5: #{forward.18} parent=0 // loop_body
    %s16 = ssub.s32 %s11, 1
    %s17 = ssub.s32 %s11, 2
    %s27 = sadd.s32 1, %s20
    %p28 = scmp.ge.s32.totalorder %s27, 1
    %s29 = scalar_select %p28, 0, %s27
    %s30 = sadd.s32 1, %s19
    %s31 = scalar_select %p28, %s30, %s19
    %p32 = scmp.ge.s32.totalorder %s31, 1
    %s33 = scalar_select %p32, 0, %s31
    %s34 = sadd.s32 1, %s18
    %s35 = scalar_select %p32, %s34, %s18
    %p36 = scmp.ge.s32.totalorder %s35, 2
    %s37 = scalar_select %p36, 0, %s35
    %s38 = ssub.s32 %s18, %s37
    %s39 = ssub.s32 %s19, %s33
    %s40 = sor.u32 %s38, %s39
    %p41 = scmp.eq.s32.totalorder %s40, 0
    %s43 = sadd.s32 %s42, 1
    %s44 = scalar_select %p41, %s42, %s43
    %p47 = pneg %p41
    %p48 = scmp.eq.s32.totalorder %s11, 1
    %p49 = por %p47, %p48
    %p50 = scmp.ne.s32.totalorder %s42, %s45
    %p51 = scmp.eq.s32.totalorder %s11, 0
    %p52 = por %p50, %p51
    %p53 = scmp.ne.s32.totalorder %s42, %s45
    %p54 = scmp.eq.s32.totalorder %s16, 1
    %p55 = por %p53, %p54
    %p56 = scmp.ne.s32.totalorder %s45, %s46
    %p57 = scmp.eq.s32.totalorder %s16, 0
    %p58 = por %p56, %p57
    %p59 = scmp.ne.s32.totalorder %s45, %s46
    %p60 = scmp.eq.s32.totalorder %s17, 1
    %p61 = por %p59, %p60
    %p63 = scmp.ne.s32.totalorder %s46, %s62
    %p64 = scmp.eq.s32.totalorder %s17, 0
    %p65 = por %p63, %p64
    %s66 = ssub.s32 %s18, %s37
    %s67 = ssub.s32 %s20, %s29
    %s68 = sor.u32 %s66, %s67
    %p69 = scmp.eq.s32.totalorder %s68, 0
    %s71 = sadd.s32 %s70, 1
    %s72 = scalar_select %p69, %s70, %s71
    %p75 = pneg %p69
    %p76 = scmp.eq.s32.totalorder %s11, 1
    %p77 = por %p75, %p76
    %p78 = scmp.ne.s32.totalorder %s70, %s73
    %p79 = scmp.eq.s32.totalorder %s11, 0
    %p80 = por %p78, %p79
    %p81 = scmp.ne.s32.totalorder %s70, %s73
    %p82 = scmp.eq.s32.totalorder %s16, 1
    %p83 = por %p81, %p82
    %p84 = scmp.ne.s32.totalorder %s73, %s74
    %p85 = scmp.eq.s32.totalorder %s16, 0
    %p86 = por %p84, %p85
    %p87 = scmp.ne.s32.totalorder %s73, %s74
    %p88 = scmp.eq.s32.totalorder %s17, 1
    %p89 = por %p87, %p88
    %p91 = scmp.ne.s32.totalorder %s74, %s90
    %p92 = scmp.eq.s32.totalorder %s17, 0
    %p93 = por %p91, %p92
    %s94 = ssub.s32 %s18, %s37
    %s95 = ssub.s32 %s19, %s33
    %s96 = sor.u32 %s94, %s95
    %p97 = scmp.eq.s32.totalorder %s96, 0
    %s99 = sadd.s32 %s98, 1
    %s100 = scalar_select %p97, %s98, %s99
    %p103 = pneg %p97
    %p104 = scmp.eq.s32.totalorder %s11, 1
    %p105 = por %p103, %p104
    %p106 = scmp.ne.s32.totalorder %s98, %s101
    %p107 = scmp.eq.s32.totalorder %s11, 0
    %p108 = por %p106, %p107
    %p109 = scmp.ne.s32.totalorder %s98, %s101
    %p110 = scmp.eq.s32.totalorder %s16, 1
    %p111 = por %p109, %p110
    %p112 = scmp.ne.s32.totalorder %s101, %s102
    %p113 = scmp.eq.s32.totalorder %s16, 0
    %p114 = por %p112, %p113
    %p115 = scmp.ne.s32.totalorder %s101, %s102
    %p116 = scmp.eq.s32.totalorder %s17, 1
    %p117 = por %p115, %p116
    %p119 = scmp.ne.s32.totalorder %s102, %s118
    %p120 = scmp.eq.s32.totalorder %s17, 0
    %p121 = por %p119, %p120
    %s122 = ssub.s32 %s18, %s37
    %s123 = ssub.s32 %s19, %s33
    %s124 = sor.u32 %s122, %s123
    %p125 = scmp.eq.s32.totalorder %s124, 0
    %s127 = sadd.s32 %s126, 1
    %s128 = scalar_select %p125, %s126, %s127
    %p131 = pneg %p125
    %p132 = scmp.eq.s32.totalorder %s11, 1
    %p133 = por %p131, %p132
    %p134 = scmp.ne.s32.totalorder %s126, %s129
    %p135 = scmp.eq.s32.totalorder %s11, 0
    %p136 = por %p134, %p135
    %p137 = scmp.ne.s32.totalorder %s126, %s129
    %p138 = scmp.eq.s32.totalorder %s16, 1
    %p139 = por %p137, %p138
    %p140 = scmp.ne.s32.totalorder %s129, %s130
    %p141 = scmp.eq.s32.totalorder %s16, 0
    %p142 = por %p140, %p141
    %p143 = scmp.ne.s32.totalorder %s129, %s130
    %p144 = scmp.eq.s32.totalorder %s17, 1
    %p145 = por %p143, %p144
    %p147 = scmp.ne.s32.totalorder %s130, %s146
    %p148 = scmp.eq.s32.totalorder %s17, 0
    %p149 = por %p147, %p148
    %s150 = ssub.s32 %s18, %s37
    %s151 = ssub.s32 %s19, %s33
    %s152 = sor.u32 %s150, %s151
    %p153 = scmp.eq.s32.totalorder %s152, 0
    %s155 = sadd.s32 %s154, 1
    %s156 = scalar_select %p153, %s154, %s155
    %p159 = pneg %p153
    %p160 = scmp.eq.s32.totalorder %s11, 1
    %p161 = por %p159, %p160
    %p162 = scmp.ne.s32.totalorder %s154, %s157
    %p163 = scmp.eq.s32.totalorder %s11, 0
    %p164 = por %p162, %p163
    %p165 = scmp.ne.s32.totalorder %s154, %s157
    %p166 = scmp.eq.s32.totalorder %s16, 1
    %p167 = por %p165, %p166
    %p168 = scmp.ne.s32.totalorder %s157, %s158
    %p169 = scmp.eq.s32.totalorder %s16, 0
    %p170 = por %p168, %p169
    %p171 = scmp.ne.s32.totalorder %s157, %s158
    %p172 = scmp.eq.s32.totalorder %s17, 1
    %p173 = por %p171, %p172
    %p175 = scmp.ne.s32.totalorder %s158, %s174
    %p176 = scmp.eq.s32.totalorder %s17, 0
    %p177 = por %p175, %p176
    %p178 = scmp.le.s32.totalorder 1, %s11
    %p179 = scmp.lt.s32.totalorder %s11, 3
    %p180 = pnand %p178, %p179
    %p181 = pneg %p180
    // Predicated region
    $region9: #{forward.18} parent=5 // pred_check
      _
    $region10: #{forward.18} parent=5 // pred_check_branch
      %183 = sbr.rel (%p180) target = $region12
    $region11: #{forward.18} parent=5 // pred_region
      %s184 = ssub.s32 %s11, 1
    $region12: #{forward.18} parent=5 // pred_fallthru
      _
    %p185 = scmp.lt.s32.totalorder %s11, 2
    // Predicated region
    $region13: #{forward.18} parent=5 // pred_check
      %p186 = pneg %p185
    $region14: #{forward.18} parent=5 // pred_check_branch
      %188 = sbr.rel (%p186) target = $region16
    $region15: #{forward.18} parent=5 // pred_region
      // Predicated region
      $region17: #{forward.18} parent=15 // pred_check
        %p189 = pneg %p52
      $region18: #{forward.18} parent=15 // pred_check_branch
        %191 = sbr.rel (%p189) target = $region20
      $region19: #{forward.18} parent=15 // pred_region
        %s192 = smul.u32 8, %s19
        %p193 = scmp.lt.s32.totalorder %s18, 1
        %s194 = scalar_select %p193, %s18, 1
        %p195 = scmp.lt.s32.totalorder %s192, 7
        %s196 = scalar_select %p195, %s192, 7
        %s197 = smul.addr %s194, 8
        %s198 = sadd.s32 %s196, %s197
        %s199 = smul.addr %s198, 4
        %s200 = scalar_lea.vmem %s0, %s199
        %s201 = smul.u32 8, %s19
      $region20: #{forward.18} parent=15 // pred_fallthru
        _
      // Predicated region
      $region21: #{forward.18} parent=15 // pred_check
        %p202 = pneg %p80
      $region22: #{forward.18} parent=15 // pred_check_branch
        %204 = sbr.rel (%p202) target = $region24
      $region23: #{forward.18} parent=15 // pred_region
        %s205 = smul.u32 8, %s20
        %p206 = scmp.lt.s32.totalorder %s18, 1
        %s207 = scalar_select %p206, %s18, 1
        %p208 = scmp.lt.s32.totalorder %s205, 7
        %s209 = scalar_select %p208, %s205, 7
        %s210 = smul.addr %s207, 8
        %s211 = sadd.s32 %s209, %s210
        %s212 = smul.addr %s211, 4
        %s213 = scalar_lea.vmem %s1, %s212
        %s214 = smul.u32 8, %s20
      $region24: #{forward.18} parent=15 // pred_fallthru
        _
      // Predicated region
      $region25: #{forward.18} parent=15 // pred_check
        %p215 = pneg %p108
      $region26: #{forward.18} parent=15 // pred_check_branch
        %217 = sbr.rel (%p215) target = $region28
      $region27: #{forward.18} parent=15 // pred_region
        %p218 = scmp.lt.s32.totalorder %s18, 1
        %s219 = scalar_select %p218, %s18, 1
        %p220 = scmp.lt.s32.totalorder %s19, 0
        %s221 = scalar_select %p220, %s19, 0
        %s222 = sadd.s32 %s221, %s219
        %s223 = scalar_lea.vmem %s2, %s222
      $region28: #{forward.18} parent=15 // pred_fallthru
        _
    $region16: #{forward.18} parent=5 // pred_fallthru
      _
    %p224 = scmp.le.s32.totalorder 1, %s11
    %p225 = scmp.lt.s32.totalorder %s11, 3
    %p226 = pnand %p224, %p225
    %p227 = pneg %p226
    // Predicated region
    $region29: #{forward.18} parent=5 // pred_check
      _
    $region30: #{forward.18} parent=5 // pred_check_branch
      %229 = sbr.rel (%p226) target = $region32
    $region31: #{forward.18} parent=5 // pred_region
      %s230 = ssub.s32 %s11, 1
      %s231 = smul.u32 8, %s22
      %p232 = scmp.lt.s32.totalorder %s21, 1
      %s233 = scalar_select %p232, %s21, 1
      %p234 = scmp.lt.s32.totalorder %s231, 7
      %s235 = scalar_select %p234, %s231, 7
      %s236 = smul.addr %s233, 8
      %s237 = sadd.s32 %s235, %s236
      %s238 = smul.addr %s237, 4
      %s239 = scalar_lea.vmem %s0, %s238
      %p240 = pneg %p58
      %p241 = pneg %p55
      %s242 = smul.u32 8, %s23
      %p243 = scmp.lt.s32.totalorder %s21, 1
      %s244 = scalar_select %p243, %s21, 1
      %p245 = scmp.lt.s32.totalorder %s242, 7
      %s246 = scalar_select %p245, %s242, 7
      %s247 = smul.addr %s244, 8
      %s248 = sadd.s32 %s246, %s247
      %s249 = smul.addr %s248, 4
      %s250 = scalar_lea.vmem %s1, %s249
      %p251 = pneg %p86
      %p252 = pneg %p83
      %p253 = scmp.lt.s32.totalorder %s21, 1
      %s254 = scalar_select %p253, %s21, 1
      %p255 = scmp.lt.s32.totalorder %s22, 0
      %s256 = scalar_select %p255, %s22, 0
      %s257 = sadd.s32 %s256, %s254
      %s258 = scalar_lea.vmem %s2, %s257
      %p259 = pneg %p114
      %p260 = pneg %p111
      %p261 = pneg %p142
      %p262 = pneg %p139
      %p263 = scmp.lt.s32.totalorder %s21, 1
      %s264 = scalar_select %p263, %s21, 1
      %p265 = scmp.lt.s32.totalorder %s22, 0
      %s266 = scalar_select %p265, %s22, 0
      %s267 = sadd.s32 %s266, %s264
      %s268 = scalar_lea.vmem %s3, %s267
      %p269 = pneg %p170
      %p270 = pneg %p167
      %p271 = scmp.lt.s32.totalorder %s21, 1
      %s272 = scalar_select %p271, %s21, 1
      %p273 = scmp.lt.s32.totalorder %s22, 0
      %s274 = scalar_select %p273, %s22, 0
      %s275 = sadd.s32 %s274, %s272
      %s276 = scalar_lea.vmem %s4, %s275
      %s277 = smul.u32 8, %s22
      %p278 = scmp.lt.s32.totalorder %s21, 1
      %s279 = scalar_select %p278, %s21, 1
      %p280 = scmp.lt.s32.totalorder %s277, 7
      %s281 = scalar_select %p280, %s277, 7
      %s282 = smul.addr %s279, 8
      %s283 = sadd.s32 %s281, %s282
      %s284 = smul.addr %s283, 4
      %s285 = scalar_lea.vmem %s0, %s284
      %s286 = smul.u32 8, %s22
      %s287 = smul.u32 8, %s23
      %p288 = scmp.lt.s32.totalorder %s21, 1
      %s289 = scalar_select %p288, %s21, 1
      %p290 = scmp.lt.s32.totalorder %s287, 7
      %s291 = scalar_select %p290, %s287, 7
      %s292 = smul.addr %s289, 8
      %s293 = sadd.s32 %s291, %s292
      %s294 = smul.addr %s293, 4
      %s295 = scalar_lea.vmem %s1, %s294
      %s296 = smul.u32 8, %s23
      %p297 = scmp.lt.s32.totalorder %s21, 1
      %s298 = scalar_select %p297, %s21, 1
      %p299 = scmp.lt.s32.totalorder %s22, 0
      %s300 = scalar_select %p299, %s22, 0
      %s301 = sadd.s32 %s300, %s298
      %s302 = scalar_lea.vmem %s2, %s301
      %p303 = scmp.lt.s32.totalorder %s21, 1
      %s304 = scalar_select %p303, %s21, 1
      %p305 = scmp.lt.s32.totalorder %s22, 0
      %s306 = scalar_select %p305, %s22, 0
      %s307 = sadd.s32 %s306, %s304
      %s308 = scalar_lea.vmem %s3, %s307
      %p309 = scmp.lt.s32.totalorder %s21, 1
      %s310 = scalar_select %p309, %s21, 1
      %p311 = scmp.lt.s32.totalorder %s22, 0
      %s312 = scalar_select %p311, %s22, 0
      %s313 = sadd.s32 %s312, %s310
      %s314 = scalar_lea.vmem %s4, %s313
      %p316 = scmp.eq.s32.totalorder %s23, 0
      // Predicated region
      $region33: #{forward.18} parent=31 // pred_check
        %p317 = pneg %p316
      $region34: #{forward.18} parent=31 // pred_check_branch
        %319 = sbr.rel (%p317) target = $region36
      $region35: #{forward.18} parent=31 // pred_region
        %vm320 = vcmask 520192
        %321 = vst.msk [vmem:[#allocation2] sm:$0x1f] %vm320, 1e+30
        %vm322 = vcmask 516096
        %323 = vst.msk [vmem:[#allocation3] sm:$0x1] %vm322, -1e+30
      $region36: #{forward.18} parent=31 // pred_fallthru
        _
      %v324 = vld [vmem:[%s295] sm:$0xf]
      %v325 = vld [vmem:[%s295 + $0x4] sm:$0xf]
      %v326 = vld [vmem:[%s295 + $0x8] sm:$0xf]
      %v327 = vld [vmem:[%s295 + $0xc] sm:$0xf]
      %v328 = vld [vmem:[%s295 + $0x10] sm:$0xf]
      %v329 = vld [vmem:[%s295 + $0x14] sm:$0xf]
      %v330 = vld [vmem:[%s295 + $0x18] sm:$0xf]
      %v331 = vld [vmem:[%s295 + $0x1c] sm:$0xf]
      %v332 = vld [vmem:[%s285] sm:$0xf]
      %v333 = vld [vmem:[%s285 + $0x4] sm:$0xf]
      %v334 = vld [vmem:[%s285 + $0x8] sm:$0xf]
      %v335 = vld [vmem:[%s285 + $0xc] sm:$0xf]
      %v336 = vld [vmem:[%s285 + $0x10] sm:$0xf]
      %v337 = vld [vmem:[%s285 + $0x14] sm:$0xf]
      %v338 = vld [vmem:[%s285 + $0x18] sm:$0xf]
      %v339 = vld [vmem:[%s285 + $0x1c] sm:$0xf]
      %v340 = vld [vmem:[%s302] sm:$0x1]
      %v349 = vunpack.c.l.b16 %v324
      %v350 = vunpack.c.l.b16 %v325
      %v351 = vunpack.c.l.b16 %v326
      %v352 = vunpack.c.l.b16 %v327
      %v353 = vunpack.c.l.b16 %v328
      %v354 = vunpack.c.l.b16 %v329
      %v355 = vunpack.c.l.b16 %v330
      %v356 = vunpack.c.l.b16 %v331
      %v357 = vpack.c.b16 %v350, %v349
      %v358 = vpack.c.b16 %v352, %v351
      %v359 = vpack.c.b16 %v354, %v353
      %v360 = vpack.c.b16 %v356, %v355
      %v369 = vunpack.c.l.b16 %v332
      %v370 = vunpack.c.l.b16 %v333
      %v371 = vunpack.c.l.b16 %v334
      %v372 = vunpack.c.l.b16 %v335
      %v373 = vunpack.c.l.b16 %v336
      %v374 = vunpack.c.l.b16 %v337
      %v375 = vunpack.c.l.b16 %v338
      %v376 = vunpack.c.l.b16 %v339
      %v377 = vpack.c.b16 %v370, %v369
      %v378 = vpack.c.b16 %v372, %v371
      %v379 = vpack.c.b16 %v374, %v373
      %v380 = vpack.c.b16 %v376, %v375
      %vm381 = vcmask 523264
      %v383 = vsel %vm381, %v357, 0
      %v386 = vsel %vm381, %v358, 0
      %v389 = vsel %vm381, %v359, 0
      %v392 = vsel %vm381, %v360, 0
      %v395 = vsel %vm381, %v377, 0
      %v398 = vsel %vm381, %v378, 0
      %v401 = vsel %vm381, %v379, 0
      %v404 = vsel %vm381, %v380, 0
      %406 = vmatpush.bf16.xpose.msra.mxu0 0
      %407 = vmatpush.bf16.xpose.msra.mxu0 0
      %408 = vmatpush.bf16.xpose.msra.mxu0 0
      %409 = vmatpush.bf16.xpose.msra.mxu0 0
      %410 = vmatpush.bf16.xpose.msra.mxu0 %v404
      %411 = vmatpush.bf16.xpose.msra.mxu0 %v401
      %412 = vmatpush.bf16.xpose.msra.mxu0 %v398
      %413 = vmatpush.bf16.xpose.msra.mxu0 %v395
      %414 = vmatmul.bf16.gmra.mxu0 %v383
      %v415 = vpop.f32.mrf.mxu0
      %v416 = vadd.f32 0.0, %v415
      %v417 = vpop.f32.mrf.mxu0
      %v418 = vadd.f32 0.0, %v417
      %419 = vmatmul.bf16.gmra.mxu0 %v386
      %v420 = vpop.f32.mrf.mxu0
      %v421 = vadd.f32 0.0, %v420
      %v422 = vpop.f32.mrf.mxu0
      %v423 = vadd.f32 0.0, %v422
      %424 = vmatmul.bf16.gmra.mxu0 %v389
      %v425 = vpop.f32.mrf.mxu0
      %v426 = vadd.f32 0.0, %v425
      %v427 = vpop.f32.mrf.mxu0
      %v428 = vadd.f32 0.0, %v427
      %429 = vmatmul.bf16.gmra.mxu0 %v392
      %v430 = vpop.f32.mrf.mxu0
      %v431 = vadd.f32 0.0, %v430
      %v432 = vpop.f32.mrf.mxu0
      %v433 = vadd.f32 0.0, %v432
      %434 = vdwg.mxu0
      %v435 = vunpack.c.l.bf16 %v324
      %v436 = vunpack.c.l.bf16 %v325
      %v437 = vunpack.c.l.bf16 %v326
      %v438 = vunpack.c.l.bf16 %v327
      %v439 = vunpack.c.l.bf16 %v328
      %v440 = vunpack.c.l.bf16 %v329
      %v441 = vunpack.c.l.bf16 %v330
      %v442 = vunpack.c.l.bf16 %v331
      %v443 = vmul.f32 %v435, %v435
      %v444 = vmul.f32 %v436, %v436
      %v445 = vmul.f32 %v437, %v437
      %v446 = vmul.f32 %v438, %v438
      %v447 = vmul.f32 %v439, %v439
      %v448 = vmul.f32 %v440, %v440
      %v449 = vmul.f32 %v441, %v441
      %v450 = vmul.f32 %v442, %v442
      %v451 = vsel %vm381, %v443, 0.0
      %452 = vadd.xlane.f32.xlu0 %v451
      %v453 = vpop.xlane.xlu0 %452
      %v454 = vsel %vm381, %v444, 0.0
      %455 = vadd.xlane.f32.xlu0 %v454
      %v456 = vpop.xlane.xlu0 %455
      %v457 = vsel %vm381, %v445, 0.0
      %458 = vadd.xlane.f32.xlu0 %v457
      %v459 = vpop.xlane.xlu0 %458
      %v460 = vsel %vm381, %v446, 0.0
      %461 = vadd.xlane.f32.xlu0 %v460
      %v462 = vpop.xlane.xlu0 %461
      %v463 = vsel %vm381, %v447, 0.0
      %464 = vadd.xlane.f32.xlu0 %v463
      %v465 = vpop.xlane.xlu0 %464
      %v466 = vsel %vm381, %v448, 0.0
      %467 = vadd.xlane.f32.xlu0 %v466
      %v468 = vpop.xlane.xlu0 %467
      %v469 = vsel %vm381, %v449, 0.0
      %470 = vadd.xlane.f32.xlu0 %v469
      %v471 = vpop.xlane.xlu0 %470
      %v472 = vsel %vm381, %v450, 0.0
      %473 = vadd.xlane.f32.xlu0 %v472
      %v474 = vpop.xlane.xlu0 %473
      %s475 = smul.u32 %s23, 64
      %v476 = vlaneseq
      %v477 = vshrl.u32 %v476, 7
      %v478 = vadd.s32 %v477, 8
      %v479 = vadd.s32 %v477, 16
      %v480 = vadd.s32 %v477, 24
      %v481 = vadd.s32 %v477, 32
      %v482 = vadd.s32 %v477, 40
      %v483 = vadd.s32 %v477, 48
      %v484 = vadd.s32 %v477, 56
      %v485 = vstv %s475
      %v486 = vadd.s32 %v485, %v477
      %v487 = vadd.s32 %v485, %v478
      %v488 = vadd.s32 %v485, %v479
      %v489 = vadd.s32 %v485, %v480
      %v490 = vadd.s32 %v485, %v481
      %v491 = vadd.s32 %v485, %v482
      %v492 = vadd.s32 %v485, %v483
      %v493 = vadd.s32 %v485, %v484
      %vm494 = vcmp.lt.s32.totalorder %v486, 64
      %vm495 = vcmp.lt.s32.totalorder %v487, 64
      %vm496 = vcmp.lt.s32.totalorder %v488, 64
      %vm497 = vcmp.lt.s32.totalorder %v489, 64
      %vm498 = vcmp.lt.s32.totalorder %v490, 64
      %vm499 = vcmp.lt.s32.totalorder %v491, 64
      %vm500 = vcmp.lt.s32.totalorder %v492, 64
      %vm501 = vcmp.lt.s32.totalorder %v493, 64
      %v502 = vsel %vm494, 0.0, 1e+30
      %v503 = vsel %vm495, 0.0, 1e+30
      %v504 = vsel %vm496, 0.0, 1e+30
      %v505 = vsel %vm497, 0.0, 1e+30
      %v506 = vsel %vm498, 0.0, 1e+30
      %v507 = vsel %vm499, 0.0, 1e+30
      %v508 = vsel %vm500, 0.0, 1e+30
      %v509 = vsel %vm501, 0.0, 1e+30
      %v510 = vadd.f32 %v453, %v502
      %v511 = vadd.f32 %v456, %v503
      %v512 = vadd.f32 %v459, %v504
      %v513 = vadd.f32 %v462, %v505
      %v514 = vadd.f32 %v465, %v506
      %v515 = vadd.f32 %v468, %v507
      %v516 = vadd.f32 %v471, %v508
      %v517 = vadd.f32 %v474, %v509
      %v518 = vsub.f32 %v453, %v502
      %v519 = vsub.f32 %v456, %v503
      %v520 = vsub.f32 %v459, %v504
      %v521 = vsub.f32 %v462, %v505
      %v522 = vsub.f32 %v465, %v506
      %v523 = vsub.f32 %v468, %v507
      %v524 = vsub.f32 %v471, %v508
      %v525 = vsub.f32 %v474, %v509
      %v526 = vld [vmem:[#allocation2] sm:$0x1f]
      %v527 = vld [vmem:[#allocation3] sm:$0x1]
      %v528 = vmul.f32 %v416, -2.0
      %v529 = vmul.f32 %v418, -2.0
      %v530 = vmul.f32 %v421, -2.0
      %v531 = vmul.f32 %v423, -2.0
      %v532 = vadd.f32 %v528, %v518
      %v533 = vadd.f32 %v529, %v519
      %v534 = vadd.f32 %v530, %v520
      %v535 = vadd.f32 %v531, %v521
      %v536 = vsel %vm381, %v532, -inf
      %v537 = vsel %vm381, %v533, -inf
      %v538 = vsel %vm381, %v534, -inf
      %v539 = vsel %vm381, %v535, -inf
      %v540 = vmax.f32 %v536, %v537
      %v541 = vmax.f32 %v538, %v539
      %v542 = vmax.f32 %v540, %v541
      %v543 = vrot.slane %v542, 4
      %v544 = vmax.f32 %v542, %v543
      %v545 = vrot.slane %v544, 2
      %v546 = vmax.f32 %v544, %v545
      %v547 = vrot.slane %v546, 1
      %v548 = vmax.f32 %v546, %v547
      %v549 = vmax.f32 %v527, %v548
      %v550 = vadd.f32 %v528, %v510
      %v551 = vadd.f32 %v529, %v511
      %v552 = vadd.f32 %v530, %v512
      %v553 = vadd.f32 %v531, %v513
      %v555 = vperm.slane %v340, 0
      %v557 = vadd.f32 %v550, %v555
      %v558 = vadd.f32 %v551, %v555
      %v559 = vadd.f32 %v552, %v555
      %v560 = vadd.f32 %v553, %v555
      %v561 = vmax.f32 %v557, 0.0
      %v562 = vmax.f32 %v558, 0.0
      %v563 = vmax.f32 %v559, 0.0
      %v564 = vmax.f32 %v560, 0.0
      %vm569 = vcmask 1044480
      %v570 = vrot.slane %v561, 3
      %v571 = vrot.slane %v562, 3
      %v572 = vsel %vm569, %v570, %v571
      %v573 = vrot.slane %v563, 3
      %v574 = vsel %vm569, %v571, %v573
      %v575 = vrot.slane %v564, 3
      %v576 = vsel %vm569, %v573, %v575
      %v582 = vsel %vm569, %v526, %v570
      %v583 = vsel %vm381, %v582, inf
      %v584 = vsel %vm381, %v572, inf
      %v585 = vsel %vm381, %v574, inf
      %v586 = vsel %vm381, %v576, inf
      %vm587 = vcmask 520192
      %v588 = vsel %vm587, %v575, inf
      %v589 = vmin.f32 %v583, %v588
      %v590 = vmin.f32 %v589, %v584
      %v591 = vmin.f32 %v585, %v586
      %v592 = vmin.f32 %v590, %v591
      %v593 = vrot.slane %v592, 4
      %v594 = vmin.f32 %v592, %v593
      %v595 = vrot.slane %v594, 2
      %v596 = vmin.f32 %v594, %v595
      %v597 = vrot.slane %v596, 1
      %v598 = vmin.f32 %v596, %v597
      %vm599 = vcmp.le.f32.partialorder %v582, %v598
      %vm600 = vcmp.le.f32.partialorder %v572, %v598
      %vm601 = vcmp.le.f32.partialorder %v574, %v598
      %vm602 = vcmp.le.f32.partialorder %v576, %v598
      %vm603 = vcmp.le.f32.partialorder %v575, %v598
      %v604 = vsel %vm599, %v477, 37
      %v605 = vsel %vm600, %v478, 37
      %v606 = vsel %vm601, %v479, 37
      %v607 = vsel %vm602, %v480, 37
      %v608 = vsel %vm603, %v481, 37
      %v609 = vsel %vm381, %v604, 2147483647
      %v610 = vsel %vm381, %v605, 2147483647
      %v611 = vsel %vm381, %v606, 2147483647
      %v612 = vsel %vm381, %v607, 2147483647
      %v613 = vsel %vm587, %v608, 2147483647
      %vm614 = vcmp.lt.s32.totalorder %v609, %v613
      %v615 = vsel %vm614, %v609, %v613
      %vm616 = vcmp.lt.s32.totalorder %v615, %v610
      %v617 = vsel %vm616, %v615, %v610
      %vm618 = vcmp.lt.s32.totalorder %v611, %v612
      %v619 = vsel %vm618, %v611, %v612
      %vm620 = vcmp.lt.s32.totalorder %v617, %v619
      %v621 = vsel %vm620, %v617, %v619
      %v622 = vrot.slane %v621, 4
      %vm623 = vcmp.lt.s32.totalorder %v621, %v622
      %v624 = vsel %vm623, %v621, %v622
      %v625 = vrot.slane %v624, 2
      %vm626 = vcmp.lt.s32.totalorder %v624, %v625
      %v627 = vsel %vm626, %v624, %v625
      %v628 = vrot.slane %v627, 1
      %vm629 = vcmp.lt.s32.totalorder %v627, %v628
      %v630 = vsel %vm629, %v627, %v628
      %vm631 = vcmp.eq.s32.totalorder %v477, %v630
      %vm632 = vcmp.eq.s32.totalorder %v478, %v630
      %vm633 = vcmp.eq.s32.totalorder %v479, %v630
      %vm634 = vcmp.eq.s32.totalorder %v480, %v630
      %vm635 = vcmp.eq.s32.totalorder %v481, %v630
      %v636 = vsel %vm631, 1e+30, %v582
      %v637 = vsel %vm632, 1e+30, %v572
      %v638 = vsel %vm633, 1e+30, %v574
      %v639 = vsel %vm634, 1e+30, %v576
      %v640 = vsel %vm635, 1e+30, %v575
      %v641 = vsel %vm381, %v636, inf
      %v642 = vsel %vm381, %v637, inf
      %v643 = vsel %vm381, %v638, inf
      %v644 = vsel %vm381, %v639, inf
      %v645 = vsel %vm587, %v640, inf
      %v646 = vmin.f32 %v641, %v645
      %v647 = vmin.f32 %v646, %v642
      %v648 = vmin.f32 %v643, %v644
      %v649 = vmin.f32 %v647, %v648
      %v650 = vrot.slane %v649, 4
      %v651 = vmin.f32 %v649, %v650
      %v652 = vrot.slane %v651, 2
      %v653 = vmin.f32 %v651, %v652
      %v654 = vrot.slane %v653, 1
      %v655 = vmin.f32 %v653, %v654
      %vm656 = vcmp.le.f32.partialorder %v636, %v655
      %vm657 = vcmp.le.f32.partialorder %v637, %v655
      %vm658 = vcmp.le.f32.partialorder %v638, %v655
      %vm659 = vcmp.le.f32.partialorder %v639, %v655
      %vm660 = vcmp.le.f32.partialorder %v640, %v655
      %v661 = vsel %vm656, %v477, 37
      %v662 = vsel %vm657, %v478, 37
      %v663 = vsel %vm658, %v479, 37
      %v664 = vsel %vm659, %v480, 37
      %v665 = vsel %vm660, %v481, 37
      %v666 = vsel %vm381, %v661, 2147483647
      %v667 = vsel %vm381, %v662, 2147483647
      %v668 = vsel %vm381, %v663, 2147483647
      %v669 = vsel %vm381, %v664, 2147483647
      %v670 = vsel %vm587, %v665, 2147483647
      %vm671 = vcmp.lt.s32.totalorder %v666, %v670
      %v672 = vsel %vm671, %v666, %v670
      %vm673 = vcmp.lt.s32.totalorder %v672, %v667
      %v674 = vsel %vm673, %v672, %v667
      %vm675 = vcmp.lt.s32.totalorder %v668, %v669
      %v676 = vsel %vm675, %v668, %v669
      %vm677 = vcmp.lt.s32.totalorder %v674, %v676
      %v678 = vsel %vm677, %v674, %v676
      %v679 = vrot.slane %v678, 4
      %vm680 = vcmp.lt.s32.totalorder %v678, %v679
      %v681 = vsel %vm680, %v678, %v679
      %v682 = vrot.slane %v681, 2
      %vm683 = vcmp.lt.s32.totalorder %v681, %v682
      %v684 = vsel %vm683, %v681, %v682
      %v685 = vrot.slane %v684, 1
      %vm686 = vcmp.lt.s32.totalorder %v684, %v685
      %v687 = vsel %vm686, %v684, %v685
      %vm688 = vcmp.eq.s32.totalorder %v477, %v687
      %vm689 = vcmp.eq.s32.totalorder %v478, %v687
      %vm690 = vcmp.eq.s32.totalorder %v479, %v687
      %vm691 = vcmp.eq.s32.totalorder %v480, %v687
      %vm692 = vcmp.eq.s32.totalorder %v481, %v687
      %v693 = vsel %vm688, 1e+30, %v636
      %v694 = vsel %vm689, 1e+30, %v637
      %v695 = vsel %vm690, 1e+30, %v638
      %v696 = vsel %vm691, 1e+30, %v639
      %v697 = vsel %vm692, 1e+30, %v640
      %v698 = vsel %vm381, %v693, inf
      %v699 = vsel %vm381, %v694, inf
      %v700 = vsel %vm381, %v695, inf
      %v701 = vsel %vm381, %v696, inf
      %v702 = vsel %vm587, %v697, inf
      %v703 = vmin.f32 %v698, %v702
      %v704 = vmin.f32 %v703, %v699
      %v705 = vmin.f32 %v700, %v701
      %v706 = vmin.f32 %v704, %v705
      %v707 = vrot.slane %v706, 4
      %v708 = vmin.f32 %v706, %v707
      %v709 = vrot.slane %v708, 2
      %v710 = vmin.f32 %v708, %v709
      %v711 = vrot.slane %v710, 1
      %v712 = vmin.f32 %v710, %v711
      %vm713 = vcmp.le.f32.partialorder %v693, %v712
      %vm714 = vcmp.le.f32.partialorder %v694, %v712
      %vm715 = vcmp.le.f32.partialorder %v695, %v712
      %vm716 = vcmp.le.f32.partialorder %v696, %v712
      %vm717 = vcmp.le.f32.partialorder %v697, %v712
      %v718 = vsel %vm713, %v477, 37
      %v719 = vsel %vm714, %v478, 37
      %v720 = vsel %vm715, %v479, 37
      %v721 = vsel %vm716, %v480, 37
      %v722 = vsel %vm717, %v481, 37
      %v723 = vsel %vm381, %v718, 2147483647
      %v724 = vsel %vm381, %v719, 2147483647
      %v725 = vsel %vm381, %v720, 2147483647
      %v726 = vsel %vm381, %v721, 2147483647
      %v727 = vsel %vm587, %v722, 2147483647
      %vm728 = vcmp.lt.s32.totalorder %v723, %v727
      %v729 = vsel %vm728, %v723, %v727
      %vm730 = vcmp.lt.s32.totalorder %v729, %v724
      %v731 = vsel %vm730, %v729, %v724
      %vm732 = vcmp.lt.s32.totalorder %v725, %v726
      %v733 = vsel %vm732, %v725, %v726
      %vm734 = vcmp.lt.s32.totalorder %v731, %v733
      %v735 = vsel %vm734, %v731, %v733
      %v736 = vrot.slane %v735, 4
      %vm737 = vcmp.lt.s32.totalorder %v735, %v736
      %v738 = vsel %vm737, %v735, %v736
      %v739 = vrot.slane %v738, 2
      %vm740 = vcmp.lt.s32.totalorder %v738, %v739
      %v741 = vsel %vm740, %v738, %v739
      %v742 = vrot.slane %v741, 1
      %vm743 = vcmp.lt.s32.totalorder %v741, %v742
      %v744 = vsel %vm743, %v741, %v742
      %vm745 = vcmp.eq.s32.totalorder %v477, %v744
      %vm746 = vcmp.eq.s32.totalorder %v478, %v744
      %vm747 = vcmp.eq.s32.totalorder %v479, %v744
      %vm748 = vcmp.eq.s32.totalorder %v480, %v744
      %vm749 = vcmp.eq.s32.totalorder %v481, %v744
      %v750 = vsel %vm745, 1e+30, %v693
      %v751 = vsel %vm746, 1e+30, %v694
      %v752 = vsel %vm747, 1e+30, %v695
      %v753 = vsel %vm748, 1e+30, %v696
      %v754 = vsel %vm749, 1e+30, %v697
      %v755 = vsel %vm381, %v750, inf
      %v756 = vsel %vm381, %v751, inf
      %v757 = vsel %vm381, %v752, inf
      %v758 = vsel %vm381, %v753, inf
      %v759 = vsel %vm587, %v754, inf
      %v760 = vmin.f32 %v755, %v759
      %v761 = vmin.f32 %v760, %v756
      %v762 = vmin.f32 %v757, %v758
      %v763 = vmin.f32 %v761, %v762
      %v764 = vrot.slane %v763, 4
      %v765 = vmin.f32 %v763, %v764
      %v766 = vrot.slane %v765, 2
      %v767 = vmin.f32 %v765, %v766
      %v768 = vrot.slane %v767, 1
      %v769 = vmin.f32 %v767, %v768
      %vm770 = vcmp.le.f32.partialorder %v750, %v769
      %vm771 = vcmp.le.f32.partialorder %v751, %v769
      %vm772 = vcmp.le.f32.partialorder %v752, %v769
      %vm773 = vcmp.le.f32.partialorder %v753, %v769
      %vm774 = vcmp.le.f32.partialorder %v754, %v769
      %v775 = vsel %vm770, %v477, 37
      %v776 = vsel %vm771, %v478, 37
      %v777 = vsel %vm772, %v479, 37
      %v778 = vsel %vm773, %v480, 37
      %v779 = vsel %vm774, %v481, 37
      %v780 = vsel %vm381, %v775, 2147483647
      %v781 = vsel %vm381, %v776, 2147483647
      %v782 = vsel %vm381, %v777, 2147483647
      %v783 = vsel %vm381, %v778, 2147483647
      %v784 = vsel %vm587, %v779, 2147483647
      %vm785 = vcmp.lt.s32.totalorder %v780, %v784
      %v786 = vsel %vm785, %v780, %v784
      %vm787 = vcmp.lt.s32.totalorder %v786, %v781
      %v788 = vsel %vm787, %v786, %v781
      %vm789 = vcmp.lt.s32.totalorder %v782, %v783
      %v790 = vsel %vm789, %v782, %v783
      %vm791 = vcmp.lt.s32.totalorder %v788, %v790
      %v792 = vsel %vm791, %v788, %v790
      %v793 = vrot.slane %v792, 4
      %vm794 = vcmp.lt.s32.totalorder %v792, %v793
      %v795 = vsel %vm794, %v792, %v793
      %v796 = vrot.slane %v795, 2
      %vm797 = vcmp.lt.s32.totalorder %v795, %v796
      %v798 = vsel %vm797, %v795, %v796
      %v799 = vrot.slane %v798, 1
      %vm800 = vcmp.lt.s32.totalorder %v798, %v799
      %v801 = vsel %vm800, %v798, %v799
      %vm802 = vcmp.eq.s32.totalorder %v477, %v801
      %vm803 = vcmp.eq.s32.totalorder %v478, %v801
      %vm804 = vcmp.eq.s32.totalorder %v479, %v801
      %vm805 = vcmp.eq.s32.totalorder %v480, %v801
      %vm806 = vcmp.eq.s32.totalorder %v481, %v801
      %v807 = vsel %vm802, 1e+30, %v750
      %v808 = vsel %vm803, 1e+30, %v751
      %v809 = vsel %vm804, 1e+30, %v752
      %v810 = vsel %vm805, 1e+30, %v753
      %v811 = vsel %vm806, 1e+30, %v754
      %v812 = vsel %vm381, %v807, inf
      %v813 = vsel %vm381, %v808, inf
      %v814 = vsel %vm381, %v809, inf
      %v815 = vsel %vm381, %v810, inf
      %v816 = vsel %vm587, %v811, inf
      %v817 = vmin.f32 %v812, %v816
      %v818 = vmin.f32 %v817, %v813
      %v819 = vmin.f32 %v814, %v815
      %v820 = vmin.f32 %v818, %v819
      %v821 = vrot.slane %v820, 4
      %v822 = vmin.f32 %v820, %v821
      %v823 = vrot.slane %v822, 2
      %v824 = vmin.f32 %v822, %v823
      %v825 = vrot.slane %v824, 1
      %v826 = vmin.f32 %v824, %v825
      %vm827 = vcmask 1040384
      %v828 = vsel %vm827, %v598, %v655
      %vm829 = vcmask 1041408
      %v830 = vsel %vm829, %v828, %v712
      %vm831 = vcmask 1042432
      %v832 = vsel %vm831, %v830, %v769
      %vm833 = vcmask 1043456
      %v834 = vsel %vm833, %v832, %v826
      %v835 = vmul.f32 %v426, -2.0
      %v836 = vmul.f32 %v428, -2.0
      %v837 = vmul.f32 %v431, -2.0
      %v838 = vmul.f32 %v433, -2.0
      %v839 = vadd.f32 %v835, %v522
      %v840 = vadd.f32 %v836, %v523
      %v841 = vadd.f32 %v837, %v524
      %v842 = vadd.f32 %v838, %v525
      %v843 = vsel %vm381, %v839, -inf
      %v844 = vsel %vm381, %v840, -inf
      %v845 = vsel %vm381, %v841, -inf
      %v846 = vsel %vm381, %v842, -inf
      %v847 = vmax.f32 %v843, %v844
      %v848 = vmax.f32 %v845, %v846
      %v849 = vmax.f32 %v847, %v848
      %v850 = vrot.slane %v849, 4
      %v851 = vmax.f32 %v849, %v850
      %v852 = vrot.slane %v851, 2
      %v853 = vmax.f32 %v851, %v852
      %v854 = vrot.slane %v853, 1
      %v855 = vmax.f32 %v853, %v854
      %v856 = vmax.f32 %v549, %v855
      %v857 = vadd.f32 %v835, %v514
      %v858 = vadd.f32 %v836, %v515
      %v859 = vadd.f32 %v837, %v516
      %v860 = vadd.f32 %v838, %v517
      %v861 = vadd.f32 %v857, %v555
      %v862 = vadd.f32 %v858, %v555
      %v863 = vadd.f32 %v859, %v555
      %v864 = vadd.f32 %v860, %v555
      %v865 = vmax.f32 %v861, 0.0
      %v866 = vmax.f32 %v862, 0.0
      %v867 = vmax.f32 %v863, 0.0
      %v868 = vmax.f32 %v864, 0.0
      %v873 = vrot.slane %v865, 3
      %v874 = vrot.slane %v866, 3
      %v875 = vsel %vm569, %v873, %v874
      %v876 = vrot.slane %v867, 3
      %v877 = vsel %vm569, %v874, %v876
      %v878 = vrot.slane %v868, 3
      %v879 = vsel %vm569, %v876, %v878
      %v885 = vsel %vm569, %v834, %v873
      %v886 = vsel %vm381, %v885, inf
      %v887 = vsel %vm381, %v875, inf
      %v888 = vsel %vm381, %v877, inf
      %v889 = vsel %vm381, %v879, inf
      %v890 = vsel %vm587, %v878, inf
      %v891 = vmin.f32 %v886, %v890
      %v892 = vmin.f32 %v891, %v887
      %v893 = vmin.f32 %v888, %v889
      %v894 = vmin.f32 %v892, %v893
      %v895 = vrot.slane %v894, 4
      %v896 = vmin.f32 %v894, %v895
      %v897 = vrot.slane %v896, 2
      %v898 = vmin.f32 %v896, %v897
      %v899 = vrot.slane %v898, 1
      %v900 = vmin.f32 %v898, %v899
      %vm901 = vcmp.le.f32.partialorder %v885, %v900
      %vm902 = vcmp.le.f32.partialorder %v875, %v900
      %vm903 = vcmp.le.f32.partialorder %v877, %v900
      %vm904 = vcmp.le.f32.partialorder %v879, %v900
      %vm905 = vcmp.le.f32.partialorder %v878, %v900
      %v906 = vsel %vm901, %v477, 37
      %v907 = vsel %vm902, %v478, 37
      %v908 = vsel %vm903, %v479, 37
      %v909 = vsel %vm904, %v480, 37
      %v910 = vsel %vm905, %v481, 37
      %v911 = vsel %vm381, %v906, 2147483647
      %v912 = vsel %vm381, %v907, 2147483647
      %v913 = vsel %vm381, %v908, 2147483647
      %v914 = vsel %vm381, %v909, 2147483647
      %v915 = vsel %vm587, %v910, 2147483647
      %vm916 = vcmp.lt.s32.totalorder %v911, %v915
      %v917 = vsel %vm916, %v911, %v915
      %vm918 = vcmp.lt.s32.totalorder %v917, %v912
      %v919 = vsel %vm918, %v917, %v912
      %vm920 = vcmp.lt.s32.totalorder %v913, %v914
      %v921 = vsel %vm920, %v913, %v914
      %vm922 = vcmp.lt.s32.totalorder %v919, %v921
      %v923 = vsel %vm922, %v919, %v921
      %v924 = vrot.slane %v923, 4
      %vm925 = vcmp.lt.s32.totalorder %v923, %v924
      %v926 = vsel %vm925, %v923, %v924
      %v927 = vrot.slane %v926, 2
      %vm928 = vcmp.lt.s32.totalorder %v926, %v927
      %v929 = vsel %vm928, %v926, %v927
      %v930 = vrot.slane %v929, 1
      %vm931 = vcmp.lt.s32.totalorder %v929, %v930
      %v932 = vsel %vm931, %v929, %v930
      %vm933 = vcmp.eq.s32.totalorder %v477, %v932
      %vm934 = vcmp.eq.s32.totalorder %v478, %v932
      %vm935 = vcmp.eq.s32.totalorder %v479, %v932
      %vm936 = vcmp.eq.s32.totalorder %v480, %v932
      %vm937 = vcmp.eq.s32.totalorder %v481, %v932
      %v938 = vsel %vm933, 1e+30, %v885
      %v939 = vsel %vm934, 1e+30, %v875
      %v940 = vsel %vm935, 1e+30, %v877
      %v941 = vsel %vm936, 1e+30, %v879
      %v942 = vsel %vm937, 1e+30, %v878
      %v943 = vsel %vm381, %v938, inf
      %v944 = vsel %vm381, %v939, inf
      %v945 = vsel %vm381, %v940, inf
      %v946 = vsel %vm381, %v941, inf
      %v947 = vsel %vm587, %v942, inf
      %v948 = vmin.f32 %v943, %v947
      %v949 = vmin.f32 %v948, %v944
      %v950 = vmin.f32 %v945, %v946
      %v951 = vmin.f32 %v949, %v950
      %v952 = vrot.slane %v951, 4
      %v953 = vmin.f32 %v951, %v952
      %v954 = vrot.slane %v953, 2
      %v955 = vmin.f32 %v953, %v954
      %v956 = vrot.slane %v955, 1
      %v957 = vmin.f32 %v955, %v956
      %vm958 = vcmp.le.f32.partialorder %v938, %v957
      %vm959 = vcmp.le.f32.partialorder %v939, %v957
      %vm960 = vcmp.le.f32.partialorder %v940, %v957
      %vm961 = vcmp.le.f32.partialorder %v941, %v957
      %vm962 = vcmp.le.f32.partialorder %v942, %v957
      %v963 = vsel %vm958, %v477, 37
      %v964 = vsel %vm959, %v478, 37
      %v965 = vsel %vm960, %v479, 37
      %v966 = vsel %vm961, %v480, 37
      %v967 = vsel %vm962, %v481, 37
      %v968 = vsel %vm381, %v963, 2147483647
      %v969 = vsel %vm381, %v964, 2147483647
      %v970 = vsel %vm381, %v965, 2147483647
      %v971 = vsel %vm381, %v966, 2147483647
      %v972 = vsel %vm587, %v967, 2147483647
      %vm973 = vcmp.lt.s32.totalorder %v968, %v972
      %v974 = vsel %vm973, %v968, %v972
      %vm975 = vcmp.lt.s32.totalorder %v974, %v969
      %v976 = vsel %vm975, %v974, %v969
      %vm977 = vcmp.lt.s32.totalorder %v970, %v971
      %v978 = vsel %vm977, %v970, %v971
      %vm979 = vcmp.lt.s32.totalorder %v976, %v978
      %v980 = vsel %vm979, %v976, %v978
      %v981 = vrot.slane %v980, 4
      %vm982 = vcmp.lt.s32.totalorder %v980, %v981
      %v983 = vsel %vm982, %v980, %v981
      %v984 = vrot.slane %v983, 2
      %vm985 = vcmp.lt.s32.totalorder %v983, %v984
      %v986 = vsel %vm985, %v983, %v984
      %v987 = vrot.slane %v986, 1
      %vm988 = vcmp.lt.s32.totalorder %v986, %v987
      %v989 = vsel %vm988, %v986, %v987
      %vm990 = vcmp.eq.s32.totalorder %v477, %v989
      %vm991 = vcmp.eq.s32.totalorder %v478, %v989
      %vm992 = vcmp.eq.s32.totalorder %v479, %v989
      %vm993 = vcmp.eq.s32.totalorder %v480, %v989
      %vm994 = vcmp.eq.s32.totalorder %v481, %v989
      %v995 = vsel %vm990, 1e+30, %v938
      %v996 = vsel %vm991, 1e+30, %v939
      %v997 = vsel %vm992, 1e+30, %v940
      %v998 = vsel %vm993, 1e+30, %v941
      %v999 = vsel %vm994, 1e+30, %v942
      %v1000 = vsel %vm381, %v995, inf
      %v1001 = vsel %vm381, %v996, inf
      %v1002 = vsel %vm381, %v997, inf
      %v1003 = vsel %vm381, %v998, inf
      %v1004 = vsel %vm587, %v999, inf
      %v1005 = vmin.f32 %v1000, %v1004
      %v1006 = vmin.f32 %v1005, %v1001
      %v1007 = vmin.f32 %v1002, %v1003
      %v1008 = vmin.f32 %v1006, %v1007
      %v1009 = vrot.slane %v1008, 4
      %v1010 = vmin.f32 %v1008, %v1009
      %v1011 = vrot.slane %v1010, 2
      %v1012 = vmin.f32 %v1010, %v1011
      %v1013 = vrot.slane %v1012, 1
      %v1014 = vmin.f32 %v1012, %v1013
      %vm1015 = vcmp.le.f32.partialorder %v995, %v1014
      %vm1016 = vcmp.le.f32.partialorder %v996, %v1014
      %vm1017 = vcmp.le.f32.partialorder %v997, %v1014
      %vm1018 = vcmp.le.f32.partialorder %v998, %v1014
      %vm1019 = vcmp.le.f32.partialorder %v999, %v1014
      %v1020 = vsel %vm1015, %v477, 37
      %v1021 = vsel %vm1016, %v478, 37
      %v1022 = vsel %vm1017, %v479, 37
      %v1023 = vsel %vm1018, %v480, 37
      %v1024 = vsel %vm1019, %v481, 37
      %v1025 = vsel %vm381, %v1020, 2147483647
      %v1026 = vsel %vm381, %v1021, 2147483647
      %v1027 = vsel %vm381, %v1022, 2147483647
      %v1028 = vsel %vm381, %v1023, 2147483647
      %v1029 = vsel %vm587, %v1024, 2147483647
      %vm1030 = vcmp.lt.s32.totalorder %v1025, %v1029
      %v1031 = vsel %vm1030, %v1025, %v1029
      %vm1032 = vcmp.lt.s32.totalorder %v1031, %v1026
      %v1033 = vsel %vm1032, %v1031, %v1026
      %vm1034 = vcmp.lt.s32.totalorder %v1027, %v1028
      %v1035 = vsel %vm1034, %v1027, %v1028
      %vm1036 = vcmp.lt.s32.totalorder %v1033, %v1035
      %v1037 = vsel %vm1036, %v1033, %v1035
      %v1038 = vrot.slane %v1037, 4
      %vm1039 = vcmp.lt.s32.totalorder %v1037, %v1038
      %v1040 = vsel %vm1039, %v1037, %v1038
      %v1041 = vrot.slane %v1040, 2
      %vm1042 = vcmp.lt.s32.totalorder %v1040, %v1041
      %v1043 = vsel %vm1042, %v1040, %v1041
      %v1044 = vrot.slane %v1043, 1
      %vm1045 = vcmp.lt.s32.totalorder %v1043, %v1044
      %v1046 = vsel %vm1045, %v1043, %v1044
      %vm1047 = vcmp.eq.s32.totalorder %v477, %v1046
      %vm1048 = vcmp.eq.s32.totalorder %v478, %v1046
      %vm1049 = vcmp.eq.s32.totalorder %v479, %v1046
      %vm1050 = vcmp.eq.s32.totalorder %v480, %v1046
      %vm1051 = vcmp.eq.s32.totalorder %v481, %v1046
      %v1052 = vsel %vm1047, 1e+30, %v995
      %v1053 = vsel %vm1048, 1e+30, %v996
      %v1054 = vsel %vm1049, 1e+30, %v997
      %v1055 = vsel %vm1050, 1e+30, %v998
      %v1056 = vsel %vm1051, 1e+30, %v999
      %v1057 = vsel %vm381, %v1052, inf
      %v1058 = vsel %vm381, %v1053, inf
      %v1059 = vsel %vm381, %v1054, inf
      %v1060 = vsel %vm381, %v1055, inf
      %v1061 = vsel %vm587, %v1056, inf
      %v1062 = vmin.f32 %v1057, %v1061
      %v1063 = vmin.f32 %v1062, %v1058
      %v1064 = vmin.f32 %v1059, %v1060
      %v1065 = vmin.f32 %v1063, %v1064
      %v1066 = vrot.slane %v1065, 4
      %v1067 = vmin.f32 %v1065, %v1066
      %v1068 = vrot.slane %v1067, 2
      %v1069 = vmin.f32 %v1067, %v1068
      %v1070 = vrot.slane %v1069, 1
      %v1071 = vmin.f32 %v1069, %v1070
      %vm1072 = vcmp.le.f32.partialorder %v1052, %v1071
      %vm1073 = vcmp.le.f32.partialorder %v1053, %v1071
      %vm1074 = vcmp.le.f32.partialorder %v1054, %v1071
      %vm1075 = vcmp.le.f32.partialorder %v1055, %v1071
      %vm1076 = vcmp.le.f32.partialorder %v1056, %v1071
      %v1077 = vsel %vm1072, %v477, 37
      %v1078 = vsel %vm1073, %v478, 37
      %v1079 = vsel %vm1074, %v479, 37
      %v1080 = vsel %vm1075, %v480, 37
      %v1081 = vsel %vm1076, %v481, 37
      %v1082 = vsel %vm381, %v1077, 2147483647
      %v1083 = vsel %vm381, %v1078, 2147483647
      %v1084 = vsel %vm381, %v1079, 2147483647
      %v1085 = vsel %vm381, %v1080, 2147483647
      %v1086 = vsel %vm587, %v1081, 2147483647
      %vm1087 = vcmp.lt.s32.totalorder %v1082, %v1086
      %v1088 = vsel %vm1087, %v1082, %v1086
      %vm1089 = vcmp.lt.s32.totalorder %v1088, %v1083
      %v1090 = vsel %vm1089, %v1088, %v1083
      %vm1091 = vcmp.lt.s32.totalorder %v1084, %v1085
      %v1092 = vsel %vm1091, %v1084, %v1085
      %vm1093 = vcmp.lt.s32.totalorder %v1090, %v1092
      %v1094 = vsel %vm1093, %v1090, %v1092
      %v1095 = vrot.slane %v1094, 4
      %vm1096 = vcmp.lt.s32.totalorder %v1094, %v1095
      %v1097 = vsel %vm1096, %v1094, %v1095
      %v1098 = vrot.slane %v1097, 2
      %vm1099 = vcmp.lt.s32.totalorder %v1097, %v1098
      %v1100 = vsel %vm1099, %v1097, %v1098
      %v1101 = vrot.slane %v1100, 1
      %vm1102 = vcmp.lt.s32.totalorder %v1100, %v1101
      %v1103 = vsel %vm1102, %v1100, %v1101
      %vm1104 = vcmp.eq.s32.totalorder %v477, %v1103
      %vm1105 = vcmp.eq.s32.totalorder %v478, %v1103
      %vm1106 = vcmp.eq.s32.totalorder %v479, %v1103
      %vm1107 = vcmp.eq.s32.totalorder %v480, %v1103
      %vm1108 = vcmp.eq.s32.totalorder %v481, %v1103
      %v1109 = vsel %vm1104, 1e+30, %v1052
      %v1110 = vsel %vm1105, 1e+30, %v1053
      %v1111 = vsel %vm1106, 1e+30, %v1054
      %v1112 = vsel %vm1107, 1e+30, %v1055
      %v1113 = vsel %vm1108, 1e+30, %v1056
      %v1114 = vsel %vm381, %v1109, inf
      %v1115 = vsel %vm381, %v1110, inf
      %v1116 = vsel %vm381, %v1111, inf
      %v1117 = vsel %vm381, %v1112, inf
      %v1118 = vsel %vm587, %v1113, inf
      %v1119 = vmin.f32 %v1114, %v1118
      %v1120 = vmin.f32 %v1119, %v1115
      %v1121 = vmin.f32 %v1116, %v1117
      %v1122 = vmin.f32 %v1120, %v1121
      %v1123 = vrot.slane %v1122, 4
      %v1124 = vmin.f32 %v1122, %v1123
      %v1125 = vrot.slane %v1124, 2
      %v1126 = vmin.f32 %v1124, %v1125
      %v1127 = vrot.slane %v1126, 1
      %v1128 = vmin.f32 %v1126, %v1127
      %v1129 = vsel %vm827, %v900, %v957
      %v1130 = vsel %vm829, %v1129, %v1014
      %v1131 = vsel %vm831, %v1130, %v1071
      %v1132 = vsel %vm833, %v1131, %v1128
      %1133 = vst.msk [vmem:[#allocation2] sm:$0x1f] %vm587, %v1132
      %vm1134 = vcmask 516096
      %1135 = vst.msk [vmem:[#allocation3] sm:$0x1] %vm1134, %v856
      // Predicated region
      $region37: #{forward.18} parent=31 // pred_check
        %p1136 = pneg %p316
      $region38: #{forward.18} parent=31 // pred_check_branch
        %1138 = sbr.rel (%p1136) target = $region40
      $region39: #{forward.18} parent=31 // pred_region
        %v1139 = vsel %vm587, %v1132, 0.0
        %v1140 = vrot.slane %v1139, 4
        %v1141 = vadd.f32 %v1139, %v1140
        %v1142 = vrot.slane %v1141, 2
        %v1143 = vadd.f32 %v1141, %v1142
        %v1144 = vrot.slane %v1143, 1
        %v1145 = vadd.f32 %v1143, %v1144
        %v1146 = vrcp.pop 5.0
        %v1147 = vmul.f32 5.0, %v1146
        %v1148 = vsub.f32 1.0, %v1147
        %v1149 = vmul.f32 %v1146, %v1148
        %v1150 = vadd.f32 %v1146, %v1149
        %vm1151 = vweird.f32 %v1146
        %v1152 = vsel %vm1151, %v1146, %v1150
        %v1153 = vmul.f32 %v1145, %v1152
        %v1154 = vsub.f32 0.0, %v1153
        %v1155 = vmul.f32 %v1154, 0.015625
        %v1156 = vmul.f32 %v1155, 1.442695
        %v1157 = vpow.pop %v1156
        %1158 = vst.msk [vmem:[%s308] sm:$0x1] %vm1134, %v1157
        %v1159 = vadd.f32 %v856, %v340
        %v1160 = vmax.f32 %v1159, 0.0
        %1161 = vst.msk [vmem:[%s314] sm:$0x1] %vm1134, %v1160
      $region40: #{forward.18} parent=31 // pred_fallthru
        _
      %p1162 = scmp.lt.s32.totalorder %s21, 1
      %s1163 = scalar_select %p1162, %s21, 1
      %p1164 = scmp.lt.s32.totalorder %s22, 0
      %s1165 = scalar_select %p1164, %s22, 0
      %s1166 = sadd.s32 %s1165, %s1163
      %s1167 = scalar_lea.vmem %s3, %s1166
      %p1168 = scmp.lt.s32.totalorder %s21, 1
      %s1169 = scalar_select %p1168, %s21, 1
      %p1170 = scmp.lt.s32.totalorder %s22, 0
      %s1171 = scalar_select %p1170, %s22, 0
      %s1172 = sadd.s32 %s1171, %s1169
      %s1173 = scalar_lea.vmem %s4, %s1172
      // Predicated region
      $region41: #{forward.18} parent=31 // pred_check
        %p1174 = pneg %p139
      $region42: #{forward.18} parent=31 // pred_check_branch
        %1176 = sbr.rel (%p1174) target = $region44
      $region43: #{forward.18} parent=31 // pred_region
        _
      $region44: #{forward.18} parent=31 // pred_fallthru
        _
      // Predicated region
      $region45: #{forward.18} parent=31 // pred_check
        %p1177 = pneg %p167
      $region46: #{forward.18} parent=31 // pred_check_branch
        %1179 = sbr.rel (%p1177) target = $region48
      $region47: #{forward.18} parent=31 // pred_region
        _
      $region48: #{forward.18} parent=31 // pred_fallthru
        _
    $region32: #{forward.18} parent=5 // pred_fallthru
      _
    %p1180 = scmp.le.s32.totalorder 2, %s11
    // Predicated region
    $region49: #{forward.18} parent=5 // pred_check
      %p1181 = pneg %p1180
    $region50: #{forward.18} parent=5 // pred_check_branch
      %1183 = sbr.rel (%p1181) target = $region52
    $region51: #{forward.18} parent=5 // pred_region
      %s1184 = ssub.s32 %s11, 2
      // Predicated region
      $region53: #{forward.18} parent=51 // pred_check
        %p1185 = pneg %p145
      $region54: #{forward.18} parent=51 // pred_check_branch
        %1187 = sbr.rel (%p1185) target = $region56
      $region55: #{forward.18} parent=51 // pred_region
        %p1188 = scmp.lt.s32.totalorder %s24, 1
        %s1189 = scalar_select %p1188, %s24, 1
        %p1190 = scmp.lt.s32.totalorder %s25, 0
        %s1191 = scalar_select %p1190, %s25, 0
        %s1192 = sadd.s32 %s1191, %s1189
        %s1193 = scalar_lea.vmem %s3, %s1192
      $region56: #{forward.18} parent=51 // pred_fallthru
        _
      // Predicated region
      $region57: #{forward.18} parent=51 // pred_check
        %p1194 = pneg %p173
      $region58: #{forward.18} parent=51 // pred_check_branch
        %1196 = sbr.rel (%p1194) target = $region60
      $region59: #{forward.18} parent=51 // pred_region
        %p1197 = scmp.lt.s32.totalorder %s24, 1
        %s1198 = scalar_select %p1197, %s24, 1
        %p1199 = scmp.lt.s32.totalorder %s25, 0
        %s1200 = scalar_select %p1199, %s25, 0
        %s1201 = sadd.s32 %s1200, %s1198
        %s1202 = scalar_lea.vmem %s4, %s1201
      $region60: #{forward.18} parent=51 // pred_fallthru
        _
    $region52: #{forward.18} parent=5 // pred_fallthru
      _
  $region6: #{forward.18} parent=0 // loop_footer
    %s15 = sadd.s32 1, %s11
  $region7: #{forward.18} parent=0 // loop_footer_branch
    %10 = sbr.rel target = $region3
  $region8: #{forward.18} parent=0 // loop_exit
    _

// kernel: forward.19
$region0: #{forward.19}
  #allocation0 [shape = 'u32[]', space=smem, size = 0x4, offset = 0x4, fixed_abs, tag = 'smem constant byte address 0x4 - core index']
  #allocation1 [shape = 'u32[72,128]{1,0:T(1,128)}', space=vmem, size = 0x9000, scoped, tag = 'internal scratch']
  #allocation2 [shape = 'f32[1,64]{1,0:T(1,128)}', space=vmem, size = 0x200, scoped, tag = 'scratch operand']
  %s0 = inlined_call_operand.vmem [shape: bf16[2,64,64], index: 0, kind: input, shape index: {}, may-alias: {0,1}]
  %s1 = inlined_call_operand.vmem [shape: bf16[2,64,64], index: 1, kind: input, shape index: {}, may-alias: {0,1}]
  %s2 = inlined_call_operand.vmem [shape: f32[2,1,64], index: 2, kind: input, shape index: {}]
  %s3 = inlined_call_operand.vmem [shape: f32[2,64,128], index: 3, kind: input, shape index: {}]
  %s4 = inlined_call_operand.vmem [shape: f32[2,1,64], index: 4, kind: input, shape index: {}]
  %s5 = inlined_call_operand.vmem [shape: f32[2,1,1], index: 5, kind: input, shape index: {}]
  %s6 = inlined_call_operand.vmem [shape: f32[2,1,64], index: 6, kind: output, shape index: {}]
  %s7 = sld [smem:[#allocation0]]
  $region65: #{forward.19} parent=0
    _
  %s9 = ssub.s32 1, %s7
  %s10 = scalar_select 0, %s9, %s7
  loop: start=0, step=1, limit=4
  $region2: #{forward.19} parent=0 // loop_pre_header
    _
  $region3: #{forward.19} parent=0 // loop_header
    %s12 = sphi 0, %s16
    %p13 = scmp.ge.s32.totalorder %s12, 4
    %s19 = sphi 0, %s38
    %s20 = sphi 0, %s34
    %s21 = sphi 0, %s30
    %s22 = sphi 0, %s19
    %s23 = sphi 0, %s20
    %s24 = sphi 0, %s21
    %s25 = sphi 0, %s22
    %s26 = sphi 0, %s23
    %s27 = sphi 0, %s24
    %s43 = sphi 0, %s45
    %s46 = sphi 0, %s43
    %s47 = sphi 0, %s46
    %s63 = sphi 0, %s47
    %s71 = sphi 0, %s73
    %s74 = sphi 0, %s71
    %s75 = sphi 0, %s74
    %s91 = sphi 0, %s75
    %s99 = sphi 0, %s101
    %s102 = sphi 0, %s99
    %s103 = sphi 0, %s102
    %s119 = sphi 0, %s103
    %s127 = sphi 0, %s129
    %s130 = sphi 0, %s127
    %s131 = sphi 0, %s130
    %s147 = sphi 0, %s131
    %s155 = sphi 0, %s157
    %s158 = sphi 0, %s155
    %s159 = sphi 0, %s158
    %s175 = sphi 0, %s159
    %s181 = sphi 0, %s183
    %s184 = sphi 0, %s181
    %s185 = sphi 0, %s184
    %s201 = sphi 0, %s185
    %s209 = sphi 0, %s211
    %s212 = sphi 0, %s209
    %s213 = sphi 0, %s212
    %s229 = sphi 0, %s213
  $region4: #{forward.19} parent=0 // loop_header_branch
    %15 = sbr.rel (%p13) target = $region8
  $region5: #{forward.19} parent=0 // loop_body
    %s17 = ssub.s32 %s12, 1
    %s18 = ssub.s32 %s12, 2
    %s28 = sadd.s32 1, %s21
    %p29 = scmp.ge.s32.totalorder %s28, 1
    %s30 = scalar_select %p29, 0, %s28
    %s31 = sadd.s32 1, %s20
    %s32 = scalar_select %p29, %s31, %s20
    %p33 = scmp.ge.s32.totalorder %s32, 1
    %s34 = scalar_select %p33, 0, %s32
    %s35 = sadd.s32 1, %s19
    %s36 = scalar_select %p33, %s35, %s19
    %p37 = scmp.ge.s32.totalorder %s36, 2
    %s38 = scalar_select %p37, 0, %s36
    %s39 = ssub.s32 %s19, %s38
    %s40 = ssub.s32 %s20, %s34
    %s41 = sor.u32 %s39, %s40
    %p42 = scmp.eq.s32.totalorder %s41, 0
    %s44 = sadd.s32 %s43, 1
    %s45 = scalar_select %p42, %s43, %s44
    %p48 = pneg %p42
    %p49 = scmp.eq.s32.totalorder %s12, 1
    %p50 = por %p48, %p49
    %p51 = scmp.ne.s32.totalorder %s43, %s46
    %p52 = scmp.eq.s32.totalorder %s12, 0
    %p53 = por %p51, %p52
    %p54 = scmp.ne.s32.totalorder %s43, %s46
    %p55 = scmp.eq.s32.totalorder %s17, 1
    %p56 = por %p54, %p55
    %p57 = scmp.ne.s32.totalorder %s46, %s47
    %p58 = scmp.eq.s32.totalorder %s17, 0
    %p59 = por %p57, %p58
    %p60 = scmp.ne.s32.totalorder %s46, %s47
    %p61 = scmp.eq.s32.totalorder %s18, 1
    %p62 = por %p60, %p61
    %p64 = scmp.ne.s32.totalorder %s47, %s63
    %p65 = scmp.eq.s32.totalorder %s18, 0
    %p66 = por %p64, %p65
    %s67 = ssub.s32 %s19, %s38
    %s68 = ssub.s32 %s21, %s30
    %s69 = sor.u32 %s67, %s68
    %p70 = scmp.eq.s32.totalorder %s69, 0
    %s72 = sadd.s32 %s71, 1
    %s73 = scalar_select %p70, %s71, %s72
    %p76 = pneg %p70
    %p77 = scmp.eq.s32.totalorder %s12, 1
    %p78 = por %p76, %p77
    %p79 = scmp.ne.s32.totalorder %s71, %s74
    %p80 = scmp.eq.s32.totalorder %s12, 0
    %p81 = por %p79, %p80
    %p82 = scmp.ne.s32.totalorder %s71, %s74
    %p83 = scmp.eq.s32.totalorder %s17, 1
    %p84 = por %p82, %p83
    %p85 = scmp.ne.s32.totalorder %s74, %s75
    %p86 = scmp.eq.s32.totalorder %s17, 0
    %p87 = por %p85, %p86
    %p88 = scmp.ne.s32.totalorder %s74, %s75
    %p89 = scmp.eq.s32.totalorder %s18, 1
    %p90 = por %p88, %p89
    %p92 = scmp.ne.s32.totalorder %s75, %s91
    %p93 = scmp.eq.s32.totalorder %s18, 0
    %p94 = por %p92, %p93
    %s95 = ssub.s32 %s19, %s38
    %s96 = ssub.s32 %s20, %s34
    %s97 = sor.u32 %s95, %s96
    %p98 = scmp.eq.s32.totalorder %s97, 0
    %s100 = sadd.s32 %s99, 1
    %s101 = scalar_select %p98, %s99, %s100
    %p104 = pneg %p98
    %p105 = scmp.eq.s32.totalorder %s12, 1
    %p106 = por %p104, %p105
    %p107 = scmp.ne.s32.totalorder %s99, %s102
    %p108 = scmp.eq.s32.totalorder %s12, 0
    %p109 = por %p107, %p108
    %p110 = scmp.ne.s32.totalorder %s99, %s102
    %p111 = scmp.eq.s32.totalorder %s17, 1
    %p112 = por %p110, %p111
    %p113 = scmp.ne.s32.totalorder %s102, %s103
    %p114 = scmp.eq.s32.totalorder %s17, 0
    %p115 = por %p113, %p114
    %p116 = scmp.ne.s32.totalorder %s102, %s103
    %p117 = scmp.eq.s32.totalorder %s18, 1
    %p118 = por %p116, %p117
    %p120 = scmp.ne.s32.totalorder %s103, %s119
    %p121 = scmp.eq.s32.totalorder %s18, 0
    %p122 = por %p120, %p121
    %s123 = ssub.s32 %s19, %s38
    %s124 = ssub.s32 %s21, %s30
    %s125 = sor.u32 %s123, %s124
    %p126 = scmp.eq.s32.totalorder %s125, 0
    %s128 = sadd.s32 %s127, 1
    %s129 = scalar_select %p126, %s127, %s128
    %p132 = pneg %p126
    %p133 = scmp.eq.s32.totalorder %s12, 1
    %p134 = por %p132, %p133
    %p135 = scmp.ne.s32.totalorder %s127, %s130
    %p136 = scmp.eq.s32.totalorder %s12, 0
    %p137 = por %p135, %p136
    %p138 = scmp.ne.s32.totalorder %s127, %s130
    %p139 = scmp.eq.s32.totalorder %s17, 1
    %p140 = por %p138, %p139
    %p141 = scmp.ne.s32.totalorder %s130, %s131
    %p142 = scmp.eq.s32.totalorder %s17, 0
    %p143 = por %p141, %p142
    %p144 = scmp.ne.s32.totalorder %s130, %s131
    %p145 = scmp.eq.s32.totalorder %s18, 1
    %p146 = por %p144, %p145
    %p148 = scmp.ne.s32.totalorder %s131, %s147
    %p149 = scmp.eq.s32.totalorder %s18, 0
    %p150 = por %p148, %p149
    %s151 = ssub.s32 %s19, %s38
    %s152 = ssub.s32 %s20, %s34
    %s153 = sor.u32 %s151, %s152
    %p154 = scmp.eq.s32.totalorder %s153, 0
    %s156 = sadd.s32 %s155, 1
    %s157 = scalar_select %p154, %s155, %s156
    %p160 = pneg %p154
    %p161 = scmp.eq.s32.totalorder %s12, 1
    %p162 = por %p160, %p161
    %p163 = scmp.ne.s32.totalorder %s155, %s158
    %p164 = scmp.eq.s32.totalorder %s12, 0
    %p165 = por %p163, %p164
    %p166 = scmp.ne.s32.totalorder %s155, %s158
    %p167 = scmp.eq.s32.totalorder %s17, 1
    %p168 = por %p166, %p167
    %p169 = scmp.ne.s32.totalorder %s158, %s159
    %p170 = scmp.eq.s32.totalorder %s17, 0
    %p171 = por %p169, %p170
    %p172 = scmp.ne.s32.totalorder %s158, %s159
    %p173 = scmp.eq.s32.totalorder %s18, 1
    %p174 = por %p172, %p173
    %p176 = scmp.ne.s32.totalorder %s159, %s175
    %p177 = scmp.eq.s32.totalorder %s18, 0
    %p178 = por %p176, %p177
    %s179 = ssub.s32 %s19, %s38
    %p180 = scmp.eq.s32.totalorder %s179, 0
    %s182 = sadd.s32 %s181, 1
    %s183 = scalar_select %p180, %s181, %s182
    %p186 = pneg %p180
    %p187 = scmp.eq.s32.totalorder %s12, 1
    %p188 = por %p186, %p187
    %p189 = scmp.ne.s32.totalorder %s181, %s184
    %p190 = scmp.eq.s32.totalorder %s12, 0
    %p191 = por %p189, %p190
    %p192 = scmp.ne.s32.totalorder %s181, %s184
    %p193 = scmp.eq.s32.totalorder %s17, 1
    %p194 = por %p192, %p193
    %p195 = scmp.ne.s32.totalorder %s184, %s185
    %p196 = scmp.eq.s32.totalorder %s17, 0
    %p197 = por %p195, %p196
    %p198 = scmp.ne.s32.totalorder %s184, %s185
    %p199 = scmp.eq.s32.totalorder %s18, 1
    %p200 = por %p198, %p199
    %p202 = scmp.ne.s32.totalorder %s185, %s201
    %p203 = scmp.eq.s32.totalorder %s18, 0
    %p204 = por %p202, %p203
    %s205 = ssub.s32 %s19, %s38
    %s206 = ssub.s32 %s20, %s34
    %s207 = sor.u32 %s205, %s206
    %p208 = scmp.eq.s32.totalorder %s207, 0
    %s210 = sadd.s32 %s209, 1
    %s211 = scalar_select %p208, %s209, %s210
    %p214 = pneg %p208
    %p215 = scmp.eq.s32.totalorder %s12, 1
    %p216 = por %p214, %p215
    %p217 = scmp.ne.s32.totalorder %s209, %s212
    %p218 = scmp.eq.s32.totalorder %s12, 0
    %p219 = por %p217, %p218
    %p220 = scmp.ne.s32.totalorder %s209, %s212
    %p221 = scmp.eq.s32.totalorder %s17, 1
    %p222 = por %p220, %p221
    %p223 = scmp.ne.s32.totalorder %s212, %s213
    %p224 = scmp.eq.s32.totalorder %s17, 0
    %p225 = por %p223, %p224
    %p226 = scmp.ne.s32.totalorder %s212, %s213
    %p227 = scmp.eq.s32.totalorder %s18, 1
    %p228 = por %p226, %p227
    %p230 = scmp.ne.s32.totalorder %s213, %s229
    %p231 = scmp.eq.s32.totalorder %s18, 0
    %p232 = por %p230, %p231
    %p233 = scmp.le.s32.totalorder 1, %s12
    %p234 = scmp.lt.s32.totalorder %s12, 3
    %p235 = pnand %p233, %p234
    %p236 = pneg %p235
    // Predicated region
    $region9: #{forward.19} parent=5 // pred_check
      _
    $region10: #{forward.19} parent=5 // pred_check_branch
      %238 = sbr.rel (%p235) target = $region12
    $region11: #{forward.19} parent=5 // pred_region
      %s239 = ssub.s32 %s12, 1
    $region12: #{forward.19} parent=5 // pred_fallthru
      _
    %p240 = scmp.lt.s32.totalorder %s12, 2
    // Predicated region
    $region13: #{forward.19} parent=5 // pred_check
      %p241 = pneg %p240
    $region14: #{forward.19} parent=5 // pred_check_branch
      %243 = sbr.rel (%p241) target = $region16
    $region15: #{forward.19} parent=5 // pred_region
      // Predicated region
      $region17: #{forward.19} parent=15 // pred_check
        %p244 = pneg %p53
      $region18: #{forward.19} parent=15 // pred_check_branch
        %246 = sbr.rel (%p244) target = $region20
      $region19: #{forward.19} parent=15 // pred_region
        %s247 = smul.u32 8, %s20
        %p248 = scmp.lt.s32.totalorder %s19, 1
        %s249 = scalar_select %p248, %s19, 1
        %p250 = scmp.lt.s32.totalorder %s247, 7
        %s251 = scalar_select %p250, %s247, 7
        %s252 = smul.addr %s249, 8
        %s253 = sadd.s32 %s251, %s252
        %s254 = smul.addr %s253, 4
        %s255 = scalar_lea.vmem %s0, %s254
        %s256 = smul.u32 8, %s20
      $region20: #{forward.19} parent=15 // pred_fallthru
        _
      // Predicated region
      $region21: #{forward.19} parent=15 // pred_check
        %p257 = pneg %p81
      $region22: #{forward.19} parent=15 // pred_check_branch
        %259 = sbr.rel (%p257) target = $region24
      $region23: #{forward.19} parent=15 // pred_region
        %s260 = smul.u32 8, %s21
        %p261 = scmp.lt.s32.totalorder %s19, 1
        %s262 = scalar_select %p261, %s19, 1
        %p263 = scmp.lt.s32.totalorder %s260, 7
        %s264 = scalar_select %p263, %s260, 7
        %s265 = smul.addr %s262, 8
        %s266 = sadd.s32 %s264, %s265
        %s267 = smul.addr %s266, 4
        %s268 = scalar_lea.vmem %s1, %s267
        %s269 = smul.u32 8, %s21
      $region24: #{forward.19} parent=15 // pred_fallthru
        _
      // Predicated region
      $region25: #{forward.19} parent=15 // pred_check
        %p270 = pneg %p109
      $region26: #{forward.19} parent=15 // pred_check_branch
        %272 = sbr.rel (%p270) target = $region28
      $region27: #{forward.19} parent=15 // pred_region
        %p273 = scmp.lt.s32.totalorder %s19, 1
        %s274 = scalar_select %p273, %s19, 1
        %p275 = scmp.lt.s32.totalorder %s20, 0
        %s276 = scalar_select %p275, %s20, 0
        %s277 = sadd.s32 %s276, %s274
        %s278 = scalar_lea.vmem %s2, %s277
      $region28: #{forward.19} parent=15 // pred_fallthru
        _
      // Predicated region
      $region29: #{forward.19} parent=15 // pred_check
        %p279 = pneg %p137
      $region30: #{forward.19} parent=15 // pred_check_branch
        %281 = sbr.rel (%p279) target = $region32
      $region31: #{forward.19} parent=15 // pred_region
        %s282 = smul.u32 8, %s21
        %p283 = scmp.lt.s32.totalorder %s19, 1
        %s284 = scalar_select %p283, %s19, 1
        %p285 = scmp.lt.s32.totalorder %s282, 7
        %s286 = scalar_select %p285, %s282, 7
        %s287 = smul.addr %s284, 8
        %s288 = sadd.s32 %s286, %s287
        %s289 = smul.addr %s288, 8
        %s290 = scalar_lea.vmem %s3, %s289
        %s291 = smul.u32 8, %s21
      $region32: #{forward.19} parent=15 // pred_fallthru
        _
      // Predicated region
      $region33: #{forward.19} parent=15 // pred_check
        %p292 = pneg %p165
      $region34: #{forward.19} parent=15 // pred_check_branch
        %294 = sbr.rel (%p292) target = $region36
      $region35: #{forward.19} parent=15 // pred_region
        %p295 = scmp.lt.s32.totalorder %s19, 1
        %s296 = scalar_select %p295, %s19, 1
        %p297 = scmp.lt.s32.totalorder %s20, 0
        %s298 = scalar_select %p297, %s20, 0
        %s299 = sadd.s32 %s298, %s296
        %s300 = scalar_lea.vmem %s4, %s299
      $region36: #{forward.19} parent=15 // pred_fallthru
        _
      // Predicated region
      $region37: #{forward.19} parent=15 // pred_check
        %p301 = pneg %p191
      $region38: #{forward.19} parent=15 // pred_check_branch
        %303 = sbr.rel (%p301) target = $region40
      $region39: #{forward.19} parent=15 // pred_region
        %p304 = scmp.lt.s32.totalorder %s19, 1
        %s305 = scalar_select %p304, %s19, 1
        %s306 = scalar_lea.vmem %s5, %s305
      $region40: #{forward.19} parent=15 // pred_fallthru
        _
    $region16: #{forward.19} parent=5 // pred_fallthru
      _
    %p307 = scmp.le.s32.totalorder 1, %s12
    %p308 = scmp.lt.s32.totalorder %s12, 3
    %p309 = pnand %p307, %p308
    %p310 = pneg %p309
    // Predicated region
    $region41: #{forward.19} parent=5 // pred_check
      _
    $region42: #{forward.19} parent=5 // pred_check_branch
      %312 = sbr.rel (%p309) target = $region44
    $region43: #{forward.19} parent=5 // pred_region
      %s313 = ssub.s32 %s12, 1
      %s314 = smul.u32 8, %s23
      %p315 = scmp.lt.s32.totalorder %s22, 1
      %s316 = scalar_select %p315, %s22, 1
      %p317 = scmp.lt.s32.totalorder %s314, 7
      %s318 = scalar_select %p317, %s314, 7
      %s319 = smul.addr %s316, 8
      %s320 = sadd.s32 %s318, %s319
      %s321 = smul.addr %s320, 4
      %s322 = scalar_lea.vmem %s0, %s321
      %p323 = pneg %p59
      %p324 = pneg %p56
      %s325 = smul.u32 8, %s24
      %p326 = scmp.lt.s32.totalorder %s22, 1
      %s327 = scalar_select %p326, %s22, 1
      %p328 = scmp.lt.s32.totalorder %s325, 7
      %s329 = scalar_select %p328, %s325, 7
      %s330 = smul.addr %s327, 8
      %s331 = sadd.s32 %s329, %s330
      %s332 = smul.addr %s331, 4
      %s333 = scalar_lea.vmem %s1, %s332
      %p334 = pneg %p87
      %p335 = pneg %p84
      %p336 = scmp.lt.s32.totalorder %s22, 1
      %s337 = scalar_select %p336, %s22, 1
      %p338 = scmp.lt.s32.totalorder %s23, 0
      %s339 = scalar_select %p338, %s23, 0
      %s340 = sadd.s32 %s339, %s337
      %s341 = scalar_lea.vmem %s2, %s340
      %p342 = pneg %p115
      %p343 = pneg %p112
      %s344 = smul.u32 8, %s24
      %p345 = scmp.lt.s32.totalorder %s22, 1
      %s346 = scalar_select %p345, %s22, 1
      %p347 = scmp.lt.s32.totalorder %s344, 7
      %s348 = scalar_select %p347, %s344, 7
      %s349 = smul.addr %s346, 8
      %s350 = sadd.s32 %s348, %s349
      %s351 = smul.addr %s350, 8
      %s352 = scalar_lea.vmem %s3, %s351
      %p353 = pneg %p143
      %p354 = pneg %p140
      %p355 = scmp.lt.s32.totalorder %s22, 1
      %s356 = scalar_select %p355, %s22, 1
      %p357 = scmp.lt.s32.totalorder %s23, 0
      %s358 = scalar_select %p357, %s23, 0
      %s359 = sadd.s32 %s358, %s356
      %s360 = scalar_lea.vmem %s4, %s359
      %p361 = pneg %p171
      %p362 = pneg %p168
      %p363 = scmp.lt.s32.totalorder %s22, 1
      %s364 = scalar_select %p363, %s22, 1
      %s365 = scalar_lea.vmem %s5, %s364
      %p366 = pneg %p197
      %p367 = pneg %p194
      %p368 = pneg %p225
      %p369 = pneg %p222
      %p370 = scmp.lt.s32.totalorder %s22, 1
      %s371 = scalar_select %p370, %s22, 1
      %p372 = scmp.lt.s32.totalorder %s23, 0
      %s373 = scalar_select %p372, %s23, 0
      %s374 = sadd.s32 %s373, %s371
      %s375 = scalar_lea.vmem %s6, %s374
      %s376 = smul.u32 8, %s23
      %p377 = scmp.lt.s32.totalorder %s22, 1
      %s378 = scalar_select %p377, %s22, 1
      %p379 = scmp.lt.s32.totalorder %s376, 7
      %s380 = scalar_select %p379, %s376, 7
      %s381 = smul.addr %s378, 8
      %s382 = sadd.s32 %s380, %s381
      %s383 = smul.addr %s382, 4
      %s384 = scalar_lea.vmem %s0, %s383
      %s385 = smul.u32 8, %s23
      %s386 = smul.u32 8, %s24
      %p387 = scmp.lt.s32.totalorder %s22, 1
      %s388 = scalar_select %p387, %s22, 1
      %p389 = scmp.lt.s32.totalorder %s386, 7
      %s390 = scalar_select %p389, %s386, 7
      %s391 = smul.addr %s388, 8
      %s392 = sadd.s32 %s390, %s391
      %s393 = smul.addr %s392, 4
      %s394 = scalar_lea.vmem %s1, %s393
      %s395 = smul.u32 8, %s24
      %p396 = scmp.lt.s32.totalorder %s22, 1
      %s397 = scalar_select %p396, %s22, 1
      %p398 = scmp.lt.s32.totalorder %s23, 0
      %s399 = scalar_select %p398, %s23, 0
      %s400 = sadd.s32 %s399, %s397
      %s401 = scalar_lea.vmem %s2, %s400
      %s402 = smul.u32 8, %s24
      %p403 = scmp.lt.s32.totalorder %s22, 1
      %s404 = scalar_select %p403, %s22, 1
      %p405 = scmp.lt.s32.totalorder %s402, 7
      %s406 = scalar_select %p405, %s402, 7
      %s407 = smul.addr %s404, 8
      %s408 = sadd.s32 %s406, %s407
      %s409 = smul.addr %s408, 8
      %s410 = scalar_lea.vmem %s3, %s409
      %s411 = smul.u32 8, %s24
      %p412 = scmp.lt.s32.totalorder %s22, 1
      %s413 = scalar_select %p412, %s22, 1
      %p414 = scmp.lt.s32.totalorder %s23, 0
      %s415 = scalar_select %p414, %s23, 0
      %s416 = sadd.s32 %s415, %s413
      %s417 = scalar_lea.vmem %s4, %s416
      %p418 = scmp.lt.s32.totalorder %s22, 1
      %s419 = scalar_select %p418, %s22, 1
      %s420 = scalar_lea.vmem %s5, %s419
      %p421 = scmp.lt.s32.totalorder %s22, 1
      %s422 = scalar_select %p421, %s22, 1
      %p423 = scmp.lt.s32.totalorder %s23, 0
      %s424 = scalar_select %p423, %s23, 0
      %s425 = sadd.s32 %s424, %s422
      %s426 = scalar_lea.vmem %s6, %s425
      %p428 = scmp.eq.s32.totalorder %s24, 0
      // Predicated region
      $region45: #{forward.19} parent=43 // pred_check
        %p429 = pneg %p428
      $region46: #{forward.19} parent=43 // pred_check_branch
        %431 = sbr.rel (%p429) target = $region48
      $region47: #{forward.19} parent=43 // pred_region
        %vm432 = vcmask 516096
        %433 = vst.msk [vmem:[#allocation2] sm:$0x1] %vm432, 1e+30
      $region48: #{forward.19} parent=43 // pred_fallthru
        _
      %v434 = vld [vmem:[%s394] sm:$0xf]
      %v435 = vld [vmem:[%s394 + $0x4] sm:$0xf]
      %v436 = vld [vmem:[%s394 + $0x8] sm:$0xf]
      %v437 = vld [vmem:[%s394 + $0xc] sm:$0xf]
      %v438 = vld [vmem:[%s394 + $0x10] sm:$0xf]
      %v439 = vld [vmem:[%s394 + $0x14] sm:$0xf]
      %v440 = vld [vmem:[%s394 + $0x18] sm:$0xf]
      %v441 = vld [vmem:[%s394 + $0x1c] sm:$0xf]
      %v442 = vld [vmem:[%s384] sm:$0xf]
      %v443 = vld [vmem:[%s384 + $0x4] sm:$0xf]
      %v444 = vld [vmem:[%s384 + $0x8] sm:$0xf]
      %v445 = vld [vmem:[%s384 + $0xc] sm:$0xf]
      %v446 = vld [vmem:[%s384 + $0x10] sm:$0xf]
      %v447 = vld [vmem:[%s384 + $0x14] sm:$0xf]
      %v448 = vld [vmem:[%s384 + $0x18] sm:$0xf]
      %v449 = vld [vmem:[%s384 + $0x1c] sm:$0xf]
      %v450 = vld [vmem:[%s401] sm:$0x1]
      %v459 = vunpack.c.l.b16 %v434
      %v460 = vunpack.c.l.b16 %v435
      %v461 = vunpack.c.l.b16 %v436
      %v462 = vunpack.c.l.b16 %v437
      %v463 = vunpack.c.l.b16 %v438
      %v464 = vunpack.c.l.b16 %v439
      %v465 = vunpack.c.l.b16 %v440
      %v466 = vunpack.c.l.b16 %v441
      %v467 = vpack.c.b16 %v460, %v459
      %v468 = vpack.c.b16 %v462, %v461
      %v469 = vpack.c.b16 %v464, %v463
      %v470 = vpack.c.b16 %v466, %v465
      %v479 = vunpack.c.l.b16 %v442
      %v480 = vunpack.c.l.b16 %v443
      %v481 = vunpack.c.l.b16 %v444
      %v482 = vunpack.c.l.b16 %v445
      %v483 = vunpack.c.l.b16 %v446
      %v484 = vunpack.c.l.b16 %v447
      %v485 = vunpack.c.l.b16 %v448
      %v486 = vunpack.c.l.b16 %v449
      %v487 = vpack.c.b16 %v480, %v479
      %v488 = vpack.c.b16 %v482, %v481
      %v489 = vpack.c.b16 %v484, %v483
      %v490 = vpack.c.b16 %v486, %v485
      %vm491 = vcmask 523264
      %v493 = vsel %vm491, %v467, 0
      %v496 = vsel %vm491, %v468, 0
      %v499 = vsel %vm491, %v469, 0
      %v502 = vsel %vm491, %v470, 0
      %v505 = vsel %vm491, %v487, 0
      %v508 = vsel %vm491, %v488, 0
      %v511 = vsel %vm491, %v489, 0
      %v514 = vsel %vm491, %v490, 0
      %516 = vmatpush.bf16.xpose.msra.mxu0 0
      %517 = vmatpush.bf16.xpose.msra.mxu0 0
      %518 = vmatpush.bf16.xpose.msra.mxu0 0
      %519 = vmatpush.bf16.xpose.msra.mxu0 0
      %520 = vmatpush.bf16.xpose.msra.mxu0 %v514
      %521 = vmatpush.bf16.xpose.msra.mxu0 %v511
      %522 = vmatpush.bf16.xpose.msra.mxu0 %v508
      %523 = vmatpush.bf16.xpose.msra.mxu0 %v505
      %524 = vmatmul.bf16.gmra.mxu0 %v493
      %v525 = vpop.f32.mrf.mxu0
      %v526 = vadd.f32 0.0, %v525
      %v527 = vpop.f32.mrf.mxu0
      %v528 = vadd.f32 0.0, %v527
      %529 = vmatmul.bf16.gmra.mxu0 %v496
      %v530 = vpop.f32.mrf.mxu0
      %v531 = vadd.f32 0.0, %v530
      %v532 = vpop.f32.mrf.mxu0
      %v533 = vadd.f32 0.0, %v532
      %534 = vmatmul.bf16.gmra.mxu0 %v499
      %v535 = vpop.f32.mrf.mxu0
      %v536 = vadd.f32 0.0, %v535
      %v537 = vpop.f32.mrf.mxu0
      %v538 = vadd.f32 0.0, %v537
      %539 = vmatmul.bf16.gmra.mxu0 %v502
      %v540 = vpop.f32.mrf.mxu0
      %v541 = vadd.f32 0.0, %v540
      %v542 = vpop.f32.mrf.mxu0
      %v543 = vadd.f32 0.0, %v542
      %544 = vdwg.mxu0
      %v545 = vunpack.c.l.bf16 %v434
      %v546 = vunpack.c.l.bf16 %v435
      %v547 = vunpack.c.l.bf16 %v436
      %v548 = vunpack.c.l.bf16 %v437
      %v549 = vunpack.c.l.bf16 %v438
      %v550 = vunpack.c.l.bf16 %v439
      %v551 = vunpack.c.l.bf16 %v440
      %v552 = vunpack.c.l.bf16 %v441
      %v553 = vmul.f32 %v545, %v545
      %v554 = vmul.f32 %v546, %v546
      %v555 = vmul.f32 %v547, %v547
      %v556 = vmul.f32 %v548, %v548
      %v557 = vmul.f32 %v549, %v549
      %v558 = vmul.f32 %v550, %v550
      %v559 = vmul.f32 %v551, %v551
      %v560 = vmul.f32 %v552, %v552
      %v561 = vsel %vm491, %v553, 0.0
      %562 = vadd.xlane.f32.xlu0 %v561
      %v563 = vpop.xlane.xlu0 %562
      %v564 = vsel %vm491, %v554, 0.0
      %565 = vadd.xlane.f32.xlu0 %v564
      %v566 = vpop.xlane.xlu0 %565
      %v567 = vsel %vm491, %v555, 0.0
      %568 = vadd.xlane.f32.xlu0 %v567
      %v569 = vpop.xlane.xlu0 %568
      %v570 = vsel %vm491, %v556, 0.0
      %571 = vadd.xlane.f32.xlu0 %v570
      %v572 = vpop.xlane.xlu0 %571
      %v573 = vsel %vm491, %v557, 0.0
      %574 = vadd.xlane.f32.xlu0 %v573
      %v575 = vpop.xlane.xlu0 %574
      %v576 = vsel %vm491, %v558, 0.0
      %577 = vadd.xlane.f32.xlu0 %v576
      %v578 = vpop.xlane.xlu0 %577
      %v579 = vsel %vm491, %v559, 0.0
      %580 = vadd.xlane.f32.xlu0 %v579
      %v581 = vpop.xlane.xlu0 %580
      %v582 = vsel %vm491, %v560, 0.0
      %583 = vadd.xlane.f32.xlu0 %v582
      %v584 = vpop.xlane.xlu0 %583
      %v586 = vperm.slane %v450, 0
      %v588 = vadd.f32 %v563, %v586
      %v589 = vadd.f32 %v566, %v586
      %v590 = vadd.f32 %v569, %v586
      %v591 = vadd.f32 %v572, %v586
      %v592 = vadd.f32 %v575, %v586
      %v593 = vadd.f32 %v578, %v586
      %v594 = vadd.f32 %v581, %v586
      %v595 = vadd.f32 %v584, %v586
      %v596 = vmul.f32 %v526, 2.0
      %v597 = vmul.f32 %v528, 2.0
      %v598 = vmul.f32 %v531, 2.0
      %v599 = vmul.f32 %v533, 2.0
      %v600 = vmul.f32 %v536, 2.0
      %v601 = vmul.f32 %v538, 2.0
      %v602 = vmul.f32 %v541, 2.0
      %v603 = vmul.f32 %v543, 2.0
      %v604 = vsub.f32 %v588, %v596
      %v605 = vsub.f32 %v589, %v597
      %v606 = vsub.f32 %v590, %v598
      %v607 = vsub.f32 %v591, %v599
      %v608 = vsub.f32 %v592, %v600
      %v609 = vsub.f32 %v593, %v601
      %v610 = vsub.f32 %v594, %v602
      %v611 = vsub.f32 %v595, %v603
      %v612 = vmax.f32 %v604, 0.0
      %v613 = vmax.f32 %v605, 0.0
      %v614 = vmax.f32 %v606, 0.0
      %v615 = vmax.f32 %v607, 0.0
      %v616 = vmax.f32 %v608, 0.0
      %v617 = vmax.f32 %v609, 0.0
      %v618 = vmax.f32 %v610, 0.0
      %v619 = vmax.f32 %v611, 0.0
      %v620 = vld [vmem:[%s410] sm:$0xff]
      %v621 = vld [vmem:[%s410 + $0x8] sm:$0xff]
      %v622 = vld [vmem:[%s410 + $0x10] sm:$0xff]
      %v623 = vld [vmem:[%s410 + $0x18] sm:$0xff]
      %v624 = vld [vmem:[%s410 + $0x20] sm:$0xff]
      %v625 = vld [vmem:[%s410 + $0x28] sm:$0xff]
      %v626 = vld [vmem:[%s410 + $0x30] sm:$0xff]
      %v627 = vld [vmem:[%s410 + $0x38] sm:$0xff]
      %v628 = vld [vmem:[%s417] sm:$0x1]
      %630 = vset.pattern.permute.xlu0 0
      %631 = vperm.xlu0 %630, %v620
      %v632 = vpop.permute.xlu0 %631
      %635 = vset.pattern.permute.xlu0 0
      %636 = vperm.xlu0 %635, %v621
      %v637 = vpop.permute.xlu0 %636
      %640 = vset.pattern.permute.xlu0 0
      %641 = vperm.xlu0 %640, %v622
      %v642 = vpop.permute.xlu0 %641
      %645 = vset.pattern.permute.xlu0 0
      %646 = vperm.xlu0 %645, %v623
      %v647 = vpop.permute.xlu0 %646
      %650 = vset.pattern.permute.xlu0 0
      %651 = vperm.xlu0 %650, %v624
      %v652 = vpop.permute.xlu0 %651
      %655 = vset.pattern.permute.xlu0 0
      %656 = vperm.xlu0 %655, %v625
      %v657 = vpop.permute.xlu0 %656
      %660 = vset.pattern.permute.xlu0 0
      %661 = vperm.xlu0 %660, %v626
      %v662 = vpop.permute.xlu0 %661
      %665 = vset.pattern.permute.xlu0 0
      %666 = vperm.xlu0 %665, %v627
      %v667 = vpop.permute.xlu0 %666
      %v670 = vperm.slane %v628, 0
      %vm672 = vcmp.gt.f32.partialorder %v632, %v670
      %vm673 = vcmp.gt.f32.partialorder %v637, %v670
      %vm674 = vcmp.gt.f32.partialorder %v642, %v670
      %vm675 = vcmp.gt.f32.partialorder %v647, %v670
      %vm676 = vcmp.gt.f32.partialorder %v652, %v670
      %vm677 = vcmp.gt.f32.partialorder %v657, %v670
      %vm678 = vcmp.gt.f32.partialorder %v662, %v670
      %vm679 = vcmp.gt.f32.partialorder %v667, %v670
      %v680 = vsel %vm672, %v612, 1e+30
      %v681 = vsel %vm673, %v613, 1e+30
      %v682 = vsel %vm674, %v614, 1e+30
      %v683 = vsel %vm675, %v615, 1e+30
      %v684 = vsel %vm676, %v616, 1e+30
      %v685 = vsel %vm677, %v617, 1e+30
      %v686 = vsel %vm678, %v618, 1e+30
      %v687 = vsel %vm679, %v619, 1e+30
      %v688 = vld [vmem:[#allocation2] sm:$0x1]
      %v689 = vsel %vm491, %v680, inf
      %v690 = vsel %vm491, %v681, inf
      %v691 = vsel %vm491, %v682, inf
      %v692 = vsel %vm491, %v683, inf
      %v693 = vsel %vm491, %v684, inf
      %v694 = vmin.f32 %v689, %v693
      %v695 = vsel %vm491, %v685, inf
      %v696 = vmin.f32 %v690, %v695
      %v697 = vsel %vm491, %v686, inf
      %v698 = vmin.f32 %v691, %v697
      %v699 = vsel %vm491, %v687, inf
      %v700 = vmin.f32 %v692, %v699
      %v701 = vmin.f32 %v694, %v696
      %v702 = vmin.f32 %v698, %v700
      %v703 = vmin.f32 %v701, %v702
      %v704 = vrot.slane %v703, 4
      %v705 = vmin.f32 %v703, %v704
      %v706 = vrot.slane %v705, 2
      %v707 = vmin.f32 %v705, %v706
      %v708 = vrot.slane %v707, 1
      %v709 = vmin.f32 %v707, %v708
      %v710 = vmin.f32 %v688, %v709
      %vm711 = vcmask 516096
      %712 = vst.msk [vmem:[#allocation2] sm:$0x1] %vm711, %v710
      // Predicated region
      $region49: #{forward.19} parent=43 // pred_check
        %p713 = pneg %p428
      $region50: #{forward.19} parent=43 // pred_check_branch
        %715 = sbr.rel (%p713) target = $region52
      $region51: #{forward.19} parent=43 // pred_region
        %v716 = vld [vmem:[#allocation2] sm:$0x1]
        %v717 = vld [vmem:[%s420] sm:$0x1]
        %719 = vset.pattern.permute.xlu0 0
        %720 = vperm.xlu0 %719, %v717
        %v721 = vpop.permute.xlu0 %720
        %v723 = vperm.slane %v721, 0
        %v724 = vmin.f32 %v716, %v723
        %725 = vst.msk [vmem:[%s426] sm:$0x1] %vm711, %v724
      $region52: #{forward.19} parent=43 // pred_fallthru
        _
      %p726 = scmp.lt.s32.totalorder %s22, 1
      %s727 = scalar_select %p726, %s22, 1
      %p728 = scmp.lt.s32.totalorder %s23, 0
      %s729 = scalar_select %p728, %s23, 0
      %s730 = sadd.s32 %s729, %s727
      %s731 = scalar_lea.vmem %s6, %s730
      // Predicated region
      $region53: #{forward.19} parent=43 // pred_check
        %p732 = pneg %p222
      $region54: #{forward.19} parent=43 // pred_check_branch
        %734 = sbr.rel (%p732) target = $region56
      $region55: #{forward.19} parent=43 // pred_region
        _
      $region56: #{forward.19} parent=43 // pred_fallthru
        _
    $region44: #{forward.19} parent=5 // pred_fallthru
      _
    %p735 = scmp.le.s32.totalorder 2, %s12
    // Predicated region
    $region57: #{forward.19} parent=5 // pred_check
      %p736 = pneg %p735
    $region58: #{forward.19} parent=5 // pred_check_branch
      %738 = sbr.rel (%p736) target = $region60
    $region59: #{forward.19} parent=5 // pred_region
      %s739 = ssub.s32 %s12, 2
      // Predicated region
      $region61: #{forward.19} parent=59 // pred_check
        %p740 = pneg %p228
      $region62: #{forward.19} parent=59 // pred_check_branch
        %742 = sbr.rel (%p740) target = $region64
      $region63: #{forward.19} parent=59 // pred_region
        %p743 = scmp.lt.s32.totalorder %s25, 1
        %s744 = scalar_select %p743, %s25, 1
        %p745 = scmp.lt.s32.totalorder %s26, 0
        %s746 = scalar_select %p745, %s26, 0
        %s747 = sadd.s32 %s746, %s744
        %s748 = scalar_lea.vmem %s6, %s747
      $region64: #{forward.19} parent=59 // pred_fallthru
        _
    $region60: #{forward.19} parent=5 // pred_fallthru
      _
  $region6: #{forward.19} parent=0 // loop_footer
    %s16 = sadd.s32 1, %s12
  $region7: #{forward.19} parent=0 // loop_footer_branch
    %11 = sbr.rel target = $region3
  $region8: #{forward.19} parent=0 // loop_exit
    _

// kernel: forward.20
$region0: #{forward.20}
  #allocation0 [shape = 'u32[]', space=smem, size = 0x4, offset = 0x4, fixed_abs, tag = 'smem constant byte address 0x4 - core index']
  #allocation1 [shape = 'u32[72,128]{1,0:T(1,128)}', space=vmem, size = 0x9000, scoped, tag = 'internal scratch']
  #allocation2 [shape = 'f32[1,64]{1,0:T(1,128)}', space=vmem, size = 0x200, scoped, tag = 'scratch operand']
  #allocation3 [shape = 's32[1,64]{1,0:T(1,128)}', space=vmem, size = 0x200, scoped, tag = 'scratch operand']
  %s0 = inlined_call_operand.vmem [shape: bf16[2,16,64], index: 0, kind: input, shape index: {}]
  %s1 = inlined_call_operand.vmem [shape: bf16[2,64,64], index: 1, kind: input, shape index: {}]
  %s2 = inlined_call_operand.vmem [shape: f32[2,1,64], index: 2, kind: input, shape index: {}]
  %s3 = inlined_call_operand.vmem [shape: s32[2,1,64], index: 3, kind: output, shape index: {}]
  %s4 = sld [smem:[#allocation0]]
  $region53: #{forward.20} parent=0
    _
  %s6 = ssub.s32 1, %s4
  %s7 = scalar_select 0, %s6, %s4
  loop: start=0, step=1, limit=4
  $region2: #{forward.20} parent=0 // loop_pre_header
    _
  $region3: #{forward.20} parent=0 // loop_header
    %s9 = sphi 0, %s13
    %p10 = scmp.ge.s32.totalorder %s9, 4
    %s16 = sphi 0, %s35
    %s17 = sphi 0, %s31
    %s18 = sphi 0, %s27
    %s19 = sphi 0, %s16
    %s20 = sphi 0, %s17
    %s21 = sphi 0, %s18
    %s22 = sphi 0, %s19
    %s23 = sphi 0, %s20
    %s24 = sphi 0, %s21
    %s40 = sphi 0, %s42
    %s43 = sphi 0, %s40
    %s44 = sphi 0, %s43
    %s60 = sphi 0, %s44
    %s68 = sphi 0, %s70
    %s71 = sphi 0, %s68
    %s72 = sphi 0, %s71
    %s88 = sphi 0, %s72
    %s96 = sphi 0, %s98
    %s99 = sphi 0, %s96
    %s100 = sphi 0, %s99
    %s116 = sphi 0, %s100
    %s124 = sphi 0, %s126
    %s127 = sphi 0, %s124
    %s128 = sphi 0, %s127
    %s144 = sphi 0, %s128
  $region4: #{forward.20} parent=0 // loop_header_branch
    %12 = sbr.rel (%p10) target = $region8
  $region5: #{forward.20} parent=0 // loop_body
    %s14 = ssub.s32 %s9, 1
    %s15 = ssub.s32 %s9, 2
    %s25 = sadd.s32 1, %s18
    %p26 = scmp.ge.s32.totalorder %s25, 1
    %s27 = scalar_select %p26, 0, %s25
    %s28 = sadd.s32 1, %s17
    %s29 = scalar_select %p26, %s28, %s17
    %p30 = scmp.ge.s32.totalorder %s29, 1
    %s31 = scalar_select %p30, 0, %s29
    %s32 = sadd.s32 1, %s16
    %s33 = scalar_select %p30, %s32, %s16
    %p34 = scmp.ge.s32.totalorder %s33, 2
    %s35 = scalar_select %p34, 0, %s33
    %s36 = ssub.s32 %s16, %s35
    %s37 = ssub.s32 %s18, %s27
    %s38 = sor.u32 %s36, %s37
    %p39 = scmp.eq.s32.totalorder %s38, 0
    %s41 = sadd.s32 %s40, 1
    %s42 = scalar_select %p39, %s40, %s41
    %p45 = pneg %p39
    %p46 = scmp.eq.s32.totalorder %s9, 1
    %p47 = por %p45, %p46
    %p48 = scmp.ne.s32.totalorder %s40, %s43
    %p49 = scmp.eq.s32.totalorder %s9, 0
    %p50 = por %p48, %p49
    %p51 = scmp.ne.s32.totalorder %s40, %s43
    %p52 = scmp.eq.s32.totalorder %s14, 1
    %p53 = por %p51, %p52
    %p54 = scmp.ne.s32.totalorder %s43, %s44
    %p55 = scmp.eq.s32.totalorder %s14, 0
    %p56 = por %p54, %p55
    %p57 = scmp.ne.s32.totalorder %s43, %s44
    %p58 = scmp.eq.s32.totalorder %s15, 1
    %p59 = por %p57, %p58
    %p61 = scmp.ne.s32.totalorder %s44, %s60
    %p62 = scmp.eq.s32.totalorder %s15, 0
    %p63 = por %p61, %p62
    %s64 = ssub.s32 %s16, %s35
    %s65 = ssub.s32 %s17, %s31
    %s66 = sor.u32 %s64, %s65
    %p67 = scmp.eq.s32.totalorder %s66, 0
    %s69 = sadd.s32 %s68, 1
    %s70 = scalar_select %p67, %s68, %s69
    %p73 = pneg %p67
    %p74 = scmp.eq.s32.totalorder %s9, 1
    %p75 = por %p73, %p74
    %p76 = scmp.ne.s32.totalorder %s68, %s71
    %p77 = scmp.eq.s32.totalorder %s9, 0
    %p78 = por %p76, %p77
    %p79 = scmp.ne.s32.totalorder %s68, %s71
    %p80 = scmp.eq.s32.totalorder %s14, 1
    %p81 = por %p79, %p80
    %p82 = scmp.ne.s32.totalorder %s71, %s72
    %p83 = scmp.eq.s32.totalorder %s14, 0
    %p84 = por %p82, %p83
    %p85 = scmp.ne.s32.totalorder %s71, %s72
    %p86 = scmp.eq.s32.totalorder %s15, 1
    %p87 = por %p85, %p86
    %p89 = scmp.ne.s32.totalorder %s72, %s88
    %p90 = scmp.eq.s32.totalorder %s15, 0
    %p91 = por %p89, %p90
    %s92 = ssub.s32 %s16, %s35
    %s93 = ssub.s32 %s17, %s31
    %s94 = sor.u32 %s92, %s93
    %p95 = scmp.eq.s32.totalorder %s94, 0
    %s97 = sadd.s32 %s96, 1
    %s98 = scalar_select %p95, %s96, %s97
    %p101 = pneg %p95
    %p102 = scmp.eq.s32.totalorder %s9, 1
    %p103 = por %p101, %p102
    %p104 = scmp.ne.s32.totalorder %s96, %s99
    %p105 = scmp.eq.s32.totalorder %s9, 0
    %p106 = por %p104, %p105
    %p107 = scmp.ne.s32.totalorder %s96, %s99
    %p108 = scmp.eq.s32.totalorder %s14, 1
    %p109 = por %p107, %p108
    %p110 = scmp.ne.s32.totalorder %s99, %s100
    %p111 = scmp.eq.s32.totalorder %s14, 0
    %p112 = por %p110, %p111
    %p113 = scmp.ne.s32.totalorder %s99, %s100
    %p114 = scmp.eq.s32.totalorder %s15, 1
    %p115 = por %p113, %p114
    %p117 = scmp.ne.s32.totalorder %s100, %s116
    %p118 = scmp.eq.s32.totalorder %s15, 0
    %p119 = por %p117, %p118
    %s120 = ssub.s32 %s16, %s35
    %s121 = ssub.s32 %s17, %s31
    %s122 = sor.u32 %s120, %s121
    %p123 = scmp.eq.s32.totalorder %s122, 0
    %s125 = sadd.s32 %s124, 1
    %s126 = scalar_select %p123, %s124, %s125
    %p129 = pneg %p123
    %p130 = scmp.eq.s32.totalorder %s9, 1
    %p131 = por %p129, %p130
    %p132 = scmp.ne.s32.totalorder %s124, %s127
    %p133 = scmp.eq.s32.totalorder %s9, 0
    %p134 = por %p132, %p133
    %p135 = scmp.ne.s32.totalorder %s124, %s127
    %p136 = scmp.eq.s32.totalorder %s14, 1
    %p137 = por %p135, %p136
    %p138 = scmp.ne.s32.totalorder %s127, %s128
    %p139 = scmp.eq.s32.totalorder %s14, 0
    %p140 = por %p138, %p139
    %p141 = scmp.ne.s32.totalorder %s127, %s128
    %p142 = scmp.eq.s32.totalorder %s15, 1
    %p143 = por %p141, %p142
    %p145 = scmp.ne.s32.totalorder %s128, %s144
    %p146 = scmp.eq.s32.totalorder %s15, 0
    %p147 = por %p145, %p146
    %p148 = scmp.le.s32.totalorder 1, %s9
    %p149 = scmp.lt.s32.totalorder %s9, 3
    %p150 = pnand %p148, %p149
    %p151 = pneg %p150
    // Predicated region
    $region9: #{forward.20} parent=5 // pred_check
      _
    $region10: #{forward.20} parent=5 // pred_check_branch
      %153 = sbr.rel (%p150) target = $region12
    $region11: #{forward.20} parent=5 // pred_region
      %s154 = ssub.s32 %s9, 1
    $region12: #{forward.20} parent=5 // pred_fallthru
      _
    %p155 = scmp.lt.s32.totalorder %s9, 2
    // Predicated region
    $region13: #{forward.20} parent=5 // pred_check
      %p156 = pneg %p155
    $region14: #{forward.20} parent=5 // pred_check_branch
      %158 = sbr.rel (%p156) target = $region16
    $region15: #{forward.20} parent=5 // pred_region
      // Predicated region
      $region17: #{forward.20} parent=15 // pred_check
        %p159 = pneg %p50
      $region18: #{forward.20} parent=15 // pred_check_branch
        %161 = sbr.rel (%p159) target = $region20
      $region19: #{forward.20} parent=15 // pred_region
        %s162 = smul.u32 2, %s18
        %p163 = scmp.lt.s32.totalorder %s16, 1
        %s164 = scalar_select %p163, %s16, 1
        %p165 = scmp.lt.s32.totalorder %s162, 1
        %s166 = scalar_select %p165, %s162, 1
        %s167 = smul.addr %s164, 2
        %s168 = sadd.s32 %s166, %s167
        %s169 = smul.addr %s168, 4
        %s170 = scalar_lea.vmem %s0, %s169
        %s171 = smul.u32 2, %s18
      $region20: #{forward.20} parent=15 // pred_fallthru
        _
      // Predicated region
      $region21: #{forward.20} parent=15 // pred_check
        %p172 = pneg %p78
      $region22: #{forward.20} parent=15 // pred_check_branch
        %174 = sbr.rel (%p172) target = $region24
      $region23: #{forward.20} parent=15 // pred_region
        %s175 = smul.u32 8, %s17
        %p176 = scmp.lt.s32.totalorder %s16, 1
        %s177 = scalar_select %p176, %s16, 1
        %p178 = scmp.lt.s32.totalorder %s175, 7
        %s179 = scalar_select %p178, %s175, 7
        %s180 = smul.addr %s177, 8
        %s181 = sadd.s32 %s179, %s180
        %s182 = smul.addr %s181, 4
        %s183 = scalar_lea.vmem %s1, %s182
        %s184 = smul.u32 8, %s17
      $region24: #{forward.20} parent=15 // pred_fallthru
        _
      // Predicated region
      $region25: #{forward.20} parent=15 // pred_check
        %p185 = pneg %p106
      $region26: #{forward.20} parent=15 // pred_check_branch
        %187 = sbr.rel (%p185) target = $region28
      $region27: #{forward.20} parent=15 // pred_region
        %p188 = scmp.lt.s32.totalorder %s16, 1
        %s189 = scalar_select %p188, %s16, 1
        %p190 = scmp.lt.s32.totalorder %s17, 0
        %s191 = scalar_select %p190, %s17, 0
        %s192 = sadd.s32 %s191, %s189
        %s193 = scalar_lea.vmem %s2, %s192
      $region28: #{forward.20} parent=15 // pred_fallthru
        _
    $region16: #{forward.20} parent=5 // pred_fallthru
      _
    %p194 = scmp.le.s32.totalorder 1, %s9
    %p195 = scmp.lt.s32.totalorder %s9, 3
    %p196 = pnand %p194, %p195
    %p197 = pneg %p196
    // Predicated region
    $region29: #{forward.20} parent=5 // pred_check
      _
    $region30: #{forward.20} parent=5 // pred_check_branch
      %199 = sbr.rel (%p196) target = $region32
    $region31: #{forward.20} parent=5 // pred_region
      %s200 = ssub.s32 %s9, 1
      %s201 = smul.u32 2, %s21
      %p202 = scmp.lt.s32.totalorder %s19, 1
      %s203 = scalar_select %p202, %s19, 1
      %p204 = scmp.lt.s32.totalorder %s201, 1
      %s205 = scalar_select %p204, %s201, 1
      %s206 = smul.addr %s203, 2
      %s207 = sadd.s32 %s205, %s206
      %s208 = smul.addr %s207, 4
      %s209 = scalar_lea.vmem %s0, %s208
      %p210 = pneg %p56
      %p211 = pneg %p53
      %s212 = smul.u32 8, %s20
      %p213 = scmp.lt.s32.totalorder %s19, 1
      %s214 = scalar_select %p213, %s19, 1
      %p215 = scmp.lt.s32.totalorder %s212, 7
      %s216 = scalar_select %p215, %s212, 7
      %s217 = smul.addr %s214, 8
      %s218 = sadd.s32 %s216, %s217
      %s219 = smul.addr %s218, 4
      %s220 = scalar_lea.vmem %s1, %s219
      %p221 = pneg %p84
      %p222 = pneg %p81
      %p223 = scmp.lt.s32.totalorder %s19, 1
      %s224 = scalar_select %p223, %s19, 1
      %p225 = scmp.lt.s32.totalorder %s20, 0
      %s226 = scalar_select %p225, %s20, 0
      %s227 = sadd.s32 %s226, %s224
      %s228 = scalar_lea.vmem %s2, %s227
      %p229 = pneg %p112
      %p230 = pneg %p109
      %p231 = pneg %p140
      %p232 = pneg %p137
      %p233 = scmp.lt.s32.totalorder %s19, 1
      %s234 = scalar_select %p233, %s19, 1
      %p235 = scmp.lt.s32.totalorder %s20, 0
      %s236 = scalar_select %p235, %s20, 0
      %s237 = sadd.s32 %s236, %s234
      %s238 = scalar_lea.vmem %s3, %s237
      %s239 = smul.u32 2, %s21
      %p240 = scmp.lt.s32.totalorder %s19, 1
      %s241 = scalar_select %p240, %s19, 1
      %p242 = scmp.lt.s32.totalorder %s239, 1
      %s243 = scalar_select %p242, %s239, 1
      %s244 = smul.addr %s241, 2
      %s245 = sadd.s32 %s243, %s244
      %s246 = smul.addr %s245, 4
      %s247 = scalar_lea.vmem %s0, %s246
      %s248 = smul.u32 2, %s21
      %s249 = smul.u32 8, %s20
      %p250 = scmp.lt.s32.totalorder %s19, 1
      %s251 = scalar_select %p250, %s19, 1
      %p252 = scmp.lt.s32.totalorder %s249, 7
      %s253 = scalar_select %p252, %s249, 7
      %s254 = smul.addr %s251, 8
      %s255 = sadd.s32 %s253, %s254
      %s256 = smul.addr %s255, 4
      %s257 = scalar_lea.vmem %s1, %s256
      %s258 = smul.u32 8, %s20
      %p259 = scmp.lt.s32.totalorder %s19, 1
      %s260 = scalar_select %p259, %s19, 1
      %p261 = scmp.lt.s32.totalorder %s20, 0
      %s262 = scalar_select %p261, %s20, 0
      %s263 = sadd.s32 %s262, %s260
      %s264 = scalar_lea.vmem %s2, %s263
      %p265 = scmp.lt.s32.totalorder %s19, 1
      %s266 = scalar_select %p265, %s19, 1
      %p267 = scmp.lt.s32.totalorder %s20, 0
      %s268 = scalar_select %p267, %s20, 0
      %s269 = sadd.s32 %s268, %s266
      %s270 = scalar_lea.vmem %s3, %s269
      %p272 = scmp.eq.s32.totalorder %s21, 0
      // Predicated region
      $region33: #{forward.20} parent=31 // pred_check
        %p273 = pneg %p272
      $region34: #{forward.20} parent=31 // pred_check_branch
        %275 = sbr.rel (%p273) target = $region36
      $region35: #{forward.20} parent=31 // pred_region
        %vm276 = vcmask 516096
        %277 = vst.msk [vmem:[#allocation2] sm:$0x1] %vm276, 1e+30
        %278 = vst.msk [vmem:[#allocation3] sm:$0x1] %vm276, 0
      $region36: #{forward.20} parent=31 // pred_fallthru
        _
      %v279 = vld [vmem:[%s247] sm:$0xf]
      %v280 = vld [vmem:[%s247 + $0x4] sm:$0xf]
      %v281 = vld [vmem:[%s257] sm:$0xf]
      %v282 = vld [vmem:[%s257 + $0x4] sm:$0xf]
      %v283 = vld [vmem:[%s257 + $0x8] sm:$0xf]
      %v284 = vld [vmem:[%s257 + $0xc] sm:$0xf]
      %v285 = vld [vmem:[%s257 + $0x10] sm:$0xf]
      %v286 = vld [vmem:[%s257 + $0x14] sm:$0xf]
      %v287 = vld [vmem:[%s257 + $0x18] sm:$0xf]
      %v288 = vld [vmem:[%s257 + $0x1c] sm:$0xf]
      %v289 = vld [vmem:[%s264] sm:$0x1]
      %v292 = vunpack.c.l.b16 %v279
      %v293 = vunpack.c.l.b16 %v280
      %v294 = vpack.c.b16 %v293, %v292
      %v303 = vunpack.c.l.b16 %v281
      %v304 = vunpack.c.l.b16 %v282
      %v305 = vunpack.c.l.b16 %v283
      %v306 = vunpack.c.l.b16 %v284
      %v307 = vunpack.c.l.b16 %v285
      %v308 = vunpack.c.l.b16 %v286
      %v309 = vunpack.c.l.b16 %v287
      %v310 = vunpack.c.l.b16 %v288
      %v311 = vpack.c.b16 %v304, %v303
      %v312 = vpack.c.b16 %v306, %v305
      %v313 = vpack.c.b16 %v308, %v307
      %v314 = vpack.c.b16 %v310, %v309
      %vm315 = vcmask 523264
      %v317 = vsel %vm315, %v294, 0
      %v320 = vsel %vm315, %v311, 0
      %v323 = vsel %vm315, %v312, 0
      %v326 = vsel %vm315, %v313, 0
      %v329 = vsel %vm315, %v314, 0
      %331 = vmatpush.bf16.xpose.msra.mxu0 0
      %332 = vmatpush.bf16.xpose.msra.mxu0 0
      %333 = vmatpush.bf16.xpose.msra.mxu0 0
      %334 = vmatpush.bf16.xpose.msra.mxu0 0
      %335 = vmatpush.bf16.xpose.msra.mxu0 %v329
      %336 = vmatpush.bf16.xpose.msra.mxu0 %v326
      %337 = vmatpush.bf16.xpose.msra.mxu0 %v323
      %338 = vmatpush.bf16.xpose.msra.mxu0 %v320
      %339 = vmatmul.bf16.gmra.mxu0 %v317
      %v340 = vpop.f32.mrf.mxu0
      %v341 = vadd.f32 0.0, %v340
      %v342 = vpop.f32.mrf.mxu0
      %v343 = vadd.f32 0.0, %v342
      %344 = vdwg.mxu0
      %v345 = vunpack.c.l.bf16 %v279
      %v346 = vunpack.c.l.bf16 %v280
      %v347 = vmul.f32 %v345, %v345
      %v348 = vmul.f32 %v346, %v346
      %v349 = vsel %vm315, %v347, 0.0
      %350 = vadd.xlane.f32.xlu0 %v349
      %v351 = vpop.xlane.xlu0 %350
      %v352 = vsel %vm315, %v348, 0.0
      %353 = vadd.xlane.f32.xlu0 %v352
      %v354 = vpop.xlane.xlu0 %353
      %s355 = smul.u32 %s21, 16
      %v356 = vlaneseq
      %v357 = vshrl.u32 %v356, 7
      %v358 = vadd.s32 %v357, 8
      %v359 = vstv %s355
      %v360 = vadd.s32 %v359, %v357
      %v361 = vadd.s32 %v359, %v358
      %vm362 = vcmp.lt.s32.totalorder %v360, 16
      %vm363 = vcmp.lt.s32.totalorder %v361, 16
      %v364 = vsel %vm362, 0.0, 1e+30
      %v365 = vsel %vm363, 0.0, 1e+30
      %v366 = vadd.f32 %v351, %v364
      %v367 = vadd.f32 %v354, %v365
      %v369 = vperm.slane %v289, 0
      %v371 = vadd.f32 %v366, %v369
      %v372 = vadd.f32 %v367, %v369
      %v373 = vmul.f32 %v341, 2.0
      %v374 = vmul.f32 %v343, 2.0
      %v375 = vsub.f32 %v371, %v373
      %v376 = vsub.f32 %v372, %v374
      %v377 = vmax.f32 %v375, 0.0
      %v378 = vmax.f32 %v376, 0.0
      %v379 = vsel %vm315, %v377, inf
      %v380 = vsel %vm315, %v378, inf
      %v381 = vmin.f32 %v379, %v380
      %v382 = vrot.slane %v381, 4
      %v383 = vmin.f32 %v381, %v382
      %v384 = vrot.slane %v383, 2
      %v385 = vmin.f32 %v383, %v384
      %v386 = vrot.slane %v385, 1
      %v387 = vmin.f32 %v385, %v386
      %vm388 = vcmp.le.f32.partialorder %v377, %v387
      %vm389 = vcmp.le.f32.partialorder %v378, %v387
      %v390 = vsel %vm388, %v360, 1073741824
      %v391 = vsel %vm389, %v361, 1073741824
      %v392 = vsel %vm315, %v390, 2147483647
      %v393 = vsel %vm315, %v391, 2147483647
      %vm394 = vcmp.lt.s32.totalorder %v392, %v393
      %v395 = vsel %vm394, %v392, %v393
      %v396 = vrot.slane %v395, 4
      %vm397 = vcmp.lt.s32.totalorder %v395, %v396
      %v398 = vsel %vm397, %v395, %v396
      %v399 = vrot.slane %v398, 2
      %vm400 = vcmp.lt.s32.totalorder %v398, %v399
      %v401 = vsel %vm400, %v398, %v399
      %v402 = vrot.slane %v401, 1
      %vm403 = vcmp.lt.s32.totalorder %v401, %v402
      %v404 = vsel %vm403, %v401, %v402
      %v405 = vld [vmem:[#allocation2] sm:$0x1]
      %vm406 = vcmp.lt.f32.partialorder %v387, %v405
      %v407 = vld [vmem:[#allocation3] sm:$0x1]
      %v408 = vsel %vm406, %v404, %v407
      %vm409 = vcmask 516096
      %410 = vst.msk [vmem:[#allocation3] sm:$0x1] %vm409, %v408
      %v411 = vld [vmem:[#allocation2] sm:$0x1]
      %v412 = vsel %vm406, %v387, %v411
      %413 = vst.msk [vmem:[#allocation2] sm:$0x1] %vm409, %v412
      // Predicated region
      $region37: #{forward.20} parent=31 // pred_check
        %p414 = pneg %p272
      $region38: #{forward.20} parent=31 // pred_check_branch
        %416 = sbr.rel (%p414) target = $region40
      $region39: #{forward.20} parent=31 // pred_region
        %v417 = vld [vmem:[#allocation3] sm:$0x1]
        %418 = vst.msk [vmem:[%s270] sm:$0x1] %vm409, %v417
      $region40: #{forward.20} parent=31 // pred_fallthru
        _
      %p419 = scmp.lt.s32.totalorder %s19, 1
      %s420 = scalar_select %p419, %s19, 1
      %p421 = scmp.lt.s32.totalorder %s20, 0
      %s422 = scalar_select %p421, %s20, 0
      %s423 = sadd.s32 %s422, %s420
      %s424 = scalar_lea.vmem %s3, %s423
      // Predicated region
      $region41: #{forward.20} parent=31 // pred_check
        %p425 = pneg %p137
      $region42: #{forward.20} parent=31 // pred_check_branch
        %427 = sbr.rel (%p425) target = $region44
      $region43: #{forward.20} parent=31 // pred_region
        _
      $region44: #{forward.20} parent=31 // pred_fallthru
        _
    $region32: #{forward.20} parent=5 // pred_fallthru
      _
    %p428 = scmp.le.s32.totalorder 2, %s9
    // Predicated region
    $region45: #{forward.20} parent=5 // pred_check
      %p429 = pneg %p428
    $region46: #{forward.20} parent=5 // pred_check_branch
      %431 = sbr.rel (%p429) target = $region48
    $region47: #{forward.20} parent=5 // pred_region
      %s432 = ssub.s32 %s9, 2
      // Predicated region
      $region49: #{forward.20} parent=47 // pred_check
        %p433 = pneg %p143
      $region50: #{forward.20} parent=47 // pred_check_branch
        %435 = sbr.rel (%p433) target = $region52
      $region51: #{forward.20} parent=47 // pred_region
        %p436 = scmp.lt.s32.totalorder %s22, 1
        %s437 = scalar_select %p436, %s22, 1
        %p438 = scmp.lt.s32.totalorder %s23, 0
        %s439 = scalar_select %p438, %s23, 0
        %s440 = sadd.s32 %s439, %s437
        %s441 = scalar_lea.vmem %s3, %s440
      $region52: #{forward.20} parent=47 // pred_fallthru
        _
    $region48: #{forward.20} parent=5 // pred_fallthru
      _
  $region6: #{forward.20} parent=0 // loop_footer
    %s13 = sadd.s32 1, %s9
  $region7: #{forward.20} parent=0 // loop_footer_branch
    %8 = sbr.rel target = $region3
  $region8: #{forward.20} parent=0 // loop_exit
    _

// kernel: div.21
$region0: #{div.21}
  #allocation0 [shape = 's32[1]{0}', space=sflag, size = 0x4, scoped, tag = 'scoped memory for div.21']
  %s0 = inlined_call_operand.vmem [shape: f32[128], index: 0, kind: input, shape index: {}]
  %s1 = inlined_call_operand.vmem [shape: f32[128], index: 1, kind: input, shape index: {}]
  %s2 = inlined_call_operand.vmem [shape: f32[128], index: 2, kind: output, shape index: {}]
  %v3 = vld [vmem:[%s0] sm:$0x1]
  %v4 = vld [vmem:[%s1] sm:$0x1]
  %5 = xla_tuple %v3, %v4
  %6 = xla_tuple %5
  %v7 = vrcp.pop %v4
  %v8 = vmul.f32 %v4, %v7
  %v9 = vsub.f32 1.0, %v8
  %v10 = vmul.f32 %v7, %v9
  %v11 = vadd.f32 %v7, %v10
  %vm12 = vweird.f32 %v4
  %vm13 = vweird.f32 %v7
  %vm14 = vmor %vm12, %vm13
  %v15 = vsel %vm14, %v7, %v11
  %v16 = vand.u32 2147483647, %v4
  %vm17 = vcmp.eq.f32.partialorder %v16, 8.507059e+37
  %v18 = vand.u32 %v4, 2147483648
  %v19 = vor.u32 1.1754944e-38, %v18
  %v20 = vsel %vm17, %v19, %v15
  %v21 = vmul.f32 %v3, %v20
  %22 = xla_tuple %v21
  %23 = vst [vmem:[%s2] sm:$0x1] %v21

// kernel: forward.21
$region0: #{forward.21}
  #allocation0 [shape = 'u32[]', space=smem, size = 0x4, offset = 0x4, fixed_abs, tag = 'smem constant byte address 0x4 - core index']
  #allocation1 [shape = 'u32[72,128]{1,0:T(1,128)}', space=vmem, size = 0x9000, scoped, tag = 'internal scratch']
  %s0 = inlined_call_operand.vmem [shape: bf16[32,64], index: 0, kind: input, shape index: {}]
  %s1 = inlined_call_operand.vmem [shape: bf16[64,64], index: 1, kind: input, shape index: {}]
  %s2 = inlined_call_operand.vmem [shape: f32[32,64], index: 2, kind: output, shape index: {}]
  %s3 = sld [smem:[#allocation0]]
  $region18: #{forward.21} parent=0
    _
  %s5 = ssub.s32 1, %s3
  %s6 = scalar_select 0, %s5, %s3
  // Predicated region
  $region2: #{forward.21} parent=0 // pred_check
    _
  $region3: #{forward.21} parent=0 // pred_check_branch
    %8 = sbr.rel (0) target = $region5
  $region4: #{forward.21} parent=0 // pred_region
    _
  $region5: #{forward.21} parent=0 // pred_fallthru
    _
  // Predicated region
  $region6: #{forward.21} parent=0 // pred_check
    _
  $region7: #{forward.21} parent=0 // pred_check_branch
    %10 = sbr.rel (0) target = $region9
  $region8: #{forward.21} parent=0 // pred_region
    _
  $region9: #{forward.21} parent=0 // pred_fallthru
    _
  %v12 = vld [vmem:[%s0] sm:$0xf]
  %v13 = vld [vmem:[%s0 + $0x4] sm:$0xf]
  %v14 = vld [vmem:[%s0 + $0x8] sm:$0xf]
  %v15 = vld [vmem:[%s0 + $0xc] sm:$0xf]
  %v16 = vld [vmem:[%s1] sm:$0xf]
  %v17 = vld [vmem:[%s1 + $0x4] sm:$0xf]
  %v18 = vld [vmem:[%s1 + $0x8] sm:$0xf]
  %v19 = vld [vmem:[%s1 + $0xc] sm:$0xf]
  %v20 = vld [vmem:[%s1 + $0x10] sm:$0xf]
  %v21 = vld [vmem:[%s1 + $0x14] sm:$0xf]
  %v22 = vld [vmem:[%s1 + $0x18] sm:$0xf]
  %v23 = vld [vmem:[%s1 + $0x1c] sm:$0xf]
  %v28 = vunpack.c.l.b16 %v12
  %v29 = vunpack.c.l.b16 %v13
  %v30 = vunpack.c.l.b16 %v14
  %v31 = vunpack.c.l.b16 %v15
  %v32 = vpack.c.b16 %v29, %v28
  %v33 = vpack.c.b16 %v31, %v30
  %v42 = vunpack.c.l.b16 %v16
  %v43 = vunpack.c.l.b16 %v17
  %v44 = vunpack.c.l.b16 %v18
  %v45 = vunpack.c.l.b16 %v19
  %v46 = vunpack.c.l.b16 %v20
  %v47 = vunpack.c.l.b16 %v21
  %v48 = vunpack.c.l.b16 %v22
  %v49 = vunpack.c.l.b16 %v23
  %v50 = vpack.c.b16 %v43, %v42
  %v51 = vpack.c.b16 %v45, %v44
  %v52 = vpack.c.b16 %v47, %v46
  %v53 = vpack.c.b16 %v49, %v48
  %vm58 = vcmask 523264
  %v60 = vsel %vm58, %v32, 0
  %v63 = vsel %vm58, %v33, 0
  %65 = vmatpush.bf16.msra.mxu0 0
  %66 = vmatpush.bf16.msra.mxu0 0
  %67 = vmatpush.bf16.msra.mxu0 0
  %68 = vmatpush.bf16.msra.mxu0 0
  %69 = vmatpush.bf16.msra.mxu0 %v53
  %70 = vmatpush.bf16.msra.mxu0 %v52
  %71 = vmatpush.bf16.msra.mxu0 %v51
  %72 = vmatpush.bf16.msra.mxu0 %v50
  %73 = vmatmul.bf16.gmra.mxu0 %v60
  %v74 = vpop.f32.mrf.mxu0
  %v75 = vadd.f32 0.0, %v74
  %v76 = vpop.f32.mrf.mxu0
  %v77 = vadd.f32 0.0, %v76
  %78 = vmatmul.bf16.gmra.mxu0 %v63
  %v79 = vpop.f32.mrf.mxu0
  %v80 = vadd.f32 0.0, %v79
  %v81 = vpop.f32.mrf.mxu0
  %v82 = vadd.f32 0.0, %v81
  %83 = vdwg.mxu0
  %84 = vst.msk [vmem:[%s2] sm:$0xff] %vm58, %v75
  %85 = vst.msk [vmem:[%s2 + $0x8] sm:$0xff] %vm58, %v77
  %86 = vst.msk [vmem:[%s2 + $0x10] sm:$0xff] %vm58, %v80
  %87 = vst.msk [vmem:[%s2 + $0x18] sm:$0xff] %vm58, %v82
  // Predicated region
  $region10: #{forward.21} parent=0 // pred_check
    _
  $region11: #{forward.21} parent=0 // pred_check_branch
    %89 = sbr.rel (0) target = $region13
  $region12: #{forward.21} parent=0 // pred_region
    _
  $region13: #{forward.21} parent=0 // pred_fallthru
    _
  // Predicated region
  $region14: #{forward.21} parent=0 // pred_check
    _
  $region15: #{forward.21} parent=0 // pred_check_branch
    %91 = sbr.rel (0) target = $region17
  $region16: #{forward.21} parent=0 // pred_region
    _
  $region17: #{forward.21} parent=0 // pred_fallthru
    _

// kernel: forward.22
$region0: #{forward.22}
  #allocation0 [shape = 'u32[]', space=smem, size = 0x4, offset = 0x4, fixed_abs, tag = 'smem constant byte address 0x4 - core index']
  #allocation1 [shape = 'u32[72,128]{1,0:T(1,128)}', space=vmem, size = 0x9000, scoped, tag = 'internal scratch']
  %s0 = inlined_call_operand.vmem [shape: bf16[8,576], index: 0, kind: input, shape index: {}]
  %s1 = inlined_call_operand.vmem [shape: bf16[576,64], index: 1, kind: input, shape index: {}]
  %s2 = inlined_call_operand.vmem [shape: f32[1,64], index: 2, kind: input, shape index: {}]
  %s3 = inlined_call_operand.vmem [shape: f32[8,64], index: 3, kind: output, shape index: {}]
  %s4 = sld [smem:[#allocation0]]
  $region22: #{forward.22} parent=0
    _
  %s6 = ssub.s32 1, %s4
  %s7 = scalar_select 0, %s6, %s4
  // Predicated region
  $region2: #{forward.22} parent=0 // pred_check
    _
  $region3: #{forward.22} parent=0 // pred_check_branch
    %9 = sbr.rel (0) target = $region5
  $region4: #{forward.22} parent=0 // pred_region
    _
  $region5: #{forward.22} parent=0 // pred_fallthru
    _
  // Predicated region
  $region6: #{forward.22} parent=0 // pred_check
    _
  $region7: #{forward.22} parent=0 // pred_check_branch
    %11 = sbr.rel (0) target = $region9
  $region8: #{forward.22} parent=0 // pred_region
    _
  $region9: #{forward.22} parent=0 // pred_fallthru
    _
  // Predicated region
  $region10: #{forward.22} parent=0 // pred_check
    _
  $region11: #{forward.22} parent=0 // pred_check_branch
    %13 = sbr.rel (0) target = $region13
  $region12: #{forward.22} parent=0 // pred_region
    _
  $region13: #{forward.22} parent=0 // pred_fallthru
    _
  %v15 = vld [vmem:[%s0] sm:$0xff]
  %v16 = vld [vmem:[%s0 + $0x8] sm:$0xff]
  %v17 = vld [vmem:[%s0 + $0x10] sm:$0xf]
  %v18 = vld [vmem:[%s1] sm:$0xf]
  %v19 = vld [vmem:[%s1 + $0x4] sm:$0xf]
  %v20 = vld [vmem:[%s1 + $0x8] sm:$0xf]
  %v21 = vld [vmem:[%s1 + $0xc] sm:$0xf]
  %v22 = vld [vmem:[%s1 + $0x10] sm:$0xf]
  %v23 = vld [vmem:[%s1 + $0x14] sm:$0xf]
  %v24 = vld [vmem:[%s1 + $0x18] sm:$0xf]
  %v25 = vld [vmem:[%s1 + $0x1c] sm:$0xf]
  %v26 = vld [vmem:[%s1 + $0x20] sm:$0xf]
  %v27 = vld [vmem:[%s1 + $0x24] sm:$0xf]
  %v28 = vld [vmem:[%s1 + $0x28] sm:$0xf]
  %v29 = vld [vmem:[%s1 + $0x2c] sm:$0xf]
  %v30 = vld [vmem:[%s1 + $0x30] sm:$0xf]
  %v31 = vld [vmem:[%s1 + $0x34] sm:$0xf]
  %v32 = vld [vmem:[%s1 + $0x38] sm:$0xf]
  %v33 = vld [vmem:[%s1 + $0x3c] sm:$0xf]
  %v34 = vld [vmem:[%s1 + $0x40] sm:$0xf]
  %v35 = vld [vmem:[%s1 + $0x44] sm:$0xf]
  %v36 = vld [vmem:[%s1 + $0x48] sm:$0xf]
  %v37 = vld [vmem:[%s1 + $0x4c] sm:$0xf]
  %v38 = vld [vmem:[%s1 + $0x50] sm:$0xf]
  %v39 = vld [vmem:[%s1 + $0x54] sm:$0xf]
  %v40 = vld [vmem:[%s1 + $0x58] sm:$0xf]
  %v41 = vld [vmem:[%s1 + $0x5c] sm:$0xf]
  %v42 = vld [vmem:[%s1 + $0x60] sm:$0xf]
  %v43 = vld [vmem:[%s1 + $0x64] sm:$0xf]
  %v44 = vld [vmem:[%s1 + $0x68] sm:$0xf]
  %v45 = vld [vmem:[%s1 + $0x6c] sm:$0xf]
  %v46 = vld [vmem:[%s1 + $0x70] sm:$0xf]
  %v47 = vld [vmem:[%s1 + $0x74] sm:$0xf]
  %v48 = vld [vmem:[%s1 + $0x78] sm:$0xf]
  %v49 = vld [vmem:[%s1 + $0x7c] sm:$0xf]
  %v50 = vld [vmem:[%s1 + $0x80] sm:$0xf]
  %v51 = vld [vmem:[%s1 + $0x84] sm:$0xf]
  %v52 = vld [vmem:[%s1 + $0x88] sm:$0xf]
  %v53 = vld [vmem:[%s1 + $0x8c] sm:$0xf]
  %v54 = vld [vmem:[%s1 + $0x90] sm:$0xf]
  %v55 = vld [vmem:[%s1 + $0x94] sm:$0xf]
  %v56 = vld [vmem:[%s1 + $0x98] sm:$0xf]
  %v57 = vld [vmem:[%s1 + $0x9c] sm:$0xf]
  %v58 = vld [vmem:[%s1 + $0xa0] sm:$0xf]
  %v59 = vld [vmem:[%s1 + $0xa4] sm:$0xf]
  %v60 = vld [vmem:[%s1 + $0xa8] sm:$0xf]
  %v61 = vld [vmem:[%s1 + $0xac] sm:$0xf]
  %v62 = vld [vmem:[%s1 + $0xb0] sm:$0xf]
  %v63 = vld [vmem:[%s1 + $0xb4] sm:$0xf]
  %v64 = vld [vmem:[%s1 + $0xb8] sm:$0xf]
  %v65 = vld [vmem:[%s1 + $0xbc] sm:$0xf]
  %v66 = vld [vmem:[%s1 + $0xc0] sm:$0xf]
  %v67 = vld [vmem:[%s1 + $0xc4] sm:$0xf]
  %v68 = vld [vmem:[%s1 + $0xc8] sm:$0xf]
  %v69 = vld [vmem:[%s1 + $0xcc] sm:$0xf]
  %v70 = vld [vmem:[%s1 + $0xd0] sm:$0xf]
  %v71 = vld [vmem:[%s1 + $0xd4] sm:$0xf]
  %v72 = vld [vmem:[%s1 + $0xd8] sm:$0xf]
  %v73 = vld [vmem:[%s1 + $0xdc] sm:$0xf]
  %v74 = vld [vmem:[%s1 + $0xe0] sm:$0xf]
  %v75 = vld [vmem:[%s1 + $0xe4] sm:$0xf]
  %v76 = vld [vmem:[%s1 + $0xe8] sm:$0xf]
  %v77 = vld [vmem:[%s1 + $0xec] sm:$0xf]
  %v78 = vld [vmem:[%s1 + $0xf0] sm:$0xf]
  %v79 = vld [vmem:[%s1 + $0xf4] sm:$0xf]
  %v80 = vld [vmem:[%s1 + $0xf8] sm:$0xf]
  %v81 = vld [vmem:[%s1 + $0xfc] sm:$0xf]
  %v82 = vld [vmem:[%s1 + $0x100] sm:$0xf]
  %v83 = vld [vmem:[%s1 + $0x104] sm:$0xf]
  %v84 = vld [vmem:[%s1 + $0x108] sm:$0xf]
  %v85 = vld [vmem:[%s1 + $0x10c] sm:$0xf]
  %v86 = vld [vmem:[%s1 + $0x110] sm:$0xf]
  %v87 = vld [vmem:[%s1 + $0x114] sm:$0xf]
  %v88 = vld [vmem:[%s1 + $0x118] sm:$0xf]
  %v89 = vld [vmem:[%s1 + $0x11c] sm:$0xf]
  %v90 = vld [vmem:[%s2] sm:$0x1]
  %v92 = vperm.slane %v90, 0
  %v97 = vunpack.c.l.b16 %v15
  %v98 = vunpack.c.h.b16 %v15
  %v99 = vunpack.c.l.b16 %v16
  %v100 = vunpack.c.h.b16 %v16
  %v101 = vunpack.c.l.b16 %v17
  %v102 = vpack.c.b16 %v97, %v97
  %v103 = vpack.c.b16 %v98, %v98
  %v104 = vpack.c.b16 %v99, %v99
  %v105 = vpack.c.b16 %v100, %v100
  %v106 = vpack.c.b16 %v101, %v101
  %v183 = vunpack.c.l.b16 %v18
  %v184 = vunpack.c.l.b16 %v19
  %v185 = vunpack.c.l.b16 %v20
  %v186 = vunpack.c.l.b16 %v21
  %v187 = vunpack.c.l.b16 %v22
  %v188 = vunpack.c.l.b16 %v23
  %v189 = vunpack.c.l.b16 %v24
  %v190 = vunpack.c.l.b16 %v25
  %v191 = vunpack.c.l.b16 %v26
  %v192 = vunpack.c.l.b16 %v27
  %v193 = vunpack.c.l.b16 %v28
  %v194 = vunpack.c.l.b16 %v29
  %v195 = vunpack.c.l.b16 %v30
  %v196 = vunpack.c.l.b16 %v31
  %v197 = vunpack.c.l.b16 %v32
  %v198 = vunpack.c.l.b16 %v33
  %v199 = vunpack.c.l.b16 %v34
  %v200 = vunpack.c.l.b16 %v35
  %v201 = vunpack.c.l.b16 %v36
  %v202 = vunpack.c.l.b16 %v37
  %v203 = vunpack.c.l.b16 %v38
  %v204 = vunpack.c.l.b16 %v39
  %v205 = vunpack.c.l.b16 %v40
  %v206 = vunpack.c.l.b16 %v41
  %v207 = vunpack.c.l.b16 %v42
  %v208 = vunpack.c.l.b16 %v43
  %v209 = vunpack.c.l.b16 %v44
  %v210 = vunpack.c.l.b16 %v45
  %v211 = vunpack.c.l.b16 %v46
  %v212 = vunpack.c.l.b16 %v47
  %v213 = vunpack.c.l.b16 %v48
  %v214 = vunpack.c.l.b16 %v49
  %v215 = vunpack.c.l.b16 %v50
  %v216 = vunpack.c.l.b16 %v51
  %v217 = vunpack.c.l.b16 %v52
  %v218 = vunpack.c.l.b16 %v53
  %v219 = vunpack.c.l.b16 %v54
  %v220 = vunpack.c.l.b16 %v55
  %v221 = vunpack.c.l.b16 %v56
  %v222 = vunpack.c.l.b16 %v57
  %v223 = vunpack.c.l.b16 %v58
  %v224 = vunpack.c.l.b16 %v59
  %v225 = vunpack.c.l.b16 %v60
  %v226 = vunpack.c.l.b16 %v61
  %v227 = vunpack.c.l.b16 %v62
  %v228 = vunpack.c.l.b16 %v63
  %v229 = vunpack.c.l.b16 %v64
  %v230 = vunpack.c.l.b16 %v65
  %v231 = vunpack.c.l.b16 %v66
  %v232 = vunpack.c.l.b16 %v67
  %v233 = vunpack.c.l.b16 %v68
  %v234 = vunpack.c.l.b16 %v69
  %v235 = vunpack.c.l.b16 %v70
  %v236 = vunpack.c.l.b16 %v71
  %v237 = vunpack.c.l.b16 %v72
  %v238 = vunpack.c.l.b16 %v73
  %v239 = vunpack.c.l.b16 %v74
  %v240 = vunpack.c.l.b16 %v75
  %v241 = vunpack.c.l.b16 %v76
  %v242 = vunpack.c.l.b16 %v77
  %v243 = vunpack.c.l.b16 %v78
  %v244 = vunpack.c.l.b16 %v79
  %v245 = vunpack.c.l.b16 %v80
  %v246 = vunpack.c.l.b16 %v81
  %v247 = vunpack.c.l.b16 %v82
  %v248 = vunpack.c.l.b16 %v83
  %v249 = vunpack.c.l.b16 %v84
  %v250 = vunpack.c.l.b16 %v85
  %v251 = vunpack.c.l.b16 %v86
  %v252 = vunpack.c.l.b16 %v87
  %v253 = vunpack.c.l.b16 %v88
  %v254 = vunpack.c.l.b16 %v89
  %v255 = vpack.c.b16 %v184, %v183
  %v256 = vpack.c.b16 %v186, %v185
  %v257 = vpack.c.b16 %v188, %v187
  %v258 = vpack.c.b16 %v190, %v189
  %v259 = vpack.c.b16 %v192, %v191
  %v260 = vpack.c.b16 %v194, %v193
  %v261 = vpack.c.b16 %v196, %v195
  %v262 = vpack.c.b16 %v198, %v197
  %v263 = vpack.c.b16 %v200, %v199
  %v264 = vpack.c.b16 %v202, %v201
  %v265 = vpack.c.b16 %v204, %v203
  %v266 = vpack.c.b16 %v206, %v205
  %v267 = vpack.c.b16 %v208, %v207
  %v268 = vpack.c.b16 %v210, %v209
  %v269 = vpack.c.b16 %v212, %v211
  %v270 = vpack.c.b16 %v214, %v213
  %v271 = vpack.c.b16 %v216, %v215
  %v272 = vpack.c.b16 %v218, %v217
  %v273 = vpack.c.b16 %v220, %v219
  %v274 = vpack.c.b16 %v222, %v221
  %v275 = vpack.c.b16 %v224, %v223
  %v276 = vpack.c.b16 %v226, %v225
  %v277 = vpack.c.b16 %v228, %v227
  %v278 = vpack.c.b16 %v230, %v229
  %v279 = vpack.c.b16 %v232, %v231
  %v280 = vpack.c.b16 %v234, %v233
  %v281 = vpack.c.b16 %v236, %v235
  %v282 = vpack.c.b16 %v238, %v237
  %v283 = vpack.c.b16 %v240, %v239
  %v284 = vpack.c.b16 %v242, %v241
  %v285 = vpack.c.b16 %v244, %v243
  %v286 = vpack.c.b16 %v246, %v245
  %v287 = vpack.c.b16 %v248, %v247
  %v288 = vpack.c.b16 %v250, %v249
  %v289 = vpack.c.b16 %v252, %v251
  %v290 = vpack.c.b16 %v254, %v253
  %vm327 = vcmask 523264
  %v329 = vsel %vm327, %v106, 0
  %331 = vmatpush.bf16.msra.mxu0 %v262
  %332 = vmatpush.bf16.msra.mxu0 %v261
  %333 = vmatpush.bf16.msra.mxu0 %v260
  %334 = vmatpush.bf16.msra.mxu0 %v259
  %335 = vmatpush.bf16.msra.mxu0 %v258
  %336 = vmatpush.bf16.msra.mxu0 %v257
  %337 = vmatpush.bf16.msra.mxu0 %v256
  %338 = vmatpush.bf16.msra.mxu0 %v255
  %339 = vmatmul.bf16.gmra.mxu0 %v102
  %v340 = vpop.f32.mrf.mxu0
  %v341 = vadd.f32 %v92, %v340
  %v342 = vpop.f32.mrf.mxu0
  %343 = vdwg.mxu0
  %344 = vmatpush.bf16.msra.mxu0 %v270
  %345 = vmatpush.bf16.msra.mxu0 %v269
  %346 = vmatpush.bf16.msra.mxu0 %v268
  %347 = vmatpush.bf16.msra.mxu0 %v267
  %348 = vmatpush.bf16.msra.mxu0 %v266
  %349 = vmatpush.bf16.msra.mxu0 %v265
  %350 = vmatpush.bf16.msra.mxu0 %v264
  %351 = vmatpush.bf16.msra.mxu0 %v263
  %352 = vmatmul.bf16.gmra.mxu0 %v103
  %v353 = vpop.f32.mrf.mxu0
  %v354 = vadd.f32 %v341, %v353
  %v355 = vpop.f32.mrf.mxu0
  %356 = vdwg.mxu0
  %357 = vmatpush.bf16.msra.mxu0 %v278
  %358 = vmatpush.bf16.msra.mxu0 %v277
  %359 = vmatpush.bf16.msra.mxu0 %v276
  %360 = vmatpush.bf16.msra.mxu0 %v275
  %361 = vmatpush.bf16.msra.mxu0 %v274
  %362 = vmatpush.bf16.msra.mxu0 %v273
  %363 = vmatpush.bf16.msra.mxu0 %v272
  %364 = vmatpush.bf16.msra.mxu0 %v271
  %365 = vmatmul.bf16.gmra.mxu0 %v104
  %v366 = vpop.f32.mrf.mxu0
  %v367 = vadd.f32 %v354, %v366
  %v368 = vpop.f32.mrf.mxu0
  %369 = vdwg.mxu0
  %370 = vmatpush.bf16.msra.mxu0 %v286
  %371 = vmatpush.bf16.msra.mxu0 %v285
  %372 = vmatpush.bf16.msra.mxu0 %v284
  %373 = vmatpush.bf16.msra.mxu0 %v283
  %374 = vmatpush.bf16.msra.mxu0 %v282
  %375 = vmatpush.bf16.msra.mxu0 %v281
  %376 = vmatpush.bf16.msra.mxu0 %v280
  %377 = vmatpush.bf16.msra.mxu0 %v279
  %378 = vmatmul.bf16.gmra.mxu0 %v105
  %v379 = vpop.f32.mrf.mxu0
  %v380 = vadd.f32 %v367, %v379
  %v381 = vpop.f32.mrf.mxu0
  %382 = vdwg.mxu0
  %383 = vmatpush.bf16.msra.mxu0 0
  %384 = vmatpush.bf16.msra.mxu0 0
  %385 = vmatpush.bf16.msra.mxu0 0
  %386 = vmatpush.bf16.msra.mxu0 0
  %387 = vmatpush.bf16.msra.mxu0 %v290
  %388 = vmatpush.bf16.msra.mxu0 %v289
  %389 = vmatpush.bf16.msra.mxu0 %v288
  %390 = vmatpush.bf16.msra.mxu0 %v287
  %391 = vmatmul.bf16.gmra.mxu0 %v329
  %v392 = vpop.f32.mrf.mxu0
  %v393 = vadd.f32 %v380, %v392
  %v394 = vpop.f32.mrf.mxu0
  %395 = vdwg.mxu0
  %396 = vst.msk [vmem:[%s3] sm:$0xff] %vm327, %v393
  // Predicated region
  $region14: #{forward.22} parent=0 // pred_check
    _
  $region15: #{forward.22} parent=0 // pred_check_branch
    %398 = sbr.rel (0) target = $region17
  $region16: #{forward.22} parent=0 // pred_region
    _
  $region17: #{forward.22} parent=0 // pred_fallthru
    _
  // Predicated region
  $region18: #{forward.22} parent=0 // pred_check
    _
  $region19: #{forward.22} parent=0 // pred_check_branch
    %400 = sbr.rel (0) target = $region21
  $region20: #{forward.22} parent=0 // pred_region
    _
  $region21: #{forward.22} parent=0 // pred_fallthru
    _

// kernel: forward.23
$region0: #{forward.23}
  #allocation0 [shape = 'u32[]', space=smem, size = 0x4, offset = 0x4, fixed_abs, tag = 'smem constant byte address 0x4 - core index']
  #allocation1 [shape = 'u32[72,128]{1,0:T(1,128)}', space=vmem, size = 0x9000, scoped, tag = 'internal scratch']
  #allocation2 [shape = 'f32[1,1]{1,0:T(1,128)S(1)}', space=vmem, size = 0x200, scoped, tag = 'scoped memory for forward.23']
  %s0 = inlined_call_operand.vmem [shape: f32[32,64], index: 0, kind: input, shape index: {}]
  %s1 = inlined_call_operand.vmem [shape: f32[1,64], index: 1, kind: input, shape index: {}]
  %s2 = inlined_call_operand.vmem [shape: f32[1,64], index: 2, kind: input, shape index: {}]
  %s3 = inlined_call_operand.vmem [shape: f32[1,64], index: 3, kind: input, shape index: {}]
  %s4 = inlined_call_operand.<no memory space> [shape: f32[1,1], index: 4, kind: input, shape index: {}]
  %s5 = inlined_call_operand.vmem [shape: f32[32,64], index: 5, kind: output, shape index: {0}]
  %s6 = inlined_call_operand.vmem [shape: f32[32,1], index: 6, kind: output, shape index: {1}]
  %7 = xla_tuple %s5, %s6
  %s8 = sld [smem:[#allocation0]]
  $region38: #{forward.23} parent=0
    _
  %s10 = ssub.s32 1, %s8
  %s11 = scalar_select 0, %s10, %s8
  %v12 = vstv %s4
  %13 = vst [vmem:[#allocation2] sm:$0x1] %v12
  // Predicated region
  $region2: #{forward.23} parent=0 // pred_check
    _
  $region3: #{forward.23} parent=0 // pred_check_branch
    %15 = sbr.rel (0) target = $region5
  $region4: #{forward.23} parent=0 // pred_region
    _
  $region5: #{forward.23} parent=0 // pred_fallthru
    _
  // Predicated region
  $region6: #{forward.23} parent=0 // pred_check
    _
  $region7: #{forward.23} parent=0 // pred_check_branch
    %17 = sbr.rel (0) target = $region9
  $region8: #{forward.23} parent=0 // pred_region
    _
  $region9: #{forward.23} parent=0 // pred_fallthru
    _
  // Predicated region
  $region10: #{forward.23} parent=0 // pred_check
    _
  $region11: #{forward.23} parent=0 // pred_check_branch
    %19 = sbr.rel (0) target = $region13
  $region12: #{forward.23} parent=0 // pred_region
    _
  $region13: #{forward.23} parent=0 // pred_fallthru
    _
  // Predicated region
  $region14: #{forward.23} parent=0 // pred_check
    _
  $region15: #{forward.23} parent=0 // pred_check_branch
    %21 = sbr.rel (0) target = $region17
  $region16: #{forward.23} parent=0 // pred_region
    _
  $region17: #{forward.23} parent=0 // pred_fallthru
    _
  // Predicated region
  $region18: #{forward.23} parent=0 // pred_check
    _
  $region19: #{forward.23} parent=0 // pred_check_branch
    %23 = sbr.rel (0) target = $region21
  $region20: #{forward.23} parent=0 // pred_region
    _
  $region21: #{forward.23} parent=0 // pred_fallthru
    _
  %v24 = vld [vmem:[%s0] sm:$0xff]
  %v25 = vld [vmem:[%s0 + $0x8] sm:$0xff]
  %v26 = vld [vmem:[%s0 + $0x10] sm:$0xff]
  %v27 = vld [vmem:[%s0 + $0x18] sm:$0xff]
  %vm28 = vcmask 523264
  %v29 = vsel %vm28, %v24, 0.0
  %30 = vadd.xlane.f32.xlu0 %v29
  %v31 = vpop.xlane.xlu0 %30
  %v32 = vsel %vm28, %v25, 0.0
  %33 = vadd.xlane.f32.xlu0 %v32
  %v34 = vpop.xlane.xlu0 %33
  %v35 = vsel %vm28, %v26, 0.0
  %36 = vadd.xlane.f32.xlu0 %v35
  %v37 = vpop.xlane.xlu0 %36
  %v38 = vsel %vm28, %v27, 0.0
  %39 = vadd.xlane.f32.xlu0 %v38
  %v40 = vpop.xlane.xlu0 %39
  %v41 = vrcp.pop 64.0
  %v42 = vmul.f32 64.0, %v41
  %v43 = vsub.f32 1.0, %v42
  %v44 = vmul.f32 %v41, %v43
  %v45 = vadd.f32 %v41, %v44
  %vm46 = vweird.f32 %v41
  %v47 = vsel %vm46, %v41, %v45
  %v48 = vmul.f32 %v31, %v47
  %v49 = vmul.f32 %v34, %v47
  %v50 = vmul.f32 %v37, %v47
  %v51 = vmul.f32 %v40, %v47
  %v52 = vsub.f32 %v24, %v48
  %v53 = vsub.f32 %v25, %v49
  %v54 = vsub.f32 %v26, %v50
  %v55 = vsub.f32 %v27, %v51
  %v56 = vmul.f32 %v52, %v52
  %v57 = vmul.f32 %v53, %v53
  %v58 = vmul.f32 %v54, %v54
  %v59 = vmul.f32 %v55, %v55
  %v60 = vsel %vm28, %v56, 0.0
  %61 = vadd.xlane.f32.xlu0 %v60
  %v62 = vpop.xlane.xlu0 %61
  %v63 = vsel %vm28, %v57, 0.0
  %64 = vadd.xlane.f32.xlu0 %v63
  %v65 = vpop.xlane.xlu0 %64
  %v66 = vsel %vm28, %v58, 0.0
  %67 = vadd.xlane.f32.xlu0 %v66
  %v68 = vpop.xlane.xlu0 %67
  %v69 = vsel %vm28, %v59, 0.0
  %70 = vadd.xlane.f32.xlu0 %v69
  %v71 = vpop.xlane.xlu0 %70
  %v72 = vmul.f32 %v62, %v47
  %v73 = vmul.f32 %v65, %v47
  %v74 = vmul.f32 %v68, %v47
  %v75 = vmul.f32 %v71, %v47
  %v76 = vadd.f32 %v72, 1e-05
  %v77 = vadd.f32 %v73, 1e-05
  %v78 = vadd.f32 %v74, 1e-05
  %v79 = vadd.f32 %v75, 1e-05
  %v80 = vrsqrt.pop %v76
  %v81 = vmul.f32 %v80, %v76
  %v82 = vmul.f32 %v81, %v80
  %v83 = vmul.f32 0.5, %v82
  %v84 = vsub.f32 1.5, %v83
  %v85 = vmul.f32 %v80, %v84
  %vm86 = vweird.f32 %v76
  %vm87 = vweird.f32 %v80
  %vm88 = vmor %vm86, %vm87
  %v89 = vsel %vm88, %v80, %v85
  %v90 = vrsqrt.pop %v77
  %v91 = vmul.f32 %v90, %v77
  %v92 = vmul.f32 %v91, %v90
  %v93 = vmul.f32 0.5, %v92
  %v94 = vsub.f32 1.5, %v93
  %v95 = vmul.f32 %v90, %v94
  %vm96 = vweird.f32 %v77
  %vm97 = vweird.f32 %v90
  %vm98 = vmor %vm96, %vm97
  %v99 = vsel %vm98, %v90, %v95
  %v100 = vrsqrt.pop %v78
  %v101 = vmul.f32 %v100, %v78
  %v102 = vmul.f32 %v101, %v100
  %v103 = vmul.f32 0.5, %v102
  %v104 = vsub.f32 1.5, %v103
  %v105 = vmul.f32 %v100, %v104
  %vm106 = vweird.f32 %v78
  %vm107 = vweird.f32 %v100
  %vm108 = vmor %vm106, %vm107
  %v109 = vsel %vm108, %v100, %v105
  %v110 = vrsqrt.pop %v79
  %v111 = vmul.f32 %v110, %v79
  %v112 = vmul.f32 %v111, %v110
  %v113 = vmul.f32 0.5, %v112
  %v114 = vsub.f32 1.5, %v113
  %v115 = vmul.f32 %v110, %v114
  %vm116 = vweird.f32 %v79
  %vm117 = vweird.f32 %v110
  %vm118 = vmor %vm116, %vm117
  %v119 = vsel %vm118, %v110, %v115
  %v120 = vmul.f32 %v52, %v89
  %v121 = vmul.f32 %v53, %v99
  %v122 = vmul.f32 %v54, %v109
  %v123 = vmul.f32 %v55, %v119
  %v124 = vld [vmem:[%s1] sm:$0x1]
  %v126 = vperm.slane %v124, 0
  %v128 = vmul.f32 %v120, %v126
  %v129 = vmul.f32 %v121, %v126
  %v130 = vmul.f32 %v122, %v126
  %v131 = vmul.f32 %v123, %v126
  %v132 = vld [vmem:[%s2] sm:$0x1]
  %v134 = vperm.slane %v132, 0
  %v136 = vadd.f32 %v128, %v134
  %v137 = vadd.f32 %v129, %v134
  %v138 = vadd.f32 %v130, %v134
  %v139 = vadd.f32 %v131, %v134
  %140 = vst.msk [vmem:[%s5] sm:$0xff] %vm28, %v136
  %141 = vst.msk [vmem:[%s5 + $0x8] sm:$0xff] %vm28, %v137
  %142 = vst.msk [vmem:[%s5 + $0x10] sm:$0xff] %vm28, %v138
  %143 = vst.msk [vmem:[%s5 + $0x18] sm:$0xff] %vm28, %v139
  %v144 = vld [vmem:[%s3] sm:$0x1]
  %v146 = vperm.slane %v144, 0
  %v148 = vmul.f32 %v136, %v146
  %v149 = vmul.f32 %v137, %v146
  %v150 = vmul.f32 %v138, %v146
  %v151 = vmul.f32 %v139, %v146
  %v152 = vsel %vm28, %v148, 0.0
  %153 = vadd.xlane.f32.xlu0 %v152
  %v154 = vpop.xlane.xlu0 %153
  %v155 = vsel %vm28, %v149, 0.0
  %156 = vadd.xlane.f32.xlu0 %v155
  %v157 = vpop.xlane.xlu0 %156
  %v158 = vsel %vm28, %v150, 0.0
  %159 = vadd.xlane.f32.xlu0 %v158
  %v160 = vpop.xlane.xlu0 %159
  %v161 = vsel %vm28, %v151, 0.0
  %162 = vadd.xlane.f32.xlu0 %v161
  %v163 = vpop.xlane.xlu0 %162
  %v164 = vld [vmem:[#allocation2] sm:$0x1]
  %v166 = vperm.slane %v164, 0
  %v168 = vadd.f32 %v154, %v166
  %v169 = vadd.f32 %v157, %v166
  %v170 = vadd.f32 %v160, %v166
  %v171 = vadd.f32 %v163, %v166
  %vm172 = vcmask 7168
  %173 = vst.msk [vmem:[%s6] sm:$0xff] %vm172, %v168
  %174 = vst.msk [vmem:[%s6 + $0x8] sm:$0xff] %vm172, %v169
  %175 = vst.msk [vmem:[%s6 + $0x10] sm:$0xff] %vm172, %v170
  %176 = vst.msk [vmem:[%s6 + $0x18] sm:$0xff] %vm172, %v171
  // Predicated region
  $region22: #{forward.23} parent=0 // pred_check
    _
  $region23: #{forward.23} parent=0 // pred_check_branch
    %178 = sbr.rel (0) target = $region25
  $region24: #{forward.23} parent=0 // pred_region
    _
  $region25: #{forward.23} parent=0 // pred_fallthru
    _
  // Predicated region
  $region26: #{forward.23} parent=0 // pred_check
    _
  $region27: #{forward.23} parent=0 // pred_check_branch
    %180 = sbr.rel (0) target = $region29
  $region28: #{forward.23} parent=0 // pred_region
    _
  $region29: #{forward.23} parent=0 // pred_fallthru
    _
  // Predicated region
  $region30: #{forward.23} parent=0 // pred_check
    _
  $region31: #{forward.23} parent=0 // pred_check_branch
    %182 = sbr.rel (0) target = $region33
  $region32: #{forward.23} parent=0 // pred_region
    _
  $region33: #{forward.23} parent=0 // pred_fallthru
    _
  // Predicated region
  $region34: #{forward.23} parent=0 // pred_check
    _
  $region35: #{forward.23} parent=0 // pred_check_branch
    %184 = sbr.rel (0) target = $region37
  $region36: #{forward.23} parent=0 // pred_region
    _
  $region37: #{forward.23} parent=0 // pred_fallthru
    _

// kernel: forward.24
$region0: #{forward.24}
  #allocation0 [shape = 'u32[]', space=smem, size = 0x4, offset = 0x4, fixed_abs, tag = 'smem constant byte address 0x4 - core index']
  #allocation1 [shape = 'u32[72,128]{1,0:T(1,128)}', space=vmem, size = 0x9000, scoped, tag = 'internal scratch']
  #allocation2 [shape = 'f32[5,32]{1,0:T(8,128)}', space=vmem, size = 0x1000, scoped, tag = 'scratch operand']
  #allocation3 [shape = 'f32[1,32]{1,0:T(1,128)}', space=vmem, size = 0x200, scoped, tag = 'scratch operand']
  %s0 = inlined_call_operand.vmem [shape: bf16[2,32,64], index: 0, kind: input, shape index: {}, may-alias: {0,1}]
  %s1 = inlined_call_operand.vmem [shape: bf16[2,32,64], index: 1, kind: input, shape index: {}, may-alias: {0,1}]
  %s2 = inlined_call_operand.vmem [shape: f32[2,1,32], index: 2, kind: input, shape index: {}]
  %s3 = inlined_call_operand.vmem [shape: f32[2,1,32], index: 3, kind: output, shape index: {0}]
  %s4 = inlined_call_operand.vmem [shape: f32[2,1,32], index: 4, kind: output, shape index: {1}]
  %5 = xla_tuple %s3, %s4
  %s6 = sld [smem:[#allocation0]]
  $region61: #{forward.24} parent=0
    _
  %s8 = ssub.s32 1, %s6
  %s9 = scalar_select 0, %s8, %s6
  loop: start=0, step=1, limit=4
  $region2: #{forward.24} parent=0 // loop_pre_header
    _
  $region3: #{forward.24} parent=0 // loop_header
    %s11 = sphi 0, %s15
    %p12 = scmp.ge.s32.totalorder %s11, 4
    %s18 = sphi 0, %s37
    %s19 = sphi 0, %s33
    %s20 = sphi 0, %s29
    %s21 = sphi 0, %s18
    %s22 = sphi 0, %s19
    %s23 = sphi 0, %s20
    %s24 = sphi 0, %s21
    %s25 = sphi 0, %s22
    %s26 = sphi 0, %s23
    %s42 = sphi 0, %s44
    %s45 = sphi 0, %s42
    %s46 = sphi 0, %s45
    %s62 = sphi 0, %s46
    %s70 = sphi 0, %s72
    %s73 = sphi 0, %s70
    %s74 = sphi 0, %s73
    %s90 = sphi 0, %s74
    %s98 = sphi 0, %s100
    %s101 = sphi 0, %s98
    %s102 = sphi 0, %s101
    %s118 = sphi 0, %s102
    %s126 = sphi 0, %s128
    %s129 = sphi 0, %s126
    %s130 = sphi 0, %s129
    %s146 = sphi 0, %s130
    %s154 = sphi 0, %s156
    %s157 = sphi 0, %s154
    %s158 = sphi 0, %s157
    %s174 = sphi 0, %s158
  $region4: #{forward.24} parent=0 // loop_header_branch
    %14 = sbr.rel (%p12) target = $region8
  $region5: #{forward.24} parent=0 // loop_body
    %s16 = ssub.s32 %s11, 1
    %s17 = ssub.s32 %s11, 2
    %s27 = sadd.s32 1, %s20
    %p28 = scmp.ge.s32.totalorder %s27, 1
    %s29 = scalar_select %p28, 0, %s27
    %s30 = sadd.s32 1, %s19
    %s31 = scalar_select %p28, %s30, %s19
    %p32 = scmp.ge.s32.totalorder %s31, 1
    %s33 = scalar_select %p32, 0, %s31
    %s34 = sadd.s32 1, %s18
    %s35 = scalar_select %p32, %s34, %s18
    %p36 = scmp.ge.s32.totalorder %s35, 2
    %s37 = scalar_select %p36, 0, %s35
    %s38 = ssub.s32 %s18, %s37
    %s39 = ssub.s32 %s19, %s33
    %s40 = sor.u32 %s38, %s39
    %p41 = scmp.eq.s32.totalorder %s40, 0
    %s43 = sadd.s32 %s42, 1
    %s44 = scalar_select %p41, %s42, %s43
    %p47 = pneg %p41
    %p48 = scmp.eq.s32.totalorder %s11, 1
    %p49 = por %p47, %p48
    %p50 = scmp.ne.s32.totalorder %s42, %s45
    %p51 = scmp.eq.s32.totalorder %s11, 0
    %p52 = por %p50, %p51
    %p53 = scmp.ne.s32.totalorder %s42, %s45
    %p54 = scmp.eq.s32.totalorder %s16, 1
    %p55 = por %p53, %p54
    %p56 = scmp.ne.s32.totalorder %s45, %s46
    %p57 = scmp.eq.s32.totalorder %s16, 0
    %p58 = por %p56, %p57
    %p59 = scmp.ne.s32.totalorder %s45, %s46
    %p60 = scmp.eq.s32.totalorder %s17, 1
    %p61 = por %p59, %p60
    %p63 = scmp.ne.s32.totalorder %s46, %s62
    %p64 = scmp.eq.s32.totalorder %s17, 0
    %p65 = por %p63, %p64
    %s66 = ssub.s32 %s18, %s37
    %s67 = ssub.s32 %s20, %s29
    %s68 = sor.u32 %s66, %s67
    %p69 = scmp.eq.s32.totalorder %s68, 0
    %s71 = sadd.s32 %s70, 1
    %s72 = scalar_select %p69, %s70, %s71
    %p75 = pneg %p69
    %p76 = scmp.eq.s32.totalorder %s11, 1
    %p77 = por %p75, %p76
    %p78 = scmp.ne.s32.totalorder %s70, %s73
    %p79 = scmp.eq.s32.totalorder %s11, 0
    %p80 = por %p78, %p79
    %p81 = scmp.ne.s32.totalorder %s70, %s73
    %p82 = scmp.eq.s32.totalorder %s16, 1
    %p83 = por %p81, %p82
    %p84 = scmp.ne.s32.totalorder %s73, %s74
    %p85 = scmp.eq.s32.totalorder %s16, 0
    %p86 = por %p84, %p85
    %p87 = scmp.ne.s32.totalorder %s73, %s74
    %p88 = scmp.eq.s32.totalorder %s17, 1
    %p89 = por %p87, %p88
    %p91 = scmp.ne.s32.totalorder %s74, %s90
    %p92 = scmp.eq.s32.totalorder %s17, 0
    %p93 = por %p91, %p92
    %s94 = ssub.s32 %s18, %s37
    %s95 = ssub.s32 %s19, %s33
    %s96 = sor.u32 %s94, %s95
    %p97 = scmp.eq.s32.totalorder %s96, 0
    %s99 = sadd.s32 %s98, 1
    %s100 = scalar_select %p97, %s98, %s99
    %p103 = pneg %p97
    %p104 = scmp.eq.s32.totalorder %s11, 1
    %p105 = por %p103, %p104
    %p106 = scmp.ne.s32.totalorder %s98, %s101
    %p107 = scmp.eq.s32.totalorder %s11, 0
    %p108 = por %p106, %p107
    %p109 = scmp.ne.s32.totalorder %s98, %s101
    %p110 = scmp.eq.s32.totalorder %s16, 1
    %p111 = por %p109, %p110
    %p112 = scmp.ne.s32.totalorder %s101, %s102
    %p113 = scmp.eq.s32.totalorder %s16, 0
    %p114 = por %p112, %p113
    %p115 = scmp.ne.s32.totalorder %s101, %s102
    %p116 = scmp.eq.s32.totalorder %s17, 1
    %p117 = por %p115, %p116
    %p119 = scmp.ne.s32.totalorder %s102, %s118
    %p120 = scmp.eq.s32.totalorder %s17, 0
    %p121 = por %p119, %p120
    %s122 = ssub.s32 %s18, %s37
    %s123 = ssub.s32 %s19, %s33
    %s124 = sor.u32 %s122, %s123
    %p125 = scmp.eq.s32.totalorder %s124, 0
    %s127 = sadd.s32 %s126, 1
    %s128 = scalar_select %p125, %s126, %s127
    %p131 = pneg %p125
    %p132 = scmp.eq.s32.totalorder %s11, 1
    %p133 = por %p131, %p132
    %p134 = scmp.ne.s32.totalorder %s126, %s129
    %p135 = scmp.eq.s32.totalorder %s11, 0
    %p136 = por %p134, %p135
    %p137 = scmp.ne.s32.totalorder %s126, %s129
    %p138 = scmp.eq.s32.totalorder %s16, 1
    %p139 = por %p137, %p138
    %p140 = scmp.ne.s32.totalorder %s129, %s130
    %p141 = scmp.eq.s32.totalorder %s16, 0
    %p142 = por %p140, %p141
    %p143 = scmp.ne.s32.totalorder %s129, %s130
    %p144 = scmp.eq.s32.totalorder %s17, 1
    %p145 = por %p143, %p144
    %p147 = scmp.ne.s32.totalorder %s130, %s146
    %p148 = scmp.eq.s32.totalorder %s17, 0
    %p149 = por %p147, %p148
    %s150 = ssub.s32 %s18, %s37
    %s151 = ssub.s32 %s19, %s33
    %s152 = sor.u32 %s150, %s151
    %p153 = scmp.eq.s32.totalorder %s152, 0
    %s155 = sadd.s32 %s154, 1
    %s156 = scalar_select %p153, %s154, %s155
    %p159 = pneg %p153
    %p160 = scmp.eq.s32.totalorder %s11, 1
    %p161 = por %p159, %p160
    %p162 = scmp.ne.s32.totalorder %s154, %s157
    %p163 = scmp.eq.s32.totalorder %s11, 0
    %p164 = por %p162, %p163
    %p165 = scmp.ne.s32.totalorder %s154, %s157
    %p166 = scmp.eq.s32.totalorder %s16, 1
    %p167 = por %p165, %p166
    %p168 = scmp.ne.s32.totalorder %s157, %s158
    %p169 = scmp.eq.s32.totalorder %s16, 0
    %p170 = por %p168, %p169
    %p171 = scmp.ne.s32.totalorder %s157, %s158
    %p172 = scmp.eq.s32.totalorder %s17, 1
    %p173 = por %p171, %p172
    %p175 = scmp.ne.s32.totalorder %s158, %s174
    %p176 = scmp.eq.s32.totalorder %s17, 0
    %p177 = por %p175, %p176
    %p178 = scmp.le.s32.totalorder 1, %s11
    %p179 = scmp.lt.s32.totalorder %s11, 3
    %p180 = pnand %p178, %p179
    %p181 = pneg %p180
    // Predicated region
    $region9: #{forward.24} parent=5 // pred_check
      _
    $region10: #{forward.24} parent=5 // pred_check_branch
      %183 = sbr.rel (%p180) target = $region12
    $region11: #{forward.24} parent=5 // pred_region
      %s184 = ssub.s32 %s11, 1
    $region12: #{forward.24} parent=5 // pred_fallthru
      _
    %p185 = scmp.lt.s32.totalorder %s11, 2
    // Predicated region
    $region13: #{forward.24} parent=5 // pred_check
      %p186 = pneg %p185
    $region14: #{forward.24} parent=5 // pred_check_branch
      %188 = sbr.rel (%p186) target = $region16
    $region15: #{forward.24} parent=5 // pred_region
      // Predicated region
      $region17: #{forward.24} parent=15 // pred_check
        %p189 = pneg %p52
      $region18: #{forward.24} parent=15 // pred_check_branch
        %191 = sbr.rel (%p189) target = $region20
      $region19: #{forward.24} parent=15 // pred_region
        %s192 = smul.u32 4, %s19
        %p193 = scmp.lt.s32.totalorder %s18, 1
        %s194 = scalar_select %p193, %s18, 1
        %p195 = scmp.lt.s32.totalorder %s192, 3
        %s196 = scalar_select %p195, %s192, 3
        %s197 = smul.addr %s194, 4
        %s198 = sadd.s32 %s196, %s197
        %s199 = smul.addr %s198, 4
        %s200 = scalar_lea.vmem %s0, %s199
        %s201 = smul.u32 4, %s19
      $region20: #{forward.24} parent=15 // pred_fallthru
        _
      // Predicated region
      $region21: #{forward.24} parent=15 // pred_check
        %p202 = pneg %p80
      $region22: #{forward.24} parent=15 // pred_check_branch
        %204 = sbr.rel (%p202) target = $region24
      $region23: #{forward.24} parent=15 // pred_region
        %s205 = smul.u32 4, %s20
        %p206 = scmp.lt.s32.totalorder %s18, 1
        %s207 = scalar_select %p206, %s18, 1
        %p208 = scmp.lt.s32.totalorder %s205, 3
        %s209 = scalar_select %p208, %s205, 3
        %s210 = smul.addr %s207, 4
        %s211 = sadd.s32 %s209, %s210
        %s212 = smul.addr %s211, 4
        %s213 = scalar_lea.vmem %s1, %s212
        %s214 = smul.u32 4, %s20
      $region24: #{forward.24} parent=15 // pred_fallthru
        _
      // Predicated region
      $region25: #{forward.24} parent=15 // pred_check
        %p215 = pneg %p108
      $region26: #{forward.24} parent=15 // pred_check_branch
        %217 = sbr.rel (%p215) target = $region28
      $region27: #{forward.24} parent=15 // pred_region
        %p218 = scmp.lt.s32.totalorder %s18, 1
        %s219 = scalar_select %p218, %s18, 1
        %p220 = scmp.lt.s32.totalorder %s19, 0
        %s221 = scalar_select %p220, %s19, 0
        %s222 = sadd.s32 %s221, %s219
        %s223 = scalar_lea.vmem %s2, %s222
      $region28: #{forward.24} parent=15 // pred_fallthru
        _
    $region16: #{forward.24} parent=5 // pred_fallthru
      _
    %p224 = scmp.le.s32.totalorder 1, %s11
    %p225 = scmp.lt.s32.totalorder %s11, 3
    %p226 = pnand %p224, %p225
    %p227 = pneg %p226
    // Predicated region
    $region29: #{forward.24} parent=5 // pred_check
      _
    $region30: #{forward.24} parent=5 // pred_check_branch
      %229 = sbr.rel (%p226) target = $region32
    $region31: #{forward.24} parent=5 // pred_region
      %s230 = ssub.s32 %s11, 1
      %s231 = smul.u32 4, %s22
      %p232 = scmp.lt.s32.totalorder %s21, 1
      %s233 = scalar_select %p232, %s21, 1
      %p234 = scmp.lt.s32.totalorder %s231, 3
      %s235 = scalar_select %p234, %s231, 3
      %s236 = smul.addr %s233, 4
      %s237 = sadd.s32 %s235, %s236
      %s238 = smul.addr %s237, 4
      %s239 = scalar_lea.vmem %s0, %s238
      %p240 = pneg %p58
      %p241 = pneg %p55
      %s242 = smul.u32 4, %s23
      %p243 = scmp.lt.s32.totalorder %s21, 1
      %s244 = scalar_select %p243, %s21, 1
      %p245 = scmp.lt.s32.totalorder %s242, 3
      %s246 = scalar_select %p245, %s242, 3
      %s247 = smul.addr %s244, 4
      %s248 = sadd.s32 %s246, %s247
      %s249 = smul.addr %s248, 4
      %s250 = scalar_lea.vmem %s1, %s249
      %p251 = pneg %p86
      %p252 = pneg %p83
      %p253 = scmp.lt.s32.totalorder %s21, 1
      %s254 = scalar_select %p253, %s21, 1
      %p255 = scmp.lt.s32.totalorder %s22, 0
      %s256 = scalar_select %p255, %s22, 0
      %s257 = sadd.s32 %s256, %s254
      %s258 = scalar_lea.vmem %s2, %s257
      %p259 = pneg %p114
      %p260 = pneg %p111
      %p261 = pneg %p142
      %p262 = pneg %p139
      %p263 = scmp.lt.s32.totalorder %s21, 1
      %s264 = scalar_select %p263, %s21, 1
      %p265 = scmp.lt.s32.totalorder %s22, 0
      %s266 = scalar_select %p265, %s22, 0
      %s267 = sadd.s32 %s266, %s264
      %s268 = scalar_lea.vmem %s3, %s267
      %p269 = pneg %p170
      %p270 = pneg %p167
      %p271 = scmp.lt.s32.totalorder %s21, 1
      %s272 = scalar_select %p271, %s21, 1
      %p273 = scmp.lt.s32.totalorder %s22, 0
      %s274 = scalar_select %p273, %s22, 0
      %s275 = sadd.s32 %s274, %s272
      %s276 = scalar_lea.vmem %s4, %s275
      %s277 = smul.u32 4, %s22
      %p278 = scmp.lt.s32.totalorder %s21, 1
      %s279 = scalar_select %p278, %s21, 1
      %p280 = scmp.lt.s32.totalorder %s277, 3
      %s281 = scalar_select %p280, %s277, 3
      %s282 = smul.addr %s279, 4
      %s283 = sadd.s32 %s281, %s282
      %s284 = smul.addr %s283, 4
      %s285 = scalar_lea.vmem %s0, %s284
      %s286 = smul.u32 4, %s22
      %s287 = smul.u32 4, %s23
      %p288 = scmp.lt.s32.totalorder %s21, 1
      %s289 = scalar_select %p288, %s21, 1
      %p290 = scmp.lt.s32.totalorder %s287, 3
      %s291 = scalar_select %p290, %s287, 3
      %s292 = smul.addr %s289, 4
      %s293 = sadd.s32 %s291, %s292
      %s294 = smul.addr %s293, 4
      %s295 = scalar_lea.vmem %s1, %s294
      %s296 = smul.u32 4, %s23
      %p297 = scmp.lt.s32.totalorder %s21, 1
      %s298 = scalar_select %p297, %s21, 1
      %p299 = scmp.lt.s32.totalorder %s22, 0
      %s300 = scalar_select %p299, %s22, 0
      %s301 = sadd.s32 %s300, %s298
      %s302 = scalar_lea.vmem %s2, %s301
      %p303 = scmp.lt.s32.totalorder %s21, 1
      %s304 = scalar_select %p303, %s21, 1
      %p305 = scmp.lt.s32.totalorder %s22, 0
      %s306 = scalar_select %p305, %s22, 0
      %s307 = sadd.s32 %s306, %s304
      %s308 = scalar_lea.vmem %s3, %s307
      %p309 = scmp.lt.s32.totalorder %s21, 1
      %s310 = scalar_select %p309, %s21, 1
      %p311 = scmp.lt.s32.totalorder %s22, 0
      %s312 = scalar_select %p311, %s22, 0
      %s313 = sadd.s32 %s312, %s310
      %s314 = scalar_lea.vmem %s4, %s313
      %p316 = scmp.eq.s32.totalorder %s23, 0
      // Predicated region
      $region33: #{forward.24} parent=31 // pred_check
        %p317 = pneg %p316
      $region34: #{forward.24} parent=31 // pred_check_branch
        %319 = sbr.rel (%p317) target = $region36
      $region35: #{forward.24} parent=31 // pred_region
        %vm320 = vcmask 258048
        %321 = vst.msk [vmem:[#allocation2] sm:$0x1f] %vm320, 1e+30
        %vm322 = vcmask 253952
        %323 = vst.msk [vmem:[#allocation3] sm:$0x1] %vm322, -1e+30
      $region36: #{forward.24} parent=31 // pred_fallthru
        _
      %v324 = vld [vmem:[%s295] sm:$0xf]
      %v325 = vld [vmem:[%s295 + $0x4] sm:$0xf]
      %v326 = vld [vmem:[%s295 + $0x8] sm:$0xf]
      %v327 = vld [vmem:[%s295 + $0xc] sm:$0xf]
      %v328 = vld [vmem:[%s285] sm:$0xf]
      %v329 = vld [vmem:[%s285 + $0x4] sm:$0xf]
      %v330 = vld [vmem:[%s285 + $0x8] sm:$0xf]
      %v331 = vld [vmem:[%s285 + $0xc] sm:$0xf]
      %v332 = vld [vmem:[%s302] sm:$0x1]
      %v337 = vunpack.c.l.b16 %v324
      %v338 = vunpack.c.l.b16 %v325
      %v339 = vunpack.c.l.b16 %v326
      %v340 = vunpack.c.l.b16 %v327
      %v341 = vpack.c.b16 %v338, %v337
      %v342 = vpack.c.b16 %v340, %v339
      %v347 = vunpack.c.l.b16 %v328
      %v348 = vunpack.c.l.b16 %v329
      %v349 = vunpack.c.l.b16 %v330
      %v350 = vunpack.c.l.b16 %v331
      %v351 = vpack.c.b16 %v348, %v347
      %v352 = vpack.c.b16 %v350, %v349
      %vm353 = vcmask 523264
      %v355 = vsel %vm353, %v341, 0
      %v358 = vsel %vm353, %v342, 0
      %v361 = vsel %vm353, %v351, 0
      %v364 = vsel %vm353, %v352, 0
      %366 = vmatpush.bf16.xpose.msra.mxu0 0
      %367 = vmatpush.bf16.xpose.msra.mxu0 0
      %368 = vmatpush.bf16.xpose.msra.mxu0 0
      %369 = vmatpush.bf16.xpose.msra.mxu0 0
      %370 = vmatpush.bf16.xpose.msra.mxu0 0
      %371 = vmatpush.bf16.xpose.msra.mxu0 0
      %372 = vmatpush.bf16.xpose.msra.mxu0 %v364
      %373 = vmatpush.bf16.xpose.msra.mxu0 %v361
      %374 = vmatmul.bf16.gmra.mxu0 %v355
      %v375 = vpop.f32.mrf.mxu0
      %v376 = vadd.f32 0.0, %v375
      %v377 = vpop.f32.mrf.mxu0
      %v378 = vadd.f32 0.0, %v377
      %379 = vmatmul.bf16.gmra.mxu0 %v358
      %v380 = vpop.f32.mrf.mxu0
      %v381 = vadd.f32 0.0, %v380
      %v382 = vpop.f32.mrf.mxu0
      %v383 = vadd.f32 0.0, %v382
      %384 = vdwg.mxu0
      %v385 = vunpack.c.l.bf16 %v324
      %v386 = vunpack.c.l.bf16 %v325
      %v387 = vunpack.c.l.bf16 %v326
      %v388 = vunpack.c.l.bf16 %v327
      %v389 = vmul.f32 %v385, %v385
      %v390 = vmul.f32 %v386, %v386
      %v391 = vmul.f32 %v387, %v387
      %v392 = vmul.f32 %v388, %v388
      %v393 = vsel %vm353, %v389, 0.0
      %394 = vadd.xlane.f32.xlu0 %v393
      %v395 = vpop.xlane.xlu0 %394
      %v396 = vsel %vm353, %v390, 0.0
      %397 = vadd.xlane.f32.xlu0 %v396
      %v398 = vpop.xlane.xlu0 %397
      %v399 = vsel %vm353, %v391, 0.0
      %400 = vadd.xlane.f32.xlu0 %v399
      %v401 = vpop.xlane.xlu0 %400
      %v402 = vsel %vm353, %v392, 0.0
      %403 = vadd.xlane.f32.xlu0 %v402
      %v404 = vpop.xlane.xlu0 %403
      %s405 = smul.u32 %s23, 32
      %v406 = vlaneseq
      %v407 = vshrl.u32 %v406, 7
      %v408 = vadd.s32 %v407, 8
      %v409 = vadd.s32 %v407, 16
      %v410 = vadd.s32 %v407, 24
      %v411 = vstv %s405
      %v412 = vadd.s32 %v411, %v407
      %v413 = vadd.s32 %v411, %v408
      %v414 = vadd.s32 %v411, %v409
      %v415 = vadd.s32 %v411, %v410
      %vm416 = vcmp.lt.s32.totalorder %v412, 16
      %vm417 = vcmp.lt.s32.totalorder %v413, 16
      %vm418 = vcmp.lt.s32.totalorder %v414, 16
      %vm419 = vcmp.lt.s32.totalorder %v415, 16
      %v420 = vsel %vm416, 0.0, 1e+30
      %v421 = vsel %vm417, 0.0, 1e+30
      %v422 = vsel %vm418, 0.0, 1e+30
      %v423 = vsel %vm419, 0.0, 1e+30
      %v424 = vadd.f32 %v395, %v420
      %v425 = vadd.f32 %v398, %v421
      %v426 = vadd.f32 %v401, %v422
      %v427 = vadd.f32 %v404, %v423
      %v428 = vsub.f32 %v395, %v420
      %v429 = vsub.f32 %v398, %v421
      %v430 = vsub.f32 %v401, %v422
      %v431 = vsub.f32 %v404, %v423
      %v432 = vld [vmem:[#allocation2] sm:$0x1f]
      %v433 = vld [vmem:[#allocation3] sm:$0x1]
      %v434 = vmul.f32 %v376, -2.0
      %v435 = vmul.f32 %v378, -2.0
      %v436 = vmul.f32 %v381, -2.0
      %v437 = vmul.f32 %v383, -2.0
      %v438 = vadd.f32 %v434, %v428
      %v439 = vadd.f32 %v435, %v429
      %v440 = vadd.f32 %v436, %v430
      %v441 = vadd.f32 %v437, %v431
      %vm442 = vcmask 261120
      %v443 = vsel %vm442, %v438, -inf
      %v444 = vsel %vm442, %v439, -inf
      %v445 = vsel %vm442, %v440, -inf
      %v446 = vsel %vm442, %v441, -inf
      %v447 = vmax.f32 %v443, %v444
      %v448 = vmax.f32 %v445, %v446
      %v449 = vmax.f32 %v447, %v448
      %v450 = vrot.slane %v449, 4
      %v451 = vmax.f32 %v449, %v450
      %v452 = vrot.slane %v451, 2
      %v453 = vmax.f32 %v451, %v452
      %v454 = vrot.slane %v453, 1
      %v455 = vmax.f32 %v453, %v454
      %v456 = vmax.f32 %v433, %v455
      %v457 = vadd.f32 %v434, %v424
      %v458 = vadd.f32 %v435, %v425
      %v459 = vadd.f32 %v436, %v426
      %v460 = vadd.f32 %v437, %v427
      %v462 = vperm.slane %v332, 0
      %v464 = vadd.f32 %v457, %v462
      %v465 = vadd.f32 %v458, %v462
      %v466 = vadd.f32 %v459, %v462
      %v467 = vadd.f32 %v460, %v462
      %v468 = vmax.f32 %v464, 0.0
      %v469 = vmax.f32 %v465, 0.0
      %v470 = vmax.f32 %v466, 0.0
      %v471 = vmax.f32 %v467, 0.0
      %vm476 = vcmask 1044480
      %v477 = vrot.slane %v468, 3
      %v478 = vrot.slane %v469, 3
      %v479 = vsel %vm476, %v477, %v478
      %v480 = vrot.slane %v470, 3
      %v481 = vsel %vm476, %v478, %v480
      %v482 = vrot.slane %v471, 3
      %v483 = vsel %vm476, %v480, %v482
      %v489 = vsel %vm476, %v432, %v477
      %v490 = vadd.s32 %v407, 32
      %v491 = vsel %vm442, %v489, inf
      %v492 = vsel %vm442, %v479, inf
      %v493 = vsel %vm442, %v481, inf
      %v494 = vsel %vm442, %v483, inf
      %vm495 = vcmask 258048
      %v496 = vsel %vm495, %v482, inf
      %v497 = vmin.f32 %v491, %v496
      %v498 = vmin.f32 %v497, %v492
      %v499 = vmin.f32 %v493, %v494
      %v500 = vmin.f32 %v498, %v499
      %v501 = vrot.slane %v500, 4
      %v502 = vmin.f32 %v500, %v501
      %v503 = vrot.slane %v502, 2
      %v504 = vmin.f32 %v502, %v503
      %v505 = vrot.slane %v504, 1
      %v506 = vmin.f32 %v504, %v505
      %vm507 = vcmp.le.f32.partialorder %v489, %v506
      %vm508 = vcmp.le.f32.partialorder %v479, %v506
      %vm509 = vcmp.le.f32.partialorder %v481, %v506
      %vm510 = vcmp.le.f32.partialorder %v483, %v506
      %vm511 = vcmp.le.f32.partialorder %v482, %v506
      %v512 = vsel %vm507, %v407, 37
      %v513 = vsel %vm508, %v408, 37
      %v514 = vsel %vm509, %v409, 37
      %v515 = vsel %vm510, %v410, 37
      %v516 = vsel %vm511, %v490, 37
      %v517 = vsel %vm442, %v512, 2147483647
      %v518 = vsel %vm442, %v513, 2147483647
      %v519 = vsel %vm442, %v514, 2147483647
      %v520 = vsel %vm442, %v515, 2147483647
      %v521 = vsel %vm495, %v516, 2147483647
      %vm522 = vcmp.lt.s32.totalorder %v517, %v521
      %v523 = vsel %vm522, %v517, %v521
      %vm524 = vcmp.lt.s32.totalorder %v523, %v518
      %v525 = vsel %vm524, %v523, %v518
      %vm526 = vcmp.lt.s32.totalorder %v519, %v520
      %v527 = vsel %vm526, %v519, %v520
      %vm528 = vcmp.lt.s32.totalorder %v525, %v527
      %v529 = vsel %vm528, %v525, %v527
      %v530 = vrot.slane %v529, 4
      %vm531 = vcmp.lt.s32.totalorder %v529, %v530
      %v532 = vsel %vm531, %v529, %v530
      %v533 = vrot.slane %v532, 2
      %vm534 = vcmp.lt.s32.totalorder %v532, %v533
      %v535 = vsel %vm534, %v532, %v533
      %v536 = vrot.slane %v535, 1
      %vm537 = vcmp.lt.s32.totalorder %v535, %v536
      %v538 = vsel %vm537, %v535, %v536
      %vm539 = vcmp.eq.s32.totalorder %v407, %v538
      %vm540 = vcmp.eq.s32.totalorder %v408, %v538
      %vm541 = vcmp.eq.s32.totalorder %v409, %v538
      %vm542 = vcmp.eq.s32.totalorder %v410, %v538
      %vm543 = vcmp.eq.s32.totalorder %v490, %v538
      %v544 = vsel %vm539, 1e+30, %v489
      %v545 = vsel %vm540, 1e+30, %v479
      %v546 = vsel %vm541, 1e+30, %v481
      %v547 = vsel %vm542, 1e+30, %v483
      %v548 = vsel %vm543, 1e+30, %v482
      %v549 = vsel %vm442, %v544, inf
      %v550 = vsel %vm442, %v545, inf
      %v551 = vsel %vm442, %v546, inf
      %v552 = vsel %vm442, %v547, inf
      %v553 = vsel %vm495, %v548, inf
      %v554 = vmin.f32 %v549, %v553
      %v555 = vmin.f32 %v554, %v550
      %v556 = vmin.f32 %v551, %v552
      %v557 = vmin.f32 %v555, %v556
      %v558 = vrot.slane %v557, 4
      %v559 = vmin.f32 %v557, %v558
      %v560 = vrot.slane %v559, 2
      %v561 = vmin.f32 %v559, %v560
      %v562 = vrot.slane %v561, 1
      %v563 = vmin.f32 %v561, %v562
      %vm564 = vcmp.le.f32.partialorder %v544, %v563
      %vm565 = vcmp.le.f32.partialorder %v545, %v563
      %vm566 = vcmp.le.f32.partialorder %v546, %v563
      %vm567 = vcmp.le.f32.partialorder %v547, %v563
      %vm568 = vcmp.le.f32.partialorder %v548, %v563
      %v569 = vsel %vm564, %v407, 37
      %v570 = vsel %vm565, %v408, 37
      %v571 = vsel %vm566, %v409, 37
      %v572 = vsel %vm567, %v410, 37
      %v573 = vsel %vm568, %v490, 37
      %v574 = vsel %vm442, %v569, 2147483647
      %v575 = vsel %vm442, %v570, 2147483647
      %v576 = vsel %vm442, %v571, 2147483647
      %v577 = vsel %vm442, %v572, 2147483647
      %v578 = vsel %vm495, %v573, 2147483647
      %vm579 = vcmp.lt.s32.totalorder %v574, %v578
      %v580 = vsel %vm579, %v574, %v578
      %vm581 = vcmp.lt.s32.totalorder %v580, %v575
      %v582 = vsel %vm581, %v580, %v575
      %vm583 = vcmp.lt.s32.totalorder %v576, %v577
      %v584 = vsel %vm583, %v576, %v577
      %vm585 = vcmp.lt.s32.totalorder %v582, %v584
      %v586 = vsel %vm585, %v582, %v584
      %v587 = vrot.slane %v586, 4
      %vm588 = vcmp.lt.s32.totalorder %v586, %v587
      %v589 = vsel %vm588, %v586, %v587
      %v590 = vrot.slane %v589, 2
      %vm591 = vcmp.lt.s32.totalorder %v589, %v590
      %v592 = vsel %vm591, %v589, %v590
      %v593 = vrot.slane %v592, 1
      %vm594 = vcmp.lt.s32.totalorder %v592, %v593
      %v595 = vsel %vm594, %v592, %v593
      %vm596 = vcmp.eq.s32.totalorder %v407, %v595
      %vm597 = vcmp.eq.s32.totalorder %v408, %v595
      %vm598 = vcmp.eq.s32.totalorder %v409, %v595
      %vm599 = vcmp.eq.s32.totalorder %v410, %v595
      %vm600 = vcmp.eq.s32.totalorder %v490, %v595
      %v601 = vsel %vm596, 1e+30, %v544
      %v602 = vsel %vm597, 1e+30, %v545
      %v603 = vsel %vm598, 1e+30, %v546
      %v604 = vsel %vm599, 1e+30, %v547
      %v605 = vsel %vm600, 1e+30, %v548
      %v606 = vsel %vm442, %v601, inf
      %v607 = vsel %vm442, %v602, inf
      %v608 = vsel %vm442, %v603, inf
      %v609 = vsel %vm442, %v604, inf
      %v610 = vsel %vm495, %v605, inf
      %v611 = vmin.f32 %v606, %v610
      %v612 = vmin.f32 %v611, %v607
      %v613 = vmin.f32 %v608, %v609
      %v614 = vmin.f32 %v612, %v613
      %v615 = vrot.slane %v614, 4
      %v616 = vmin.f32 %v614, %v615
      %v617 = vrot.slane %v616, 2
      %v618 = vmin.f32 %v616, %v617
      %v619 = vrot.slane %v618, 1
      %v620 = vmin.f32 %v618, %v619
      %vm621 = vcmp.le.f32.partialorder %v601, %v620
      %vm622 = vcmp.le.f32.partialorder %v602, %v620
      %vm623 = vcmp.le.f32.partialorder %v603, %v620
      %vm624 = vcmp.le.f32.partialorder %v604, %v620
      %vm625 = vcmp.le.f32.partialorder %v605, %v620
      %v626 = vsel %vm621, %v407, 37
      %v627 = vsel %vm622, %v408, 37
      %v628 = vsel %vm623, %v409, 37
      %v629 = vsel %vm624, %v410, 37
      %v630 = vsel %vm625, %v490, 37
      %v631 = vsel %vm442, %v626, 2147483647
      %v632 = vsel %vm442, %v627, 2147483647
      %v633 = vsel %vm442, %v628, 2147483647
      %v634 = vsel %vm442, %v629, 2147483647
      %v635 = vsel %vm495, %v630, 2147483647
      %vm636 = vcmp.lt.s32.totalorder %v631, %v635
      %v637 = vsel %vm636, %v631, %v635
      %vm638 = vcmp.lt.s32.totalorder %v637, %v632
      %v639 = vsel %vm638, %v637, %v632
      %vm640 = vcmp.lt.s32.totalorder %v633, %v634
      %v641 = vsel %vm640, %v633, %v634
      %vm642 = vcmp.lt.s32.totalorder %v639, %v641
      %v643 = vsel %vm642, %v639, %v641
      %v644 = vrot.slane %v643, 4
      %vm645 = vcmp.lt.s32.totalorder %v643, %v644
      %v646 = vsel %vm645, %v643, %v644
      %v647 = vrot.slane %v646, 2
      %vm648 = vcmp.lt.s32.totalorder %v646, %v647
      %v649 = vsel %vm648, %v646, %v647
      %v650 = vrot.slane %v649, 1
      %vm651 = vcmp.lt.s32.totalorder %v649, %v650
      %v652 = vsel %vm651, %v649, %v650
      %vm653 = vcmp.eq.s32.totalorder %v407, %v652
      %vm654 = vcmp.eq.s32.totalorder %v408, %v652
      %vm655 = vcmp.eq.s32.totalorder %v409, %v652
      %vm656 = vcmp.eq.s32.totalorder %v410, %v652
      %vm657 = vcmp.eq.s32.totalorder %v490, %v652
      %v658 = vsel %vm653, 1e+30, %v601
      %v659 = vsel %vm654, 1e+30, %v602
      %v660 = vsel %vm655, 1e+30, %v603
      %v661 = vsel %vm656, 1e+30, %v604
      %v662 = vsel %vm657, 1e+30, %v605
      %v663 = vsel %vm442, %v658, inf
      %v664 = vsel %vm442, %v659, inf
      %v665 = vsel %vm442, %v660, inf
      %v666 = vsel %vm442, %v661, inf
      %v667 = vsel %vm495, %v662, inf
      %v668 = vmin.f32 %v663, %v667
      %v669 = vmin.f32 %v668, %v664
      %v670 = vmin.f32 %v665, %v666
      %v671 = vmin.f32 %v669, %v670
      %v672 = vrot.slane %v671, 4
      %v673 = vmin.f32 %v671, %v672
      %v674 = vrot.slane %v673, 2
      %v675 = vmin.f32 %v673, %v674
      %v676 = vrot.slane %v675, 1
      %v677 = vmin.f32 %v675, %v676
      %vm678 = vcmp.le.f32.partialorder %v658, %v677
      %vm679 = vcmp.le.f32.partialorder %v659, %v677
      %vm680 = vcmp.le.f32.partialorder %v660, %v677
      %vm681 = vcmp.le.f32.partialorder %v661, %v677
      %vm682 = vcmp.le.f32.partialorder %v662, %v677
      %v683 = vsel %vm678, %v407, 37
      %v684 = vsel %vm679, %v408, 37
      %v685 = vsel %vm680, %v409, 37
      %v686 = vsel %vm681, %v410, 37
      %v687 = vsel %vm682, %v490, 37
      %v688 = vsel %vm442, %v683, 2147483647
      %v689 = vsel %vm442, %v684, 2147483647
      %v690 = vsel %vm442, %v685, 2147483647
      %v691 = vsel %vm442, %v686, 2147483647
      %v692 = vsel %vm495, %v687, 2147483647
      %vm693 = vcmp.lt.s32.totalorder %v688, %v692
      %v694 = vsel %vm693, %v688, %v692
      %vm695 = vcmp.lt.s32.totalorder %v694, %v689
      %v696 = vsel %vm695, %v694, %v689
      %vm697 = vcmp.lt.s32.totalorder %v690, %v691
      %v698 = vsel %vm697, %v690, %v691
      %vm699 = vcmp.lt.s32.totalorder %v696, %v698
      %v700 = vsel %vm699, %v696, %v698
      %v701 = vrot.slane %v700, 4
      %vm702 = vcmp.lt.s32.totalorder %v700, %v701
      %v703 = vsel %vm702, %v700, %v701
      %v704 = vrot.slane %v703, 2
      %vm705 = vcmp.lt.s32.totalorder %v703, %v704
      %v706 = vsel %vm705, %v703, %v704
      %v707 = vrot.slane %v706, 1
      %vm708 = vcmp.lt.s32.totalorder %v706, %v707
      %v709 = vsel %vm708, %v706, %v707
      %vm710 = vcmp.eq.s32.totalorder %v407, %v709
      %vm711 = vcmp.eq.s32.totalorder %v408, %v709
      %vm712 = vcmp.eq.s32.totalorder %v409, %v709
      %vm713 = vcmp.eq.s32.totalorder %v410, %v709
      %vm714 = vcmp.eq.s32.totalorder %v490, %v709
      %v715 = vsel %vm710, 1e+30, %v658
      %v716 = vsel %vm711, 1e+30, %v659
      %v717 = vsel %vm712, 1e+30, %v660
      %v718 = vsel %vm713, 1e+30, %v661
      %v719 = vsel %vm714, 1e+30, %v662
      %v720 = vsel %vm442, %v715, inf
      %v721 = vsel %vm442, %v716, inf
      %v722 = vsel %vm442, %v717, inf
      %v723 = vsel %vm442, %v718, inf
      %v724 = vsel %vm495, %v719, inf
      %v725 = vmin.f32 %v720, %v724
      %v726 = vmin.f32 %v725, %v721
      %v727 = vmin.f32 %v722, %v723
      %v728 = vmin.f32 %v726, %v727
      %v729 = vrot.slane %v728, 4
      %v730 = vmin.f32 %v728, %v729
      %v731 = vrot.slane %v730, 2
      %v732 = vmin.f32 %v730, %v731
      %v733 = vrot.slane %v732, 1
      %v734 = vmin.f32 %v732, %v733
      %vm735 = vcmask 1040384
      %v736 = vsel %vm735, %v506, %v563
      %vm737 = vcmask 1041408
      %v738 = vsel %vm737, %v736, %v620
      %vm739 = vcmask 1042432
      %v740 = vsel %vm739, %v738, %v677
      %vm741 = vcmask 1043456
      %v742 = vsel %vm741, %v740, %v734
      %743 = vst.msk [vmem:[#allocation2] sm:$0x1f] %vm495, %v742
      %vm744 = vcmask 253952
      %745 = vst.msk [vmem:[#allocation3] sm:$0x1] %vm744, %v456
      // Predicated region
      $region37: #{forward.24} parent=31 // pred_check
        %p746 = pneg %p316
      $region38: #{forward.24} parent=31 // pred_check_branch
        %748 = sbr.rel (%p746) target = $region40
      $region39: #{forward.24} parent=31 // pred_region
        %v749 = vsel %vm495, %v742, 0.0
        %v750 = vrot.slane %v749, 4
        %v751 = vadd.f32 %v749, %v750
        %v752 = vrot.slane %v751, 2
        %v753 = vadd.f32 %v751, %v752
        %v754 = vrot.slane %v753, 1
        %v755 = vadd.f32 %v753, %v754
        %v756 = vrcp.pop 5.0
        %v757 = vmul.f32 5.0, %v756
        %v758 = vsub.f32 1.0, %v757
        %v759 = vmul.f32 %v756, %v758
        %v760 = vadd.f32 %v756, %v759
        %vm761 = vweird.f32 %v756
        %v762 = vsel %vm761, %v756, %v760
        %v763 = vmul.f32 %v755, %v762
        %v764 = vsub.f32 0.0, %v763
        %v765 = vmul.f32 %v764, 0.015625
        %v766 = vmul.f32 %v765, 1.442695
        %v767 = vpow.pop %v766
        %768 = vst.msk [vmem:[%s308] sm:$0x1] %vm744, %v767
        %v769 = vadd.f32 %v456, %v332
        %v770 = vmax.f32 %v769, 0.0
        %771 = vst.msk [vmem:[%s314] sm:$0x1] %vm744, %v770
      $region40: #{forward.24} parent=31 // pred_fallthru
        _
      %p772 = scmp.lt.s32.totalorder %s21, 1
      %s773 = scalar_select %p772, %s21, 1
      %p774 = scmp.lt.s32.totalorder %s22, 0
      %s775 = scalar_select %p774, %s22, 0
      %s776 = sadd.s32 %s775, %s773
      %s777 = scalar_lea.vmem %s3, %s776
      %p778 = scmp.lt.s32.totalorder %s21, 1
      %s779 = scalar_select %p778, %s21, 1
      %p780 = scmp.lt.s32.totalorder %s22, 0
      %s781 = scalar_select %p780, %s22, 0
      %s782 = sadd.s32 %s781, %s779
      %s783 = scalar_lea.vmem %s4, %s782
      // Predicated region
      $region41: #{forward.24} parent=31 // pred_check
        %p784 = pneg %p139
      $region42: #{forward.24} parent=31 // pred_check_branch
        %786 = sbr.rel (%p784) target = $region44
      $region43: #{forward.24} parent=31 // pred_region
        _
      $region44: #{forward.24} parent=31 // pred_fallthru
        _
      // Predicated region
      $region45: #{forward.24} parent=31 // pred_check
        %p787 = pneg %p167
      $region46: #{forward.24} parent=31 // pred_check_branch
        %789 = sbr.rel (%p787) target = $region48
      $region47: #{forward.24} parent=31 // pred_region
        _
      $region48: #{forward.24} parent=31 // pred_fallthru
        _
    $region32: #{forward.24} parent=5 // pred_fallthru
      _
    %p790 = scmp.le.s32.totalorder 2, %s11
    // Predicated region
    $region49: #{forward.24} parent=5 // pred_check
      %p791 = pneg %p790
    $region50: #{forward.24} parent=5 // pred_check_branch
      %793 = sbr.rel (%p791) target = $region52
    $region51: #{forward.24} parent=5 // pred_region
      %s794 = ssub.s32 %s11, 2
      // Predicated region
      $region53: #{forward.24} parent=51 // pred_check
        %p795 = pneg %p145
      $region54: #{forward.24} parent=51 // pred_check_branch
        %797 = sbr.rel (%p795) target = $region56
      $region55: #{forward.24} parent=51 // pred_region
        %p798 = scmp.lt.s32.totalorder %s24, 1
        %s799 = scalar_select %p798, %s24, 1
        %p800 = scmp.lt.s32.totalorder %s25, 0
        %s801 = scalar_select %p800, %s25, 0
        %s802 = sadd.s32 %s801, %s799
        %s803 = scalar_lea.vmem %s3, %s802
      $region56: #{forward.24} parent=51 // pred_fallthru
        _
      // Predicated region
      $region57: #{forward.24} parent=51 // pred_check
        %p804 = pneg %p173
      $region58: #{forward.24} parent=51 // pred_check_branch
        %806 = sbr.rel (%p804) target = $region60
      $region59: #{forward.24} parent=51 // pred_region
        %p807 = scmp.lt.s32.totalorder %s24, 1
        %s808 = scalar_select %p807, %s24, 1
        %p809 = scmp.lt.s32.totalorder %s25, 0
        %s810 = scalar_select %p809, %s25, 0
        %s811 = sadd.s32 %s810, %s808
        %s812 = scalar_lea.vmem %s4, %s811
      $region60: #{forward.24} parent=51 // pred_fallthru
        _
    $region52: #{forward.24} parent=5 // pred_fallthru
      _
  $region6: #{forward.24} parent=0 // loop_footer
    %s15 = sadd.s32 1, %s11
  $region7: #{forward.24} parent=0 // loop_footer_branch
    %10 = sbr.rel target = $region3
  $region8: #{forward.24} parent=0 // loop_exit
    _

// kernel: forward.25
$region0: #{forward.25}
  #allocation0 [shape = 'u32[]', space=smem, size = 0x4, offset = 0x4, fixed_abs, tag = 'smem constant byte address 0x4 - core index']
  #allocation1 [shape = 'u32[72,128]{1,0:T(1,128)}', space=vmem, size = 0x9000, scoped, tag = 'internal scratch']
  #allocation2 [shape = 'f32[1,32]{1,0:T(1,128)}', space=vmem, size = 0x200, scoped, tag = 'scratch operand']
  %s0 = inlined_call_operand.vmem [shape: bf16[2,32,64], index: 0, kind: input, shape index: {}, may-alias: {0,1}]
  %s1 = inlined_call_operand.vmem [shape: bf16[2,32,64], index: 1, kind: input, shape index: {}, may-alias: {0,1}]
  %s2 = inlined_call_operand.vmem [shape: f32[2,1,32], index: 2, kind: input, shape index: {}]
  %s3 = inlined_call_operand.vmem [shape: f32[2,32,128], index: 3, kind: input, shape index: {}]
  %s4 = inlined_call_operand.vmem [shape: f32[2,1,32], index: 4, kind: input, shape index: {}]
  %s5 = inlined_call_operand.vmem [shape: f32[2,1,1], index: 5, kind: input, shape index: {}]
  %s6 = inlined_call_operand.vmem [shape: f32[2,1,32], index: 6, kind: output, shape index: {}]
  %s7 = sld [smem:[#allocation0]]
  $region65: #{forward.25} parent=0
    _
  %s9 = ssub.s32 1, %s7
  %s10 = scalar_select 0, %s9, %s7
  loop: start=0, step=1, limit=4
  $region2: #{forward.25} parent=0 // loop_pre_header
    _
  $region3: #{forward.25} parent=0 // loop_header
    %s12 = sphi 0, %s16
    %p13 = scmp.ge.s32.totalorder %s12, 4
    %s19 = sphi 0, %s38
    %s20 = sphi 0, %s34
    %s21 = sphi 0, %s30
    %s22 = sphi 0, %s19
    %s23 = sphi 0, %s20
    %s24 = sphi 0, %s21
    %s25 = sphi 0, %s22
    %s26 = sphi 0, %s23
    %s27 = sphi 0, %s24
    %s43 = sphi 0, %s45
    %s46 = sphi 0, %s43
    %s47 = sphi 0, %s46
    %s63 = sphi 0, %s47
    %s71 = sphi 0, %s73
    %s74 = sphi 0, %s71
    %s75 = sphi 0, %s74
    %s91 = sphi 0, %s75
    %s99 = sphi 0, %s101
    %s102 = sphi 0, %s99
    %s103 = sphi 0, %s102
    %s119 = sphi 0, %s103
    %s127 = sphi 0, %s129
    %s130 = sphi 0, %s127
    %s131 = sphi 0, %s130
    %s147 = sphi 0, %s131
    %s155 = sphi 0, %s157
    %s158 = sphi 0, %s155
    %s159 = sphi 0, %s158
    %s175 = sphi 0, %s159
    %s181 = sphi 0, %s183
    %s184 = sphi 0, %s181
    %s185 = sphi 0, %s184
    %s201 = sphi 0, %s185
    %s209 = sphi 0, %s211
    %s212 = sphi 0, %s209
    %s213 = sphi 0, %s212
    %s229 = sphi 0, %s213
  $region4: #{forward.25} parent=0 // loop_header_branch
    %15 = sbr.rel (%p13) target = $region8
  $region5: #{forward.25} parent=0 // loop_body
    %s17 = ssub.s32 %s12, 1
    %s18 = ssub.s32 %s12, 2
    %s28 = sadd.s32 1, %s21
    %p29 = scmp.ge.s32.totalorder %s28, 1
    %s30 = scalar_select %p29, 0, %s28
    %s31 = sadd.s32 1, %s20
    %s32 = scalar_select %p29, %s31, %s20
    %p33 = scmp.ge.s32.totalorder %s32, 1
    %s34 = scalar_select %p33, 0, %s32
    %s35 = sadd.s32 1, %s19
    %s36 = scalar_select %p33, %s35, %s19
    %p37 = scmp.ge.s32.totalorder %s36, 2
    %s38 = scalar_select %p37, 0, %s36
    %s39 = ssub.s32 %s19, %s38
    %s40 = ssub.s32 %s20, %s34
    %s41 = sor.u32 %s39, %s40
    %p42 = scmp.eq.s32.totalorder %s41, 0
    %s44 = sadd.s32 %s43, 1
    %s45 = scalar_select %p42, %s43, %s44
    %p48 = pneg %p42
    %p49 = scmp.eq.s32.totalorder %s12, 1
    %p50 = por %p48, %p49
    %p51 = scmp.ne.s32.totalorder %s43, %s46
    %p52 = scmp.eq.s32.totalorder %s12, 0
    %p53 = por %p51, %p52
    %p54 = scmp.ne.s32.totalorder %s43, %s46
    %p55 = scmp.eq.s32.totalorder %s17, 1
    %p56 = por %p54, %p55
    %p57 = scmp.ne.s32.totalorder %s46, %s47
    %p58 = scmp.eq.s32.totalorder %s17, 0
    %p59 = por %p57, %p58
    %p60 = scmp.ne.s32.totalorder %s46, %s47
    %p61 = scmp.eq.s32.totalorder %s18, 1
    %p62 = por %p60, %p61
    %p64 = scmp.ne.s32.totalorder %s47, %s63
    %p65 = scmp.eq.s32.totalorder %s18, 0
    %p66 = por %p64, %p65
    %s67 = ssub.s32 %s19, %s38
    %s68 = ssub.s32 %s21, %s30
    %s69 = sor.u32 %s67, %s68
    %p70 = scmp.eq.s32.totalorder %s69, 0
    %s72 = sadd.s32 %s71, 1
    %s73 = scalar_select %p70, %s71, %s72
    %p76 = pneg %p70
    %p77 = scmp.eq.s32.totalorder %s12, 1
    %p78 = por %p76, %p77
    %p79 = scmp.ne.s32.totalorder %s71, %s74
    %p80 = scmp.eq.s32.totalorder %s12, 0
    %p81 = por %p79, %p80
    %p82 = scmp.ne.s32.totalorder %s71, %s74
    %p83 = scmp.eq.s32.totalorder %s17, 1
    %p84 = por %p82, %p83
    %p85 = scmp.ne.s32.totalorder %s74, %s75
    %p86 = scmp.eq.s32.totalorder %s17, 0
    %p87 = por %p85, %p86
    %p88 = scmp.ne.s32.totalorder %s74, %s75
    %p89 = scmp.eq.s32.totalorder %s18, 1
    %p90 = por %p88, %p89
    %p92 = scmp.ne.s32.totalorder %s75, %s91
    %p93 = scmp.eq.s32.totalorder %s18, 0
    %p94 = por %p92, %p93
    %s95 = ssub.s32 %s19, %s38
    %s96 = ssub.s32 %s20, %s34
    %s97 = sor.u32 %s95, %s96
    %p98 = scmp.eq.s32.totalorder %s97, 0
    %s100 = sadd.s32 %s99, 1
    %s101 = scalar_select %p98, %s99, %s100
    %p104 = pneg %p98
    %p105 = scmp.eq.s32.totalorder %s12, 1
    %p106 = por %p104, %p105
    %p107 = scmp.ne.s32.totalorder %s99, %s102
    %p108 = scmp.eq.s32.totalorder %s12, 0
    %p109 = por %p107, %p108
    %p110 = scmp.ne.s32.totalorder %s99, %s102
    %p111 = scmp.eq.s32.totalorder %s17, 1
    %p112 = por %p110, %p111
    %p113 = scmp.ne.s32.totalorder %s102, %s103
    %p114 = scmp.eq.s32.totalorder %s17, 0
    %p115 = por %p113, %p114
    %p116 = scmp.ne.s32.totalorder %s102, %s103
    %p117 = scmp.eq.s32.totalorder %s18, 1
    %p118 = por %p116, %p117
    %p120 = scmp.ne.s32.totalorder %s103, %s119
    %p121 = scmp.eq.s32.totalorder %s18, 0
    %p122 = por %p120, %p121
    %s123 = ssub.s32 %s19, %s38
    %s124 = ssub.s32 %s21, %s30
    %s125 = sor.u32 %s123, %s124
    %p126 = scmp.eq.s32.totalorder %s125, 0
    %s128 = sadd.s32 %s127, 1
    %s129 = scalar_select %p126, %s127, %s128
    %p132 = pneg %p126
    %p133 = scmp.eq.s32.totalorder %s12, 1
    %p134 = por %p132, %p133
    %p135 = scmp.ne.s32.totalorder %s127, %s130
    %p136 = scmp.eq.s32.totalorder %s12, 0
    %p137 = por %p135, %p136
    %p138 = scmp.ne.s32.totalorder %s127, %s130
    %p139 = scmp.eq.s32.totalorder %s17, 1
    %p140 = por %p138, %p139
    %p141 = scmp.ne.s32.totalorder %s130, %s131
    %p142 = scmp.eq.s32.totalorder %s17, 0
    %p143 = por %p141, %p142
    %p144 = scmp.ne.s32.totalorder %s130, %s131
    %p145 = scmp.eq.s32.totalorder %s18, 1
    %p146 = por %p144, %p145
    %p148 = scmp.ne.s32.totalorder %s131, %s147
    %p149 = scmp.eq.s32.totalorder %s18, 0
    %p150 = por %p148, %p149
    %s151 = ssub.s32 %s19, %s38
    %s152 = ssub.s32 %s20, %s34
    %s153 = sor.u32 %s151, %s152
    %p154 = scmp.eq.s32.totalorder %s153, 0
    %s156 = sadd.s32 %s155, 1
    %s157 = scalar_select %p154, %s155, %s156
    %p160 = pneg %p154
    %p161 = scmp.eq.s32.totalorder %s12, 1
    %p162 = por %p160, %p161
    %p163 = scmp.ne.s32.totalorder %s155, %s158
    %p164 = scmp.eq.s32.totalorder %s12, 0
    %p165 = por %p163, %p164
    %p166 = scmp.ne.s32.totalorder %s155, %s158
    %p167 = scmp.eq.s32.totalorder %s17, 1
    %p168 = por %p166, %p167
    %p169 = scmp.ne.s32.totalorder %s158, %s159
    %p170 = scmp.eq.s32.totalorder %s17, 0
    %p171 = por %p169, %p170
    %p172 = scmp.ne.s32.totalorder %s158, %s159
    %p173 = scmp.eq.s32.totalorder %s18, 1
    %p174 = por %p172, %p173
    %p176 = scmp.ne.s32.totalorder %s159, %s175
    %p177 = scmp.eq.s32.totalorder %s18, 0
    %p178 = por %p176, %p177
    %s179 = ssub.s32 %s19, %s38
    %p180 = scmp.eq.s32.totalorder %s179, 0
    %s182 = sadd.s32 %s181, 1
    %s183 = scalar_select %p180, %s181, %s182
    %p186 = pneg %p180
    %p187 = scmp.eq.s32.totalorder %s12, 1
    %p188 = por %p186, %p187
    %p189 = scmp.ne.s32.totalorder %s181, %s184
    %p190 = scmp.eq.s32.totalorder %s12, 0
    %p191 = por %p189, %p190
    %p192 = scmp.ne.s32.totalorder %s181, %s184
    %p193 = scmp.eq.s32.totalorder %s17, 1
    %p194 = por %p192, %p193
    %p195 = scmp.ne.s32.totalorder %s184, %s185
    %p196 = scmp.eq.s32.totalorder %s17, 0
    %p197 = por %p195, %p196
    %p198 = scmp.ne.s32.totalorder %s184, %s185
    %p199 = scmp.eq.s32.totalorder %s18, 1
    %p200 = por %p198, %p199
    %p202 = scmp.ne.s32.totalorder %s185, %s201
    %p203 = scmp.eq.s32.totalorder %s18, 0
    %p204 = por %p202, %p203
    %s205 = ssub.s32 %s19, %s38
    %s206 = ssub.s32 %s20, %s34
    %s207 = sor.u32 %s205, %s206
    %p208 = scmp.eq.s32.totalorder %s207, 0
    %s210 = sadd.s32 %s209, 1
    %s211 = scalar_select %p208, %s209, %s210
    %p214 = pneg %p208
    %p215 = scmp.eq.s32.totalorder %s12, 1
    %p216 = por %p214, %p215
    %p217 = scmp.ne.s32.totalorder %s209, %s212
    %p218 = scmp.eq.s32.totalorder %s12, 0
    %p219 = por %p217, %p218
    %p220 = scmp.ne.s32.totalorder %s209, %s212
    %p221 = scmp.eq.s32.totalorder %s17, 1
    %p222 = por %p220, %p221
    %p223 = scmp.ne.s32.totalorder %s212, %s213
    %p224 = scmp.eq.s32.totalorder %s17, 0
    %p225 = por %p223, %p224
    %p226 = scmp.ne.s32.totalorder %s212, %s213
    %p227 = scmp.eq.s32.totalorder %s18, 1
    %p228 = por %p226, %p227
    %p230 = scmp.ne.s32.totalorder %s213, %s229
    %p231 = scmp.eq.s32.totalorder %s18, 0
    %p232 = por %p230, %p231
    %p233 = scmp.le.s32.totalorder 1, %s12
    %p234 = scmp.lt.s32.totalorder %s12, 3
    %p235 = pnand %p233, %p234
    %p236 = pneg %p235
    // Predicated region
    $region9: #{forward.25} parent=5 // pred_check
      _
    $region10: #{forward.25} parent=5 // pred_check_branch
      %238 = sbr.rel (%p235) target = $region12
    $region11: #{forward.25} parent=5 // pred_region
      %s239 = ssub.s32 %s12, 1
    $region12: #{forward.25} parent=5 // pred_fallthru
      _
    %p240 = scmp.lt.s32.totalorder %s12, 2
    // Predicated region
    $region13: #{forward.25} parent=5 // pred_check
      %p241 = pneg %p240
    $region14: #{forward.25} parent=5 // pred_check_branch
      %243 = sbr.rel (%p241) target = $region16
    $region15: #{forward.25} parent=5 // pred_region
      // Predicated region
      $region17: #{forward.25} parent=15 // pred_check
        %p244 = pneg %p53
      $region18: #{forward.25} parent=15 // pred_check_branch
        %246 = sbr.rel (%p244) target = $region20
      $region19: #{forward.25} parent=15 // pred_region
        %s247 = smul.u32 4, %s20
        %p248 = scmp.lt.s32.totalorder %s19, 1
        %s249 = scalar_select %p248, %s19, 1
        %p250 = scmp.lt.s32.totalorder %s247, 3
        %s251 = scalar_select %p250, %s247, 3
        %s252 = smul.addr %s249, 4
        %s253 = sadd.s32 %s251, %s252
        %s254 = smul.addr %s253, 4
        %s255 = scalar_lea.vmem %s0, %s254
        %s256 = smul.u32 4, %s20
      $region20: #{forward.25} parent=15 // pred_fallthru
        _
      // Predicated region
      $region21: #{forward.25} parent=15 // pred_check
        %p257 = pneg %p81
      $region22: #{forward.25} parent=15 // pred_check_branch
        %259 = sbr.rel (%p257) target = $region24
      $region23: #{forward.25} parent=15 // pred_region
        %s260 = smul.u32 4, %s21
        %p261 = scmp.lt.s32.totalorder %s19, 1
        %s262 = scalar_select %p261, %s19, 1
        %p263 = scmp.lt.s32.totalorder %s260, 3
        %s264 = scalar_select %p263, %s260, 3
        %s265 = smul.addr %s262, 4
        %s266 = sadd.s32 %s264, %s265
        %s267 = smul.addr %s266, 4
        %s268 = scalar_lea.vmem %s1, %s267
        %s269 = smul.u32 4, %s21
      $region24: #{forward.25} parent=15 // pred_fallthru
        _
      // Predicated region
      $region25: #{forward.25} parent=15 // pred_check
        %p270 = pneg %p109
      $region26: #{forward.25} parent=15 // pred_check_branch
        %272 = sbr.rel (%p270) target = $region28
      $region27: #{forward.25} parent=15 // pred_region
        %p273 = scmp.lt.s32.totalorder %s19, 1
        %s274 = scalar_select %p273, %s19, 1
        %p275 = scmp.lt.s32.totalorder %s20, 0
        %s276 = scalar_select %p275, %s20, 0
        %s277 = sadd.s32 %s276, %s274
        %s278 = scalar_lea.vmem %s2, %s277
      $region28: #{forward.25} parent=15 // pred_fallthru
        _
      // Predicated region
      $region29: #{forward.25} parent=15 // pred_check
        %p279 = pneg %p137
      $region30: #{forward.25} parent=15 // pred_check_branch
        %281 = sbr.rel (%p279) target = $region32
      $region31: #{forward.25} parent=15 // pred_region
        %s282 = smul.u32 4, %s21
        %p283 = scmp.lt.s32.totalorder %s19, 1
        %s284 = scalar_select %p283, %s19, 1
        %p285 = scmp.lt.s32.totalorder %s282, 3
        %s286 = scalar_select %p285, %s282, 3
        %s287 = smul.addr %s284, 4
        %s288 = sadd.s32 %s286, %s287
        %s289 = smul.addr %s288, 8
        %s290 = scalar_lea.vmem %s3, %s289
        %s291 = smul.u32 4, %s21
      $region32: #{forward.25} parent=15 // pred_fallthru
        _
      // Predicated region
      $region33: #{forward.25} parent=15 // pred_check
        %p292 = pneg %p165
      $region34: #{forward.25} parent=15 // pred_check_branch
        %294 = sbr.rel (%p292) target = $region36
      $region35: #{forward.25} parent=15 // pred_region
        %p295 = scmp.lt.s32.totalorder %s19, 1
        %s296 = scalar_select %p295, %s19, 1
        %p297 = scmp.lt.s32.totalorder %s20, 0
        %s298 = scalar_select %p297, %s20, 0
        %s299 = sadd.s32 %s298, %s296
        %s300 = scalar_lea.vmem %s4, %s299
      $region36: #{forward.25} parent=15 // pred_fallthru
        _
      // Predicated region
      $region37: #{forward.25} parent=15 // pred_check
        %p301 = pneg %p191
      $region38: #{forward.25} parent=15 // pred_check_branch
        %303 = sbr.rel (%p301) target = $region40
      $region39: #{forward.25} parent=15 // pred_region
        %p304 = scmp.lt.s32.totalorder %s19, 1
        %s305 = scalar_select %p304, %s19, 1
        %s306 = scalar_lea.vmem %s5, %s305
      $region40: #{forward.25} parent=15 // pred_fallthru
        _
    $region16: #{forward.25} parent=5 // pred_fallthru
      _
    %p307 = scmp.le.s32.totalorder 1, %s12
    %p308 = scmp.lt.s32.totalorder %s12, 3
    %p309 = pnand %p307, %p308
    %p310 = pneg %p309
    // Predicated region
    $region41: #{forward.25} parent=5 // pred_check
      _
    $region42: #{forward.25} parent=5 // pred_check_branch
      %312 = sbr.rel (%p309) target = $region44
    $region43: #{forward.25} parent=5 // pred_region
      %s313 = ssub.s32 %s12, 1
      %s314 = smul.u32 4, %s23
      %p315 = scmp.lt.s32.totalorder %s22, 1
      %s316 = scalar_select %p315, %s22, 1
      %p317 = scmp.lt.s32.totalorder %s314, 3
      %s318 = scalar_select %p317, %s314, 3
      %s319 = smul.addr %s316, 4
      %s320 = sadd.s32 %s318, %s319
      %s321 = smul.addr %s320, 4
      %s322 = scalar_lea.vmem %s0, %s321
      %p323 = pneg %p59
      %p324 = pneg %p56
      %s325 = smul.u32 4, %s24
      %p326 = scmp.lt.s32.totalorder %s22, 1
      %s327 = scalar_select %p326, %s22, 1
      %p328 = scmp.lt.s32.totalorder %s325, 3
      %s329 = scalar_select %p328, %s325, 3
      %s330 = smul.addr %s327, 4
      %s331 = sadd.s32 %s329, %s330
      %s332 = smul.addr %s331, 4
      %s333 = scalar_lea.vmem %s1, %s332
      %p334 = pneg %p87
      %p335 = pneg %p84
      %p336 = scmp.lt.s32.totalorder %s22, 1
      %s337 = scalar_select %p336, %s22, 1
      %p338 = scmp.lt.s32.totalorder %s23, 0
      %s339 = scalar_select %p338, %s23, 0
      %s340 = sadd.s32 %s339, %s337
      %s341 = scalar_lea.vmem %s2, %s340
      %p342 = pneg %p115
      %p343 = pneg %p112
      %s344 = smul.u32 4, %s24
      %p345 = scmp.lt.s32.totalorder %s22, 1
      %s346 = scalar_select %p345, %s22, 1
      %p347 = scmp.lt.s32.totalorder %s344, 3
      %s348 = scalar_select %p347, %s344, 3
      %s349 = smul.addr %s346, 4
      %s350 = sadd.s32 %s348, %s349
      %s351 = smul.addr %s350, 8
      %s352 = scalar_lea.vmem %s3, %s351
      %p353 = pneg %p143
      %p354 = pneg %p140
      %p355 = scmp.lt.s32.totalorder %s22, 1
      %s356 = scalar_select %p355, %s22, 1
      %p357 = scmp.lt.s32.totalorder %s23, 0
      %s358 = scalar_select %p357, %s23, 0
      %s359 = sadd.s32 %s358, %s356
      %s360 = scalar_lea.vmem %s4, %s359
      %p361 = pneg %p171
      %p362 = pneg %p168
      %p363 = scmp.lt.s32.totalorder %s22, 1
      %s364 = scalar_select %p363, %s22, 1
      %s365 = scalar_lea.vmem %s5, %s364
      %p366 = pneg %p197
      %p367 = pneg %p194
      %p368 = pneg %p225
      %p369 = pneg %p222
      %p370 = scmp.lt.s32.totalorder %s22, 1
      %s371 = scalar_select %p370, %s22, 1
      %p372 = scmp.lt.s32.totalorder %s23, 0
      %s373 = scalar_select %p372, %s23, 0
      %s374 = sadd.s32 %s373, %s371
      %s375 = scalar_lea.vmem %s6, %s374
      %s376 = smul.u32 4, %s23
      %p377 = scmp.lt.s32.totalorder %s22, 1
      %s378 = scalar_select %p377, %s22, 1
      %p379 = scmp.lt.s32.totalorder %s376, 3
      %s380 = scalar_select %p379, %s376, 3
      %s381 = smul.addr %s378, 4
      %s382 = sadd.s32 %s380, %s381
      %s383 = smul.addr %s382, 4
      %s384 = scalar_lea.vmem %s0, %s383
      %s385 = smul.u32 4, %s23
      %s386 = smul.u32 4, %s24
      %p387 = scmp.lt.s32.totalorder %s22, 1
      %s388 = scalar_select %p387, %s22, 1
      %p389 = scmp.lt.s32.totalorder %s386, 3
      %s390 = scalar_select %p389, %s386, 3
      %s391 = smul.addr %s388, 4
      %s392 = sadd.s32 %s390, %s391
      %s393 = smul.addr %s392, 4
      %s394 = scalar_lea.vmem %s1, %s393
      %s395 = smul.u32 4, %s24
      %p396 = scmp.lt.s32.totalorder %s22, 1
      %s397 = scalar_select %p396, %s22, 1
      %p398 = scmp.lt.s32.totalorder %s23, 0
      %s399 = scalar_select %p398, %s23, 0
      %s400 = sadd.s32 %s399, %s397
      %s401 = scalar_lea.vmem %s2, %s400
      %s402 = smul.u32 4, %s24
      %p403 = scmp.lt.s32.totalorder %s22, 1
      %s404 = scalar_select %p403, %s22, 1
      %p405 = scmp.lt.s32.totalorder %s402, 3
      %s406 = scalar_select %p405, %s402, 3
      %s407 = smul.addr %s404, 4
      %s408 = sadd.s32 %s406, %s407
      %s409 = smul.addr %s408, 8
      %s410 = scalar_lea.vmem %s3, %s409
      %s411 = smul.u32 4, %s24
      %p412 = scmp.lt.s32.totalorder %s22, 1
      %s413 = scalar_select %p412, %s22, 1
      %p414 = scmp.lt.s32.totalorder %s23, 0
      %s415 = scalar_select %p414, %s23, 0
      %s416 = sadd.s32 %s415, %s413
      %s417 = scalar_lea.vmem %s4, %s416
      %p418 = scmp.lt.s32.totalorder %s22, 1
      %s419 = scalar_select %p418, %s22, 1
      %s420 = scalar_lea.vmem %s5, %s419
      %p421 = scmp.lt.s32.totalorder %s22, 1
      %s422 = scalar_select %p421, %s22, 1
      %p423 = scmp.lt.s32.totalorder %s23, 0
      %s424 = scalar_select %p423, %s23, 0
      %s425 = sadd.s32 %s424, %s422
      %s426 = scalar_lea.vmem %s6, %s425
      %p428 = scmp.eq.s32.totalorder %s24, 0
      // Predicated region
      $region45: #{forward.25} parent=43 // pred_check
        %p429 = pneg %p428
      $region46: #{forward.25} parent=43 // pred_check_branch
        %431 = sbr.rel (%p429) target = $region48
      $region47: #{forward.25} parent=43 // pred_region
        %vm432 = vcmask 253952
        %433 = vst.msk [vmem:[#allocation2] sm:$0x1] %vm432, 1e+30
      $region48: #{forward.25} parent=43 // pred_fallthru
        _
      %v434 = vld [vmem:[%s394] sm:$0xf]
      %v435 = vld [vmem:[%s394 + $0x4] sm:$0xf]
      %v436 = vld [vmem:[%s394 + $0x8] sm:$0xf]
      %v437 = vld [vmem:[%s394 + $0xc] sm:$0xf]
      %v438 = vld [vmem:[%s384] sm:$0xf]
      %v439 = vld [vmem:[%s384 + $0x4] sm:$0xf]
      %v440 = vld [vmem:[%s384 + $0x8] sm:$0xf]
      %v441 = vld [vmem:[%s384 + $0xc] sm:$0xf]
      %v442 = vld [vmem:[%s401] sm:$0x1]
      %v447 = vunpack.c.l.b16 %v434
      %v448 = vunpack.c.l.b16 %v435
      %v449 = vunpack.c.l.b16 %v436
      %v450 = vunpack.c.l.b16 %v437
      %v451 = vpack.c.b16 %v448, %v447
      %v452 = vpack.c.b16 %v450, %v449
      %v457 = vunpack.c.l.b16 %v438
      %v458 = vunpack.c.l.b16 %v439
      %v459 = vunpack.c.l.b16 %v440
      %v460 = vunpack.c.l.b16 %v441
      %v461 = vpack.c.b16 %v458, %v457
      %v462 = vpack.c.b16 %v460, %v459
      %vm463 = vcmask 523264
      %v465 = vsel %vm463, %v451, 0
      %v468 = vsel %vm463, %v452, 0
      %v471 = vsel %vm463, %v461, 0
      %v474 = vsel %vm463, %v462, 0
      %476 = vmatpush.bf16.xpose.msra.mxu0 0
      %477 = vmatpush.bf16.xpose.msra.mxu0 0
      %478 = vmatpush.bf16.xpose.msra.mxu0 0
      %479 = vmatpush.bf16.xpose.msra.mxu0 0
      %480 = vmatpush.bf16.xpose.msra.mxu0 0
      %481 = vmatpush.bf16.xpose.msra.mxu0 0
      %482 = vmatpush.bf16.xpose.msra.mxu0 %v474
      %483 = vmatpush.bf16.xpose.msra.mxu0 %v471
      %484 = vmatmul.bf16.gmra.mxu0 %v465
      %v485 = vpop.f32.mrf.mxu0
      %v486 = vadd.f32 0.0, %v485
      %v487 = vpop.f32.mrf.mxu0
      %v488 = vadd.f32 0.0, %v487
      %489 = vmatmul.bf16.gmra.mxu0 %v468
      %v490 = vpop.f32.mrf.mxu0
      %v491 = vadd.f32 0.0, %v490
      %v492 = vpop.f32.mrf.mxu0
      %v493 = vadd.f32 0.0, %v492
      %494 = vdwg.mxu0
      %v495 = vunpack.c.l.bf16 %v434
      %v496 = vunpack.c.l.bf16 %v435
      %v497 = vunpack.c.l.bf16 %v436
      %v498 = vunpack.c.l.bf16 %v437
      %v499 = vmul.f32 %v495, %v495
      %v500 = vmul.f32 %v496, %v496
      %v501 = vmul.f32 %v497, %v497
      %v502 = vmul.f32 %v498, %v498
      %v503 = vsel %vm463, %v499, 0.0
      %504 = vadd.xlane.f32.xlu0 %v503
      %v505 = vpop.xlane.xlu0 %504
      %v506 = vsel %vm463, %v500, 0.0
      %507 = vadd.xlane.f32.xlu0 %v506
      %v508 = vpop.xlane.xlu0 %507
      %v509 = vsel %vm463, %v501, 0.0
      %510 = vadd.xlane.f32.xlu0 %v509
      %v511 = vpop.xlane.xlu0 %510
      %v512 = vsel %vm463, %v502, 0.0
      %513 = vadd.xlane.f32.xlu0 %v512
      %v514 = vpop.xlane.xlu0 %513
      %v516 = vperm.slane %v442, 0
      %v518 = vadd.f32 %v505, %v516
      %v519 = vadd.f32 %v508, %v516
      %v520 = vadd.f32 %v511, %v516
      %v521 = vadd.f32 %v514, %v516
      %v522 = vmul.f32 %v486, 2.0
      %v523 = vmul.f32 %v488, 2.0
      %v524 = vmul.f32 %v491, 2.0
      %v525 = vmul.f32 %v493, 2.0
      %v526 = vsub.f32 %v518, %v522
      %v527 = vsub.f32 %v519, %v523
      %v528 = vsub.f32 %v520, %v524
      %v529 = vsub.f32 %v521, %v525
      %v530 = vmax.f32 %v526, 0.0
      %v531 = vmax.f32 %v527, 0.0
      %v532 = vmax.f32 %v528, 0.0
      %v533 = vmax.f32 %v529, 0.0
      %v534 = vld [vmem:[%s410] sm:$0xff]
      %v535 = vld [vmem:[%s410 + $0x8] sm:$0xff]
      %v536 = vld [vmem:[%s410 + $0x10] sm:$0xff]
      %v537 = vld [vmem:[%s410 + $0x18] sm:$0xff]
      %v538 = vld [vmem:[%s417] sm:$0x1]
      %540 = vset.pattern.permute.xlu0 0
      %541 = vperm.xlu0 %540, %v534
      %v542 = vpop.permute.xlu0 %541
      %545 = vset.pattern.permute.xlu0 0
      %546 = vperm.xlu0 %545, %v535
      %v547 = vpop.permute.xlu0 %546
      %550 = vset.pattern.permute.xlu0 0
      %551 = vperm.xlu0 %550, %v536
      %v552 = vpop.permute.xlu0 %551
      %555 = vset.pattern.permute.xlu0 0
      %556 = vperm.xlu0 %555, %v537
      %v557 = vpop.permute.xlu0 %556
      %v560 = vperm.slane %v538, 0
      %vm562 = vcmp.gt.f32.partialorder %v542, %v560
      %vm563 = vcmp.gt.f32.partialorder %v547, %v560
      %vm564 = vcmp.gt.f32.partialorder %v552, %v560
      %vm565 = vcmp.gt.f32.partialorder %v557, %v560
      %v566 = vsel %vm562, %v530, 1e+30
      %v567 = vsel %vm563, %v531, 1e+30
      %v568 = vsel %vm564, %v532, 1e+30
      %v569 = vsel %vm565, %v533, 1e+30
      %v570 = vld [vmem:[#allocation2] sm:$0x1]
      %vm571 = vcmask 261120
      %v572 = vsel %vm571, %v566, inf
      %v573 = vsel %vm571, %v567, inf
      %v574 = vsel %vm571, %v568, inf
      %v575 = vsel %vm571, %v569, inf
      %v576 = vmin.f32 %v572, %v573
      %v577 = vmin.f32 %v574, %v575
      %v578 = vmin.f32 %v576, %v577
      %v579 = vrot.slane %v578, 4
      %v580 = vmin.f32 %v578, %v579
      %v581 = vrot.slane %v580, 2
      %v582 = vmin.f32 %v580, %v581
      %v583 = vrot.slane %v582, 1
      %v584 = vmin.f32 %v582, %v583
      %v585 = vmin.f32 %v570, %v584
      %vm586 = vcmask 253952
      %587 = vst.msk [vmem:[#allocation2] sm:$0x1] %vm586, %v585
      // Predicated region
      $region49: #{forward.25} parent=43 // pred_check
        %p588 = pneg %p428
      $region50: #{forward.25} parent=43 // pred_check_branch
        %590 = sbr.rel (%p588) target = $region52
      $region51: #{forward.25} parent=43 // pred_region
        %v591 = vld [vmem:[#allocation2] sm:$0x1]
        %v592 = vld [vmem:[%s420] sm:$0x1]
        %594 = vset.pattern.permute.xlu0 0
        %595 = vperm.xlu0 %594, %v592
        %v596 = vpop.permute.xlu0 %595
        %v598 = vperm.slane %v596, 0
        %v599 = vmin.f32 %v591, %v598
        %600 = vst.msk [vmem:[%s426] sm:$0x1] %vm586, %v599
      $region52: #{forward.25} parent=43 // pred_fallthru
        _
      %p601 = scmp.lt.s32.totalorder %s22, 1
      %s602 = scalar_select %p601, %s22, 1
      %p603 = scmp.lt.s32.totalorder %s23, 0
      %s604 = scalar_select %p603, %s23, 0
      %s605 = sadd.s32 %s604, %s602
      %s606 = scalar_lea.vmem %s6, %s605
      // Predicated region
      $region53: #{forward.25} parent=43 // pred_check
        %p607 = pneg %p222
      $region54: #{forward.25} parent=43 // pred_check_branch
        %609 = sbr.rel (%p607) target = $region56
      $region55: #{forward.25} parent=43 // pred_region
        _
      $region56: #{forward.25} parent=43 // pred_fallthru
        _
    $region44: #{forward.25} parent=5 // pred_fallthru
      _
    %p610 = scmp.le.s32.totalorder 2, %s12
    // Predicated region
    $region57: #{forward.25} parent=5 // pred_check
      %p611 = pneg %p610
    $region58: #{forward.25} parent=5 // pred_check_branch
      %613 = sbr.rel (%p611) target = $region60
    $region59: #{forward.25} parent=5 // pred_region
      %s614 = ssub.s32 %s12, 2
      // Predicated region
      $region61: #{forward.25} parent=59 // pred_check
        %p615 = pneg %p228
      $region62: #{forward.25} parent=59 // pred_check_branch
        %617 = sbr.rel (%p615) target = $region64
      $region63: #{forward.25} parent=59 // pred_region
        %p618 = scmp.lt.s32.totalorder %s25, 1
        %s619 = scalar_select %p618, %s25, 1
        %p620 = scmp.lt.s32.totalorder %s26, 0
        %s621 = scalar_select %p620, %s26, 0
        %s622 = sadd.s32 %s621, %s619
        %s623 = scalar_lea.vmem %s6, %s622
      $region64: #{forward.25} parent=59 // pred_fallthru
        _
    $region60: #{forward.25} parent=5 // pred_fallthru
      _
  $region6: #{forward.25} parent=0 // loop_footer
    %s16 = sadd.s32 1, %s12
  $region7: #{forward.25} parent=0 // loop_footer_branch
    %11 = sbr.rel target = $region3
  $region8: #{forward.25} parent=0 // loop_exit
    _

// kernel: forward.26
$region0: #{forward.26}
  #allocation0 [shape = 'u32[]', space=smem, size = 0x4, offset = 0x4, fixed_abs, tag = 'smem constant byte address 0x4 - core index']
  #allocation1 [shape = 'u32[72,128]{1,0:T(1,128)}', space=vmem, size = 0x9000, scoped, tag = 'internal scratch']
  #allocation2 [shape = 'f32[1,32]{1,0:T(1,128)}', space=vmem, size = 0x200, scoped, tag = 'scratch operand']
  #allocation3 [shape = 's32[1,32]{1,0:T(1,128)}', space=vmem, size = 0x200, scoped, tag = 'scratch operand']
  %s0 = inlined_call_operand.vmem [shape: bf16[2,8,64], index: 0, kind: input, shape index: {}]
  %s1 = inlined_call_operand.vmem [shape: bf16[2,32,64], index: 1, kind: input, shape index: {}]
  %s2 = inlined_call_operand.vmem [shape: f32[2,1,32], index: 2, kind: input, shape index: {}]
  %s3 = inlined_call_operand.vmem [shape: s32[2,1,32], index: 3, kind: output, shape index: {}]
  %s4 = sld [smem:[#allocation0]]
  $region53: #{forward.26} parent=0
    _
  %s6 = ssub.s32 1, %s4
  %s7 = scalar_select 0, %s6, %s4
  loop: start=0, step=1, limit=4
  $region2: #{forward.26} parent=0 // loop_pre_header
    _
  $region3: #{forward.26} parent=0 // loop_header
    %s9 = sphi 0, %s13
    %p10 = scmp.ge.s32.totalorder %s9, 4
    %s16 = sphi 0, %s35
    %s17 = sphi 0, %s31
    %s18 = sphi 0, %s27
    %s19 = sphi 0, %s16
    %s20 = sphi 0, %s17
    %s21 = sphi 0, %s18
    %s22 = sphi 0, %s19
    %s23 = sphi 0, %s20
    %s24 = sphi 0, %s21
    %s40 = sphi 0, %s42
    %s43 = sphi 0, %s40
    %s44 = sphi 0, %s43
    %s60 = sphi 0, %s44
    %s68 = sphi 0, %s70
    %s71 = sphi 0, %s68
    %s72 = sphi 0, %s71
    %s88 = sphi 0, %s72
    %s96 = sphi 0, %s98
    %s99 = sphi 0, %s96
    %s100 = sphi 0, %s99
    %s116 = sphi 0, %s100
    %s124 = sphi 0, %s126
    %s127 = sphi 0, %s124
    %s128 = sphi 0, %s127
    %s144 = sphi 0, %s128
  $region4: #{forward.26} parent=0 // loop_header_branch
    %12 = sbr.rel (%p10) target = $region8
  $region5: #{forward.26} parent=0 // loop_body
    %s14 = ssub.s32 %s9, 1
    %s15 = ssub.s32 %s9, 2
    %s25 = sadd.s32 1, %s18
    %p26 = scmp.ge.s32.totalorder %s25, 1
    %s27 = scalar_select %p26, 0, %s25
    %s28 = sadd.s32 1, %s17
    %s29 = scalar_select %p26, %s28, %s17
    %p30 = scmp.ge.s32.totalorder %s29, 1
    %s31 = scalar_select %p30, 0, %s29
    %s32 = sadd.s32 1, %s16
    %s33 = scalar_select %p30, %s32, %s16
    %p34 = scmp.ge.s32.totalorder %s33, 2
    %s35 = scalar_select %p34, 0, %s33
    %s36 = ssub.s32 %s16, %s35
    %s37 = ssub.s32 %s18, %s27
    %s38 = sor.u32 %s36, %s37
    %p39 = scmp.eq.s32.totalorder %s38, 0
    %s41 = sadd.s32 %s40, 1
    %s42 = scalar_select %p39, %s40, %s41
    %p45 = pneg %p39
    %p46 = scmp.eq.s32.totalorder %s9, 1
    %p47 = por %p45, %p46
    %p48 = scmp.ne.s32.totalorder %s40, %s43
    %p49 = scmp.eq.s32.totalorder %s9, 0
    %p50 = por %p48, %p49
    %p51 = scmp.ne.s32.totalorder %s40, %s43
    %p52 = scmp.eq.s32.totalorder %s14, 1
    %p53 = por %p51, %p52
    %p54 = scmp.ne.s32.totalorder %s43, %s44
    %p55 = scmp.eq.s32.totalorder %s14, 0
    %p56 = por %p54, %p55
    %p57 = scmp.ne.s32.totalorder %s43, %s44
    %p58 = scmp.eq.s32.totalorder %s15, 1
    %p59 = por %p57, %p58
    %p61 = scmp.ne.s32.totalorder %s44, %s60
    %p62 = scmp.eq.s32.totalorder %s15, 0
    %p63 = por %p61, %p62
    %s64 = ssub.s32 %s16, %s35
    %s65 = ssub.s32 %s17, %s31
    %s66 = sor.u32 %s64, %s65
    %p67 = scmp.eq.s32.totalorder %s66, 0
    %s69 = sadd.s32 %s68, 1
    %s70 = scalar_select %p67, %s68, %s69
    %p73 = pneg %p67
    %p74 = scmp.eq.s32.totalorder %s9, 1
    %p75 = por %p73, %p74
    %p76 = scmp.ne.s32.totalorder %s68, %s71
    %p77 = scmp.eq.s32.totalorder %s9, 0
    %p78 = por %p76, %p77
    %p79 = scmp.ne.s32.totalorder %s68, %s71
    %p80 = scmp.eq.s32.totalorder %s14, 1
    %p81 = por %p79, %p80
    %p82 = scmp.ne.s32.totalorder %s71, %s72
    %p83 = scmp.eq.s32.totalorder %s14, 0
    %p84 = por %p82, %p83
    %p85 = scmp.ne.s32.totalorder %s71, %s72
    %p86 = scmp.eq.s32.totalorder %s15, 1
    %p87 = por %p85, %p86
    %p89 = scmp.ne.s32.totalorder %s72, %s88
    %p90 = scmp.eq.s32.totalorder %s15, 0
    %p91 = por %p89, %p90
    %s92 = ssub.s32 %s16, %s35
    %s93 = ssub.s32 %s17, %s31
    %s94 = sor.u32 %s92, %s93
    %p95 = scmp.eq.s32.totalorder %s94, 0
    %s97 = sadd.s32 %s96, 1
    %s98 = scalar_select %p95, %s96, %s97
    %p101 = pneg %p95
    %p102 = scmp.eq.s32.totalorder %s9, 1
    %p103 = por %p101, %p102
    %p104 = scmp.ne.s32.totalorder %s96, %s99
    %p105 = scmp.eq.s32.totalorder %s9, 0
    %p106 = por %p104, %p105
    %p107 = scmp.ne.s32.totalorder %s96, %s99
    %p108 = scmp.eq.s32.totalorder %s14, 1
    %p109 = por %p107, %p108
    %p110 = scmp.ne.s32.totalorder %s99, %s100
    %p111 = scmp.eq.s32.totalorder %s14, 0
    %p112 = por %p110, %p111
    %p113 = scmp.ne.s32.totalorder %s99, %s100
    %p114 = scmp.eq.s32.totalorder %s15, 1
    %p115 = por %p113, %p114
    %p117 = scmp.ne.s32.totalorder %s100, %s116
    %p118 = scmp.eq.s32.totalorder %s15, 0
    %p119 = por %p117, %p118
    %s120 = ssub.s32 %s16, %s35
    %s121 = ssub.s32 %s17, %s31
    %s122 = sor.u32 %s120, %s121
    %p123 = scmp.eq.s32.totalorder %s122, 0
    %s125 = sadd.s32 %s124, 1
    %s126 = scalar_select %p123, %s124, %s125
    %p129 = pneg %p123
    %p130 = scmp.eq.s32.totalorder %s9, 1
    %p131 = por %p129, %p130
    %p132 = scmp.ne.s32.totalorder %s124, %s127
    %p133 = scmp.eq.s32.totalorder %s9, 0
    %p134 = por %p132, %p133
    %p135 = scmp.ne.s32.totalorder %s124, %s127
    %p136 = scmp.eq.s32.totalorder %s14, 1
    %p137 = por %p135, %p136
    %p138 = scmp.ne.s32.totalorder %s127, %s128
    %p139 = scmp.eq.s32.totalorder %s14, 0
    %p140 = por %p138, %p139
    %p141 = scmp.ne.s32.totalorder %s127, %s128
    %p142 = scmp.eq.s32.totalorder %s15, 1
    %p143 = por %p141, %p142
    %p145 = scmp.ne.s32.totalorder %s128, %s144
    %p146 = scmp.eq.s32.totalorder %s15, 0
    %p147 = por %p145, %p146
    %p148 = scmp.le.s32.totalorder 1, %s9
    %p149 = scmp.lt.s32.totalorder %s9, 3
    %p150 = pnand %p148, %p149
    %p151 = pneg %p150
    // Predicated region
    $region9: #{forward.26} parent=5 // pred_check
      _
    $region10: #{forward.26} parent=5 // pred_check_branch
      %153 = sbr.rel (%p150) target = $region12
    $region11: #{forward.26} parent=5 // pred_region
      %s154 = ssub.s32 %s9, 1
    $region12: #{forward.26} parent=5 // pred_fallthru
      _
    %p155 = scmp.lt.s32.totalorder %s9, 2
    // Predicated region
    $region13: #{forward.26} parent=5 // pred_check
      %p156 = pneg %p155
    $region14: #{forward.26} parent=5 // pred_check_branch
      %158 = sbr.rel (%p156) target = $region16
    $region15: #{forward.26} parent=5 // pred_region
      // Predicated region
      $region17: #{forward.26} parent=15 // pred_check
        %p159 = pneg %p50
      $region18: #{forward.26} parent=15 // pred_check_branch
        %161 = sbr.rel (%p159) target = $region20
      $region19: #{forward.26} parent=15 // pred_region
        %p162 = scmp.lt.s32.totalorder %s16, 1
        %s163 = scalar_select %p162, %s16, 1
        %p164 = scmp.lt.s32.totalorder %s18, 0
        %s165 = scalar_select %p164, %s18, 0
        %s166 = sadd.s32 %s165, %s163
        %s167 = smul.addr %s166, 4
        %s168 = scalar_lea.vmem %s0, %s167
      $region20: #{forward.26} parent=15 // pred_fallthru
        _
      // Predicated region
      $region21: #{forward.26} parent=15 // pred_check
        %p169 = pneg %p78
      $region22: #{forward.26} parent=15 // pred_check_branch
        %171 = sbr.rel (%p169) target = $region24
      $region23: #{forward.26} parent=15 // pred_region
        %s172 = smul.u32 4, %s17
        %p173 = scmp.lt.s32.totalorder %s16, 1
        %s174 = scalar_select %p173, %s16, 1
        %p175 = scmp.lt.s32.totalorder %s172, 3
        %s176 = scalar_select %p175, %s172, 3
        %s177 = smul.addr %s174, 4
        %s178 = sadd.s32 %s176, %s177
        %s179 = smul.addr %s178, 4
        %s180 = scalar_lea.vmem %s1, %s179
        %s181 = smul.u32 4, %s17
      $region24: #{forward.26} parent=15 // pred_fallthru
        _
      // Predicated region
      $region25: #{forward.26} parent=15 // pred_check
        %p182 = pneg %p106
      $region26: #{forward.26} parent=15 // pred_check_branch
        %184 = sbr.rel (%p182) target = $region28
      $region27: #{forward.26} parent=15 // pred_region
        %p185 = scmp.lt.s32.totalorder %s16, 1
        %s186 = scalar_select %p185, %s16, 1
        %p187 = scmp.lt.s32.totalorder %s17, 0
        %s188 = scalar_select %p187, %s17, 0
        %s189 = sadd.s32 %s188, %s186
        %s190 = scalar_lea.vmem %s2, %s189
      $region28: #{forward.26} parent=15 // pred_fallthru
        _
    $region16: #{forward.26} parent=5 // pred_fallthru
      _
    %p191 = scmp.le.s32.totalorder 1, %s9
    %p192 = scmp.lt.s32.totalorder %s9, 3
    %p193 = pnand %p191, %p192
    %p194 = pneg %p193
    // Predicated region
    $region29: #{forward.26} parent=5 // pred_check
      _
    $region30: #{forward.26} parent=5 // pred_check_branch
      %196 = sbr.rel (%p193) target = $region32
    $region31: #{forward.26} parent=5 // pred_region
      %s197 = ssub.s32 %s9, 1
      %p198 = scmp.lt.s32.totalorder %s19, 1
      %s199 = scalar_select %p198, %s19, 1
      %p200 = scmp.lt.s32.totalorder %s21, 0
      %s201 = scalar_select %p200, %s21, 0
      %s202 = sadd.s32 %s201, %s199
      %s203 = smul.addr %s202, 4
      %s204 = scalar_lea.vmem %s0, %s203
      %p205 = pneg %p56
      %p206 = pneg %p53
      %s207 = smul.u32 4, %s20
      %p208 = scmp.lt.s32.totalorder %s19, 1
      %s209 = scalar_select %p208, %s19, 1
      %p210 = scmp.lt.s32.totalorder %s207, 3
      %s211 = scalar_select %p210, %s207, 3
      %s212 = smul.addr %s209, 4
      %s213 = sadd.s32 %s211, %s212
      %s214 = smul.addr %s213, 4
      %s215 = scalar_lea.vmem %s1, %s214
      %p216 = pneg %p84
      %p217 = pneg %p81
      %p218 = scmp.lt.s32.totalorder %s19, 1
      %s219 = scalar_select %p218, %s19, 1
      %p220 = scmp.lt.s32.totalorder %s20, 0
      %s221 = scalar_select %p220, %s20, 0
      %s222 = sadd.s32 %s221, %s219
      %s223 = scalar_lea.vmem %s2, %s222
      %p224 = pneg %p112
      %p225 = pneg %p109
      %p226 = pneg %p140
      %p227 = pneg %p137
      %p228 = scmp.lt.s32.totalorder %s19, 1
      %s229 = scalar_select %p228, %s19, 1
      %p230 = scmp.lt.s32.totalorder %s20, 0
      %s231 = scalar_select %p230, %s20, 0
      %s232 = sadd.s32 %s231, %s229
      %s233 = scalar_lea.vmem %s3, %s232
      %p234 = scmp.lt.s32.totalorder %s19, 1
      %s235 = scalar_select %p234, %s19, 1
      %p236 = scmp.lt.s32.totalorder %s21, 0
      %s237 = scalar_select %p236, %s21, 0
      %s238 = sadd.s32 %s237, %s235
      %s239 = smul.addr %s238, 4
      %s240 = scalar_lea.vmem %s0, %s239
      %s241 = smul.u32 4, %s20
      %p242 = scmp.lt.s32.totalorder %s19, 1
      %s243 = scalar_select %p242, %s19, 1
      %p244 = scmp.lt.s32.totalorder %s241, 3
      %s245 = scalar_select %p244, %s241, 3
      %s246 = smul.addr %s243, 4
      %s247 = sadd.s32 %s245, %s246
      %s248 = smul.addr %s247, 4
      %s249 = scalar_lea.vmem %s1, %s248
      %s250 = smul.u32 4, %s20
      %p251 = scmp.lt.s32.totalorder %s19, 1
      %s252 = scalar_select %p251, %s19, 1
      %p253 = scmp.lt.s32.totalorder %s20, 0
      %s254 = scalar_select %p253, %s20, 0
      %s255 = sadd.s32 %s254, %s252
      %s256 = scalar_lea.vmem %s2, %s255
      %p257 = scmp.lt.s32.totalorder %s19, 1
      %s258 = scalar_select %p257, %s19, 1
      %p259 = scmp.lt.s32.totalorder %s20, 0
      %s260 = scalar_select %p259, %s20, 0
      %s261 = sadd.s32 %s260, %s258
      %s262 = scalar_lea.vmem %s3, %s261
      %p264 = scmp.eq.s32.totalorder %s21, 0
      // Predicated region
      $region33: #{forward.26} parent=31 // pred_check
        %p265 = pneg %p264
      $region34: #{forward.26} parent=31 // pred_check_branch
        %267 = sbr.rel (%p265) target = $region36
      $region35: #{forward.26} parent=31 // pred_region
        %vm268 = vcmask 253952
        %269 = vst.msk [vmem:[#allocation2] sm:$0x1] %vm268, 1e+30
        %270 = vst.msk [vmem:[#allocation3] sm:$0x1] %vm268, 0
      $region36: #{forward.26} parent=31 // pred_fallthru
        _
      %v271 = vld [vmem:[%s240] sm:$0xf]
      %v272 = vld [vmem:[%s249] sm:$0xf]
      %v273 = vld [vmem:[%s249 + $0x4] sm:$0xf]
      %v274 = vld [vmem:[%s249 + $0x8] sm:$0xf]
      %v275 = vld [vmem:[%s249 + $0xc] sm:$0xf]
      %v276 = vld [vmem:[%s256] sm:$0x1]
      %v281 = vunpack.c.l.b16 %v272
      %v282 = vunpack.c.l.b16 %v273
      %v283 = vunpack.c.l.b16 %v274
      %v284 = vunpack.c.l.b16 %v275
      %v285 = vpack.c.b16 %v282, %v281
      %v286 = vpack.c.b16 %v284, %v283
      %vm287 = vcmask 523264
      %v289 = vsel %vm287, %v271, 0
      %v292 = vsel %vm287, %v285, 0
      %v295 = vsel %vm287, %v286, 0
      %297 = vmatpush.bf16.xpose.msra.mxu0 0
      %298 = vmatpush.bf16.xpose.msra.mxu0 0
      %299 = vmatpush.bf16.xpose.msra.mxu0 0
      %300 = vmatpush.bf16.xpose.msra.mxu0 0
      %301 = vmatpush.bf16.xpose.msra.mxu0 0
      %302 = vmatpush.bf16.xpose.msra.mxu0 0
      %303 = vmatpush.bf16.xpose.msra.mxu0 %v295
      %304 = vmatpush.bf16.xpose.msra.mxu0 %v292
      %305 = vmatmul.bf16.gmra.mxu0 %v289
      %v306 = vpop.f32.mrf.mxu0
      %v307 = vadd.f32 0.0, %v306
      %v308 = vpop.f32.mrf.mxu0
      %309 = vdwg.mxu0
      %v310 = vunpack.c.l.bf16 %v271
      %v311 = vmul.f32 %v310, %v310
      %v312 = vsel %vm287, %v311, 0.0
      %313 = vadd.xlane.f32.xlu0 %v312
      %v314 = vpop.xlane.xlu0 %313
      %s315 = smul.u32 %s21, 8
      %v316 = vlaneseq
      %v317 = vshrl.u32 %v316, 7
      %v318 = vstv %s315
      %v319 = vadd.s32 %v318, %v317
      %vm320 = vcmp.lt.s32.totalorder %v319, 4
      %v321 = vsel %vm320, 0.0, 1e+30
      %v322 = vadd.f32 %v314, %v321
      %v324 = vperm.slane %v276, 0
      %v326 = vadd.f32 %v322, %v324
      %v327 = vmul.f32 %v307, 2.0
      %v328 = vsub.f32 %v326, %v327
      %v329 = vmax.f32 %v328, 0.0
      %vm330 = vcmask 261120
      %v331 = vsel %vm330, %v329, inf
      %v332 = vrot.slane %v331, 4
      %v333 = vmin.f32 %v331, %v332
      %v334 = vrot.slane %v333, 2
      %v335 = vmin.f32 %v333, %v334
      %v336 = vrot.slane %v335, 1
      %v337 = vmin.f32 %v335, %v336
      %vm338 = vcmp.le.f32.partialorder %v329, %v337
      %v339 = vsel %vm338, %v319, 1073741824
      %v340 = vsel %vm330, %v339, 2147483647
      %v341 = vrot.slane %v340, 4
      %vm342 = vcmp.lt.s32.totalorder %v340, %v341
      %v343 = vsel %vm342, %v340, %v341
      %v344 = vrot.slane %v343, 2
      %vm345 = vcmp.lt.s32.totalorder %v343, %v344
      %v346 = vsel %vm345, %v343, %v344
      %v347 = vrot.slane %v346, 1
      %vm348 = vcmp.lt.s32.totalorder %v346, %v347
      %v349 = vsel %vm348, %v346, %v347
      %v350 = vld [vmem:[#allocation2] sm:$0x1]
      %vm351 = vcmp.lt.f32.partialorder %v337, %v350
      %v352 = vld [vmem:[#allocation3] sm:$0x1]
      %v353 = vsel %vm351, %v349, %v352
      %vm354 = vcmask 253952
      %355 = vst.msk [vmem:[#allocation3] sm:$0x1] %vm354, %v353
      %v356 = vld [vmem:[#allocation2] sm:$0x1]
      %v357 = vsel %vm351, %v337, %v356
      %358 = vst.msk [vmem:[#allocation2] sm:$0x1] %vm354, %v357
      // Predicated region
      $region37: #{forward.26} parent=31 // pred_check
        %p359 = pneg %p264
      $region38: #{forward.26} parent=31 // pred_check_branch
        %361 = sbr.rel (%p359) target = $region40
      $region39: #{forward.26} parent=31 // pred_region
        %v362 = vld [vmem:[#allocation3] sm:$0x1]
        %363 = vst.msk [vmem:[%s262] sm:$0x1] %vm354, %v362
      $region40: #{forward.26} parent=31 // pred_fallthru
        _
      %p364 = scmp.lt.s32.totalorder %s19, 1
      %s365 = scalar_select %p364, %s19, 1
      %p366 = scmp.lt.s32.totalorder %s20, 0
      %s367 = scalar_select %p366, %s20, 0
      %s368 = sadd.s32 %s367, %s365
      %s369 = scalar_lea.vmem %s3, %s368
      // Predicated region
      $region41: #{forward.26} parent=31 // pred_check
        %p370 = pneg %p137
      $region42: #{forward.26} parent=31 // pred_check_branch
        %372 = sbr.rel (%p370) target = $region44
      $region43: #{forward.26} parent=31 // pred_region
        _
      $region44: #{forward.26} parent=31 // pred_fallthru
        _
    $region32: #{forward.26} parent=5 // pred_fallthru
      _
    %p373 = scmp.le.s32.totalorder 2, %s9
    // Predicated region
    $region45: #{forward.26} parent=5 // pred_check
      %p374 = pneg %p373
    $region46: #{forward.26} parent=5 // pred_check_branch
      %376 = sbr.rel (%p374) target = $region48
    $region47: #{forward.26} parent=5 // pred_region
      %s377 = ssub.s32 %s9, 2
      // Predicated region
      $region49: #{forward.26} parent=47 // pred_check
        %p378 = pneg %p143
      $region50: #{forward.26} parent=47 // pred_check_branch
        %380 = sbr.rel (%p378) target = $region52
      $region51: #{forward.26} parent=47 // pred_region
        %p381 = scmp.lt.s32.totalorder %s22, 1
        %s382 = scalar_select %p381, %s22, 1
        %p383 = scmp.lt.s32.totalorder %s23, 0
        %s384 = scalar_select %p383, %s23, 0
        %s385 = sadd.s32 %s384, %s382
        %s386 = scalar_lea.vmem %s3, %s385
      $region52: #{forward.26} parent=47 // pred_fallthru
        _
    $region48: #{forward.26} parent=5 // pred_fallthru
      _
  $region6: #{forward.26} parent=0 // loop_footer
    %s13 = sadd.s32 1, %s9
  $region7: #{forward.26} parent=0 // loop_footer_branch
    %8 = sbr.rel target = $region3
  $region8: #{forward.26} parent=0 // loop_exit
    _

// kernel: div.24
$region0: #{div.24}
  #allocation0 [shape = 's32[1]{0}', space=sflag, size = 0x4, scoped, tag = 'scoped memory for div.24']
  %s0 = inlined_call_operand.vmem [shape: f32[32], index: 0, kind: input, shape index: {}]
  %s1 = inlined_call_operand.vmem [shape: f32[32], index: 1, kind: input, shape index: {}]
  %s2 = inlined_call_operand.vmem [shape: f32[32], index: 2, kind: output, shape index: {}]
  %v3 = vld [vmem:[%s0] sm:$0x1]
  %v4 = vld [vmem:[%s1] sm:$0x1]
  %5 = xla_tuple %v3, %v4
  %6 = xla_tuple %5
  %v7 = vrcp.pop %v4
  %v8 = vmul.f32 %v4, %v7
  %v9 = vsub.f32 1.0, %v8
  %v10 = vmul.f32 %v7, %v9
  %v11 = vadd.f32 %v7, %v10
  %vm12 = vweird.f32 %v4
  %vm13 = vweird.f32 %v7
  %vm14 = vmor %vm12, %vm13
  %v15 = vsel %vm14, %v7, %v11
  %v16 = vand.u32 2147483647, %v4
  %vm17 = vcmp.eq.f32.partialorder %v16, 8.507059e+37
  %v18 = vand.u32 %v4, 2147483648
  %v19 = vor.u32 1.1754944e-38, %v18
  %v20 = vsel %vm17, %v19, %v15
  %v21 = vmul.f32 %v3, %v20
  %22 = xla_tuple %v21
  %23 = vst [vmem:[%s2] sm:$0x1] %v21

// kernel: forward.27
$region0: #{forward.27}
  #allocation0 [shape = 'u32[]', space=smem, size = 0x4, offset = 0x4, fixed_abs, tag = 'smem constant byte address 0x4 - core index']
  #allocation1 [shape = 'u32[72,128]{1,0:T(1,128)}', space=vmem, size = 0x9000, scoped, tag = 'internal scratch']
  %s0 = inlined_call_operand.vmem [shape: bf16[8,64], index: 0, kind: input, shape index: {}]
  %s1 = inlined_call_operand.vmem [shape: bf16[64,128], index: 1, kind: input, shape index: {}]
  %s2 = inlined_call_operand.vmem [shape: f32[1,128], index: 2, kind: input, shape index: {}]
  %s3 = inlined_call_operand.hbm [shape: f32[8,128], index: 3, kind: output, shape index: {}]
  %s4 = sld [smem:[#allocation0]]
  $region22: #{forward.27} parent=0
    _
  %s6 = ssub.s32 1, %s4
  %s7 = scalar_select 0, %s6, %s4
  $region1: #{forward.27} parent=0
    #allocation2 [shape = 'u8[4096]{0}', space=vmem, size = 0x1000, scoped, tag = 'output window, operand 0, single buffered']
    #allocation3 [shape = 's32[1]{0}', space=sflag, size = 0x4, scoped, tag = 'scoped memory for forward.27']
    %8 = vsyncpa [#allocation3], 0
    // Predicated region
    $region2: #{forward.27} parent=1 // pred_check
      _
    $region3: #{forward.27} parent=1 // pred_check_branch
      %10 = sbr.rel (0) target = $region5
    $region4: #{forward.27} parent=1 // pred_region
      _
    $region5: #{forward.27} parent=1 // pred_fallthru
      _
    // Predicated region
    $region6: #{forward.27} parent=1 // pred_check
      _
    $region7: #{forward.27} parent=1 // pred_check_branch
      %12 = sbr.rel (0) target = $region9
    $region8: #{forward.27} parent=1 // pred_region
      _
    $region9: #{forward.27} parent=1 // pred_fallthru
      _
    // Predicated region
    $region10: #{forward.27} parent=1 // pred_check
      _
    $region11: #{forward.27} parent=1 // pred_check_branch
      %14 = sbr.rel (0) target = $region13
    $region12: #{forward.27} parent=1 // pred_region
      _
    $region13: #{forward.27} parent=1 // pred_fallthru
      _
    %v16 = vld [vmem:[%s0] sm:$0xf]
    %v17 = vld [vmem:[%s1] sm:$0xf]
    %v18 = vld [vmem:[%s1 + $0x4] sm:$0xf]
    %v19 = vld [vmem:[%s1 + $0x8] sm:$0xf]
    %v20 = vld [vmem:[%s1 + $0xc] sm:$0xf]
    %v21 = vld [vmem:[%s1 + $0x10] sm:$0xf]
    %v22 = vld [vmem:[%s1 + $0x14] sm:$0xf]
    %v23 = vld [vmem:[%s1 + $0x18] sm:$0xf]
    %v24 = vld [vmem:[%s1 + $0x1c] sm:$0xf]
    %v25 = vld [vmem:[%s2] sm:$0x1]
    %v27 = vperm.slane %v25, 0
    %v37 = vunpack.c.l.b16 %v17
    %v38 = vunpack.c.l.b16 %v18
    %v39 = vunpack.c.l.b16 %v19
    %v40 = vunpack.c.l.b16 %v20
    %v41 = vunpack.c.l.b16 %v21
    %v42 = vunpack.c.l.b16 %v22
    %v43 = vunpack.c.l.b16 %v23
    %v44 = vunpack.c.l.b16 %v24
    %v45 = vpack.c.b16 %v38, %v37
    %v46 = vpack.c.b16 %v40, %v39
    %v47 = vpack.c.b16 %v42, %v41
    %v48 = vpack.c.b16 %v44, %v43
    %vm53 = vcmask 523264
    %v55 = vsel %vm53, %v16, 0
    %57 = vmatpush.bf16.msra.mxu0 0
    %58 = vmatpush.bf16.msra.mxu0 0
    %59 = vmatpush.bf16.msra.mxu0 0
    %60 = vmatpush.bf16.msra.mxu0 0
    %61 = vmatpush.bf16.msra.mxu0 %v48
    %62 = vmatpush.bf16.msra.mxu0 %v47
    %63 = vmatpush.bf16.msra.mxu0 %v46
    %64 = vmatpush.bf16.msra.mxu0 %v45
    %65 = vmatmul.bf16.gmra.mxu0 %v55
    %v66 = vpop.f32.mrf.mxu0
    %v67 = vadd.f32 %v27, %v66
    %v68 = vpop.f32.mrf.mxu0
    %69 = vdwg.mxu0
    %70 = vst [vmem:[#allocation2] sm:$0xff] %v67
    // Predicated region
    $region14: #{forward.27} parent=1 // pred_check
      _
    $region15: #{forward.27} parent=1 // pred_check_branch
      %72 = sbr.rel (0) target = $region17
    $region16: #{forward.27} parent=1 // pred_region
      %74 = vsyncadd [#allocation3], 0
      %s76 = sshll.u32 [#allocation2], 4
      %s77 = int_to_ptr.vmem [resolvable:$true] %s76
      %s78 = sshll.u32 %s3, 4
      %s79 = int_to_ptr.hbm [resolvable:$true] %s78
      %81 = dma.vmem_to_hbm [thread:$0]  %s77, 128, %s79, [#allocation3]
    $region17: #{forward.27} parent=1 // pred_fallthru
      _
    // Predicated region
    $region18: #{forward.27} parent=1 // pred_check
      _
    $region19: #{forward.27} parent=1 // pred_check_branch
      %83 = sbr.rel (0) target = $region21
    $region20: #{forward.27} parent=1 // pred_region
      %85 = dma.done [#allocation3], 128
    $region21: #{forward.27} parent=1 // pred_fallthru
      _
    %86 = vsyncpa [#allocation3], 1

</llo_original>
